<compile_context>
chip_gen: v5e
topology: v5e:2x2
jax: 0.10.0
libtpu: 0.0.40
codegen_flags: <defaults>
</compile_context>

<pallas_src>
import functools

import jax
import jax.numpy as jnp
import numpy as np
from jax.experimental import pallas as pl
from jax.experimental.pallas import tpu as pltpu

_BN_EPS = 1e-5


# ---------------------------------------------------------------------------
# In-kernel building blocks.  Activations are channel-major (C, P) f32 values,
# where the first H*W of the P (>=128) lanes hold the row-major spatial plane.
# ---------------------------------------------------------------------------
def _shift_lanes(a, off):
    """result[:, m] = a[:, (m + off) % P]  (wrap never hits a valid, unmasked tap)."""
    P = a.shape[-1]
    s = (-off) % P                      # jnp.roll semantics: out[m] = in[(m - s) % P]
    if s == 0:
        return a
    return pltpu.roll(a, s, axis=1)     # XLU lane rotation


def _conv3x3(a, row_w, mask_ref, w_ref, shift_ref, relu):
    """3x3 / pad=1 conv, channel-major: (Cin, P) -> (Cout, P), ONE MXU matmul."""
    taps = []
    t = 0
    for kh in range(3):
        for kw in range(3):
            off = (kh - 1) * row_w + (kw - 1)
            taps.append(_shift_lanes(a, off) * mask_ref[t:t + 1, :])
            t += 1
    cols = jnp.concatenate(taps, axis=0).astype(jnp.bfloat16)        # (9*Cin, P)
    y = jnp.dot(w_ref[...], cols, preferred_element_type=jnp.float32)  # (Cout, P)
    y = y + shift_ref[...]                                           # (Cout, 1)
    if relu:
        y = jnp.maximum(y, 0.0)
    return y


def _double_conv(a, row_w, mask_ref, w1, s1, w2, s2):
    a = _conv3x3(a, row_w, mask_ref, w1, s1, relu=True)
    return _conv3x3(a, row_w, mask_ref, w2, s2, relu=True)


def _maxpool2x2(a, row_w, sel_ref):
    """2x2/stride-2 max pool: VPU max of lane rolls + one 0/1 compaction matmul."""
    hmax = jnp.maximum(a, _shift_lanes(a, 1))
    vmax = jnp.maximum(hmax, _shift_lanes(hmax, row_w))
    return jnp.dot(vmax.astype(jnp.bfloat16), sel_ref[...],
                   preferred_element_type=jnp.float32)


def _dilate2x(a, scat_ref):
    """Stride-2 zero dilation (ConvTranspose2d s=2) via a 0/1 scatter matmul."""
    return jnp.dot(a.astype(jnp.bfloat16), scat_ref[...],
                   preferred_element_type=jnp.float32)


# ---------------------------------------------------------------------------
# The fused kernel: one grid step == one batch element, the whole network.
# ---------------------------------------------------------------------------
def _aemad_kernel(*refs, W):
    o_ref = refs[-1]
    ins = refs[:-1]
    pos = 0

    def take(n):
        nonlocal pos
        out = ins[pos:pos + n]
        pos += n
        return out

    (x_ref,) = take(1)
    mask_refs = take(4)                                  # levels 0..3
    widths = [W >> l for l in range(4)]                  # spatial row width per level

    a = x_ref[0].astype(jnp.float32)                     # (Cin_pad, H*W) channel-major

    # ---- inconv -----------------------------------------------------------
    w1, s1, w2, s2 = take(4)
    a = _double_conv(a, widths[0], mask_refs[0], w1, s1, w2, s2)

    # ---- down x3: maxpool(2) + double_conv --------------------------------
    for lvl in (1, 2, 3):
        sel, w1, s1, w2, s2 = take(5)
        a = _maxpool2x2(a, widths[lvl - 1], sel)
        a = _double_conv(a, widths[lvl], mask_refs[lvl], w1, s1, w2, s2)

    # ---- up x3: ConvTranspose2d(k3,s2,p1,op1) + double_conv ----------------
    for lvl in (2, 1, 0):
        scat, wu, bu, w1, s1, w2, s2 = take(7)
        a = _dilate2x(a, scat)
        a = _conv3x3(a, widths[lvl], mask_refs[lvl], wu, bu, relu=False)
        a = _double_conv(a, widths[lvl], mask_refs[lvl], w1, s1, w2, s2)

    # ---- outconv (1x1) -> lane-dense NCHW output ---------------------------
    wo, bo = take(2)
    y = jnp.dot(wo[...], a.astype(jnp.bfloat16),
                preferred_element_type=jnp.float32) + bo[...]
    o_ref[0] = y.astype(o_ref.dtype)


# ---------------------------------------------------------------------------
# Host-precomputed structural constants (jit-time constants).
# ---------------------------------------------------------------------------
def _conv_masks(Hr, Wr, P):
    """(9, P) f32 per-tap boundary-validity masks for a 3x3/pad=1 conv."""
    m = np.arange(Hr * Wr)
    hh, ww = m // Wr, m % Wr
    out = np.zeros((9, P), np.float32)
    t = 0
    for kh in range(3):
        for kw in range(3):
            dh, dw = kh - 1, kw - 1
            out[t, :Hr * Wr] = ((hh + dh >= 0) & (hh + dh < Hr) &
                                (ww + dw >= 0) & (ww + dw < Wr))
            t += 1
    return jnp.asarray(out)


def _pool_select(Hr, Wr, p_in, p_out):
    """(p_in, p_out) bf16 0/1 matrix: column mo picks the 2x2 anchor lane."""
    Ho, Wo = Hr // 2, Wr // 2
    s = np.zeros((p_in, p_out), np.float32)
    mo = np.arange(Ho * Wo)
    s[(2 * (mo // Wo)) * Wr + 2 * (mo % Wo), mo] = 1.0
    return jnp.asarray(s).astype(jnp.bfloat16)


def _dilate_scatter(Hr, Wr, p_in, p_out):
    """(p_in, p_out) bf16 0/1 matrix: stride-2 zero-dilation (Hr,Wr)->(2Hr,2Wr)."""
    d = np.zeros((p_in, p_out), np.float32)
    mi = np.arange(Hr * Wr)
    d[mi, (2 * (mi // Wr)) * (2 * Wr) + 2 * (mi % Wr)] = 1.0
    return jnp.asarray(d).astype(jnp.bfloat16)


# ---------------------------------------------------------------------------
# Deterministic synthetic parameters (mirror the PyTorch module shapes).
# ---------------------------------------------------------------------------
def _fold_conv_bn(key, cin, cout, cin_pad=None):
    """Conv2d(3x3,p=1)+BatchNorm2d(eval stats) folded into channel-major matmul form."""
    kw, kb = jax.random.split(key)
    w = jax.random.normal(kw, (cout, cin, 3, 3), jnp.float32) / np.sqrt(9.0 * cin)
    b = jax.random.normal(kb, (cout,), jnp.float32) * 0.01
    scale = 1.0 / np.sqrt(1.0 + _BN_EPS)              # gamma=1, running_var=1
    shift = (b * scale).reshape(cout, 1)              # beta=0, running_mean=0
    if cin_pad is not None and cin_pad > cin:
        w = jnp.pad(w, ((0, 0), (0, cin_pad - cin), (0, 0), (0, 0)))
    wmat = (w * scale).transpose(0, 2, 3, 1).reshape(cout, -1)   # (cout, 9*cin)
    return wmat.astype(jnp.bfloat16), shift.astype(jnp.float32)


def _fold_conv_transpose(key, ch):
    """ConvTranspose2d(k=3,s=2,p=1,op=1) as a 3x3/pad-1 conv on the zero-dilated map."""
    kw, kb = jax.random.split(key)
    wt = jax.random.normal(kw, (ch, ch, 3, 3), jnp.float32) / np.sqrt(9.0 * ch)
    bt = jax.random.normal(kb, (ch,), jnp.float32) * 0.01
    wf = jnp.transpose(wt[:, :, ::-1, ::-1], (1, 0, 2, 3))   # flip taps, swap in/out
    wmat = wf.transpose(0, 2, 3, 1).reshape(ch, 9 * ch)
    return wmat.astype(jnp.bfloat16), bt.reshape(ch, 1).astype(jnp.float32)


def init_aemad(key, in_channels=3, features_root=8):
    F = features_root
    assert F % 8 == 0, "features_root must be a multiple of 8 (sublane tile)"
    cin_pad = -(-in_channels // 8) * 8
    ks = jax.random.split(key, 9)

    def dconv(k, cin, cout, pad_first=None):
        k1, k2 = jax.random.split(k)
        return _fold_conv_bn(k1, cin, cout, cin_pad=pad_first) + \
               _fold_conv_bn(k2, cout, cout)

    def up(k, cin, cout):
        k1, k2 = jax.random.split(k)
        return _fold_conv_transpose(k1, cin) + dconv(k2, cin, cout)

    return {
        "inc": dconv(ks[0], in_channels, F, pad_first=cin_pad),
        "downs": [dconv(ks[1], F, 2 * F),
                  dconv(ks[2], 2 * F, 4 * F),
                  dconv(ks[3], 4 * F, 8 * F)],
        "ups": [up(ks[4], 8 * F, 4 * F),
                up(ks[5], 4 * F, 2 * F),
                up(ks[6], 2 * F, F)],
        "outc_w": (jax.random.normal(ks[7], (in_channels, F), jnp.float32)
                   / np.sqrt(float(F))).astype(jnp.bfloat16),
        "outc_b": (jax.random.normal(ks[8], (in_channels,), jnp.float32)
                   * 0.01).reshape(in_channels, 1).astype(jnp.float32),
    }


# ---------------------------------------------------------------------------
# AEMAD forward: one fused pallas_call.
# ---------------------------------------------------------------------------
def aemad_forward(params, raw_nchw):
    """Returns (target_raw, output_raw), both NCHW, matching the PyTorch module."""
    N, Cin, H, W = raw_nchw.shape
    M = H * W
    assert H % 8 == 0 and W % 8 == 0, "three 2x2 pool levels required"
    assert M % 128 == 0, "level-0 plane must be lane aligned (H*W % 128 == 0)"

    cin_pad = params["inc"][0].shape[1] // 9            # first conv K = 9 * cin_pad
    x = raw_nchw.reshape(N, Cin, M).astype(jnp.float32)  # NCHW flat == channel-major
    if cin_pad > Cin:
        x = jnp.pad(x, ((0, 0), (0, cin_pad - Cin), (0, 0)))

    # Structural constants (masks / pool-selection / dilation scatter), padded
    # so every lane dimension is >= 128 (junk lanes never reach valid lanes).
    Ms = [(H >> l) * (W >> l) for l in range(4)]
    Ps = [max(128, -(-m // 128) * 128) for m in Ms]
    masks = [_conv_masks(H >> l, W >> l, Ps[l]) for l in range(4)]
    sels = [_pool_select(H >> l, W >> l, Ps[l], Ps[l + 1]) for l in range(3)]
    dils = [_dilate_scatter(H >> (3 - i), W >> (3 - i), Ps[3 - i], Ps[2 - i])
            for i in range(3)]

    flat = list(masks)
    flat += list(params["inc"])
    for l in range(3):
        flat += [sels[l], *params["downs"][l]]
    for i in range(3):
        flat += [dils[i], *params["ups"][i]]
    flat += [params["outc_w"], params["outc_b"]]

    out_ch = params["outc_w"].shape[0]
    out = pl.pallas_call(
        functools.partial(_aemad_kernel, W=W),
        out_shape=jax.ShapeDtypeStruct((N, out_ch, M), jnp.float32),
        grid=(N,),
        in_specs=([pl.BlockSpec((1, cin_pad, M), lambda n: (n, 0, 0))]
                  + [pl.BlockSpec(p.shape, lambda n: (0, 0)) for p in flat]),
        out_specs=pl.BlockSpec((1, out_ch, M), lambda n: (n, 0, 0)),
        compiler_params=pltpu.CompilerParams(
            dimension_semantics=("parallel",)),
    )(x, *flat)

    return raw_nchw, out.reshape(N, out_ch, H, W)       # metadata-only reshape


# ---------------------------------------------------------------------------
if __name__ == "__main__":
    key = jax.random.PRNGKey(0)
    k_param, k_data = jax.random.split(key)

    in_channels, features_root = 3, 8
    N, H, W = 2, 16, 16

    params = init_aemad(k_param, in_channels=in_channels, features_root=features_root)
    raw = jax.random.normal(k_data, (N, in_channels, H, W), jnp.float32)

    fwd = jax.jit(aemad_forward)
    target_raw, output_raw = fwd(params, raw)
    jax.block_until_ready((target_raw, output_raw))

    assert target_raw.shape == (N, in_channels, H, W)
    assert output_raw.shape == (N, in_channels, H, W)
    assert bool(jnp.all(jnp.isfinite(output_raw)))

    print("KERNEL_OK")
</pallas_src>

<mosaic_0001>
module attributes {stable_mosaic.version = 11 : i64} {
  func.func @_aemad_kernel(%arg0: i32, %arg1: memref<1x8x256xf32, #tpu.memory_space<vmem>>, %arg2: memref<9x256xf32, #tpu.memory_space<vmem>>, %arg3: memref<9x128xf32, #tpu.memory_space<vmem>>, %arg4: memref<9x128xf32, #tpu.memory_space<vmem>>, %arg5: memref<9x128xf32, #tpu.memory_space<vmem>>, %arg6: memref<8x72xbf16, #tpu.memory_space<vmem>>, %arg7: memref<8x1xf32, #tpu.memory_space<vmem>>, %arg8: memref<8x72xbf16, #tpu.memory_space<vmem>>, %arg9: memref<8x1xf32, #tpu.memory_space<vmem>>, %arg10: memref<256x128xbf16, #tpu.memory_space<vmem>>, %arg11: memref<16x72xbf16, #tpu.memory_space<vmem>>, %arg12: memref<16x1xf32, #tpu.memory_space<vmem>>, %arg13: memref<16x144xbf16, #tpu.memory_space<vmem>>, %arg14: memref<16x1xf32, #tpu.memory_space<vmem>>, %arg15: memref<128x128xbf16, #tpu.memory_space<vmem>>, %arg16: memref<32x144xbf16, #tpu.memory_space<vmem>>, %arg17: memref<32x1xf32, #tpu.memory_space<vmem>>, %arg18: memref<32x288xbf16, #tpu.memory_space<vmem>>, %arg19: memref<32x1xf32, #tpu.memory_space<vmem>>, %arg20: memref<128x128xbf16, #tpu.memory_space<vmem>>, %arg21: memref<64x288xbf16, #tpu.memory_space<vmem>>, %arg22: memref<64x1xf32, #tpu.memory_space<vmem>>, %arg23: memref<64x576xbf16, #tpu.memory_space<vmem>>, %arg24: memref<64x1xf32, #tpu.memory_space<vmem>>, %arg25: memref<128x128xbf16, #tpu.memory_space<vmem>>, %arg26: memref<64x576xbf16, #tpu.memory_space<vmem>>, %arg27: memref<64x1xf32, #tpu.memory_space<vmem>>, %arg28: memref<32x576xbf16, #tpu.memory_space<vmem>>, %arg29: memref<32x1xf32, #tpu.memory_space<vmem>>, %arg30: memref<32x288xbf16, #tpu.memory_space<vmem>>, %arg31: memref<32x1xf32, #tpu.memory_space<vmem>>, %arg32: memref<128x128xbf16, #tpu.memory_space<vmem>>, %arg33: memref<32x288xbf16, #tpu.memory_space<vmem>>, %arg34: memref<32x1xf32, #tpu.memory_space<vmem>>, %arg35: memref<16x288xbf16, #tpu.memory_space<vmem>>, %arg36: memref<16x1xf32, #tpu.memory_space<vmem>>, %arg37: memref<16x144xbf16, #tpu.memory_space<vmem>>, %arg38: memref<16x1xf32, #tpu.memory_space<vmem>>, %arg39: memref<128x256xbf16, #tpu.memory_space<vmem>>, %arg40: memref<16x144xbf16, #tpu.memory_space<vmem>>, %arg41: memref<16x1xf32, #tpu.memory_space<vmem>>, %arg42: memref<8x144xbf16, #tpu.memory_space<vmem>>, %arg43: memref<8x1xf32, #tpu.memory_space<vmem>>, %arg44: memref<8x72xbf16, #tpu.memory_space<vmem>>, %arg45: memref<8x1xf32, #tpu.memory_space<vmem>>, %arg46: memref<3x8xbf16, #tpu.memory_space<vmem>>, %arg47: memref<3x1xf32, #tpu.memory_space<vmem>>, %arg48: memref<1x3x256xf32, #tpu.memory_space<vmem>>) attributes {dimension_semantics = [#tpu.dimension_semantics<parallel>], iteration_bounds = array<i64: 2>, scalar_prefetch = 0 : i64, scratch_operands = 0 : i64, tpu.core_type = #tpu.core_type<tc>, window_params = [{transform_indices = @transform_0, window_bounds = array<i64: 1, 8, 256>}, {pipeline_mode = #tpu.pipeline_mode<synchronous>, transform_indices = @transform_1, window_bounds = array<i64: 9, 256>}, {pipeline_mode = #tpu.pipeline_mode<synchronous>, transform_indices = @transform_2, window_bounds = array<i64: 9, 128>}, {pipeline_mode = #tpu.pipeline_mode<synchronous>, transform_indices = @transform_3, window_bounds = array<i64: 9, 128>}, {pipeline_mode = #tpu.pipeline_mode<synchronous>, transform_indices = @transform_4, window_bounds = array<i64: 9, 128>}, {pipeline_mode = #tpu.pipeline_mode<synchronous>, transform_indices = @transform_5, window_bounds = array<i64: 8, 72>}, {pipeline_mode = #tpu.pipeline_mode<synchronous>, transform_indices = @transform_6, window_bounds = array<i64: 8, 1>}, {pipeline_mode = #tpu.pipeline_mode<synchronous>, transform_indices = @transform_7, window_bounds = array<i64: 8, 72>}, {pipeline_mode = #tpu.pipeline_mode<synchronous>, transform_indices = @transform_8, window_bounds = array<i64: 8, 1>}, {pipeline_mode = #tpu.pipeline_mode<synchronous>, transform_indices = @transform_9, window_bounds = array<i64: 256, 128>}, {pipeline_mode = #tpu.pipeline_mode<synchronous>, transform_indices = @transform_10, window_bounds = array<i64: 16, 72>}, {pipeline_mode = #tpu.pipeline_mode<synchronous>, transform_indices = @transform_11, window_bounds = array<i64: 16, 1>}, {pipeline_mode = #tpu.pipeline_mode<synchronous>, transform_indices = @transform_12, window_bounds = array<i64: 16, 144>}, {pipeline_mode = #tpu.pipeline_mode<synchronous>, transform_indices = @transform_13, window_bounds = array<i64: 16, 1>}, {pipeline_mode = #tpu.pipeline_mode<synchronous>, transform_indices = @transform_14, window_bounds = array<i64: 128, 128>}, {pipeline_mode = #tpu.pipeline_mode<synchronous>, transform_indices = @transform_15, window_bounds = array<i64: 32, 144>}, {pipeline_mode = #tpu.pipeline_mode<synchronous>, transform_indices = @transform_16, window_bounds = array<i64: 32, 1>}, {pipeline_mode = #tpu.pipeline_mode<synchronous>, transform_indices = @transform_17, window_bounds = array<i64: 32, 288>}, {pipeline_mode = #tpu.pipeline_mode<synchronous>, transform_indices = @transform_18, window_bounds = array<i64: 32, 1>}, {pipeline_mode = #tpu.pipeline_mode<synchronous>, transform_indices = @transform_19, window_bounds = array<i64: 128, 128>}, {pipeline_mode = #tpu.pipeline_mode<synchronous>, transform_indices = @transform_20, window_bounds = array<i64: 64, 288>}, {pipeline_mode = #tpu.pipeline_mode<synchronous>, transform_indices = @transform_21, window_bounds = array<i64: 64, 1>}, {pipeline_mode = #tpu.pipeline_mode<synchronous>, transform_indices = @transform_22, window_bounds = array<i64: 64, 576>}, {pipeline_mode = #tpu.pipeline_mode<synchronous>, transform_indices = @transform_23, window_bounds = array<i64: 64, 1>}, {pipeline_mode = #tpu.pipeline_mode<synchronous>, transform_indices = @transform_24, window_bounds = array<i64: 128, 128>}, {pipeline_mode = #tpu.pipeline_mode<synchronous>, transform_indices = @transform_25, window_bounds = array<i64: 64, 576>}, {pipeline_mode = #tpu.pipeline_mode<synchronous>, transform_indices = @transform_26, window_bounds = array<i64: 64, 1>}, {pipeline_mode = #tpu.pipeline_mode<synchronous>, transform_indices = @transform_27, window_bounds = array<i64: 32, 576>}, {pipeline_mode = #tpu.pipeline_mode<synchronous>, transform_indices = @transform_28, window_bounds = array<i64: 32, 1>}, {pipeline_mode = #tpu.pipeline_mode<synchronous>, transform_indices = @transform_29, window_bounds = array<i64: 32, 288>}, {pipeline_mode = #tpu.pipeline_mode<synchronous>, transform_indices = @transform_30, window_bounds = array<i64: 32, 1>}, {pipeline_mode = #tpu.pipeline_mode<synchronous>, transform_indices = @transform_31, window_bounds = array<i64: 128, 128>}, {pipeline_mode = #tpu.pipeline_mode<synchronous>, transform_indices = @transform_32, window_bounds = array<i64: 32, 288>}, {pipeline_mode = #tpu.pipeline_mode<synchronous>, transform_indices = @transform_33, window_bounds = array<i64: 32, 1>}, {pipeline_mode = #tpu.pipeline_mode<synchronous>, transform_indices = @transform_34, window_bounds = array<i64: 16, 288>}, {pipeline_mode = #tpu.pipeline_mode<synchronous>, transform_indices = @transform_35, window_bounds = array<i64: 16, 1>}, {pipeline_mode = #tpu.pipeline_mode<synchronous>, transform_indices = @transform_36, window_bounds = array<i64: 16, 144>}, {pipeline_mode = #tpu.pipeline_mode<synchronous>, transform_indices = @transform_37, window_bounds = array<i64: 16, 1>}, {pipeline_mode = #tpu.pipeline_mode<synchronous>, transform_indices = @transform_38, window_bounds = array<i64: 128, 256>}, {pipeline_mode = #tpu.pipeline_mode<synchronous>, transform_indices = @transform_39, window_bounds = array<i64: 16, 144>}, {pipeline_mode = #tpu.pipeline_mode<synchronous>, transform_indices = @transform_40, window_bounds = array<i64: 16, 1>}, {pipeline_mode = #tpu.pipeline_mode<synchronous>, transform_indices = @transform_41, window_bounds = array<i64: 8, 144>}, {pipeline_mode = #tpu.pipeline_mode<synchronous>, transform_indices = @transform_42, window_bounds = array<i64: 8, 1>}, {pipeline_mode = #tpu.pipeline_mode<synchronous>, transform_indices = @transform_43, window_bounds = array<i64: 8, 72>}, {pipeline_mode = #tpu.pipeline_mode<synchronous>, transform_indices = @transform_44, window_bounds = array<i64: 8, 1>}, {pipeline_mode = #tpu.pipeline_mode<synchronous>, transform_indices = @transform_45, window_bounds = array<i64: 3, 8>}, {pipeline_mode = #tpu.pipeline_mode<synchronous>, transform_indices = @transform_46, window_bounds = array<i64: 3, 1>}, {transform_indices = @transform_47, window_bounds = array<i64: 1, 3, 256>}]} {
    %c0 = arith.constant 0 : index
    %c0_0 = arith.constant 0 : index
    %c0_1 = arith.constant 0 : index
    %0 = vector.load %arg1[%c0, %c0_0, %c0_1] : memref<1x8x256xf32, #tpu.memory_space<vmem>>, vector<1x8x256xf32>
    %1 = vector.shape_cast %0 : vector<1x8x256xf32> to vector<8x256xf32>
    %c17_i32 = arith.constant 17 : i32
    %2 = tpu.dynamic_rotate %1 by %c17_i32 dim 1 : vector<8x256xf32>, i32 -> vector<8x256xf32>
    %c0_2 = arith.constant 0 : index
    %c0_3 = arith.constant 0 : index
    %3 = vector.load %arg2[%c0_2, %c0_3] : memref<9x256xf32, #tpu.memory_space<vmem>>, vector<1x256xf32>
    %4 = vector.broadcast %3 : vector<1x256xf32> to vector<8x256xf32>
    %5 = arith.mulf %2, %4 : vector<8x256xf32>
    %c16_i32 = arith.constant 16 : i32
    %6 = tpu.dynamic_rotate %1 by %c16_i32 dim 1 : vector<8x256xf32>, i32 -> vector<8x256xf32>
    %c1 = arith.constant 1 : index
    %c0_4 = arith.constant 0 : index
    %7 = vector.load %arg2[%c1, %c0_4] : memref<9x256xf32, #tpu.memory_space<vmem>>, vector<1x256xf32>
    %8 = vector.broadcast %7 : vector<1x256xf32> to vector<8x256xf32>
    %9 = arith.mulf %6, %8 : vector<8x256xf32>
    %c15_i32 = arith.constant 15 : i32
    %10 = tpu.dynamic_rotate %1 by %c15_i32 dim 1 : vector<8x256xf32>, i32 -> vector<8x256xf32>
    %c2 = arith.constant 2 : index
    %c0_5 = arith.constant 0 : index
    %11 = vector.load %arg2[%c2, %c0_5] : memref<9x256xf32, #tpu.memory_space<vmem>>, vector<1x256xf32>
    %12 = vector.broadcast %11 : vector<1x256xf32> to vector<8x256xf32>
    %13 = arith.mulf %10, %12 : vector<8x256xf32>
    %c1_i32 = arith.constant 1 : i32
    %14 = tpu.dynamic_rotate %1 by %c1_i32 dim 1 : vector<8x256xf32>, i32 -> vector<8x256xf32>
    %c3 = arith.constant 3 : index
    %c0_6 = arith.constant 0 : index
    %15 = vector.load %arg2[%c3, %c0_6] : memref<9x256xf32, #tpu.memory_space<vmem>>, vector<1x256xf32>
    %16 = vector.broadcast %15 : vector<1x256xf32> to vector<8x256xf32>
    %17 = arith.mulf %14, %16 : vector<8x256xf32>
    %c4 = arith.constant 4 : index
    %c0_7 = arith.constant 0 : index
    %18 = vector.load %arg2[%c4, %c0_7] : memref<9x256xf32, #tpu.memory_space<vmem>>, vector<1x256xf32>
    %19 = vector.broadcast %18 : vector<1x256xf32> to vector<8x256xf32>
    %20 = arith.mulf %1, %19 : vector<8x256xf32>
    %c255_i32 = arith.constant 255 : i32
    %21 = tpu.dynamic_rotate %1 by %c255_i32 dim 1 : vector<8x256xf32>, i32 -> vector<8x256xf32>
    %c5 = arith.constant 5 : index
    %c0_8 = arith.constant 0 : index
    %22 = vector.load %arg2[%c5, %c0_8] : memref<9x256xf32, #tpu.memory_space<vmem>>, vector<1x256xf32>
    %23 = vector.broadcast %22 : vector<1x256xf32> to vector<8x256xf32>
    %24 = arith.mulf %21, %23 : vector<8x256xf32>
    %c241_i32 = arith.constant 241 : i32
    %25 = tpu.dynamic_rotate %1 by %c241_i32 dim 1 : vector<8x256xf32>, i32 -> vector<8x256xf32>
    %c6 = arith.constant 6 : index
    %c0_9 = arith.constant 0 : index
    %26 = vector.load %arg2[%c6, %c0_9] : memref<9x256xf32, #tpu.memory_space<vmem>>, vector<1x256xf32>
    %27 = vector.broadcast %26 : vector<1x256xf32> to vector<8x256xf32>
    %28 = arith.mulf %25, %27 : vector<8x256xf32>
    %c240_i32 = arith.constant 240 : i32
    %29 = tpu.dynamic_rotate %1 by %c240_i32 dim 1 : vector<8x256xf32>, i32 -> vector<8x256xf32>
    %c7 = arith.constant 7 : index
    %c0_10 = arith.constant 0 : index
    %30 = vector.load %arg2[%c7, %c0_10] : memref<9x256xf32, #tpu.memory_space<vmem>>, vector<1x256xf32>
    %31 = vector.broadcast %30 : vector<1x256xf32> to vector<8x256xf32>
    %32 = arith.mulf %29, %31 : vector<8x256xf32>
    %c239_i32 = arith.constant 239 : i32
    %33 = tpu.dynamic_rotate %1 by %c239_i32 dim 1 : vector<8x256xf32>, i32 -> vector<8x256xf32>
    %c8 = arith.constant 8 : index
    %c0_11 = arith.constant 0 : index
    %34 = vector.load %arg2[%c8, %c0_11] : memref<9x256xf32, #tpu.memory_space<vmem>>, vector<1x256xf32>
    %35 = vector.broadcast %34 : vector<1x256xf32> to vector<8x256xf32>
    %36 = arith.mulf %33, %35 : vector<8x256xf32>
    %37 = tpu.concatenate %5, %9, %13, %17, %20, %24, %28, %32, %36 in 0 : vector<8x256xf32>, vector<8x256xf32>, vector<8x256xf32>, vector<8x256xf32>, vector<8x256xf32>, vector<8x256xf32>, vector<8x256xf32>, vector<8x256xf32>, vector<8x256xf32> -> vector<72x256xf32>
    %38 = arith.truncf %37 : vector<72x256xf32> to vector<72x256xbf16>
    %c0_12 = arith.constant 0 : index
    %c0_13 = arith.constant 0 : index
    %39 = vector.load %arg6[%c0_12, %c0_13] : memref<8x72xbf16, #tpu.memory_space<vmem>>, vector<8x72xbf16>
    %cst = arith.constant dense<0.000000e+00> : vector<8x256xf32>
    %40 = tpu.matmul %39, %38, %cst {dimension_numbers = #tpu.dot_dimension_numbers<[1], [0], [0], [1], [0, 0, 1, 1], [], []>} : vector<8x72xbf16>, vector<72x256xbf16>, vector<8x256xf32> -> vector<8x256xf32>
    %c0_14 = arith.constant 0 : index
    %c0_15 = arith.constant 0 : index
    %41 = vector.load %arg7[%c0_14, %c0_15] : memref<8x1xf32, #tpu.memory_space<vmem>>, vector<8x1xf32>
    %42 = vector.broadcast %41 : vector<8x1xf32> to vector<8x256xf32>
    %43 = arith.addf %40, %42 : vector<8x256xf32>
    %cst_16 = arith.constant 0.000000e+00 : f32
    %44 = vector.broadcast %cst_16 : f32 to vector<8x256xf32>
    %45 = arith.maximumf %43, %44 : vector<8x256xf32>
    %c17_i32_17 = arith.constant 17 : i32
    %46 = tpu.dynamic_rotate %45 by %c17_i32_17 dim 1 : vector<8x256xf32>, i32 -> vector<8x256xf32>
    %c0_18 = arith.constant 0 : index
    %c0_19 = arith.constant 0 : index
    %47 = vector.load %arg2[%c0_18, %c0_19] : memref<9x256xf32, #tpu.memory_space<vmem>>, vector<1x256xf32>
    %48 = vector.broadcast %47 : vector<1x256xf32> to vector<8x256xf32>
    %49 = arith.mulf %46, %48 : vector<8x256xf32>
    %c16_i32_20 = arith.constant 16 : i32
    %50 = tpu.dynamic_rotate %45 by %c16_i32_20 dim 1 : vector<8x256xf32>, i32 -> vector<8x256xf32>
    %c1_21 = arith.constant 1 : index
    %c0_22 = arith.constant 0 : index
    %51 = vector.load %arg2[%c1_21, %c0_22] : memref<9x256xf32, #tpu.memory_space<vmem>>, vector<1x256xf32>
    %52 = vector.broadcast %51 : vector<1x256xf32> to vector<8x256xf32>
    %53 = arith.mulf %50, %52 : vector<8x256xf32>
    %c15_i32_23 = arith.constant 15 : i32
    %54 = tpu.dynamic_rotate %45 by %c15_i32_23 dim 1 : vector<8x256xf32>, i32 -> vector<8x256xf32>
    %c2_24 = arith.constant 2 : index
    %c0_25 = arith.constant 0 : index
    %55 = vector.load %arg2[%c2_24, %c0_25] : memref<9x256xf32, #tpu.memory_space<vmem>>, vector<1x256xf32>
    %56 = vector.broadcast %55 : vector<1x256xf32> to vector<8x256xf32>
    %57 = arith.mulf %54, %56 : vector<8x256xf32>
    %c1_i32_26 = arith.constant 1 : i32
    %58 = tpu.dynamic_rotate %45 by %c1_i32_26 dim 1 : vector<8x256xf32>, i32 -> vector<8x256xf32>
    %c3_27 = arith.constant 3 : index
    %c0_28 = arith.constant 0 : index
    %59 = vector.load %arg2[%c3_27, %c0_28] : memref<9x256xf32, #tpu.memory_space<vmem>>, vector<1x256xf32>
    %60 = vector.broadcast %59 : vector<1x256xf32> to vector<8x256xf32>
    %61 = arith.mulf %58, %60 : vector<8x256xf32>
    %c4_29 = arith.constant 4 : index
    %c0_30 = arith.constant 0 : index
    %62 = vector.load %arg2[%c4_29, %c0_30] : memref<9x256xf32, #tpu.memory_space<vmem>>, vector<1x256xf32>
    %63 = vector.broadcast %62 : vector<1x256xf32> to vector<8x256xf32>
    %64 = arith.mulf %45, %63 : vector<8x256xf32>
    %c255_i32_31 = arith.constant 255 : i32
    %65 = tpu.dynamic_rotate %45 by %c255_i32_31 dim 1 : vector<8x256xf32>, i32 -> vector<8x256xf32>
    %c5_32 = arith.constant 5 : index
    %c0_33 = arith.constant 0 : index
    %66 = vector.load %arg2[%c5_32, %c0_33] : memref<9x256xf32, #tpu.memory_space<vmem>>, vector<1x256xf32>
    %67 = vector.broadcast %66 : vector<1x256xf32> to vector<8x256xf32>
    %68 = arith.mulf %65, %67 : vector<8x256xf32>
    %c241_i32_34 = arith.constant 241 : i32
    %69 = tpu.dynamic_rotate %45 by %c241_i32_34 dim 1 : vector<8x256xf32>, i32 -> vector<8x256xf32>
    %c6_35 = arith.constant 6 : index
    %c0_36 = arith.constant 0 : index
    %70 = vector.load %arg2[%c6_35, %c0_36] : memref<9x256xf32, #tpu.memory_space<vmem>>, vector<1x256xf32>
    %71 = vector.broadcast %70 : vector<1x256xf32> to vector<8x256xf32>
    %72 = arith.mulf %69, %71 : vector<8x256xf32>
    %c240_i32_37 = arith.constant 240 : i32
    %73 = tpu.dynamic_rotate %45 by %c240_i32_37 dim 1 : vector<8x256xf32>, i32 -> vector<8x256xf32>
    %c7_38 = arith.constant 7 : index
    %c0_39 = arith.constant 0 : index
    %74 = vector.load %arg2[%c7_38, %c0_39] : memref<9x256xf32, #tpu.memory_space<vmem>>, vector<1x256xf32>
    %75 = vector.broadcast %74 : vector<1x256xf32> to vector<8x256xf32>
    %76 = arith.mulf %73, %75 : vector<8x256xf32>
    %c239_i32_40 = arith.constant 239 : i32
    %77 = tpu.dynamic_rotate %45 by %c239_i32_40 dim 1 : vector<8x256xf32>, i32 -> vector<8x256xf32>
    %c8_41 = arith.constant 8 : index
    %c0_42 = arith.constant 0 : index
    %78 = vector.load %arg2[%c8_41, %c0_42] : memref<9x256xf32, #tpu.memory_space<vmem>>, vector<1x256xf32>
    %79 = vector.broadcast %78 : vector<1x256xf32> to vector<8x256xf32>
    %80 = arith.mulf %77, %79 : vector<8x256xf32>
    %81 = tpu.concatenate %49, %53, %57, %61, %64, %68, %72, %76, %80 in 0 : vector<8x256xf32>, vector<8x256xf32>, vector<8x256xf32>, vector<8x256xf32>, vector<8x256xf32>, vector<8x256xf32>, vector<8x256xf32>, vector<8x256xf32>, vector<8x256xf32> -> vector<72x256xf32>
    %82 = arith.truncf %81 : vector<72x256xf32> to vector<72x256xbf16>
    %c0_43 = arith.constant 0 : index
    %c0_44 = arith.constant 0 : index
    %83 = vector.load %arg8[%c0_43, %c0_44] : memref<8x72xbf16, #tpu.memory_space<vmem>>, vector<8x72xbf16>
    %cst_45 = arith.constant dense<0.000000e+00> : vector<8x256xf32>
    %84 = tpu.matmul %83, %82, %cst_45 {dimension_numbers = #tpu.dot_dimension_numbers<[1], [0], [0], [1], [0, 0, 1, 1], [], []>} : vector<8x72xbf16>, vector<72x256xbf16>, vector<8x256xf32> -> vector<8x256xf32>
    %c0_46 = arith.constant 0 : index
    %c0_47 = arith.constant 0 : index
    %85 = vector.load %arg9[%c0_46, %c0_47] : memref<8x1xf32, #tpu.memory_space<vmem>>, vector<8x1xf32>
    %86 = vector.broadcast %85 : vector<8x1xf32> to vector<8x256xf32>
    %87 = arith.addf %84, %86 : vector<8x256xf32>
    %cst_48 = arith.constant 0.000000e+00 : f32
    %88 = vector.broadcast %cst_48 : f32 to vector<8x256xf32>
    %89 = arith.maximumf %87, %88 : vector<8x256xf32>
    %c255_i32_49 = arith.constant 255 : i32
    %90 = tpu.dynamic_rotate %89 by %c255_i32_49 dim 1 : vector<8x256xf32>, i32 -> vector<8x256xf32>
    %91 = arith.maximumf %89, %90 : vector<8x256xf32>
    %c240_i32_50 = arith.constant 240 : i32
    %92 = tpu.dynamic_rotate %91 by %c240_i32_50 dim 1 : vector<8x256xf32>, i32 -> vector<8x256xf32>
    %93 = arith.maximumf %91, %92 : vector<8x256xf32>
    %94 = arith.truncf %93 : vector<8x256xf32> to vector<8x256xbf16>
    %c0_51 = arith.constant 0 : index
    %c0_52 = arith.constant 0 : index
    %95 = vector.load %arg10[%c0_51, %c0_52] : memref<256x128xbf16, #tpu.memory_space<vmem>>, vector<256x128xbf16>
    %cst_53 = arith.constant dense<0.000000e+00> : vector<8x128xf32>
    %96 = tpu.matmul %94, %95, %cst_53 {dimension_numbers = #tpu.dot_dimension_numbers<[1], [0], [0], [1], [0, 0, 1, 1], [], []>} : vector<8x256xbf16>, vector<256x128xbf16>, vector<8x128xf32> -> vector<8x128xf32>
    %c9_i32 = arith.constant 9 : i32
    %97 = tpu.dynamic_rotate %96 by %c9_i32 dim 1 : vector<8x128xf32>, i32 -> vector<8x128xf32>
    %c0_54 = arith.constant 0 : index
    %c0_55 = arith.constant 0 : index
    %98 = vector.load %arg3[%c0_54, %c0_55] : memref<9x128xf32, #tpu.memory_space<vmem>>, vector<1x128xf32>
    %99 = vector.broadcast %98 : vector<1x128xf32> to vector<8x128xf32>
    %100 = arith.mulf %97, %99 : vector<8x128xf32>
    %c8_i32 = arith.constant 8 : i32
    %101 = tpu.dynamic_rotate %96 by %c8_i32 dim 1 : vector<8x128xf32>, i32 -> vector<8x128xf32>
    %c1_56 = arith.constant 1 : index
    %c0_57 = arith.constant 0 : index
    %102 = vector.load %arg3[%c1_56, %c0_57] : memref<9x128xf32, #tpu.memory_space<vmem>>, vector<1x128xf32>
    %103 = vector.broadcast %102 : vector<1x128xf32> to vector<8x128xf32>
    %104 = arith.mulf %101, %103 : vector<8x128xf32>
    %c7_i32 = arith.constant 7 : i32
    %105 = tpu.dynamic_rotate %96 by %c7_i32 dim 1 : vector<8x128xf32>, i32 -> vector<8x128xf32>
    %c2_58 = arith.constant 2 : index
    %c0_59 = arith.constant 0 : index
    %106 = vector.load %arg3[%c2_58, %c0_59] : memref<9x128xf32, #tpu.memory_space<vmem>>, vector<1x128xf32>
    %107 = vector.broadcast %106 : vector<1x128xf32> to vector<8x128xf32>
    %108 = arith.mulf %105, %107 : vector<8x128xf32>
    %c1_i32_60 = arith.constant 1 : i32
    %109 = tpu.dynamic_rotate %96 by %c1_i32_60 dim 1 : vector<8x128xf32>, i32 -> vector<8x128xf32>
    %c3_61 = arith.constant 3 : index
    %c0_62 = arith.constant 0 : index
    %110 = vector.load %arg3[%c3_61, %c0_62] : memref<9x128xf32, #tpu.memory_space<vmem>>, vector<1x128xf32>
    %111 = vector.broadcast %110 : vector<1x128xf32> to vector<8x128xf32>
    %112 = arith.mulf %109, %111 : vector<8x128xf32>
    %c4_63 = arith.constant 4 : index
    %c0_64 = arith.constant 0 : index
    %113 = vector.load %arg3[%c4_63, %c0_64] : memref<9x128xf32, #tpu.memory_space<vmem>>, vector<1x128xf32>
    %114 = vector.broadcast %113 : vector<1x128xf32> to vector<8x128xf32>
    %115 = arith.mulf %96, %114 : vector<8x128xf32>
    %c127_i32 = arith.constant 127 : i32
    %116 = tpu.dynamic_rotate %96 by %c127_i32 dim 1 : vector<8x128xf32>, i32 -> vector<8x128xf32>
    %c5_65 = arith.constant 5 : index
    %c0_66 = arith.constant 0 : index
    %117 = vector.load %arg3[%c5_65, %c0_66] : memref<9x128xf32, #tpu.memory_space<vmem>>, vector<1x128xf32>
    %118 = vector.broadcast %117 : vector<1x128xf32> to vector<8x128xf32>
    %119 = arith.mulf %116, %118 : vector<8x128xf32>
    %c121_i32 = arith.constant 121 : i32
    %120 = tpu.dynamic_rotate %96 by %c121_i32 dim 1 : vector<8x128xf32>, i32 -> vector<8x128xf32>
    %c6_67 = arith.constant 6 : index
    %c0_68 = arith.constant 0 : index
    %121 = vector.load %arg3[%c6_67, %c0_68] : memref<9x128xf32, #tpu.memory_space<vmem>>, vector<1x128xf32>
    %122 = vector.broadcast %121 : vector<1x128xf32> to vector<8x128xf32>
    %123 = arith.mulf %120, %122 : vector<8x128xf32>
    %c120_i32 = arith.constant 120 : i32
    %124 = tpu.dynamic_rotate %96 by %c120_i32 dim 1 : vector<8x128xf32>, i32 -> vector<8x128xf32>
    %c7_69 = arith.constant 7 : index
    %c0_70 = arith.constant 0 : index
    %125 = vector.load %arg3[%c7_69, %c0_70] : memref<9x128xf32, #tpu.memory_space<vmem>>, vector<1x128xf32>
    %126 = vector.broadcast %125 : vector<1x128xf32> to vector<8x128xf32>
    %127 = arith.mulf %124, %126 : vector<8x128xf32>
    %c119_i32 = arith.constant 119 : i32
    %128 = tpu.dynamic_rotate %96 by %c119_i32 dim 1 : vector<8x128xf32>, i32 -> vector<8x128xf32>
    %c8_71 = arith.constant 8 : index
    %c0_72 = arith.constant 0 : index
    %129 = vector.load %arg3[%c8_71, %c0_72] : memref<9x128xf32, #tpu.memory_space<vmem>>, vector<1x128xf32>
    %130 = vector.broadcast %129 : vector<1x128xf32> to vector<8x128xf32>
    %131 = arith.mulf %128, %130 : vector<8x128xf32>
    %132 = tpu.concatenate %100, %104, %108, %112, %115, %119, %123, %127, %131 in 0 : vector<8x128xf32>, vector<8x128xf32>, vector<8x128xf32>, vector<8x128xf32>, vector<8x128xf32>, vector<8x128xf32>, vector<8x128xf32>, vector<8x128xf32>, vector<8x128xf32> -> vector<72x128xf32>
    %133 = arith.truncf %132 : vector<72x128xf32> to vector<72x128xbf16>
    %c0_73 = arith.constant 0 : index
    %c0_74 = arith.constant 0 : index
    %134 = vector.load %arg11[%c0_73, %c0_74] : memref<16x72xbf16, #tpu.memory_space<vmem>>, vector<16x72xbf16>
    %cst_75 = arith.constant dense<0.000000e+00> : vector<16x128xf32>
    %135 = tpu.matmul %134, %133, %cst_75 {dimension_numbers = #tpu.dot_dimension_numbers<[1], [0], [0], [1], [0, 0, 1, 1], [], []>} : vector<16x72xbf16>, vector<72x128xbf16>, vector<16x128xf32> -> vector<16x128xf32>
    %c0_76 = arith.constant 0 : index
    %c0_77 = arith.constant 0 : index
    %136 = vector.load %arg12[%c0_76, %c0_77] : memref<16x1xf32, #tpu.memory_space<vmem>>, vector<16x1xf32>
    %137 = vector.broadcast %136 : vector<16x1xf32> to vector<16x128xf32>
    %138 = arith.addf %135, %137 : vector<16x128xf32>
    %cst_78 = arith.constant 0.000000e+00 : f32
    %139 = vector.broadcast %cst_78 : f32 to vector<16x128xf32>
    %140 = arith.maximumf %138, %139 : vector<16x128xf32>
    %c9_i32_79 = arith.constant 9 : i32
    %141 = tpu.dynamic_rotate %140 by %c9_i32_79 dim 1 : vector<16x128xf32>, i32 -> vector<16x128xf32>
    %c0_80 = arith.constant 0 : index
    %c0_81 = arith.constant 0 : index
    %142 = vector.load %arg3[%c0_80, %c0_81] : memref<9x128xf32, #tpu.memory_space<vmem>>, vector<1x128xf32>
    %143 = vector.broadcast %142 : vector<1x128xf32> to vector<16x128xf32>
    %144 = arith.mulf %141, %143 : vector<16x128xf32>
    %c8_i32_82 = arith.constant 8 : i32
    %145 = tpu.dynamic_rotate %140 by %c8_i32_82 dim 1 : vector<16x128xf32>, i32 -> vector<16x128xf32>
    %c1_83 = arith.constant 1 : index
    %c0_84 = arith.constant 0 : index
    %146 = vector.load %arg3[%c1_83, %c0_84] : memref<9x128xf32, #tpu.memory_space<vmem>>, vector<1x128xf32>
    %147 = vector.broadcast %146 : vector<1x128xf32> to vector<16x128xf32>
    %148 = arith.mulf %145, %147 : vector<16x128xf32>
    %c7_i32_85 = arith.constant 7 : i32
    %149 = tpu.dynamic_rotate %140 by %c7_i32_85 dim 1 : vector<16x128xf32>, i32 -> vector<16x128xf32>
    %c2_86 = arith.constant 2 : index
    %c0_87 = arith.constant 0 : index
    %150 = vector.load %arg3[%c2_86, %c0_87] : memref<9x128xf32, #tpu.memory_space<vmem>>, vector<1x128xf32>
    %151 = vector.broadcast %150 : vector<1x128xf32> to vector<16x128xf32>
    %152 = arith.mulf %149, %151 : vector<16x128xf32>
    %c1_i32_88 = arith.constant 1 : i32
    %153 = tpu.dynamic_rotate %140 by %c1_i32_88 dim 1 : vector<16x128xf32>, i32 -> vector<16x128xf32>
    %c3_89 = arith.constant 3 : index
    %c0_90 = arith.constant 0 : index
    %154 = vector.load %arg3[%c3_89, %c0_90] : memref<9x128xf32, #tpu.memory_space<vmem>>, vector<1x128xf32>
    %155 = vector.broadcast %154 : vector<1x128xf32> to vector<16x128xf32>
    %156 = arith.mulf %153, %155 : vector<16x128xf32>
    %c4_91 = arith.constant 4 : index
    %c0_92 = arith.constant 0 : index
    %157 = vector.load %arg3[%c4_91, %c0_92] : memref<9x128xf32, #tpu.memory_space<vmem>>, vector<1x128xf32>
    %158 = vector.broadcast %157 : vector<1x128xf32> to vector<16x128xf32>
    %159 = arith.mulf %140, %158 : vector<16x128xf32>
    %c127_i32_93 = arith.constant 127 : i32
    %160 = tpu.dynamic_rotate %140 by %c127_i32_93 dim 1 : vector<16x128xf32>, i32 -> vector<16x128xf32>
    %c5_94 = arith.constant 5 : index
    %c0_95 = arith.constant 0 : index
    %161 = vector.load %arg3[%c5_94, %c0_95] : memref<9x128xf32, #tpu.memory_space<vmem>>, vector<1x128xf32>
    %162 = vector.broadcast %161 : vector<1x128xf32> to vector<16x128xf32>
    %163 = arith.mulf %160, %162 : vector<16x128xf32>
    %c121_i32_96 = arith.constant 121 : i32
    %164 = tpu.dynamic_rotate %140 by %c121_i32_96 dim 1 : vector<16x128xf32>, i32 -> vector<16x128xf32>
    %c6_97 = arith.constant 6 : index
    %c0_98 = arith.constant 0 : index
    %165 = vector.load %arg3[%c6_97, %c0_98] : memref<9x128xf32, #tpu.memory_space<vmem>>, vector<1x128xf32>
    %166 = vector.broadcast %165 : vector<1x128xf32> to vector<16x128xf32>
    %167 = arith.mulf %164, %166 : vector<16x128xf32>
    %c120_i32_99 = arith.constant 120 : i32
    %168 = tpu.dynamic_rotate %140 by %c120_i32_99 dim 1 : vector<16x128xf32>, i32 -> vector<16x128xf32>
    %c7_100 = arith.constant 7 : index
    %c0_101 = arith.constant 0 : index
    %169 = vector.load %arg3[%c7_100, %c0_101] : memref<9x128xf32, #tpu.memory_space<vmem>>, vector<1x128xf32>
    %170 = vector.broadcast %169 : vector<1x128xf32> to vector<16x128xf32>
    %171 = arith.mulf %168, %170 : vector<16x128xf32>
    %c119_i32_102 = arith.constant 119 : i32
    %172 = tpu.dynamic_rotate %140 by %c119_i32_102 dim 1 : vector<16x128xf32>, i32 -> vector<16x128xf32>
    %c8_103 = arith.constant 8 : index
    %c0_104 = arith.constant 0 : index
    %173 = vector.load %arg3[%c8_103, %c0_104] : memref<9x128xf32, #tpu.memory_space<vmem>>, vector<1x128xf32>
    %174 = vector.broadcast %173 : vector<1x128xf32> to vector<16x128xf32>
    %175 = arith.mulf %172, %174 : vector<16x128xf32>
    %176 = tpu.concatenate %144, %148, %152, %156, %159, %163, %167, %171, %175 in 0 : vector<16x128xf32>, vector<16x128xf32>, vector<16x128xf32>, vector<16x128xf32>, vector<16x128xf32>, vector<16x128xf32>, vector<16x128xf32>, vector<16x128xf32>, vector<16x128xf32> -> vector<144x128xf32>
    %177 = arith.truncf %176 : vector<144x128xf32> to vector<144x128xbf16>
    %c0_105 = arith.constant 0 : index
    %c0_106 = arith.constant 0 : index
    %178 = vector.load %arg13[%c0_105, %c0_106] : memref<16x144xbf16, #tpu.memory_space<vmem>>, vector<16x144xbf16>
    %cst_107 = arith.constant dense<0.000000e+00> : vector<16x128xf32>
    %179 = tpu.matmul %178, %177, %cst_107 {dimension_numbers = #tpu.dot_dimension_numbers<[1], [0], [0], [1], [0, 0, 1, 1], [], []>} : vector<16x144xbf16>, vector<144x128xbf16>, vector<16x128xf32> -> vector<16x128xf32>
    %c0_108 = arith.constant 0 : index
    %c0_109 = arith.constant 0 : index
    %180 = vector.load %arg14[%c0_108, %c0_109] : memref<16x1xf32, #tpu.memory_space<vmem>>, vector<16x1xf32>
    %181 = vector.broadcast %180 : vector<16x1xf32> to vector<16x128xf32>
    %182 = arith.addf %179, %181 : vector<16x128xf32>
    %cst_110 = arith.constant 0.000000e+00 : f32
    %183 = vector.broadcast %cst_110 : f32 to vector<16x128xf32>
    %184 = arith.maximumf %182, %183 : vector<16x128xf32>
    %c127_i32_111 = arith.constant 127 : i32
    %185 = tpu.dynamic_rotate %184 by %c127_i32_111 dim 1 : vector<16x128xf32>, i32 -> vector<16x128xf32>
    %186 = arith.maximumf %184, %185 : vector<16x128xf32>
    %c120_i32_112 = arith.constant 120 : i32
    %187 = tpu.dynamic_rotate %186 by %c120_i32_112 dim 1 : vector<16x128xf32>, i32 -> vector<16x128xf32>
    %188 = arith.maximumf %186, %187 : vector<16x128xf32>
    %189 = arith.truncf %188 : vector<16x128xf32> to vector<16x128xbf16>
    %c0_113 = arith.constant 0 : index
    %c0_114 = arith.constant 0 : index
    %190 = vector.load %arg15[%c0_113, %c0_114] : memref<128x128xbf16, #tpu.memory_space<vmem>>, vector<128x128xbf16>
    %cst_115 = arith.constant dense<0.000000e+00> : vector<16x128xf32>
    %191 = tpu.matmul %189, %190, %cst_115 {dimension_numbers = #tpu.dot_dimension_numbers<[1], [0], [0], [1], [0, 0, 1, 1], [], []>} : vector<16x128xbf16>, vector<128x128xbf16>, vector<16x128xf32> -> vector<16x128xf32>
    %c5_i32 = arith.constant 5 : i32
    %192 = tpu.dynamic_rotate %191 by %c5_i32 dim 1 : vector<16x128xf32>, i32 -> vector<16x128xf32>
    %c0_116 = arith.constant 0 : index
    %c0_117 = arith.constant 0 : index
    %193 = vector.load %arg4[%c0_116, %c0_117] : memref<9x128xf32, #tpu.memory_space<vmem>>, vector<1x128xf32>
    %194 = vector.broadcast %193 : vector<1x128xf32> to vector<16x128xf32>
    %195 = arith.mulf %192, %194 : vector<16x128xf32>
    %c4_i32 = arith.constant 4 : i32
    %196 = tpu.dynamic_rotate %191 by %c4_i32 dim 1 : vector<16x128xf32>, i32 -> vector<16x128xf32>
    %c1_118 = arith.constant 1 : index
    %c0_119 = arith.constant 0 : index
    %197 = vector.load %arg4[%c1_118, %c0_119] : memref<9x128xf32, #tpu.memory_space<vmem>>, vector<1x128xf32>
    %198 = vector.broadcast %197 : vector<1x128xf32> to vector<16x128xf32>
    %199 = arith.mulf %196, %198 : vector<16x128xf32>
    %c3_i32 = arith.constant 3 : i32
    %200 = tpu.dynamic_rotate %191 by %c3_i32 dim 1 : vector<16x128xf32>, i32 -> vector<16x128xf32>
    %c2_120 = arith.constant 2 : index
    %c0_121 = arith.constant 0 : index
    %201 = vector.load %arg4[%c2_120, %c0_121] : memref<9x128xf32, #tpu.memory_space<vmem>>, vector<1x128xf32>
    %202 = vector.broadcast %201 : vector<1x128xf32> to vector<16x128xf32>
    %203 = arith.mulf %200, %202 : vector<16x128xf32>
    %c1_i32_122 = arith.constant 1 : i32
    %204 = tpu.dynamic_rotate %191 by %c1_i32_122 dim 1 : vector<16x128xf32>, i32 -> vector<16x128xf32>
    %c3_123 = arith.constant 3 : index
    %c0_124 = arith.constant 0 : index
    %205 = vector.load %arg4[%c3_123, %c0_124] : memref<9x128xf32, #tpu.memory_space<vmem>>, vector<1x128xf32>
    %206 = vector.broadcast %205 : vector<1x128xf32> to vector<16x128xf32>
    %207 = arith.mulf %204, %206 : vector<16x128xf32>
    %c4_125 = arith.constant 4 : index
    %c0_126 = arith.constant 0 : index
    %208 = vector.load %arg4[%c4_125, %c0_126] : memref<9x128xf32, #tpu.memory_space<vmem>>, vector<1x128xf32>
    %209 = vector.broadcast %208 : vector<1x128xf32> to vector<16x128xf32>
    %210 = arith.mulf %191, %209 : vector<16x128xf32>
    %c127_i32_127 = arith.constant 127 : i32
    %211 = tpu.dynamic_rotate %191 by %c127_i32_127 dim 1 : vector<16x128xf32>, i32 -> vector<16x128xf32>
    %c5_128 = arith.constant 5 : index
    %c0_129 = arith.constant 0 : index
    %212 = vector.load %arg4[%c5_128, %c0_129] : memref<9x128xf32, #tpu.memory_space<vmem>>, vector<1x128xf32>
    %213 = vector.broadcast %212 : vector<1x128xf32> to vector<16x128xf32>
    %214 = arith.mulf %211, %213 : vector<16x128xf32>
    %c125_i32 = arith.constant 125 : i32
    %215 = tpu.dynamic_rotate %191 by %c125_i32 dim 1 : vector<16x128xf32>, i32 -> vector<16x128xf32>
    %c6_130 = arith.constant 6 : index
    %c0_131 = arith.constant 0 : index
    %216 = vector.load %arg4[%c6_130, %c0_131] : memref<9x128xf32, #tpu.memory_space<vmem>>, vector<1x128xf32>
    %217 = vector.broadcast %216 : vector<1x128xf32> to vector<16x128xf32>
    %218 = arith.mulf %215, %217 : vector<16x128xf32>
    %c124_i32 = arith.constant 124 : i32
    %219 = tpu.dynamic_rotate %191 by %c124_i32 dim 1 : vector<16x128xf32>, i32 -> vector<16x128xf32>
    %c7_132 = arith.constant 7 : index
    %c0_133 = arith.constant 0 : index
    %220 = vector.load %arg4[%c7_132, %c0_133] : memref<9x128xf32, #tpu.memory_space<vmem>>, vector<1x128xf32>
    %221 = vector.broadcast %220 : vector<1x128xf32> to vector<16x128xf32>
    %222 = arith.mulf %219, %221 : vector<16x128xf32>
    %c123_i32 = arith.constant 123 : i32
    %223 = tpu.dynamic_rotate %191 by %c123_i32 dim 1 : vector<16x128xf32>, i32 -> vector<16x128xf32>
    %c8_134 = arith.constant 8 : index
    %c0_135 = arith.constant 0 : index
    %224 = vector.load %arg4[%c8_134, %c0_135] : memref<9x128xf32, #tpu.memory_space<vmem>>, vector<1x128xf32>
    %225 = vector.broadcast %224 : vector<1x128xf32> to vector<16x128xf32>
    %226 = arith.mulf %223, %225 : vector<16x128xf32>
    %227 = tpu.concatenate %195, %199, %203, %207, %210, %214, %218, %222, %226 in 0 : vector<16x128xf32>, vector<16x128xf32>, vector<16x128xf32>, vector<16x128xf32>, vector<16x128xf32>, vector<16x128xf32>, vector<16x128xf32>, vector<16x128xf32>, vector<16x128xf32> -> vector<144x128xf32>
    %228 = arith.truncf %227 : vector<144x128xf32> to vector<144x128xbf16>
    %c0_136 = arith.constant 0 : index
    %c0_137 = arith.constant 0 : index
    %229 = vector.load %arg16[%c0_136, %c0_137] : memref<32x144xbf16, #tpu.memory_space<vmem>>, vector<32x144xbf16>
    %cst_138 = arith.constant dense<0.000000e+00> : vector<32x128xf32>
    %230 = tpu.matmul %229, %228, %cst_138 {dimension_numbers = #tpu.dot_dimension_numbers<[1], [0], [0], [1], [0, 0, 1, 1], [], []>} : vector<32x144xbf16>, vector<144x128xbf16>, vector<32x128xf32> -> vector<32x128xf32>
    %c0_139 = arith.constant 0 : index
    %c0_140 = arith.constant 0 : index
    %231 = vector.load %arg17[%c0_139, %c0_140] : memref<32x1xf32, #tpu.memory_space<vmem>>, vector<32x1xf32>
    %232 = vector.broadcast %231 : vector<32x1xf32> to vector<32x128xf32>
    %233 = arith.addf %230, %232 : vector<32x128xf32>
    %cst_141 = arith.constant 0.000000e+00 : f32
    %234 = vector.broadcast %cst_141 : f32 to vector<32x128xf32>
    %235 = arith.maximumf %233, %234 : vector<32x128xf32>
    %c5_i32_142 = arith.constant 5 : i32
    %236 = tpu.dynamic_rotate %235 by %c5_i32_142 dim 1 : vector<32x128xf32>, i32 -> vector<32x128xf32>
    %c0_143 = arith.constant 0 : index
    %c0_144 = arith.constant 0 : index
    %237 = vector.load %arg4[%c0_143, %c0_144] : memref<9x128xf32, #tpu.memory_space<vmem>>, vector<1x128xf32>
    %238 = vector.broadcast %237 : vector<1x128xf32> to vector<32x128xf32>
    %239 = arith.mulf %236, %238 : vector<32x128xf32>
    %c4_i32_145 = arith.constant 4 : i32
    %240 = tpu.dynamic_rotate %235 by %c4_i32_145 dim 1 : vector<32x128xf32>, i32 -> vector<32x128xf32>
    %c1_146 = arith.constant 1 : index
    %c0_147 = arith.constant 0 : index
    %241 = vector.load %arg4[%c1_146, %c0_147] : memref<9x128xf32, #tpu.memory_space<vmem>>, vector<1x128xf32>
    %242 = vector.broadcast %241 : vector<1x128xf32> to vector<32x128xf32>
    %243 = arith.mulf %240, %242 : vector<32x128xf32>
    %c3_i32_148 = arith.constant 3 : i32
    %244 = tpu.dynamic_rotate %235 by %c3_i32_148 dim 1 : vector<32x128xf32>, i32 -> vector<32x128xf32>
    %c2_149 = arith.constant 2 : index
    %c0_150 = arith.constant 0 : index
    %245 = vector.load %arg4[%c2_149, %c0_150] : memref<9x128xf32, #tpu.memory_space<vmem>>, vector<1x128xf32>
    %246 = vector.broadcast %245 : vector<1x128xf32> to vector<32x128xf32>
    %247 = arith.mulf %244, %246 : vector<32x128xf32>
    %c1_i32_151 = arith.constant 1 : i32
    %248 = tpu.dynamic_rotate %235 by %c1_i32_151 dim 1 : vector<32x128xf32>, i32 -> vector<32x128xf32>
    %c3_152 = arith.constant 3 : index
    %c0_153 = arith.constant 0 : index
    %249 = vector.load %arg4[%c3_152, %c0_153] : memref<9x128xf32, #tpu.memory_space<vmem>>, vector<1x128xf32>
    %250 = vector.broadcast %249 : vector<1x128xf32> to vector<32x128xf32>
    %251 = arith.mulf %248, %250 : vector<32x128xf32>
    %c4_154 = arith.constant 4 : index
    %c0_155 = arith.constant 0 : index
    %252 = vector.load %arg4[%c4_154, %c0_155] : memref<9x128xf32, #tpu.memory_space<vmem>>, vector<1x128xf32>
    %253 = vector.broadcast %252 : vector<1x128xf32> to vector<32x128xf32>
    %254 = arith.mulf %235, %253 : vector<32x128xf32>
    %c127_i32_156 = arith.constant 127 : i32
    %255 = tpu.dynamic_rotate %235 by %c127_i32_156 dim 1 : vector<32x128xf32>, i32 -> vector<32x128xf32>
    %c5_157 = arith.constant 5 : index
    %c0_158 = arith.constant 0 : index
    %256 = vector.load %arg4[%c5_157, %c0_158] : memref<9x128xf32, #tpu.memory_space<vmem>>, vector<1x128xf32>
    %257 = vector.broadcast %256 : vector<1x128xf32> to vector<32x128xf32>
    %258 = arith.mulf %255, %257 : vector<32x128xf32>
    %c125_i32_159 = arith.constant 125 : i32
    %259 = tpu.dynamic_rotate %235 by %c125_i32_159 dim 1 : vector<32x128xf32>, i32 -> vector<32x128xf32>
    %c6_160 = arith.constant 6 : index
    %c0_161 = arith.constant 0 : index
    %260 = vector.load %arg4[%c6_160, %c0_161] : memref<9x128xf32, #tpu.memory_space<vmem>>, vector<1x128xf32>
    %261 = vector.broadcast %260 : vector<1x128xf32> to vector<32x128xf32>
    %262 = arith.mulf %259, %261 : vector<32x128xf32>
    %c124_i32_162 = arith.constant 124 : i32
    %263 = tpu.dynamic_rotate %235 by %c124_i32_162 dim 1 : vector<32x128xf32>, i32 -> vector<32x128xf32>
    %c7_163 = arith.constant 7 : index
    %c0_164 = arith.constant 0 : index
    %264 = vector.load %arg4[%c7_163, %c0_164] : memref<9x128xf32, #tpu.memory_space<vmem>>, vector<1x128xf32>
    %265 = vector.broadcast %264 : vector<1x128xf32> to vector<32x128xf32>
    %266 = arith.mulf %263, %265 : vector<32x128xf32>
    %c123_i32_165 = arith.constant 123 : i32
    %267 = tpu.dynamic_rotate %235 by %c123_i32_165 dim 1 : vector<32x128xf32>, i32 -> vector<32x128xf32>
    %c8_166 = arith.constant 8 : index
    %c0_167 = arith.constant 0 : index
    %268 = vector.load %arg4[%c8_166, %c0_167] : memref<9x128xf32, #tpu.memory_space<vmem>>, vector<1x128xf32>
    %269 = vector.broadcast %268 : vector<1x128xf32> to vector<32x128xf32>
    %270 = arith.mulf %267, %269 : vector<32x128xf32>
    %271 = tpu.concatenate %239, %243, %247, %251, %254, %258, %262, %266, %270 in 0 : vector<32x128xf32>, vector<32x128xf32>, vector<32x128xf32>, vector<32x128xf32>, vector<32x128xf32>, vector<32x128xf32>, vector<32x128xf32>, vector<32x128xf32>, vector<32x128xf32> -> vector<288x128xf32>
    %272 = arith.truncf %271 : vector<288x128xf32> to vector<288x128xbf16>
    %c0_168 = arith.constant 0 : index
    %c0_169 = arith.constant 0 : index
    %273 = vector.load %arg18[%c0_168, %c0_169] : memref<32x288xbf16, #tpu.memory_space<vmem>>, vector<32x288xbf16>
    %cst_170 = arith.constant dense<0.000000e+00> : vector<32x128xf32>
    %274 = tpu.matmul %273, %272, %cst_170 {dimension_numbers = #tpu.dot_dimension_numbers<[1], [0], [0], [1], [0, 0, 1, 1], [], []>} : vector<32x288xbf16>, vector<288x128xbf16>, vector<32x128xf32> -> vector<32x128xf32>
    %c0_171 = arith.constant 0 : index
    %c0_172 = arith.constant 0 : index
    %275 = vector.load %arg19[%c0_171, %c0_172] : memref<32x1xf32, #tpu.memory_space<vmem>>, vector<32x1xf32>
    %276 = vector.broadcast %275 : vector<32x1xf32> to vector<32x128xf32>
    %277 = arith.addf %274, %276 : vector<32x128xf32>
    %cst_173 = arith.constant 0.000000e+00 : f32
    %278 = vector.broadcast %cst_173 : f32 to vector<32x128xf32>
    %279 = arith.maximumf %277, %278 : vector<32x128xf32>
    %c127_i32_174 = arith.constant 127 : i32
    %280 = tpu.dynamic_rotate %279 by %c127_i32_174 dim 1 : vector<32x128xf32>, i32 -> vector<32x128xf32>
    %281 = arith.maximumf %279, %280 : vector<32x128xf32>
    %c124_i32_175 = arith.constant 124 : i32
    %282 = tpu.dynamic_rotate %281 by %c124_i32_175 dim 1 : vector<32x128xf32>, i32 -> vector<32x128xf32>
    %283 = arith.maximumf %281, %282 : vector<32x128xf32>
    %284 = arith.truncf %283 : vector<32x128xf32> to vector<32x128xbf16>
    %c0_176 = arith.constant 0 : index
    %c0_177 = arith.constant 0 : index
    %285 = vector.load %arg20[%c0_176, %c0_177] : memref<128x128xbf16, #tpu.memory_space<vmem>>, vector<128x128xbf16>
    %cst_178 = arith.constant dense<0.000000e+00> : vector<32x128xf32>
    %286 = tpu.matmul %284, %285, %cst_178 {dimension_numbers = #tpu.dot_dimension_numbers<[1], [0], [0], [1], [0, 0, 1, 1], [], []>} : vector<32x128xbf16>, vector<128x128xbf16>, vector<32x128xf32> -> vector<32x128xf32>
    %c3_i32_179 = arith.constant 3 : i32
    %287 = tpu.dynamic_rotate %286 by %c3_i32_179 dim 1 : vector<32x128xf32>, i32 -> vector<32x128xf32>
    %c0_180 = arith.constant 0 : index
    %c0_181 = arith.constant 0 : index
    %288 = vector.load %arg5[%c0_180, %c0_181] : memref<9x128xf32, #tpu.memory_space<vmem>>, vector<1x128xf32>
    %289 = vector.broadcast %288 : vector<1x128xf32> to vector<32x128xf32>
    %290 = arith.mulf %287, %289 : vector<32x128xf32>
    %c2_i32 = arith.constant 2 : i32
    %291 = tpu.dynamic_rotate %286 by %c2_i32 dim 1 : vector<32x128xf32>, i32 -> vector<32x128xf32>
    %c1_182 = arith.constant 1 : index
    %c0_183 = arith.constant 0 : index
    %292 = vector.load %arg5[%c1_182, %c0_183] : memref<9x128xf32, #tpu.memory_space<vmem>>, vector<1x128xf32>
    %293 = vector.broadcast %292 : vector<1x128xf32> to vector<32x128xf32>
    %294 = arith.mulf %291, %293 : vector<32x128xf32>
    %c1_i32_184 = arith.constant 1 : i32
    %295 = tpu.dynamic_rotate %286 by %c1_i32_184 dim 1 : vector<32x128xf32>, i32 -> vector<32x128xf32>
    %c2_185 = arith.constant 2 : index
    %c0_186 = arith.constant 0 : index
    %296 = vector.load %arg5[%c2_185, %c0_186] : memref<9x128xf32, #tpu.memory_space<vmem>>, vector<1x128xf32>
    %297 = vector.broadcast %296 : vector<1x128xf32> to vector<32x128xf32>
    %298 = arith.mulf %295, %297 : vector<32x128xf32>
    %c1_i32_187 = arith.constant 1 : i32
    %299 = tpu.dynamic_rotate %286 by %c1_i32_187 dim 1 : vector<32x128xf32>, i32 -> vector<32x128xf32>
    %c3_188 = arith.constant 3 : index
    %c0_189 = arith.constant 0 : index
    %300 = vector.load %arg5[%c3_188, %c0_189] : memref<9x128xf32, #tpu.memory_space<vmem>>, vector<1x128xf32>
    %301 = vector.broadcast %300 : vector<1x128xf32> to vector<32x128xf32>
    %302 = arith.mulf %299, %301 : vector<32x128xf32>
    %c4_190 = arith.constant 4 : index
    %c0_191 = arith.constant 0 : index
    %303 = vector.load %arg5[%c4_190, %c0_191] : memref<9x128xf32, #tpu.memory_space<vmem>>, vector<1x128xf32>
    %304 = vector.broadcast %303 : vector<1x128xf32> to vector<32x128xf32>
    %305 = arith.mulf %286, %304 : vector<32x128xf32>
    %c127_i32_192 = arith.constant 127 : i32
    %306 = tpu.dynamic_rotate %286 by %c127_i32_192 dim 1 : vector<32x128xf32>, i32 -> vector<32x128xf32>
    %c5_193 = arith.constant 5 : index
    %c0_194 = arith.constant 0 : index
    %307 = vector.load %arg5[%c5_193, %c0_194] : memref<9x128xf32, #tpu.memory_space<vmem>>, vector<1x128xf32>
    %308 = vector.broadcast %307 : vector<1x128xf32> to vector<32x128xf32>
    %309 = arith.mulf %306, %308 : vector<32x128xf32>
    %c127_i32_195 = arith.constant 127 : i32
    %310 = tpu.dynamic_rotate %286 by %c127_i32_195 dim 1 : vector<32x128xf32>, i32 -> vector<32x128xf32>
    %c6_196 = arith.constant 6 : index
    %c0_197 = arith.constant 0 : index
    %311 = vector.load %arg5[%c6_196, %c0_197] : memref<9x128xf32, #tpu.memory_space<vmem>>, vector<1x128xf32>
    %312 = vector.broadcast %311 : vector<1x128xf32> to vector<32x128xf32>
    %313 = arith.mulf %310, %312 : vector<32x128xf32>
    %c126_i32 = arith.constant 126 : i32
    %314 = tpu.dynamic_rotate %286 by %c126_i32 dim 1 : vector<32x128xf32>, i32 -> vector<32x128xf32>
    %c7_198 = arith.constant 7 : index
    %c0_199 = arith.constant 0 : index
    %315 = vector.load %arg5[%c7_198, %c0_199] : memref<9x128xf32, #tpu.memory_space<vmem>>, vector<1x128xf32>
    %316 = vector.broadcast %315 : vector<1x128xf32> to vector<32x128xf32>
    %317 = arith.mulf %314, %316 : vector<32x128xf32>
    %c125_i32_200 = arith.constant 125 : i32
    %318 = tpu.dynamic_rotate %286 by %c125_i32_200 dim 1 : vector<32x128xf32>, i32 -> vector<32x128xf32>
    %c8_201 = arith.constant 8 : index
    %c0_202 = arith.constant 0 : index
    %319 = vector.load %arg5[%c8_201, %c0_202] : memref<9x128xf32, #tpu.memory_space<vmem>>, vector<1x128xf32>
    %320 = vector.broadcast %319 : vector<1x128xf32> to vector<32x128xf32>
    %321 = arith.mulf %318, %320 : vector<32x128xf32>
    %322 = tpu.concatenate %290, %294, %298, %302, %305, %309, %313, %317, %321 in 0 : vector<32x128xf32>, vector<32x128xf32>, vector<32x128xf32>, vector<32x128xf32>, vector<32x128xf32>, vector<32x128xf32>, vector<32x128xf32>, vector<32x128xf32>, vector<32x128xf32> -> vector<288x128xf32>
    %323 = arith.truncf %322 : vector<288x128xf32> to vector<288x128xbf16>
    %c0_203 = arith.constant 0 : index
    %c0_204 = arith.constant 0 : index
    %324 = vector.load %arg21[%c0_203, %c0_204] : memref<64x288xbf16, #tpu.memory_space<vmem>>, vector<64x288xbf16>
    %cst_205 = arith.constant dense<0.000000e+00> : vector<64x128xf32>
    %325 = tpu.matmul %324, %323, %cst_205 {dimension_numbers = #tpu.dot_dimension_numbers<[1], [0], [0], [1], [0, 0, 1, 1], [], []>} : vector<64x288xbf16>, vector<288x128xbf16>, vector<64x128xf32> -> vector<64x128xf32>
    %c0_206 = arith.constant 0 : index
    %c0_207 = arith.constant 0 : index
    %326 = vector.load %arg22[%c0_206, %c0_207] : memref<64x1xf32, #tpu.memory_space<vmem>>, vector<64x1xf32>
    %327 = vector.broadcast %326 : vector<64x1xf32> to vector<64x128xf32>
    %328 = arith.addf %325, %327 : vector<64x128xf32>
    %cst_208 = arith.constant 0.000000e+00 : f32
    %329 = vector.broadcast %cst_208 : f32 to vector<64x128xf32>
    %330 = arith.maximumf %328, %329 : vector<64x128xf32>
    %c3_i32_209 = arith.constant 3 : i32
    %331 = tpu.dynamic_rotate %330 by %c3_i32_209 dim 1 : vector<64x128xf32>, i32 -> vector<64x128xf32>
    %c0_210 = arith.constant 0 : index
    %c0_211 = arith.constant 0 : index
    %332 = vector.load %arg5[%c0_210, %c0_211] : memref<9x128xf32, #tpu.memory_space<vmem>>, vector<1x128xf32>
    %333 = vector.broadcast %332 : vector<1x128xf32> to vector<64x128xf32>
    %334 = arith.mulf %331, %333 : vector<64x128xf32>
    %c2_i32_212 = arith.constant 2 : i32
    %335 = tpu.dynamic_rotate %330 by %c2_i32_212 dim 1 : vector<64x128xf32>, i32 -> vector<64x128xf32>
    %c1_213 = arith.constant 1 : index
    %c0_214 = arith.constant 0 : index
    %336 = vector.load %arg5[%c1_213, %c0_214] : memref<9x128xf32, #tpu.memory_space<vmem>>, vector<1x128xf32>
    %337 = vector.broadcast %336 : vector<1x128xf32> to vector<64x128xf32>
    %338 = arith.mulf %335, %337 : vector<64x128xf32>
    %c1_i32_215 = arith.constant 1 : i32
    %339 = tpu.dynamic_rotate %330 by %c1_i32_215 dim 1 : vector<64x128xf32>, i32 -> vector<64x128xf32>
    %c2_216 = arith.constant 2 : index
    %c0_217 = arith.constant 0 : index
    %340 = vector.load %arg5[%c2_216, %c0_217] : memref<9x128xf32, #tpu.memory_space<vmem>>, vector<1x128xf32>
    %341 = vector.broadcast %340 : vector<1x128xf32> to vector<64x128xf32>
    %342 = arith.mulf %339, %341 : vector<64x128xf32>
    %c1_i32_218 = arith.constant 1 : i32
    %343 = tpu.dynamic_rotate %330 by %c1_i32_218 dim 1 : vector<64x128xf32>, i32 -> vector<64x128xf32>
    %c3_219 = arith.constant 3 : index
    %c0_220 = arith.constant 0 : index
    %344 = vector.load %arg5[%c3_219, %c0_220] : memref<9x128xf32, #tpu.memory_space<vmem>>, vector<1x128xf32>
    %345 = vector.broadcast %344 : vector<1x128xf32> to vector<64x128xf32>
    %346 = arith.mulf %343, %345 : vector<64x128xf32>
    %c4_221 = arith.constant 4 : index
    %c0_222 = arith.constant 0 : index
    %347 = vector.load %arg5[%c4_221, %c0_222] : memref<9x128xf32, #tpu.memory_space<vmem>>, vector<1x128xf32>
    %348 = vector.broadcast %347 : vector<1x128xf32> to vector<64x128xf32>
    %349 = arith.mulf %330, %348 : vector<64x128xf32>
    %c127_i32_223 = arith.constant 127 : i32
    %350 = tpu.dynamic_rotate %330 by %c127_i32_223 dim 1 : vector<64x128xf32>, i32 -> vector<64x128xf32>
    %c5_224 = arith.constant 5 : index
    %c0_225 = arith.constant 0 : index
    %351 = vector.load %arg5[%c5_224, %c0_225] : memref<9x128xf32, #tpu.memory_space<vmem>>, vector<1x128xf32>
    %352 = vector.broadcast %351 : vector<1x128xf32> to vector<64x128xf32>
    %353 = arith.mulf %350, %352 : vector<64x128xf32>
    %c127_i32_226 = arith.constant 127 : i32
    %354 = tpu.dynamic_rotate %330 by %c127_i32_226 dim 1 : vector<64x128xf32>, i32 -> vector<64x128xf32>
    %c6_227 = arith.constant 6 : index
    %c0_228 = arith.constant 0 : index
    %355 = vector.load %arg5[%c6_227, %c0_228] : memref<9x128xf32, #tpu.memory_space<vmem>>, vector<1x128xf32>
    %356 = vector.broadcast %355 : vector<1x128xf32> to vector<64x128xf32>
    %357 = arith.mulf %354, %356 : vector<64x128xf32>
    %c126_i32_229 = arith.constant 126 : i32
    %358 = tpu.dynamic_rotate %330 by %c126_i32_229 dim 1 : vector<64x128xf32>, i32 -> vector<64x128xf32>
    %c7_230 = arith.constant 7 : index
    %c0_231 = arith.constant 0 : index
    %359 = vector.load %arg5[%c7_230, %c0_231] : memref<9x128xf32, #tpu.memory_space<vmem>>, vector<1x128xf32>
    %360 = vector.broadcast %359 : vector<1x128xf32> to vector<64x128xf32>
    %361 = arith.mulf %358, %360 : vector<64x128xf32>
    %c125_i32_232 = arith.constant 125 : i32
    %362 = tpu.dynamic_rotate %330 by %c125_i32_232 dim 1 : vector<64x128xf32>, i32 -> vector<64x128xf32>
    %c8_233 = arith.constant 8 : index
    %c0_234 = arith.constant 0 : index
    %363 = vector.load %arg5[%c8_233, %c0_234] : memref<9x128xf32, #tpu.memory_space<vmem>>, vector<1x128xf32>
    %364 = vector.broadcast %363 : vector<1x128xf32> to vector<64x128xf32>
    %365 = arith.mulf %362, %364 : vector<64x128xf32>
    %366 = tpu.concatenate %334, %338, %342, %346, %349, %353, %357, %361, %365 in 0 : vector<64x128xf32>, vector<64x128xf32>, vector<64x128xf32>, vector<64x128xf32>, vector<64x128xf32>, vector<64x128xf32>, vector<64x128xf32>, vector<64x128xf32>, vector<64x128xf32> -> vector<576x128xf32>
    %367 = arith.truncf %366 : vector<576x128xf32> to vector<576x128xbf16>
    %c0_235 = arith.constant 0 : index
    %c0_236 = arith.constant 0 : index
    %368 = vector.load %arg23[%c0_235, %c0_236] : memref<64x576xbf16, #tpu.memory_space<vmem>>, vector<64x576xbf16>
    %cst_237 = arith.constant dense<0.000000e+00> : vector<64x128xf32>
    %369 = tpu.matmul %368, %367, %cst_237 {dimension_numbers = #tpu.dot_dimension_numbers<[1], [0], [0], [1], [0, 0, 1, 1], [], []>} : vector<64x576xbf16>, vector<576x128xbf16>, vector<64x128xf32> -> vector<64x128xf32>
    %c0_238 = arith.constant 0 : index
    %c0_239 = arith.constant 0 : index
    %370 = vector.load %arg24[%c0_238, %c0_239] : memref<64x1xf32, #tpu.memory_space<vmem>>, vector<64x1xf32>
    %371 = vector.broadcast %370 : vector<64x1xf32> to vector<64x128xf32>
    %372 = arith.addf %369, %371 : vector<64x128xf32>
    %cst_240 = arith.constant 0.000000e+00 : f32
    %373 = vector.broadcast %cst_240 : f32 to vector<64x128xf32>
    %374 = arith.maximumf %372, %373 : vector<64x128xf32>
    %375 = arith.truncf %374 : vector<64x128xf32> to vector<64x128xbf16>
    %c0_241 = arith.constant 0 : index
    %c0_242 = arith.constant 0 : index
    %376 = vector.load %arg25[%c0_241, %c0_242] : memref<128x128xbf16, #tpu.memory_space<vmem>>, vector<128x128xbf16>
    %cst_243 = arith.constant dense<0.000000e+00> : vector<64x128xf32>
    %377 = tpu.matmul %375, %376, %cst_243 {dimension_numbers = #tpu.dot_dimension_numbers<[1], [0], [0], [1], [0, 0, 1, 1], [], []>} : vector<64x128xbf16>, vector<128x128xbf16>, vector<64x128xf32> -> vector<64x128xf32>
    %c5_i32_244 = arith.constant 5 : i32
    %378 = tpu.dynamic_rotate %377 by %c5_i32_244 dim 1 : vector<64x128xf32>, i32 -> vector<64x128xf32>
    %c0_245 = arith.constant 0 : index
    %c0_246 = arith.constant 0 : index
    %379 = vector.load %arg4[%c0_245, %c0_246] : memref<9x128xf32, #tpu.memory_space<vmem>>, vector<1x128xf32>
    %380 = vector.broadcast %379 : vector<1x128xf32> to vector<64x128xf32>
    %381 = arith.mulf %378, %380 : vector<64x128xf32>
    %c4_i32_247 = arith.constant 4 : i32
    %382 = tpu.dynamic_rotate %377 by %c4_i32_247 dim 1 : vector<64x128xf32>, i32 -> vector<64x128xf32>
    %c1_248 = arith.constant 1 : index
    %c0_249 = arith.constant 0 : index
    %383 = vector.load %arg4[%c1_248, %c0_249] : memref<9x128xf32, #tpu.memory_space<vmem>>, vector<1x128xf32>
    %384 = vector.broadcast %383 : vector<1x128xf32> to vector<64x128xf32>
    %385 = arith.mulf %382, %384 : vector<64x128xf32>
    %c3_i32_250 = arith.constant 3 : i32
    %386 = tpu.dynamic_rotate %377 by %c3_i32_250 dim 1 : vector<64x128xf32>, i32 -> vector<64x128xf32>
    %c2_251 = arith.constant 2 : index
    %c0_252 = arith.constant 0 : index
    %387 = vector.load %arg4[%c2_251, %c0_252] : memref<9x128xf32, #tpu.memory_space<vmem>>, vector<1x128xf32>
    %388 = vector.broadcast %387 : vector<1x128xf32> to vector<64x128xf32>
    %389 = arith.mulf %386, %388 : vector<64x128xf32>
    %c1_i32_253 = arith.constant 1 : i32
    %390 = tpu.dynamic_rotate %377 by %c1_i32_253 dim 1 : vector<64x128xf32>, i32 -> vector<64x128xf32>
    %c3_254 = arith.constant 3 : index
    %c0_255 = arith.constant 0 : index
    %391 = vector.load %arg4[%c3_254, %c0_255] : memref<9x128xf32, #tpu.memory_space<vmem>>, vector<1x128xf32>
    %392 = vector.broadcast %391 : vector<1x128xf32> to vector<64x128xf32>
    %393 = arith.mulf %390, %392 : vector<64x128xf32>
    %c4_256 = arith.constant 4 : index
    %c0_257 = arith.constant 0 : index
    %394 = vector.load %arg4[%c4_256, %c0_257] : memref<9x128xf32, #tpu.memory_space<vmem>>, vector<1x128xf32>
    %395 = vector.broadcast %394 : vector<1x128xf32> to vector<64x128xf32>
    %396 = arith.mulf %377, %395 : vector<64x128xf32>
    %c127_i32_258 = arith.constant 127 : i32
    %397 = tpu.dynamic_rotate %377 by %c127_i32_258 dim 1 : vector<64x128xf32>, i32 -> vector<64x128xf32>
    %c5_259 = arith.constant 5 : index
    %c0_260 = arith.constant 0 : index
    %398 = vector.load %arg4[%c5_259, %c0_260] : memref<9x128xf32, #tpu.memory_space<vmem>>, vector<1x128xf32>
    %399 = vector.broadcast %398 : vector<1x128xf32> to vector<64x128xf32>
    %400 = arith.mulf %397, %399 : vector<64x128xf32>
    %c125_i32_261 = arith.constant 125 : i32
    %401 = tpu.dynamic_rotate %377 by %c125_i32_261 dim 1 : vector<64x128xf32>, i32 -> vector<64x128xf32>
    %c6_262 = arith.constant 6 : index
    %c0_263 = arith.constant 0 : index
    %402 = vector.load %arg4[%c6_262, %c0_263] : memref<9x128xf32, #tpu.memory_space<vmem>>, vector<1x128xf32>
    %403 = vector.broadcast %402 : vector<1x128xf32> to vector<64x128xf32>
    %404 = arith.mulf %401, %403 : vector<64x128xf32>
    %c124_i32_264 = arith.constant 124 : i32
    %405 = tpu.dynamic_rotate %377 by %c124_i32_264 dim 1 : vector<64x128xf32>, i32 -> vector<64x128xf32>
    %c7_265 = arith.constant 7 : index
    %c0_266 = arith.constant 0 : index
    %406 = vector.load %arg4[%c7_265, %c0_266] : memref<9x128xf32, #tpu.memory_space<vmem>>, vector<1x128xf32>
    %407 = vector.broadcast %406 : vector<1x128xf32> to vector<64x128xf32>
    %408 = arith.mulf %405, %407 : vector<64x128xf32>
    %c123_i32_267 = arith.constant 123 : i32
    %409 = tpu.dynamic_rotate %377 by %c123_i32_267 dim 1 : vector<64x128xf32>, i32 -> vector<64x128xf32>
    %c8_268 = arith.constant 8 : index
    %c0_269 = arith.constant 0 : index
    %410 = vector.load %arg4[%c8_268, %c0_269] : memref<9x128xf32, #tpu.memory_space<vmem>>, vector<1x128xf32>
    %411 = vector.broadcast %410 : vector<1x128xf32> to vector<64x128xf32>
    %412 = arith.mulf %409, %411 : vector<64x128xf32>
    %413 = tpu.concatenate %381, %385, %389, %393, %396, %400, %404, %408, %412 in 0 : vector<64x128xf32>, vector<64x128xf32>, vector<64x128xf32>, vector<64x128xf32>, vector<64x128xf32>, vector<64x128xf32>, vector<64x128xf32>, vector<64x128xf32>, vector<64x128xf32> -> vector<576x128xf32>
    %414 = arith.truncf %413 : vector<576x128xf32> to vector<576x128xbf16>
    %c0_270 = arith.constant 0 : index
    %c0_271 = arith.constant 0 : index
    %415 = vector.load %arg26[%c0_270, %c0_271] : memref<64x576xbf16, #tpu.memory_space<vmem>>, vector<64x576xbf16>
    %cst_272 = arith.constant dense<0.000000e+00> : vector<64x128xf32>
    %416 = tpu.matmul %415, %414, %cst_272 {dimension_numbers = #tpu.dot_dimension_numbers<[1], [0], [0], [1], [0, 0, 1, 1], [], []>} : vector<64x576xbf16>, vector<576x128xbf16>, vector<64x128xf32> -> vector<64x128xf32>
    %c0_273 = arith.constant 0 : index
    %c0_274 = arith.constant 0 : index
    %417 = vector.load %arg27[%c0_273, %c0_274] : memref<64x1xf32, #tpu.memory_space<vmem>>, vector<64x1xf32>
    %418 = vector.broadcast %417 : vector<64x1xf32> to vector<64x128xf32>
    %419 = arith.addf %416, %418 : vector<64x128xf32>
    %c5_i32_275 = arith.constant 5 : i32
    %420 = tpu.dynamic_rotate %419 by %c5_i32_275 dim 1 : vector<64x128xf32>, i32 -> vector<64x128xf32>
    %c0_276 = arith.constant 0 : index
    %c0_277 = arith.constant 0 : index
    %421 = vector.load %arg4[%c0_276, %c0_277] : memref<9x128xf32, #tpu.memory_space<vmem>>, vector<1x128xf32>
    %422 = vector.broadcast %421 : vector<1x128xf32> to vector<64x128xf32>
    %423 = arith.mulf %420, %422 : vector<64x128xf32>
    %c4_i32_278 = arith.constant 4 : i32
    %424 = tpu.dynamic_rotate %419 by %c4_i32_278 dim 1 : vector<64x128xf32>, i32 -> vector<64x128xf32>
    %c1_279 = arith.constant 1 : index
    %c0_280 = arith.constant 0 : index
    %425 = vector.load %arg4[%c1_279, %c0_280] : memref<9x128xf32, #tpu.memory_space<vmem>>, vector<1x128xf32>
    %426 = vector.broadcast %425 : vector<1x128xf32> to vector<64x128xf32>
    %427 = arith.mulf %424, %426 : vector<64x128xf32>
    %c3_i32_281 = arith.constant 3 : i32
    %428 = tpu.dynamic_rotate %419 by %c3_i32_281 dim 1 : vector<64x128xf32>, i32 -> vector<64x128xf32>
    %c2_282 = arith.constant 2 : index
    %c0_283 = arith.constant 0 : index
    %429 = vector.load %arg4[%c2_282, %c0_283] : memref<9x128xf32, #tpu.memory_space<vmem>>, vector<1x128xf32>
    %430 = vector.broadcast %429 : vector<1x128xf32> to vector<64x128xf32>
    %431 = arith.mulf %428, %430 : vector<64x128xf32>
    %c1_i32_284 = arith.constant 1 : i32
    %432 = tpu.dynamic_rotate %419 by %c1_i32_284 dim 1 : vector<64x128xf32>, i32 -> vector<64x128xf32>
    %c3_285 = arith.constant 3 : index
    %c0_286 = arith.constant 0 : index
    %433 = vector.load %arg4[%c3_285, %c0_286] : memref<9x128xf32, #tpu.memory_space<vmem>>, vector<1x128xf32>
    %434 = vector.broadcast %433 : vector<1x128xf32> to vector<64x128xf32>
    %435 = arith.mulf %432, %434 : vector<64x128xf32>
    %c4_287 = arith.constant 4 : index
    %c0_288 = arith.constant 0 : index
    %436 = vector.load %arg4[%c4_287, %c0_288] : memref<9x128xf32, #tpu.memory_space<vmem>>, vector<1x128xf32>
    %437 = vector.broadcast %436 : vector<1x128xf32> to vector<64x128xf32>
    %438 = arith.mulf %419, %437 : vector<64x128xf32>
    %c127_i32_289 = arith.constant 127 : i32
    %439 = tpu.dynamic_rotate %419 by %c127_i32_289 dim 1 : vector<64x128xf32>, i32 -> vector<64x128xf32>
    %c5_290 = arith.constant 5 : index
    %c0_291 = arith.constant 0 : index
    %440 = vector.load %arg4[%c5_290, %c0_291] : memref<9x128xf32, #tpu.memory_space<vmem>>, vector<1x128xf32>
    %441 = vector.broadcast %440 : vector<1x128xf32> to vector<64x128xf32>
    %442 = arith.mulf %439, %441 : vector<64x128xf32>
    %c125_i32_292 = arith.constant 125 : i32
    %443 = tpu.dynamic_rotate %419 by %c125_i32_292 dim 1 : vector<64x128xf32>, i32 -> vector<64x128xf32>
    %c6_293 = arith.constant 6 : index
    %c0_294 = arith.constant 0 : index
    %444 = vector.load %arg4[%c6_293, %c0_294] : memref<9x128xf32, #tpu.memory_space<vmem>>, vector<1x128xf32>
    %445 = vector.broadcast %444 : vector<1x128xf32> to vector<64x128xf32>
    %446 = arith.mulf %443, %445 : vector<64x128xf32>
    %c124_i32_295 = arith.constant 124 : i32
    %447 = tpu.dynamic_rotate %419 by %c124_i32_295 dim 1 : vector<64x128xf32>, i32 -> vector<64x128xf32>
    %c7_296 = arith.constant 7 : index
    %c0_297 = arith.constant 0 : index
    %448 = vector.load %arg4[%c7_296, %c0_297] : memref<9x128xf32, #tpu.memory_space<vmem>>, vector<1x128xf32>
    %449 = vector.broadcast %448 : vector<1x128xf32> to vector<64x128xf32>
    %450 = arith.mulf %447, %449 : vector<64x128xf32>
    %c123_i32_298 = arith.constant 123 : i32
    %451 = tpu.dynamic_rotate %419 by %c123_i32_298 dim 1 : vector<64x128xf32>, i32 -> vector<64x128xf32>
    %c8_299 = arith.constant 8 : index
    %c0_300 = arith.constant 0 : index
    %452 = vector.load %arg4[%c8_299, %c0_300] : memref<9x128xf32, #tpu.memory_space<vmem>>, vector<1x128xf32>
    %453 = vector.broadcast %452 : vector<1x128xf32> to vector<64x128xf32>
    %454 = arith.mulf %451, %453 : vector<64x128xf32>
    %455 = tpu.concatenate %423, %427, %431, %435, %438, %442, %446, %450, %454 in 0 : vector<64x128xf32>, vector<64x128xf32>, vector<64x128xf32>, vector<64x128xf32>, vector<64x128xf32>, vector<64x128xf32>, vector<64x128xf32>, vector<64x128xf32>, vector<64x128xf32> -> vector<576x128xf32>
    %456 = arith.truncf %455 : vector<576x128xf32> to vector<576x128xbf16>
    %c0_301 = arith.constant 0 : index
    %c0_302 = arith.constant 0 : index
    %457 = vector.load %arg28[%c0_301, %c0_302] : memref<32x576xbf16, #tpu.memory_space<vmem>>, vector<32x576xbf16>
    %cst_303 = arith.constant dense<0.000000e+00> : vector<32x128xf32>
    %458 = tpu.matmul %457, %456, %cst_303 {dimension_numbers = #tpu.dot_dimension_numbers<[1], [0], [0], [1], [0, 0, 1, 1], [], []>} : vector<32x576xbf16>, vector<576x128xbf16>, vector<32x128xf32> -> vector<32x128xf32>
    %c0_304 = arith.constant 0 : index
    %c0_305 = arith.constant 0 : index
    %459 = vector.load %arg29[%c0_304, %c0_305] : memref<32x1xf32, #tpu.memory_space<vmem>>, vector<32x1xf32>
    %460 = vector.broadcast %459 : vector<32x1xf32> to vector<32x128xf32>
    %461 = arith.addf %458, %460 : vector<32x128xf32>
    %cst_306 = arith.constant 0.000000e+00 : f32
    %462 = vector.broadcast %cst_306 : f32 to vector<32x128xf32>
    %463 = arith.maximumf %461, %462 : vector<32x128xf32>
    %c5_i32_307 = arith.constant 5 : i32
    %464 = tpu.dynamic_rotate %463 by %c5_i32_307 dim 1 : vector<32x128xf32>, i32 -> vector<32x128xf32>
    %c0_308 = arith.constant 0 : index
    %c0_309 = arith.constant 0 : index
    %465 = vector.load %arg4[%c0_308, %c0_309] : memref<9x128xf32, #tpu.memory_space<vmem>>, vector<1x128xf32>
    %466 = vector.broadcast %465 : vector<1x128xf32> to vector<32x128xf32>
    %467 = arith.mulf %464, %466 : vector<32x128xf32>
    %c4_i32_310 = arith.constant 4 : i32
    %468 = tpu.dynamic_rotate %463 by %c4_i32_310 dim 1 : vector<32x128xf32>, i32 -> vector<32x128xf32>
    %c1_311 = arith.constant 1 : index
    %c0_312 = arith.constant 0 : index
    %469 = vector.load %arg4[%c1_311, %c0_312] : memref<9x128xf32, #tpu.memory_space<vmem>>, vector<1x128xf32>
    %470 = vector.broadcast %469 : vector<1x128xf32> to vector<32x128xf32>
    %471 = arith.mulf %468, %470 : vector<32x128xf32>
    %c3_i32_313 = arith.constant 3 : i32
    %472 = tpu.dynamic_rotate %463 by %c3_i32_313 dim 1 : vector<32x128xf32>, i32 -> vector<32x128xf32>
    %c2_314 = arith.constant 2 : index
    %c0_315 = arith.constant 0 : index
    %473 = vector.load %arg4[%c2_314, %c0_315] : memref<9x128xf32, #tpu.memory_space<vmem>>, vector<1x128xf32>
    %474 = vector.broadcast %473 : vector<1x128xf32> to vector<32x128xf32>
    %475 = arith.mulf %472, %474 : vector<32x128xf32>
    %c1_i32_316 = arith.constant 1 : i32
    %476 = tpu.dynamic_rotate %463 by %c1_i32_316 dim 1 : vector<32x128xf32>, i32 -> vector<32x128xf32>
    %c3_317 = arith.constant 3 : index
    %c0_318 = arith.constant 0 : index
    %477 = vector.load %arg4[%c3_317, %c0_318] : memref<9x128xf32, #tpu.memory_space<vmem>>, vector<1x128xf32>
    %478 = vector.broadcast %477 : vector<1x128xf32> to vector<32x128xf32>
    %479 = arith.mulf %476, %478 : vector<32x128xf32>
    %c4_319 = arith.constant 4 : index
    %c0_320 = arith.constant 0 : index
    %480 = vector.load %arg4[%c4_319, %c0_320] : memref<9x128xf32, #tpu.memory_space<vmem>>, vector<1x128xf32>
    %481 = vector.broadcast %480 : vector<1x128xf32> to vector<32x128xf32>
    %482 = arith.mulf %463, %481 : vector<32x128xf32>
    %c127_i32_321 = arith.constant 127 : i32
    %483 = tpu.dynamic_rotate %463 by %c127_i32_321 dim 1 : vector<32x128xf32>, i32 -> vector<32x128xf32>
    %c5_322 = arith.constant 5 : index
    %c0_323 = arith.constant 0 : index
    %484 = vector.load %arg4[%c5_322, %c0_323] : memref<9x128xf32, #tpu.memory_space<vmem>>, vector<1x128xf32>
    %485 = vector.broadcast %484 : vector<1x128xf32> to vector<32x128xf32>
    %486 = arith.mulf %483, %485 : vector<32x128xf32>
    %c125_i32_324 = arith.constant 125 : i32
    %487 = tpu.dynamic_rotate %463 by %c125_i32_324 dim 1 : vector<32x128xf32>, i32 -> vector<32x128xf32>
    %c6_325 = arith.constant 6 : index
    %c0_326 = arith.constant 0 : index
    %488 = vector.load %arg4[%c6_325, %c0_326] : memref<9x128xf32, #tpu.memory_space<vmem>>, vector<1x128xf32>
    %489 = vector.broadcast %488 : vector<1x128xf32> to vector<32x128xf32>
    %490 = arith.mulf %487, %489 : vector<32x128xf32>
    %c124_i32_327 = arith.constant 124 : i32
    %491 = tpu.dynamic_rotate %463 by %c124_i32_327 dim 1 : vector<32x128xf32>, i32 -> vector<32x128xf32>
    %c7_328 = arith.constant 7 : index
    %c0_329 = arith.constant 0 : index
    %492 = vector.load %arg4[%c7_328, %c0_329] : memref<9x128xf32, #tpu.memory_space<vmem>>, vector<1x128xf32>
    %493 = vector.broadcast %492 : vector<1x128xf32> to vector<32x128xf32>
    %494 = arith.mulf %491, %493 : vector<32x128xf32>
    %c123_i32_330 = arith.constant 123 : i32
    %495 = tpu.dynamic_rotate %463 by %c123_i32_330 dim 1 : vector<32x128xf32>, i32 -> vector<32x128xf32>
    %c8_331 = arith.constant 8 : index
    %c0_332 = arith.constant 0 : index
    %496 = vector.load %arg4[%c8_331, %c0_332] : memref<9x128xf32, #tpu.memory_space<vmem>>, vector<1x128xf32>
    %497 = vector.broadcast %496 : vector<1x128xf32> to vector<32x128xf32>
    %498 = arith.mulf %495, %497 : vector<32x128xf32>
    %499 = tpu.concatenate %467, %471, %475, %479, %482, %486, %490, %494, %498 in 0 : vector<32x128xf32>, vector<32x128xf32>, vector<32x128xf32>, vector<32x128xf32>, vector<32x128xf32>, vector<32x128xf32>, vector<32x128xf32>, vector<32x128xf32>, vector<32x128xf32> -> vector<288x128xf32>
    %500 = arith.truncf %499 : vector<288x128xf32> to vector<288x128xbf16>
    %c0_333 = arith.constant 0 : index
    %c0_334 = arith.constant 0 : index
    %501 = vector.load %arg30[%c0_333, %c0_334] : memref<32x288xbf16, #tpu.memory_space<vmem>>, vector<32x288xbf16>
    %cst_335 = arith.constant dense<0.000000e+00> : vector<32x128xf32>
    %502 = tpu.matmul %501, %500, %cst_335 {dimension_numbers = #tpu.dot_dimension_numbers<[1], [0], [0], [1], [0, 0, 1, 1], [], []>} : vector<32x288xbf16>, vector<288x128xbf16>, vector<32x128xf32> -> vector<32x128xf32>
    %c0_336 = arith.constant 0 : index
    %c0_337 = arith.constant 0 : index
    %503 = vector.load %arg31[%c0_336, %c0_337] : memref<32x1xf32, #tpu.memory_space<vmem>>, vector<32x1xf32>
    %504 = vector.broadcast %503 : vector<32x1xf32> to vector<32x128xf32>
    %505 = arith.addf %502, %504 : vector<32x128xf32>
    %cst_338 = arith.constant 0.000000e+00 : f32
    %506 = vector.broadcast %cst_338 : f32 to vector<32x128xf32>
    %507 = arith.maximumf %505, %506 : vector<32x128xf32>
    %508 = arith.truncf %507 : vector<32x128xf32> to vector<32x128xbf16>
    %c0_339 = arith.constant 0 : index
    %c0_340 = arith.constant 0 : index
    %509 = vector.load %arg32[%c0_339, %c0_340] : memref<128x128xbf16, #tpu.memory_space<vmem>>, vector<128x128xbf16>
    %cst_341 = arith.constant dense<0.000000e+00> : vector<32x128xf32>
    %510 = tpu.matmul %508, %509, %cst_341 {dimension_numbers = #tpu.dot_dimension_numbers<[1], [0], [0], [1], [0, 0, 1, 1], [], []>} : vector<32x128xbf16>, vector<128x128xbf16>, vector<32x128xf32> -> vector<32x128xf32>
    %c9_i32_342 = arith.constant 9 : i32
    %511 = tpu.dynamic_rotate %510 by %c9_i32_342 dim 1 : vector<32x128xf32>, i32 -> vector<32x128xf32>
    %c0_343 = arith.constant 0 : index
    %c0_344 = arith.constant 0 : index
    %512 = vector.load %arg3[%c0_343, %c0_344] : memref<9x128xf32, #tpu.memory_space<vmem>>, vector<1x128xf32>
    %513 = vector.broadcast %512 : vector<1x128xf32> to vector<32x128xf32>
    %514 = arith.mulf %511, %513 : vector<32x128xf32>
    %c8_i32_345 = arith.constant 8 : i32
    %515 = tpu.dynamic_rotate %510 by %c8_i32_345 dim 1 : vector<32x128xf32>, i32 -> vector<32x128xf32>
    %c1_346 = arith.constant 1 : index
    %c0_347 = arith.constant 0 : index
    %516 = vector.load %arg3[%c1_346, %c0_347] : memref<9x128xf32, #tpu.memory_space<vmem>>, vector<1x128xf32>
    %517 = vector.broadcast %516 : vector<1x128xf32> to vector<32x128xf32>
    %518 = arith.mulf %515, %517 : vector<32x128xf32>
    %c7_i32_348 = arith.constant 7 : i32
    %519 = tpu.dynamic_rotate %510 by %c7_i32_348 dim 1 : vector<32x128xf32>, i32 -> vector<32x128xf32>
    %c2_349 = arith.constant 2 : index
    %c0_350 = arith.constant 0 : index
    %520 = vector.load %arg3[%c2_349, %c0_350] : memref<9x128xf32, #tpu.memory_space<vmem>>, vector<1x128xf32>
    %521 = vector.broadcast %520 : vector<1x128xf32> to vector<32x128xf32>
    %522 = arith.mulf %519, %521 : vector<32x128xf32>
    %c1_i32_351 = arith.constant 1 : i32
    %523 = tpu.dynamic_rotate %510 by %c1_i32_351 dim 1 : vector<32x128xf32>, i32 -> vector<32x128xf32>
    %c3_352 = arith.constant 3 : index
    %c0_353 = arith.constant 0 : index
    %524 = vector.load %arg3[%c3_352, %c0_353] : memref<9x128xf32, #tpu.memory_space<vmem>>, vector<1x128xf32>
    %525 = vector.broadcast %524 : vector<1x128xf32> to vector<32x128xf32>
    %526 = arith.mulf %523, %525 : vector<32x128xf32>
    %c4_354 = arith.constant 4 : index
    %c0_355 = arith.constant 0 : index
    %527 = vector.load %arg3[%c4_354, %c0_355] : memref<9x128xf32, #tpu.memory_space<vmem>>, vector<1x128xf32>
    %528 = vector.broadcast %527 : vector<1x128xf32> to vector<32x128xf32>
    %529 = arith.mulf %510, %528 : vector<32x128xf32>
    %c127_i32_356 = arith.constant 127 : i32
    %530 = tpu.dynamic_rotate %510 by %c127_i32_356 dim 1 : vector<32x128xf32>, i32 -> vector<32x128xf32>
    %c5_357 = arith.constant 5 : index
    %c0_358 = arith.constant 0 : index
    %531 = vector.load %arg3[%c5_357, %c0_358] : memref<9x128xf32, #tpu.memory_space<vmem>>, vector<1x128xf32>
    %532 = vector.broadcast %531 : vector<1x128xf32> to vector<32x128xf32>
    %533 = arith.mulf %530, %532 : vector<32x128xf32>
    %c121_i32_359 = arith.constant 121 : i32
    %534 = tpu.dynamic_rotate %510 by %c121_i32_359 dim 1 : vector<32x128xf32>, i32 -> vector<32x128xf32>
    %c6_360 = arith.constant 6 : index
    %c0_361 = arith.constant 0 : index
    %535 = vector.load %arg3[%c6_360, %c0_361] : memref<9x128xf32, #tpu.memory_space<vmem>>, vector<1x128xf32>
    %536 = vector.broadcast %535 : vector<1x128xf32> to vector<32x128xf32>
    %537 = arith.mulf %534, %536 : vector<32x128xf32>
    %c120_i32_362 = arith.constant 120 : i32
    %538 = tpu.dynamic_rotate %510 by %c120_i32_362 dim 1 : vector<32x128xf32>, i32 -> vector<32x128xf32>
    %c7_363 = arith.constant 7 : index
    %c0_364 = arith.constant 0 : index
    %539 = vector.load %arg3[%c7_363, %c0_364] : memref<9x128xf32, #tpu.memory_space<vmem>>, vector<1x128xf32>
    %540 = vector.broadcast %539 : vector<1x128xf32> to vector<32x128xf32>
    %541 = arith.mulf %538, %540 : vector<32x128xf32>
    %c119_i32_365 = arith.constant 119 : i32
    %542 = tpu.dynamic_rotate %510 by %c119_i32_365 dim 1 : vector<32x128xf32>, i32 -> vector<32x128xf32>
    %c8_366 = arith.constant 8 : index
    %c0_367 = arith.constant 0 : index
    %543 = vector.load %arg3[%c8_366, %c0_367] : memref<9x128xf32, #tpu.memory_space<vmem>>, vector<1x128xf32>
    %544 = vector.broadcast %543 : vector<1x128xf32> to vector<32x128xf32>
    %545 = arith.mulf %542, %544 : vector<32x128xf32>
    %546 = tpu.concatenate %514, %518, %522, %526, %529, %533, %537, %541, %545 in 0 : vector<32x128xf32>, vector<32x128xf32>, vector<32x128xf32>, vector<32x128xf32>, vector<32x128xf32>, vector<32x128xf32>, vector<32x128xf32>, vector<32x128xf32>, vector<32x128xf32> -> vector<288x128xf32>
    %547 = arith.truncf %546 : vector<288x128xf32> to vector<288x128xbf16>
    %c0_368 = arith.constant 0 : index
    %c0_369 = arith.constant 0 : index
    %548 = vector.load %arg33[%c0_368, %c0_369] : memref<32x288xbf16, #tpu.memory_space<vmem>>, vector<32x288xbf16>
    %cst_370 = arith.constant dense<0.000000e+00> : vector<32x128xf32>
    %549 = tpu.matmul %548, %547, %cst_370 {dimension_numbers = #tpu.dot_dimension_numbers<[1], [0], [0], [1], [0, 0, 1, 1], [], []>} : vector<32x288xbf16>, vector<288x128xbf16>, vector<32x128xf32> -> vector<32x128xf32>
    %c0_371 = arith.constant 0 : index
    %c0_372 = arith.constant 0 : index
    %550 = vector.load %arg34[%c0_371, %c0_372] : memref<32x1xf32, #tpu.memory_space<vmem>>, vector<32x1xf32>
    %551 = vector.broadcast %550 : vector<32x1xf32> to vector<32x128xf32>
    %552 = arith.addf %549, %551 : vector<32x128xf32>
    %c9_i32_373 = arith.constant 9 : i32
    %553 = tpu.dynamic_rotate %552 by %c9_i32_373 dim 1 : vector<32x128xf32>, i32 -> vector<32x128xf32>
    %c0_374 = arith.constant 0 : index
    %c0_375 = arith.constant 0 : index
    %554 = vector.load %arg3[%c0_374, %c0_375] : memref<9x128xf32, #tpu.memory_space<vmem>>, vector<1x128xf32>
    %555 = vector.broadcast %554 : vector<1x128xf32> to vector<32x128xf32>
    %556 = arith.mulf %553, %555 : vector<32x128xf32>
    %c8_i32_376 = arith.constant 8 : i32
    %557 = tpu.dynamic_rotate %552 by %c8_i32_376 dim 1 : vector<32x128xf32>, i32 -> vector<32x128xf32>
    %c1_377 = arith.constant 1 : index
    %c0_378 = arith.constant 0 : index
    %558 = vector.load %arg3[%c1_377, %c0_378] : memref<9x128xf32, #tpu.memory_space<vmem>>, vector<1x128xf32>
    %559 = vector.broadcast %558 : vector<1x128xf32> to vector<32x128xf32>
    %560 = arith.mulf %557, %559 : vector<32x128xf32>
    %c7_i32_379 = arith.constant 7 : i32
    %561 = tpu.dynamic_rotate %552 by %c7_i32_379 dim 1 : vector<32x128xf32>, i32 -> vector<32x128xf32>
    %c2_380 = arith.constant 2 : index
    %c0_381 = arith.constant 0 : index
    %562 = vector.load %arg3[%c2_380, %c0_381] : memref<9x128xf32, #tpu.memory_space<vmem>>, vector<1x128xf32>
    %563 = vector.broadcast %562 : vector<1x128xf32> to vector<32x128xf32>
    %564 = arith.mulf %561, %563 : vector<32x128xf32>
    %c1_i32_382 = arith.constant 1 : i32
    %565 = tpu.dynamic_rotate %552 by %c1_i32_382 dim 1 : vector<32x128xf32>, i32 -> vector<32x128xf32>
    %c3_383 = arith.constant 3 : index
    %c0_384 = arith.constant 0 : index
    %566 = vector.load %arg3[%c3_383, %c0_384] : memref<9x128xf32, #tpu.memory_space<vmem>>, vector<1x128xf32>
    %567 = vector.broadcast %566 : vector<1x128xf32> to vector<32x128xf32>
    %568 = arith.mulf %565, %567 : vector<32x128xf32>
    %c4_385 = arith.constant 4 : index
    %c0_386 = arith.constant 0 : index
    %569 = vector.load %arg3[%c4_385, %c0_386] : memref<9x128xf32, #tpu.memory_space<vmem>>, vector<1x128xf32>
    %570 = vector.broadcast %569 : vector<1x128xf32> to vector<32x128xf32>
    %571 = arith.mulf %552, %570 : vector<32x128xf32>
    %c127_i32_387 = arith.constant 127 : i32
    %572 = tpu.dynamic_rotate %552 by %c127_i32_387 dim 1 : vector<32x128xf32>, i32 -> vector<32x128xf32>
    %c5_388 = arith.constant 5 : index
    %c0_389 = arith.constant 0 : index
    %573 = vector.load %arg3[%c5_388, %c0_389] : memref<9x128xf32, #tpu.memory_space<vmem>>, vector<1x128xf32>
    %574 = vector.broadcast %573 : vector<1x128xf32> to vector<32x128xf32>
    %575 = arith.mulf %572, %574 : vector<32x128xf32>
    %c121_i32_390 = arith.constant 121 : i32
    %576 = tpu.dynamic_rotate %552 by %c121_i32_390 dim 1 : vector<32x128xf32>, i32 -> vector<32x128xf32>
    %c6_391 = arith.constant 6 : index
    %c0_392 = arith.constant 0 : index
    %577 = vector.load %arg3[%c6_391, %c0_392] : memref<9x128xf32, #tpu.memory_space<vmem>>, vector<1x128xf32>
    %578 = vector.broadcast %577 : vector<1x128xf32> to vector<32x128xf32>
    %579 = arith.mulf %576, %578 : vector<32x128xf32>
    %c120_i32_393 = arith.constant 120 : i32
    %580 = tpu.dynamic_rotate %552 by %c120_i32_393 dim 1 : vector<32x128xf32>, i32 -> vector<32x128xf32>
    %c7_394 = arith.constant 7 : index
    %c0_395 = arith.constant 0 : index
    %581 = vector.load %arg3[%c7_394, %c0_395] : memref<9x128xf32, #tpu.memory_space<vmem>>, vector<1x128xf32>
    %582 = vector.broadcast %581 : vector<1x128xf32> to vector<32x128xf32>
    %583 = arith.mulf %580, %582 : vector<32x128xf32>
    %c119_i32_396 = arith.constant 119 : i32
    %584 = tpu.dynamic_rotate %552 by %c119_i32_396 dim 1 : vector<32x128xf32>, i32 -> vector<32x128xf32>
    %c8_397 = arith.constant 8 : index
    %c0_398 = arith.constant 0 : index
    %585 = vector.load %arg3[%c8_397, %c0_398] : memref<9x128xf32, #tpu.memory_space<vmem>>, vector<1x128xf32>
    %586 = vector.broadcast %585 : vector<1x128xf32> to vector<32x128xf32>
    %587 = arith.mulf %584, %586 : vector<32x128xf32>
    %588 = tpu.concatenate %556, %560, %564, %568, %571, %575, %579, %583, %587 in 0 : vector<32x128xf32>, vector<32x128xf32>, vector<32x128xf32>, vector<32x128xf32>, vector<32x128xf32>, vector<32x128xf32>, vector<32x128xf32>, vector<32x128xf32>, vector<32x128xf32> -> vector<288x128xf32>
    %589 = arith.truncf %588 : vector<288x128xf32> to vector<288x128xbf16>
    %c0_399 = arith.constant 0 : index
    %c0_400 = arith.constant 0 : index
    %590 = vector.load %arg35[%c0_399, %c0_400] : memref<16x288xbf16, #tpu.memory_space<vmem>>, vector<16x288xbf16>
    %cst_401 = arith.constant dense<0.000000e+00> : vector<16x128xf32>
    %591 = tpu.matmul %590, %589, %cst_401 {dimension_numbers = #tpu.dot_dimension_numbers<[1], [0], [0], [1], [0, 0, 1, 1], [], []>} : vector<16x288xbf16>, vector<288x128xbf16>, vector<16x128xf32> -> vector<16x128xf32>
    %c0_402 = arith.constant 0 : index
    %c0_403 = arith.constant 0 : index
    %592 = vector.load %arg36[%c0_402, %c0_403] : memref<16x1xf32, #tpu.memory_space<vmem>>, vector<16x1xf32>
    %593 = vector.broadcast %592 : vector<16x1xf32> to vector<16x128xf32>
    %594 = arith.addf %591, %593 : vector<16x128xf32>
    %cst_404 = arith.constant 0.000000e+00 : f32
    %595 = vector.broadcast %cst_404 : f32 to vector<16x128xf32>
    %596 = arith.maximumf %594, %595 : vector<16x128xf32>
    %c9_i32_405 = arith.constant 9 : i32
    %597 = tpu.dynamic_rotate %596 by %c9_i32_405 dim 1 : vector<16x128xf32>, i32 -> vector<16x128xf32>
    %c0_406 = arith.constant 0 : index
    %c0_407 = arith.constant 0 : index
    %598 = vector.load %arg3[%c0_406, %c0_407] : memref<9x128xf32, #tpu.memory_space<vmem>>, vector<1x128xf32>
    %599 = vector.broadcast %598 : vector<1x128xf32> to vector<16x128xf32>
    %600 = arith.mulf %597, %599 : vector<16x128xf32>
    %c8_i32_408 = arith.constant 8 : i32
    %601 = tpu.dynamic_rotate %596 by %c8_i32_408 dim 1 : vector<16x128xf32>, i32 -> vector<16x128xf32>
    %c1_409 = arith.constant 1 : index
    %c0_410 = arith.constant 0 : index
    %602 = vector.load %arg3[%c1_409, %c0_410] : memref<9x128xf32, #tpu.memory_space<vmem>>, vector<1x128xf32>
    %603 = vector.broadcast %602 : vector<1x128xf32> to vector<16x128xf32>
    %604 = arith.mulf %601, %603 : vector<16x128xf32>
    %c7_i32_411 = arith.constant 7 : i32
    %605 = tpu.dynamic_rotate %596 by %c7_i32_411 dim 1 : vector<16x128xf32>, i32 -> vector<16x128xf32>
    %c2_412 = arith.constant 2 : index
    %c0_413 = arith.constant 0 : index
    %606 = vector.load %arg3[%c2_412, %c0_413] : memref<9x128xf32, #tpu.memory_space<vmem>>, vector<1x128xf32>
    %607 = vector.broadcast %606 : vector<1x128xf32> to vector<16x128xf32>
    %608 = arith.mulf %605, %607 : vector<16x128xf32>
    %c1_i32_414 = arith.constant 1 : i32
    %609 = tpu.dynamic_rotate %596 by %c1_i32_414 dim 1 : vector<16x128xf32>, i32 -> vector<16x128xf32>
    %c3_415 = arith.constant 3 : index
    %c0_416 = arith.constant 0 : index
    %610 = vector.load %arg3[%c3_415, %c0_416] : memref<9x128xf32, #tpu.memory_space<vmem>>, vector<1x128xf32>
    %611 = vector.broadcast %610 : vector<1x128xf32> to vector<16x128xf32>
    %612 = arith.mulf %609, %611 : vector<16x128xf32>
    %c4_417 = arith.constant 4 : index
    %c0_418 = arith.constant 0 : index
    %613 = vector.load %arg3[%c4_417, %c0_418] : memref<9x128xf32, #tpu.memory_space<vmem>>, vector<1x128xf32>
    %614 = vector.broadcast %613 : vector<1x128xf32> to vector<16x128xf32>
    %615 = arith.mulf %596, %614 : vector<16x128xf32>
    %c127_i32_419 = arith.constant 127 : i32
    %616 = tpu.dynamic_rotate %596 by %c127_i32_419 dim 1 : vector<16x128xf32>, i32 -> vector<16x128xf32>
    %c5_420 = arith.constant 5 : index
    %c0_421 = arith.constant 0 : index
    %617 = vector.load %arg3[%c5_420, %c0_421] : memref<9x128xf32, #tpu.memory_space<vmem>>, vector<1x128xf32>
    %618 = vector.broadcast %617 : vector<1x128xf32> to vector<16x128xf32>
    %619 = arith.mulf %616, %618 : vector<16x128xf32>
    %c121_i32_422 = arith.constant 121 : i32
    %620 = tpu.dynamic_rotate %596 by %c121_i32_422 dim 1 : vector<16x128xf32>, i32 -> vector<16x128xf32>
    %c6_423 = arith.constant 6 : index
    %c0_424 = arith.constant 0 : index
    %621 = vector.load %arg3[%c6_423, %c0_424] : memref<9x128xf32, #tpu.memory_space<vmem>>, vector<1x128xf32>
    %622 = vector.broadcast %621 : vector<1x128xf32> to vector<16x128xf32>
    %623 = arith.mulf %620, %622 : vector<16x128xf32>
    %c120_i32_425 = arith.constant 120 : i32
    %624 = tpu.dynamic_rotate %596 by %c120_i32_425 dim 1 : vector<16x128xf32>, i32 -> vector<16x128xf32>
    %c7_426 = arith.constant 7 : index
    %c0_427 = arith.constant 0 : index
    %625 = vector.load %arg3[%c7_426, %c0_427] : memref<9x128xf32, #tpu.memory_space<vmem>>, vector<1x128xf32>
    %626 = vector.broadcast %625 : vector<1x128xf32> to vector<16x128xf32>
    %627 = arith.mulf %624, %626 : vector<16x128xf32>
    %c119_i32_428 = arith.constant 119 : i32
    %628 = tpu.dynamic_rotate %596 by %c119_i32_428 dim 1 : vector<16x128xf32>, i32 -> vector<16x128xf32>
    %c8_429 = arith.constant 8 : index
    %c0_430 = arith.constant 0 : index
    %629 = vector.load %arg3[%c8_429, %c0_430] : memref<9x128xf32, #tpu.memory_space<vmem>>, vector<1x128xf32>
    %630 = vector.broadcast %629 : vector<1x128xf32> to vector<16x128xf32>
    %631 = arith.mulf %628, %630 : vector<16x128xf32>
    %632 = tpu.concatenate %600, %604, %608, %612, %615, %619, %623, %627, %631 in 0 : vector<16x128xf32>, vector<16x128xf32>, vector<16x128xf32>, vector<16x128xf32>, vector<16x128xf32>, vector<16x128xf32>, vector<16x128xf32>, vector<16x128xf32>, vector<16x128xf32> -> vector<144x128xf32>
    %633 = arith.truncf %632 : vector<144x128xf32> to vector<144x128xbf16>
    %c0_431 = arith.constant 0 : index
    %c0_432 = arith.constant 0 : index
    %634 = vector.load %arg37[%c0_431, %c0_432] : memref<16x144xbf16, #tpu.memory_space<vmem>>, vector<16x144xbf16>
    %cst_433 = arith.constant dense<0.000000e+00> : vector<16x128xf32>
    %635 = tpu.matmul %634, %633, %cst_433 {dimension_numbers = #tpu.dot_dimension_numbers<[1], [0], [0], [1], [0, 0, 1, 1], [], []>} : vector<16x144xbf16>, vector<144x128xbf16>, vector<16x128xf32> -> vector<16x128xf32>
    %c0_434 = arith.constant 0 : index
    %c0_435 = arith.constant 0 : index
    %636 = vector.load %arg38[%c0_434, %c0_435] : memref<16x1xf32, #tpu.memory_space<vmem>>, vector<16x1xf32>
    %637 = vector.broadcast %636 : vector<16x1xf32> to vector<16x128xf32>
    %638 = arith.addf %635, %637 : vector<16x128xf32>
    %cst_436 = arith.constant 0.000000e+00 : f32
    %639 = vector.broadcast %cst_436 : f32 to vector<16x128xf32>
    %640 = arith.maximumf %638, %639 : vector<16x128xf32>
    %641 = arith.truncf %640 : vector<16x128xf32> to vector<16x128xbf16>
    %c0_437 = arith.constant 0 : index
    %c0_438 = arith.constant 0 : index
    %642 = vector.load %arg39[%c0_437, %c0_438] : memref<128x256xbf16, #tpu.memory_space<vmem>>, vector<128x256xbf16>
    %cst_439 = arith.constant dense<0.000000e+00> : vector<16x256xf32>
    %643 = tpu.matmul %641, %642, %cst_439 {dimension_numbers = #tpu.dot_dimension_numbers<[1], [0], [0], [1], [0, 0, 1, 1], [], []>} : vector<16x128xbf16>, vector<128x256xbf16>, vector<16x256xf32> -> vector<16x256xf32>
    %c17_i32_440 = arith.constant 17 : i32
    %644 = tpu.dynamic_rotate %643 by %c17_i32_440 dim 1 : vector<16x256xf32>, i32 -> vector<16x256xf32>
    %c0_441 = arith.constant 0 : index
    %c0_442 = arith.constant 0 : index
    %645 = vector.load %arg2[%c0_441, %c0_442] : memref<9x256xf32, #tpu.memory_space<vmem>>, vector<1x256xf32>
    %646 = vector.broadcast %645 : vector<1x256xf32> to vector<16x256xf32>
    %647 = arith.mulf %644, %646 : vector<16x256xf32>
    %c16_i32_443 = arith.constant 16 : i32
    %648 = tpu.dynamic_rotate %643 by %c16_i32_443 dim 1 : vector<16x256xf32>, i32 -> vector<16x256xf32>
    %c1_444 = arith.constant 1 : index
    %c0_445 = arith.constant 0 : index
    %649 = vector.load %arg2[%c1_444, %c0_445] : memref<9x256xf32, #tpu.memory_space<vmem>>, vector<1x256xf32>
    %650 = vector.broadcast %649 : vector<1x256xf32> to vector<16x256xf32>
    %651 = arith.mulf %648, %650 : vector<16x256xf32>
    %c15_i32_446 = arith.constant 15 : i32
    %652 = tpu.dynamic_rotate %643 by %c15_i32_446 dim 1 : vector<16x256xf32>, i32 -> vector<16x256xf32>
    %c2_447 = arith.constant 2 : index
    %c0_448 = arith.constant 0 : index
    %653 = vector.load %arg2[%c2_447, %c0_448] : memref<9x256xf32, #tpu.memory_space<vmem>>, vector<1x256xf32>
    %654 = vector.broadcast %653 : vector<1x256xf32> to vector<16x256xf32>
    %655 = arith.mulf %652, %654 : vector<16x256xf32>
    %c1_i32_449 = arith.constant 1 : i32
    %656 = tpu.dynamic_rotate %643 by %c1_i32_449 dim 1 : vector<16x256xf32>, i32 -> vector<16x256xf32>
    %c3_450 = arith.constant 3 : index
    %c0_451 = arith.constant 0 : index
    %657 = vector.load %arg2[%c3_450, %c0_451] : memref<9x256xf32, #tpu.memory_space<vmem>>, vector<1x256xf32>
    %658 = vector.broadcast %657 : vector<1x256xf32> to vector<16x256xf32>
    %659 = arith.mulf %656, %658 : vector<16x256xf32>
    %c4_452 = arith.constant 4 : index
    %c0_453 = arith.constant 0 : index
    %660 = vector.load %arg2[%c4_452, %c0_453] : memref<9x256xf32, #tpu.memory_space<vmem>>, vector<1x256xf32>
    %661 = vector.broadcast %660 : vector<1x256xf32> to vector<16x256xf32>
    %662 = arith.mulf %643, %661 : vector<16x256xf32>
    %c255_i32_454 = arith.constant 255 : i32
    %663 = tpu.dynamic_rotate %643 by %c255_i32_454 dim 1 : vector<16x256xf32>, i32 -> vector<16x256xf32>
    %c5_455 = arith.constant 5 : index
    %c0_456 = arith.constant 0 : index
    %664 = vector.load %arg2[%c5_455, %c0_456] : memref<9x256xf32, #tpu.memory_space<vmem>>, vector<1x256xf32>
    %665 = vector.broadcast %664 : vector<1x256xf32> to vector<16x256xf32>
    %666 = arith.mulf %663, %665 : vector<16x256xf32>
    %c241_i32_457 = arith.constant 241 : i32
    %667 = tpu.dynamic_rotate %643 by %c241_i32_457 dim 1 : vector<16x256xf32>, i32 -> vector<16x256xf32>
    %c6_458 = arith.constant 6 : index
    %c0_459 = arith.constant 0 : index
    %668 = vector.load %arg2[%c6_458, %c0_459] : memref<9x256xf32, #tpu.memory_space<vmem>>, vector<1x256xf32>
    %669 = vector.broadcast %668 : vector<1x256xf32> to vector<16x256xf32>
    %670 = arith.mulf %667, %669 : vector<16x256xf32>
    %c240_i32_460 = arith.constant 240 : i32
    %671 = tpu.dynamic_rotate %643 by %c240_i32_460 dim 1 : vector<16x256xf32>, i32 -> vector<16x256xf32>
    %c7_461 = arith.constant 7 : index
    %c0_462 = arith.constant 0 : index
    %672 = vector.load %arg2[%c7_461, %c0_462] : memref<9x256xf32, #tpu.memory_space<vmem>>, vector<1x256xf32>
    %673 = vector.broadcast %672 : vector<1x256xf32> to vector<16x256xf32>
    %674 = arith.mulf %671, %673 : vector<16x256xf32>
    %c239_i32_463 = arith.constant 239 : i32
    %675 = tpu.dynamic_rotate %643 by %c239_i32_463 dim 1 : vector<16x256xf32>, i32 -> vector<16x256xf32>
    %c8_464 = arith.constant 8 : index
    %c0_465 = arith.constant 0 : index
    %676 = vector.load %arg2[%c8_464, %c0_465] : memref<9x256xf32, #tpu.memory_space<vmem>>, vector<1x256xf32>
    %677 = vector.broadcast %676 : vector<1x256xf32> to vector<16x256xf32>
    %678 = arith.mulf %675, %677 : vector<16x256xf32>
    %679 = tpu.concatenate %647, %651, %655, %659, %662, %666, %670, %674, %678 in 0 : vector<16x256xf32>, vector<16x256xf32>, vector<16x256xf32>, vector<16x256xf32>, vector<16x256xf32>, vector<16x256xf32>, vector<16x256xf32>, vector<16x256xf32>, vector<16x256xf32> -> vector<144x256xf32>
    %680 = arith.truncf %679 : vector<144x256xf32> to vector<144x256xbf16>
    %c0_466 = arith.constant 0 : index
    %c0_467 = arith.constant 0 : index
    %681 = vector.load %arg40[%c0_466, %c0_467] : memref<16x144xbf16, #tpu.memory_space<vmem>>, vector<16x144xbf16>
    %cst_468 = arith.constant dense<0.000000e+00> : vector<16x256xf32>
    %682 = tpu.matmul %681, %680, %cst_468 {dimension_numbers = #tpu.dot_dimension_numbers<[1], [0], [0], [1], [0, 0, 1, 1], [], []>} : vector<16x144xbf16>, vector<144x256xbf16>, vector<16x256xf32> -> vector<16x256xf32>
    %c0_469 = arith.constant 0 : index
    %c0_470 = arith.constant 0 : index
    %683 = vector.load %arg41[%c0_469, %c0_470] : memref<16x1xf32, #tpu.memory_space<vmem>>, vector<16x1xf32>
    %684 = vector.broadcast %683 : vector<16x1xf32> to vector<16x256xf32>
    %685 = arith.addf %682, %684 : vector<16x256xf32>
    %c17_i32_471 = arith.constant 17 : i32
    %686 = tpu.dynamic_rotate %685 by %c17_i32_471 dim 1 : vector<16x256xf32>, i32 -> vector<16x256xf32>
    %c0_472 = arith.constant 0 : index
    %c0_473 = arith.constant 0 : index
    %687 = vector.load %arg2[%c0_472, %c0_473] : memref<9x256xf32, #tpu.memory_space<vmem>>, vector<1x256xf32>
    %688 = vector.broadcast %687 : vector<1x256xf32> to vector<16x256xf32>
    %689 = arith.mulf %686, %688 : vector<16x256xf32>
    %c16_i32_474 = arith.constant 16 : i32
    %690 = tpu.dynamic_rotate %685 by %c16_i32_474 dim 1 : vector<16x256xf32>, i32 -> vector<16x256xf32>
    %c1_475 = arith.constant 1 : index
    %c0_476 = arith.constant 0 : index
    %691 = vector.load %arg2[%c1_475, %c0_476] : memref<9x256xf32, #tpu.memory_space<vmem>>, vector<1x256xf32>
    %692 = vector.broadcast %691 : vector<1x256xf32> to vector<16x256xf32>
    %693 = arith.mulf %690, %692 : vector<16x256xf32>
    %c15_i32_477 = arith.constant 15 : i32
    %694 = tpu.dynamic_rotate %685 by %c15_i32_477 dim 1 : vector<16x256xf32>, i32 -> vector<16x256xf32>
    %c2_478 = arith.constant 2 : index
    %c0_479 = arith.constant 0 : index
    %695 = vector.load %arg2[%c2_478, %c0_479] : memref<9x256xf32, #tpu.memory_space<vmem>>, vector<1x256xf32>
    %696 = vector.broadcast %695 : vector<1x256xf32> to vector<16x256xf32>
    %697 = arith.mulf %694, %696 : vector<16x256xf32>
    %c1_i32_480 = arith.constant 1 : i32
    %698 = tpu.dynamic_rotate %685 by %c1_i32_480 dim 1 : vector<16x256xf32>, i32 -> vector<16x256xf32>
    %c3_481 = arith.constant 3 : index
    %c0_482 = arith.constant 0 : index
    %699 = vector.load %arg2[%c3_481, %c0_482] : memref<9x256xf32, #tpu.memory_space<vmem>>, vector<1x256xf32>
    %700 = vector.broadcast %699 : vector<1x256xf32> to vector<16x256xf32>
    %701 = arith.mulf %698, %700 : vector<16x256xf32>
    %c4_483 = arith.constant 4 : index
    %c0_484 = arith.constant 0 : index
    %702 = vector.load %arg2[%c4_483, %c0_484] : memref<9x256xf32, #tpu.memory_space<vmem>>, vector<1x256xf32>
    %703 = vector.broadcast %702 : vector<1x256xf32> to vector<16x256xf32>
    %704 = arith.mulf %685, %703 : vector<16x256xf32>
    %c255_i32_485 = arith.constant 255 : i32
    %705 = tpu.dynamic_rotate %685 by %c255_i32_485 dim 1 : vector<16x256xf32>, i32 -> vector<16x256xf32>
    %c5_486 = arith.constant 5 : index
    %c0_487 = arith.constant 0 : index
    %706 = vector.load %arg2[%c5_486, %c0_487] : memref<9x256xf32, #tpu.memory_space<vmem>>, vector<1x256xf32>
    %707 = vector.broadcast %706 : vector<1x256xf32> to vector<16x256xf32>
    %708 = arith.mulf %705, %707 : vector<16x256xf32>
    %c241_i32_488 = arith.constant 241 : i32
    %709 = tpu.dynamic_rotate %685 by %c241_i32_488 dim 1 : vector<16x256xf32>, i32 -> vector<16x256xf32>
    %c6_489 = arith.constant 6 : index
    %c0_490 = arith.constant 0 : index
    %710 = vector.load %arg2[%c6_489, %c0_490] : memref<9x256xf32, #tpu.memory_space<vmem>>, vector<1x256xf32>
    %711 = vector.broadcast %710 : vector<1x256xf32> to vector<16x256xf32>
    %712 = arith.mulf %709, %711 : vector<16x256xf32>
    %c240_i32_491 = arith.constant 240 : i32
    %713 = tpu.dynamic_rotate %685 by %c240_i32_491 dim 1 : vector<16x256xf32>, i32 -> vector<16x256xf32>
    %c7_492 = arith.constant 7 : index
    %c0_493 = arith.constant 0 : index
    %714 = vector.load %arg2[%c7_492, %c0_493] : memref<9x256xf32, #tpu.memory_space<vmem>>, vector<1x256xf32>
    %715 = vector.broadcast %714 : vector<1x256xf32> to vector<16x256xf32>
    %716 = arith.mulf %713, %715 : vector<16x256xf32>
    %c239_i32_494 = arith.constant 239 : i32
    %717 = tpu.dynamic_rotate %685 by %c239_i32_494 dim 1 : vector<16x256xf32>, i32 -> vector<16x256xf32>
    %c8_495 = arith.constant 8 : index
    %c0_496 = arith.constant 0 : index
    %718 = vector.load %arg2[%c8_495, %c0_496] : memref<9x256xf32, #tpu.memory_space<vmem>>, vector<1x256xf32>
    %719 = vector.broadcast %718 : vector<1x256xf32> to vector<16x256xf32>
    %720 = arith.mulf %717, %719 : vector<16x256xf32>
    %721 = tpu.concatenate %689, %693, %697, %701, %704, %708, %712, %716, %720 in 0 : vector<16x256xf32>, vector<16x256xf32>, vector<16x256xf32>, vector<16x256xf32>, vector<16x256xf32>, vector<16x256xf32>, vector<16x256xf32>, vector<16x256xf32>, vector<16x256xf32> -> vector<144x256xf32>
    %722 = arith.truncf %721 : vector<144x256xf32> to vector<144x256xbf16>
    %c0_497 = arith.constant 0 : index
    %c0_498 = arith.constant 0 : index
    %723 = vector.load %arg42[%c0_497, %c0_498] : memref<8x144xbf16, #tpu.memory_space<vmem>>, vector<8x144xbf16>
    %cst_499 = arith.constant dense<0.000000e+00> : vector<8x256xf32>
    %724 = tpu.matmul %723, %722, %cst_499 {dimension_numbers = #tpu.dot_dimension_numbers<[1], [0], [0], [1], [0, 0, 1, 1], [], []>} : vector<8x144xbf16>, vector<144x256xbf16>, vector<8x256xf32> -> vector<8x256xf32>
    %c0_500 = arith.constant 0 : index
    %c0_501 = arith.constant 0 : index
    %725 = vector.load %arg43[%c0_500, %c0_501] : memref<8x1xf32, #tpu.memory_space<vmem>>, vector<8x1xf32>
    %726 = vector.broadcast %725 : vector<8x1xf32> to vector<8x256xf32>
    %727 = arith.addf %724, %726 : vector<8x256xf32>
    %cst_502 = arith.constant 0.000000e+00 : f32
    %728 = vector.broadcast %cst_502 : f32 to vector<8x256xf32>
    %729 = arith.maximumf %727, %728 : vector<8x256xf32>
    %c17_i32_503 = arith.constant 17 : i32
    %730 = tpu.dynamic_rotate %729 by %c17_i32_503 dim 1 : vector<8x256xf32>, i32 -> vector<8x256xf32>
    %c0_504 = arith.constant 0 : index
    %c0_505 = arith.constant 0 : index
    %731 = vector.load %arg2[%c0_504, %c0_505] : memref<9x256xf32, #tpu.memory_space<vmem>>, vector<1x256xf32>
    %732 = vector.broadcast %731 : vector<1x256xf32> to vector<8x256xf32>
    %733 = arith.mulf %730, %732 : vector<8x256xf32>
    %c16_i32_506 = arith.constant 16 : i32
    %734 = tpu.dynamic_rotate %729 by %c16_i32_506 dim 1 : vector<8x256xf32>, i32 -> vector<8x256xf32>
    %c1_507 = arith.constant 1 : index
    %c0_508 = arith.constant 0 : index
    %735 = vector.load %arg2[%c1_507, %c0_508] : memref<9x256xf32, #tpu.memory_space<vmem>>, vector<1x256xf32>
    %736 = vector.broadcast %735 : vector<1x256xf32> to vector<8x256xf32>
    %737 = arith.mulf %734, %736 : vector<8x256xf32>
    %c15_i32_509 = arith.constant 15 : i32
    %738 = tpu.dynamic_rotate %729 by %c15_i32_509 dim 1 : vector<8x256xf32>, i32 -> vector<8x256xf32>
    %c2_510 = arith.constant 2 : index
    %c0_511 = arith.constant 0 : index
    %739 = vector.load %arg2[%c2_510, %c0_511] : memref<9x256xf32, #tpu.memory_space<vmem>>, vector<1x256xf32>
    %740 = vector.broadcast %739 : vector<1x256xf32> to vector<8x256xf32>
    %741 = arith.mulf %738, %740 : vector<8x256xf32>
    %c1_i32_512 = arith.constant 1 : i32
    %742 = tpu.dynamic_rotate %729 by %c1_i32_512 dim 1 : vector<8x256xf32>, i32 -> vector<8x256xf32>
    %c3_513 = arith.constant 3 : index
    %c0_514 = arith.constant 0 : index
    %743 = vector.load %arg2[%c3_513, %c0_514] : memref<9x256xf32, #tpu.memory_space<vmem>>, vector<1x256xf32>
    %744 = vector.broadcast %743 : vector<1x256xf32> to vector<8x256xf32>
    %745 = arith.mulf %742, %744 : vector<8x256xf32>
    %c4_515 = arith.constant 4 : index
    %c0_516 = arith.constant 0 : index
    %746 = vector.load %arg2[%c4_515, %c0_516] : memref<9x256xf32, #tpu.memory_space<vmem>>, vector<1x256xf32>
    %747 = vector.broadcast %746 : vector<1x256xf32> to vector<8x256xf32>
    %748 = arith.mulf %729, %747 : vector<8x256xf32>
    %c255_i32_517 = arith.constant 255 : i32
    %749 = tpu.dynamic_rotate %729 by %c255_i32_517 dim 1 : vector<8x256xf32>, i32 -> vector<8x256xf32>
    %c5_518 = arith.constant 5 : index
    %c0_519 = arith.constant 0 : index
    %750 = vector.load %arg2[%c5_518, %c0_519] : memref<9x256xf32, #tpu.memory_space<vmem>>, vector<1x256xf32>
    %751 = vector.broadcast %750 : vector<1x256xf32> to vector<8x256xf32>
    %752 = arith.mulf %749, %751 : vector<8x256xf32>
    %c241_i32_520 = arith.constant 241 : i32
    %753 = tpu.dynamic_rotate %729 by %c241_i32_520 dim 1 : vector<8x256xf32>, i32 -> vector<8x256xf32>
    %c6_521 = arith.constant 6 : index
    %c0_522 = arith.constant 0 : index
    %754 = vector.load %arg2[%c6_521, %c0_522] : memref<9x256xf32, #tpu.memory_space<vmem>>, vector<1x256xf32>
    %755 = vector.broadcast %754 : vector<1x256xf32> to vector<8x256xf32>
    %756 = arith.mulf %753, %755 : vector<8x256xf32>
    %c240_i32_523 = arith.constant 240 : i32
    %757 = tpu.dynamic_rotate %729 by %c240_i32_523 dim 1 : vector<8x256xf32>, i32 -> vector<8x256xf32>
    %c7_524 = arith.constant 7 : index
    %c0_525 = arith.constant 0 : index
    %758 = vector.load %arg2[%c7_524, %c0_525] : memref<9x256xf32, #tpu.memory_space<vmem>>, vector<1x256xf32>
    %759 = vector.broadcast %758 : vector<1x256xf32> to vector<8x256xf32>
    %760 = arith.mulf %757, %759 : vector<8x256xf32>
    %c239_i32_526 = arith.constant 239 : i32
    %761 = tpu.dynamic_rotate %729 by %c239_i32_526 dim 1 : vector<8x256xf32>, i32 -> vector<8x256xf32>
    %c8_527 = arith.constant 8 : index
    %c0_528 = arith.constant 0 : index
    %762 = vector.load %arg2[%c8_527, %c0_528] : memref<9x256xf32, #tpu.memory_space<vmem>>, vector<1x256xf32>
    %763 = vector.broadcast %762 : vector<1x256xf32> to vector<8x256xf32>
    %764 = arith.mulf %761, %763 : vector<8x256xf32>
    %765 = tpu.concatenate %733, %737, %741, %745, %748, %752, %756, %760, %764 in 0 : vector<8x256xf32>, vector<8x256xf32>, vector<8x256xf32>, vector<8x256xf32>, vector<8x256xf32>, vector<8x256xf32>, vector<8x256xf32>, vector<8x256xf32>, vector<8x256xf32> -> vector<72x256xf32>
    %766 = arith.truncf %765 : vector<72x256xf32> to vector<72x256xbf16>
    %c0_529 = arith.constant 0 : index
    %c0_530 = arith.constant 0 : index
    %767 = vector.load %arg44[%c0_529, %c0_530] : memref<8x72xbf16, #tpu.memory_space<vmem>>, vector<8x72xbf16>
    %cst_531 = arith.constant dense<0.000000e+00> : vector<8x256xf32>
    %768 = tpu.matmul %767, %766, %cst_531 {dimension_numbers = #tpu.dot_dimension_numbers<[1], [0], [0], [1], [0, 0, 1, 1], [], []>} : vector<8x72xbf16>, vector<72x256xbf16>, vector<8x256xf32> -> vector<8x256xf32>
    %c0_532 = arith.constant 0 : index
    %c0_533 = arith.constant 0 : index
    %769 = vector.load %arg45[%c0_532, %c0_533] : memref<8x1xf32, #tpu.memory_space<vmem>>, vector<8x1xf32>
    %770 = vector.broadcast %769 : vector<8x1xf32> to vector<8x256xf32>
    %771 = arith.addf %768, %770 : vector<8x256xf32>
    %cst_534 = arith.constant 0.000000e+00 : f32
    %772 = vector.broadcast %cst_534 : f32 to vector<8x256xf32>
    %773 = arith.maximumf %771, %772 : vector<8x256xf32>
    %c0_535 = arith.constant 0 : index
    %c0_536 = arith.constant 0 : index
    %774 = vector.load %arg46[%c0_535, %c0_536] : memref<3x8xbf16, #tpu.memory_space<vmem>>, vector<3x8xbf16>
    %775 = arith.truncf %773 : vector<8x256xf32> to vector<8x256xbf16>
    %cst_537 = arith.constant dense<0.000000e+00> : vector<3x256xf32>
    %776 = tpu.matmul %774, %775, %cst_537 {dimension_numbers = #tpu.dot_dimension_numbers<[1], [0], [0], [1], [0, 0, 1, 1], [], []>} : vector<3x8xbf16>, vector<8x256xbf16>, vector<3x256xf32> -> vector<3x256xf32>
    %c0_538 = arith.constant 0 : index
    %c0_539 = arith.constant 0 : index
    %777 = vector.load %arg47[%c0_538, %c0_539] : memref<3x1xf32, #tpu.memory_space<vmem>>, vector<3x1xf32>
    %778 = vector.broadcast %777 : vector<3x1xf32> to vector<3x256xf32>
    %779 = arith.addf %776, %778 : vector<3x256xf32>
    %c0_540 = arith.constant 0 : index
    %c0_541 = arith.constant 0 : index
    %c0_542 = arith.constant 0 : index
    %780 = vector.load %arg48[%c0_540, %c0_541, %c0_542] : memref<1x3x256xf32, #tpu.memory_space<vmem>>, vector<1x3x256xf32>
    %781 = vector.shape_cast %780 : vector<1x3x256xf32> to vector<3x256xf32>
    %782 = vector.shape_cast %779 : vector<3x256xf32> to vector<1x3x256xf32>
    tpu.vector_store %arg48[%c0_540, %c0_541, %c0_542], %782 {strides = array<i32>} : memref<1x3x256xf32, #tpu.memory_space<vmem>>, vector<1x3x256xf32>,
    return
  }
  func.func @transform_0(%arg0: i32) -> (i32, i32, i32) {
    %c0_i32 = arith.constant 0 : i32
    %c0_i32_0 = arith.constant 0 : i32
    %c0_i32_1 = arith.constant 0 : i32
    return %arg0, %c0_i32, %c0_i32_0 : i32, i32, i32
  }
  func.func @transform_1(%arg0: i32) -> (i32, i32) {
    %c0_i32 = arith.constant 0 : i32
    %c0_i32_0 = arith.constant 0 : i32
    %c0_i32_1 = arith.constant 0 : i32
    return %c0_i32, %c0_i32_0 : i32, i32
  }
  func.func @transform_2(%arg0: i32) -> (i32, i32) {
    %c0_i32 = arith.constant 0 : i32
    %c0_i32_0 = arith.constant 0 : i32
    %c0_i32_1 = arith.constant 0 : i32
    return %c0_i32, %c0_i32_0 : i32, i32
  }
  func.func @transform_3(%arg0: i32) -> (i32, i32) {
    %c0_i32 = arith.constant 0 : i32
    %c0_i32_0 = arith.constant 0 : i32
    %c0_i32_1 = arith.constant 0 : i32
    return %c0_i32, %c0_i32_0 : i32, i32
  }
  func.func @transform_4(%arg0: i32) -> (i32, i32) {
    %c0_i32 = arith.constant 0 : i32
    %c0_i32_0 = arith.constant 0 : i32
    %c0_i32_1 = arith.constant 0 : i32
    return %c0_i32, %c0_i32_0 : i32, i32
  }
  func.func @transform_5(%arg0: i32) -> (i32, i32) {
    %c0_i32 = arith.constant 0 : i32
    %c0_i32_0 = arith.constant 0 : i32
    %c0_i32_1 = arith.constant 0 : i32
    return %c0_i32, %c0_i32_0 : i32, i32
  }
  func.func @transform_6(%arg0: i32) -> (i32, i32) {
    %c0_i32 = arith.constant 0 : i32
    %c0_i32_0 = arith.constant 0 : i32
    %c0_i32_1 = arith.constant 0 : i32
    return %c0_i32, %c0_i32_0 : i32, i32
  }
  func.func @transform_7(%arg0: i32) -> (i32, i32) {
    %c0_i32 = arith.constant 0 : i32
    %c0_i32_0 = arith.constant 0 : i32
    %c0_i32_1 = arith.constant 0 : i32
    return %c0_i32, %c0_i32_0 : i32, i32
  }
  func.func @transform_8(%arg0: i32) -> (i32, i32) {
    %c0_i32 = arith.constant 0 : i32
    %c0_i32_0 = arith.constant 0 : i32
    %c0_i32_1 = arith.constant 0 : i32
    return %c0_i32, %c0_i32_0 : i32, i32
  }
  func.func @transform_9(%arg0: i32) -> (i32, i32) {
    %c0_i32 = arith.constant 0 : i32
    %c0_i32_0 = arith.constant 0 : i32
    %c0_i32_1 = arith.constant 0 : i32
    return %c0_i32, %c0_i32_0 : i32, i32
  }
  func.func @transform_10(%arg0: i32) -> (i32, i32) {
    %c0_i32 = arith.constant 0 : i32
    %c0_i32_0 = arith.constant 0 : i32
    %c0_i32_1 = arith.constant 0 : i32
    return %c0_i32, %c0_i32_0 : i32, i32
  }
  func.func @transform_11(%arg0: i32) -> (i32, i32) {
    %c0_i32 = arith.constant 0 : i32
    %c0_i32_0 = arith.constant 0 : i32
    %c0_i32_1 = arith.constant 0 : i32
    return %c0_i32, %c0_i32_0 : i32, i32
  }
  func.func @transform_12(%arg0: i32) -> (i32, i32) {
    %c0_i32 = arith.constant 0 : i32
    %c0_i32_0 = arith.constant 0 : i32
    %c0_i32_1 = arith.constant 0 : i32
    return %c0_i32, %c0_i32_0 : i32, i32
  }
  func.func @transform_13(%arg0: i32) -> (i32, i32) {
    %c0_i32 = arith.constant 0 : i32
    %c0_i32_0 = arith.constant 0 : i32
    %c0_i32_1 = arith.constant 0 : i32
    return %c0_i32, %c0_i32_0 : i32, i32
  }
  func.func @transform_14(%arg0: i32) -> (i32, i32) {
    %c0_i32 = arith.constant 0 : i32
    %c0_i32_0 = arith.constant 0 : i32
    %c0_i32_1 = arith.constant 0 : i32
    return %c0_i32, %c0_i32_0 : i32, i32
  }
  func.func @transform_15(%arg0: i32) -> (i32, i32) {
    %c0_i32 = arith.constant 0 : i32
    %c0_i32_0 = arith.constant 0 : i32
    %c0_i32_1 = arith.constant 0 : i32
    return %c0_i32, %c0_i32_0 : i32, i32
  }
  func.func @transform_16(%arg0: i32) -> (i32, i32) {
    %c0_i32 = arith.constant 0 : i32
    %c0_i32_0 = arith.constant 0 : i32
    %c0_i32_1 = arith.constant 0 : i32
    return %c0_i32, %c0_i32_0 : i32, i32
  }
  func.func @transform_17(%arg0: i32) -> (i32, i32) {
    %c0_i32 = arith.constant 0 : i32
    %c0_i32_0 = arith.constant 0 : i32
    %c0_i32_1 = arith.constant 0 : i32
    return %c0_i32, %c0_i32_0 : i32, i32
  }
  func.func @transform_18(%arg0: i32) -> (i32, i32) {
    %c0_i32 = arith.constant 0 : i32
    %c0_i32_0 = arith.constant 0 : i32
    %c0_i32_1 = arith.constant 0 : i32
    return %c0_i32, %c0_i32_0 : i32, i32
  }
  func.func @transform_19(%arg0: i32) -> (i32, i32) {
    %c0_i32 = arith.constant 0 : i32
    %c0_i32_0 = arith.constant 0 : i32
    %c0_i32_1 = arith.constant 0 : i32
    return %c0_i32, %c0_i32_0 : i32, i32
  }
  func.func @transform_20(%arg0: i32) -> (i32, i32) {
    %c0_i32 = arith.constant 0 : i32
    %c0_i32_0 = arith.constant 0 : i32
    %c0_i32_1 = arith.constant 0 : i32
    return %c0_i32, %c0_i32_0 : i32, i32
  }
  func.func @transform_21(%arg0: i32) -> (i32, i32) {
    %c0_i32 = arith.constant 0 : i32
    %c0_i32_0 = arith.constant 0 : i32
    %c0_i32_1 = arith.constant 0 : i32
    return %c0_i32, %c0_i32_0 : i32, i32
  }
  func.func @transform_22(%arg0: i32) -> (i32, i32) {
    %c0_i32 = arith.constant 0 : i32
    %c0_i32_0 = arith.constant 0 : i32
    %c0_i32_1 = arith.constant 0 : i32
    return %c0_i32, %c0_i32_0 : i32, i32
  }
  func.func @transform_23(%arg0: i32) -> (i32, i32) {
    %c0_i32 = arith.constant 0 : i32
    %c0_i32_0 = arith.constant 0 : i32
    %c0_i32_1 = arith.constant 0 : i32
    return %c0_i32, %c0_i32_0 : i32, i32
  }
  func.func @transform_24(%arg0: i32) -> (i32, i32) {
    %c0_i32 = arith.constant 0 : i32
    %c0_i32_0 = arith.constant 0 : i32
    %c0_i32_1 = arith.constant 0 : i32
    return %c0_i32, %c0_i32_0 : i32, i32
  }
  func.func @transform_25(%arg0: i32) -> (i32, i32) {
    %c0_i32 = arith.constant 0 : i32
    %c0_i32_0 = arith.constant 0 : i32
    %c0_i32_1 = arith.constant 0 : i32
    return %c0_i32, %c0_i32_0 : i32, i32
  }
  func.func @transform_26(%arg0: i32) -> (i32, i32) {
    %c0_i32 = arith.constant 0 : i32
    %c0_i32_0 = arith.constant 0 : i32
    %c0_i32_1 = arith.constant 0 : i32
    return %c0_i32, %c0_i32_0 : i32, i32
  }
  func.func @transform_27(%arg0: i32) -> (i32, i32) {
    %c0_i32 = arith.constant 0 : i32
    %c0_i32_0 = arith.constant 0 : i32
    %c0_i32_1 = arith.constant 0 : i32
    return %c0_i32, %c0_i32_0 : i32, i32
  }
  func.func @transform_28(%arg0: i32) -> (i32, i32) {
    %c0_i32 = arith.constant 0 : i32
    %c0_i32_0 = arith.constant 0 : i32
    %c0_i32_1 = arith.constant 0 : i32
    return %c0_i32, %c0_i32_0 : i32, i32
  }
  func.func @transform_29(%arg0: i32) -> (i32, i32) {
    %c0_i32 = arith.constant 0 : i32
    %c0_i32_0 = arith.constant 0 : i32
    %c0_i32_1 = arith.constant 0 : i32
    return %c0_i32, %c0_i32_0 : i32, i32
  }
  func.func @transform_30(%arg0: i32) -> (i32, i32) {
    %c0_i32 = arith.constant 0 : i32
    %c0_i32_0 = arith.constant 0 : i32
    %c0_i32_1 = arith.constant 0 : i32
    return %c0_i32, %c0_i32_0 : i32, i32
  }
  func.func @transform_31(%arg0: i32) -> (i32, i32) {
    %c0_i32 = arith.constant 0 : i32
    %c0_i32_0 = arith.constant 0 : i32
    %c0_i32_1 = arith.constant 0 : i32
    return %c0_i32, %c0_i32_0 : i32, i32
  }
  func.func @transform_32(%arg0: i32) -> (i32, i32) {
    %c0_i32 = arith.constant 0 : i32
    %c0_i32_0 = arith.constant 0 : i32
    %c0_i32_1 = arith.constant 0 : i32
    return %c0_i32, %c0_i32_0 : i32, i32
  }
  func.func @transform_33(%arg0: i32) -> (i32, i32) {
    %c0_i32 = arith.constant 0 : i32
    %c0_i32_0 = arith.constant 0 : i32
    %c0_i32_1 = arith.constant 0 : i32
    return %c0_i32, %c0_i32_0 : i32, i32
  }
  func.func @transform_34(%arg0: i32) -> (i32, i32) {
    %c0_i32 = arith.constant 0 : i32
    %c0_i32_0 = arith.constant 0 : i32
    %c0_i32_1 = arith.constant 0 : i32
    return %c0_i32, %c0_i32_0 : i32, i32
  }
  func.func @transform_35(%arg0: i32) -> (i32, i32) {
    %c0_i32 = arith.constant 0 : i32
    %c0_i32_0 = arith.constant 0 : i32
    %c0_i32_1 = arith.constant 0 : i32
    return %c0_i32, %c0_i32_0 : i32, i32
  }
  func.func @transform_36(%arg0: i32) -> (i32, i32) {
    %c0_i32 = arith.constant 0 : i32
    %c0_i32_0 = arith.constant 0 : i32
    %c0_i32_1 = arith.constant 0 : i32
    return %c0_i32, %c0_i32_0 : i32, i32
  }
  func.func @transform_37(%arg0: i32) -> (i32, i32) {
    %c0_i32 = arith.constant 0 : i32
    %c0_i32_0 = arith.constant 0 : i32
    %c0_i32_1 = arith.constant 0 : i32
    return %c0_i32, %c0_i32_0 : i32, i32
  }
  func.func @transform_38(%arg0: i32) -> (i32, i32) {
    %c0_i32 = arith.constant 0 : i32
    %c0_i32_0 = arith.constant 0 : i32
    %c0_i32_1 = arith.constant 0 : i32
    return %c0_i32, %c0_i32_0 : i32, i32
  }
  func.func @transform_39(%arg0: i32) -> (i32, i32) {
    %c0_i32 = arith.constant 0 : i32
    %c0_i32_0 = arith.constant 0 : i32
    %c0_i32_1 = arith.constant 0 : i32
    return %c0_i32, %c0_i32_0 : i32, i32
  }
  func.func @transform_40(%arg0: i32) -> (i32, i32) {
    %c0_i32 = arith.constant 0 : i32
    %c0_i32_0 = arith.constant 0 : i32
    %c0_i32_1 = arith.constant 0 : i32
    return %c0_i32, %c0_i32_0 : i32, i32
  }
  func.func @transform_41(%arg0: i32) -> (i32, i32) {
    %c0_i32 = arith.constant 0 : i32
    %c0_i32_0 = arith.constant 0 : i32
    %c0_i32_1 = arith.constant 0 : i32
    return %c0_i32, %c0_i32_0 : i32, i32
  }
  func.func @transform_42(%arg0: i32) -> (i32, i32) {
    %c0_i32 = arith.constant 0 : i32
    %c0_i32_0 = arith.constant 0 : i32
    %c0_i32_1 = arith.constant 0 : i32
    return %c0_i32, %c0_i32_0 : i32, i32
  }
  func.func @transform_43(%arg0: i32) -> (i32, i32) {
    %c0_i32 = arith.constant 0 : i32
    %c0_i32_0 = arith.constant 0 : i32
    %c0_i32_1 = arith.constant 0 : i32
    return %c0_i32, %c0_i32_0 : i32, i32
  }
  func.func @transform_44(%arg0: i32) -> (i32, i32) {
    %c0_i32 = arith.constant 0 : i32
    %c0_i32_0 = arith.constant 0 : i32
    %c0_i32_1 = arith.constant 0 : i32
    return %c0_i32, %c0_i32_0 : i32, i32
  }
  func.func @transform_45(%arg0: i32) -> (i32, i32) {
    %c0_i32 = arith.constant 0 : i32
    %c0_i32_0 = arith.constant 0 : i32
    %c0_i32_1 = arith.constant 0 : i32
    return %c0_i32, %c0_i32_0 : i32, i32
  }
  func.func @transform_46(%arg0: i32) -> (i32, i32) {
    %c0_i32 = arith.constant 0 : i32
    %c0_i32_0 = arith.constant 0 : i32
    %c0_i32_1 = arith.constant 0 : i32
    return %c0_i32, %c0_i32_0 : i32, i32
  }
  func.func @transform_47(%arg0: i32) -> (i32, i32, i32) {
    %c0_i32 = arith.constant 0 : i32
    %c0_i32_0 = arith.constant 0 : i32
    %c0_i32_1 = arith.constant 0 : i32
    return %arg0, %c0_i32, %c0_i32_0 : i32, i32, i32
  }
}

</mosaic_0001>

<llo_original>
// kernel: aemad_forward.1
$region0: #{aemad_forward.1}
  #allocation0 [shape = 'u32[]', space=smem, size = 0x4, offset = 0x4, fixed_abs, tag = 'smem constant byte address 0x4 - core index']
  #allocation1 [shape = 'u32[72,128]{1,0:T(1,128)}', space=vmem, size = 0x9000, scoped, tag = 'internal scratch']
  %s0 = inlined_call_operand.smem [shape: u32[48], index: -1, kind: input, shape index: {}]
  %s1 = sld [smem:[%s0]]
  %s2 = scalar_lea.smem %s0, 1
  %s3 = sld [smem:[%s2]]
  %s4 = scalar_lea.smem %s0, 2
  %s5 = sld [smem:[%s4]]
  %s6 = scalar_lea.smem %s0, 3
  %s7 = sld [smem:[%s6]]
  %s8 = scalar_lea.smem %s0, 4
  %s9 = sld [smem:[%s8]]
  %s10 = scalar_lea.smem %s0, 5
  %s11 = sld [smem:[%s10]]
  %s12 = scalar_lea.smem %s0, 6
  %s13 = sld [smem:[%s12]]
  %s14 = scalar_lea.smem %s0, 7
  %s15 = sld [smem:[%s14]]
  %s16 = scalar_lea.smem %s0, 8
  %s17 = sld [smem:[%s16]]
  %s18 = scalar_lea.smem %s0, 9
  %s19 = sld [smem:[%s18]]
  %s20 = scalar_lea.smem %s0, 10
  %s21 = sld [smem:[%s20]]
  %s22 = scalar_lea.smem %s0, 11
  %s23 = sld [smem:[%s22]]
  %s24 = scalar_lea.smem %s0, 12
  %s25 = sld [smem:[%s24]]
  %s26 = scalar_lea.smem %s0, 13
  %s27 = sld [smem:[%s26]]
  %s28 = scalar_lea.smem %s0, 14
  %s29 = sld [smem:[%s28]]
  %s30 = scalar_lea.smem %s0, 15
  %s31 = sld [smem:[%s30]]
  %s32 = scalar_lea.smem %s0, 16
  %s33 = sld [smem:[%s32]]
  %s34 = scalar_lea.smem %s0, 17
  %s35 = sld [smem:[%s34]]
  %s36 = scalar_lea.smem %s0, 18
  %s37 = sld [smem:[%s36]]
  %s38 = scalar_lea.smem %s0, 19
  %s39 = sld [smem:[%s38]]
  %s40 = scalar_lea.smem %s0, 20
  %s41 = sld [smem:[%s40]]
  %s42 = scalar_lea.smem %s0, 21
  %s43 = sld [smem:[%s42]]
  %s44 = scalar_lea.smem %s0, 22
  %s45 = sld [smem:[%s44]]
  %s46 = scalar_lea.smem %s0, 23
  %s47 = sld [smem:[%s46]]
  %s48 = scalar_lea.smem %s0, 24
  %s49 = sld [smem:[%s48]]
  %s50 = scalar_lea.smem %s0, 25
  %s51 = sld [smem:[%s50]]
  %s52 = scalar_lea.smem %s0, 26
  %s53 = sld [smem:[%s52]]
  %s54 = scalar_lea.smem %s0, 27
  %s55 = sld [smem:[%s54]]
  %s56 = scalar_lea.smem %s0, 28
  %s57 = sld [smem:[%s56]]
  %s58 = scalar_lea.smem %s0, 29
  %s59 = sld [smem:[%s58]]
  %s60 = scalar_lea.smem %s0, 30
  %s61 = sld [smem:[%s60]]
  %s62 = scalar_lea.smem %s0, 31
  %s63 = sld [smem:[%s62]]
  %s64 = scalar_lea.smem %s0, 32
  %s65 = sld [smem:[%s64]]
  %s66 = scalar_lea.smem %s0, 33
  %s67 = sld [smem:[%s66]]
  %s68 = scalar_lea.smem %s0, 34
  %s69 = sld [smem:[%s68]]
  %s70 = scalar_lea.smem %s0, 35
  %s71 = sld [smem:[%s70]]
  %s72 = scalar_lea.smem %s0, 36
  %s73 = sld [smem:[%s72]]
  %s74 = scalar_lea.smem %s0, 37
  %s75 = sld [smem:[%s74]]
  %s76 = scalar_lea.smem %s0, 38
  %s77 = sld [smem:[%s76]]
  %s78 = scalar_lea.smem %s0, 39
  %s79 = sld [smem:[%s78]]
  %s80 = scalar_lea.smem %s0, 40
  %s81 = sld [smem:[%s80]]
  %s82 = scalar_lea.smem %s0, 41
  %s83 = sld [smem:[%s82]]
  %s84 = scalar_lea.smem %s0, 42
  %s85 = sld [smem:[%s84]]
  %s86 = scalar_lea.smem %s0, 43
  %s87 = sld [smem:[%s86]]
  %s88 = scalar_lea.smem %s0, 44
  %s89 = sld [smem:[%s88]]
  %s90 = scalar_lea.smem %s0, 45
  %s91 = sld [smem:[%s90]]
  %s92 = scalar_lea.smem %s0, 46
  %s93 = sld [smem:[%s92]]
  %s94 = scalar_lea.smem %s0, 47
  %s95 = sld [smem:[%s94]]
  %s96 = sld [smem:[#allocation0]]
  $region297: #{aemad_forward.1} parent=0
    _
  %s98 = ssub.s32 1, %s96
  %s99 = scalar_select 0, %s98, %s96
  $region1: #{aemad_forward.1} parent=0
    #allocation2 [shape = 'u8[8192]{0}', space=vmem, size = 0x2000, scoped, tag = 'input window, operand 2, single buffered']
    #allocation3 [shape = 's32[2]{0}', space=sflag, size = 0x8, scoped, tag = 'scoped memory for aemad_forward.1']
    #allocation4 [shape = 'u8[8192]{0}', space=vmem, size = 0x2000, scoped, tag = 'input window, operand 3, single buffered']
    #allocation5 [shape = 's32[1]{0}', space=sflag, size = 0x4, scoped, tag = 'scoped memory for aemad_forward.1']
    #allocation6 [shape = 'u8[8192]{0}', space=vmem, size = 0x2000, scoped, tag = 'input window, operand 4, single buffered']
    #allocation7 [shape = 'u8[2048]{0}', space=vmem, size = 0x800, scoped, tag = 'input window, operand 7, single buffered']
    #allocation8 [shape = 's32[1]{0}', space=sflag, size = 0x4, scoped, tag = 'scoped memory for aemad_forward.1']
    #allocation9 [shape = 'u8[4096]{0}', space=vmem, size = 0x1000, scoped, tag = 'input window, operand 10, single buffered']
    #allocation10 [shape = 'u8[8192]{0}', space=vmem, size = 0x2000, scoped, tag = 'input window, operand 12, single buffered']
    #allocation11 [shape = 's32[1]{0}', space=sflag, size = 0x4, scoped, tag = 'scoped memory for aemad_forward.1']
    #allocation12 [shape = 'u8[24576]{0}', space=vmem, size = 0x6000, scoped, tag = 'input window, operand 17, single buffered']
    #allocation13 [shape = 'u8[49152]{0}', space=vmem, size = 0xc000, scoped, tag = 'input window, operand 20, single buffered']
    #allocation14 [shape = 's32[1]{0}', space=sflag, size = 0x4, scoped, tag = 'scoped memory for aemad_forward.1']
    #allocation15 [shape = 'u8[81920]{0}', space=vmem, size = 0x14000, scoped, tag = 'input window, operand 25, single buffered']
    #allocation16 [shape = 'u8[40960]{0}', space=vmem, size = 0xa000, scoped, tag = 'input window, operand 27, single buffered']
    #allocation17 [shape = 's32[1]{0}', space=sflag, size = 0x4, scoped, tag = 'scoped memory for aemad_forward.1']
    #allocation18 [shape = 'u8[24576]{0}', space=vmem, size = 0x6000, scoped, tag = 'input window, operand 29, single buffered']
    #allocation19 [shape = 'u8[32768]{0}', space=vmem, size = 0x8000, scoped, tag = 'input window, operand 31, single buffered']
    #allocation20 [shape = 's32[1]{0}', space=sflag, size = 0x4, scoped, tag = 'scoped memory for aemad_forward.1']
    #allocation21 [shape = 'u8[24576]{0}', space=vmem, size = 0x6000, scoped, tag = 'input window, operand 32, single buffered']
    #allocation22 [shape = 'u8[8192]{0}', space=vmem, size = 0x2000, scoped, tag = 'input window, operand 36, single buffered']
    #allocation23 [shape = 's32[1]{0}', space=sflag, size = 0x4, scoped, tag = 'scoped memory for aemad_forward.1']
    #allocation24 [shape = 'u8[65536]{0}', space=vmem, size = 0x10000, scoped, tag = 'input window, operand 38, single buffered']
    #allocation25 [shape = 'u8[8192]{0}', space=vmem, size = 0x2000, scoped, tag = 'input window, operand 39, single buffered']
    #allocation26 [shape = 's32[1]{0}', space=sflag, size = 0x4, scoped, tag = 'scoped memory for aemad_forward.1']
    #allocation27 [shape = 'u8[4096]{0}', space=vmem, size = 0x1000, scoped, tag = 'input window, operand 41, single buffered']
    #allocation28 [shape = 'u8[2048]{0}', space=vmem, size = 0x800, scoped, tag = 'input window, operand 43, single buffered']
    #allocation29 [shape = 's32[1]{0}', space=sflag, size = 0x4, scoped, tag = 'scoped memory for aemad_forward.1']
    #allocation30 [shape = 'u8[1024]{0}', space=vmem, size = 0x400, scoped, tag = 'input window, operand 45, single buffered']
    %100 = vsyncpa [#allocation3], 0
    %101 = vsyncpa [#allocation5], 0
    %102 = vsyncpa [#allocation8], 0
    %103 = vsyncpa [#allocation11], 0
    %104 = vsyncpa [#allocation14], 0
    %105 = vsyncpa [#allocation17], 0
    %106 = vsyncpa [#allocation20], 0
    %107 = vsyncpa [#allocation23], 0
    %108 = vsyncpa [#allocation26], 0
    %109 = vsyncpa [#allocation29], 0
    loop: start=0, step=1, limit=4
    $region2: #{aemad_forward.1} parent=1 // loop_pre_header
      _
    $region3: #{aemad_forward.1} parent=1 // loop_header
      %s111 = sphi 0, %s115
      %p112 = scmp.ge.s32.totalorder %s111, 4
      %s121 = sphi 0, %s123
      %s124 = sphi 0, %s121
      %s125 = sphi 0, %s124
      %s141 = sphi 0, %s125
      %s145 = sphi 0, %s145
      %s147 = sphi 0, %s145
      %s148 = sphi 0, %s147
      %s162 = sphi 0, %s148
      %s166 = sphi 0, %s166
      %s168 = sphi 0, %s166
      %s169 = sphi 0, %s168
      %s183 = sphi 0, %s169
      %s187 = sphi 0, %s187
      %s189 = sphi 0, %s187
      %s190 = sphi 0, %s189
      %s204 = sphi 0, %s190
      %s208 = sphi 0, %s208
      %s210 = sphi 0, %s208
      %s211 = sphi 0, %s210
      %s225 = sphi 0, %s211
      %s229 = sphi 0, %s229
      %s231 = sphi 0, %s229
      %s232 = sphi 0, %s231
      %s246 = sphi 0, %s232
      %s250 = sphi 0, %s250
      %s252 = sphi 0, %s250
      %s253 = sphi 0, %s252
      %s267 = sphi 0, %s253
      %s271 = sphi 0, %s271
      %s273 = sphi 0, %s271
      %s274 = sphi 0, %s273
      %s288 = sphi 0, %s274
      %s292 = sphi 0, %s292
      %s294 = sphi 0, %s292
      %s295 = sphi 0, %s294
      %s309 = sphi 0, %s295
      %s313 = sphi 0, %s313
      %s315 = sphi 0, %s313
      %s316 = sphi 0, %s315
      %s330 = sphi 0, %s316
      %s334 = sphi 0, %s334
      %s336 = sphi 0, %s334
      %s337 = sphi 0, %s336
      %s351 = sphi 0, %s337
      %s355 = sphi 0, %s355
      %s357 = sphi 0, %s355
      %s358 = sphi 0, %s357
      %s372 = sphi 0, %s358
      %s376 = sphi 0, %s376
      %s378 = sphi 0, %s376
      %s379 = sphi 0, %s378
      %s393 = sphi 0, %s379
      %s397 = sphi 0, %s397
      %s399 = sphi 0, %s397
      %s400 = sphi 0, %s399
      %s414 = sphi 0, %s400
      %s418 = sphi 0, %s418
      %s420 = sphi 0, %s418
      %s421 = sphi 0, %s420
      %s435 = sphi 0, %s421
      %s439 = sphi 0, %s439
      %s441 = sphi 0, %s439
      %s442 = sphi 0, %s441
      %s456 = sphi 0, %s442
      %s460 = sphi 0, %s460
      %s462 = sphi 0, %s460
      %s463 = sphi 0, %s462
      %s477 = sphi 0, %s463
      %s481 = sphi 0, %s481
      %s483 = sphi 0, %s481
      %s484 = sphi 0, %s483
      %s498 = sphi 0, %s484
      %s502 = sphi 0, %s502
      %s504 = sphi 0, %s502
      %s505 = sphi 0, %s504
      %s519 = sphi 0, %s505
      %s523 = sphi 0, %s523
      %s525 = sphi 0, %s523
      %s526 = sphi 0, %s525
      %s540 = sphi 0, %s526
      %s544 = sphi 0, %s544
      %s546 = sphi 0, %s544
      %s547 = sphi 0, %s546
      %s561 = sphi 0, %s547
      %s565 = sphi 0, %s565
      %s567 = sphi 0, %s565
      %s568 = sphi 0, %s567
      %s582 = sphi 0, %s568
      %s586 = sphi 0, %s586
      %s588 = sphi 0, %s586
      %s589 = sphi 0, %s588
      %s603 = sphi 0, %s589
      %s607 = sphi 0, %s607
      %s609 = sphi 0, %s607
      %s610 = sphi 0, %s609
      %s624 = sphi 0, %s610
      %s628 = sphi 0, %s628
      %s630 = sphi 0, %s628
      %s631 = sphi 0, %s630
      %s645 = sphi 0, %s631
      %s649 = sphi 0, %s649
      %s651 = sphi 0, %s649
      %s652 = sphi 0, %s651
      %s666 = sphi 0, %s652
      %s670 = sphi 0, %s670
      %s672 = sphi 0, %s670
      %s673 = sphi 0, %s672
      %s687 = sphi 0, %s673
      %s691 = sphi 0, %s691
      %s693 = sphi 0, %s691
      %s694 = sphi 0, %s693
      %s708 = sphi 0, %s694
      %s712 = sphi 0, %s712
      %s714 = sphi 0, %s712
      %s715 = sphi 0, %s714
      %s729 = sphi 0, %s715
      %s733 = sphi 0, %s733
      %s735 = sphi 0, %s733
      %s736 = sphi 0, %s735
      %s750 = sphi 0, %s736
      %s754 = sphi 0, %s754
      %s756 = sphi 0, %s754
      %s757 = sphi 0, %s756
      %s771 = sphi 0, %s757
      %s775 = sphi 0, %s775
      %s777 = sphi 0, %s775
      %s778 = sphi 0, %s777
      %s792 = sphi 0, %s778
      %s796 = sphi 0, %s796
      %s798 = sphi 0, %s796
      %s799 = sphi 0, %s798
      %s813 = sphi 0, %s799
      %s817 = sphi 0, %s817
      %s819 = sphi 0, %s817
      %s820 = sphi 0, %s819
      %s834 = sphi 0, %s820
      %s838 = sphi 0, %s838
      %s840 = sphi 0, %s838
      %s841 = sphi 0, %s840
      %s855 = sphi 0, %s841
      %s859 = sphi 0, %s859
      %s861 = sphi 0, %s859
      %s862 = sphi 0, %s861
      %s876 = sphi 0, %s862
      %s880 = sphi 0, %s880
      %s882 = sphi 0, %s880
      %s883 = sphi 0, %s882
      %s897 = sphi 0, %s883
      %s901 = sphi 0, %s901
      %s903 = sphi 0, %s901
      %s904 = sphi 0, %s903
      %s918 = sphi 0, %s904
      %s922 = sphi 0, %s922
      %s924 = sphi 0, %s922
      %s925 = sphi 0, %s924
      %s939 = sphi 0, %s925
      %s943 = sphi 0, %s943
      %s945 = sphi 0, %s943
      %s946 = sphi 0, %s945
      %s960 = sphi 0, %s946
      %s964 = sphi 0, %s964
      %s966 = sphi 0, %s964
      %s967 = sphi 0, %s966
      %s981 = sphi 0, %s967
      %s985 = sphi 0, %s985
      %s987 = sphi 0, %s985
      %s988 = sphi 0, %s987
      %s1002 = sphi 0, %s988
      %s1006 = sphi 0, %s1006
      %s1008 = sphi 0, %s1006
      %s1009 = sphi 0, %s1008
      %s1023 = sphi 0, %s1009
      %s1027 = sphi 0, %s1027
      %s1029 = sphi 0, %s1027
      %s1030 = sphi 0, %s1029
      %s1044 = sphi 0, %s1030
      %s1048 = sphi 0, %s1048
      %s1050 = sphi 0, %s1048
      %s1051 = sphi 0, %s1050
      %s1065 = sphi 0, %s1051
      %s1069 = sphi 0, %s1069
      %s1071 = sphi 0, %s1069
      %s1072 = sphi 0, %s1071
      %s1086 = sphi 0, %s1072
      %s1090 = sphi 0, %s1090
      %s1092 = sphi 0, %s1090
      %s1093 = sphi 0, %s1092
      %s1107 = sphi 0, %s1093
      %s1113 = sphi 0, %s1115
      %s1116 = sphi 0, %s1113
      %s1117 = sphi 0, %s1116
      %s1133 = sphi 0, %s1117
    $region4: #{aemad_forward.1} parent=1 // loop_header_branch
      %114 = sbr.rel (%p112) target = $region8
    $region5: #{aemad_forward.1} parent=1 // loop_body
      %s116 = ssub.s32 %s111, 1
      %s117 = ssub.s32 %s111, 2
      %s118 = sadd.s32 %s111, 1
      %s119 = ssub.s32 %s111, %s118
      %p120 = scmp.eq.s32.totalorder %s119, 0
      %s122 = sadd.s32 %s121, 1
      %s123 = scalar_select %p120, %s121, %s122
      %p126 = pneg %p120
      %p127 = scmp.eq.s32.totalorder %s111, 1
      %p128 = por %p126, %p127
      %p129 = scmp.ne.s32.totalorder %s121, %s124
      %p130 = scmp.eq.s32.totalorder %s111, 0
      %p131 = por %p129, %p130
      %p132 = scmp.ne.s32.totalorder %s121, %s124
      %p133 = scmp.eq.s32.totalorder %s116, 1
      %p134 = por %p132, %p133
      %p135 = scmp.ne.s32.totalorder %s124, %s125
      %p136 = scmp.eq.s32.totalorder %s116, 0
      %p137 = por %p135, %p136
      %p138 = scmp.ne.s32.totalorder %s124, %s125
      %p139 = scmp.eq.s32.totalorder %s117, 1
      %p140 = por %p138, %p139
      %p142 = scmp.ne.s32.totalorder %s125, %s141
      %p143 = scmp.eq.s32.totalorder %s117, 0
      %p144 = por %p142, %p143
      %s146 = sadd.s32 %s145, 1
      %p149 = scmp.eq.s32.totalorder %s111, 1
      %p150 = scmp.ne.s32.totalorder %s145, %s147
      %p151 = scmp.eq.s32.totalorder %s111, 0
      %p152 = por %p150, %p151
      %p153 = scmp.ne.s32.totalorder %s145, %s147
      %p154 = scmp.eq.s32.totalorder %s116, 1
      %p155 = por %p153, %p154
      %p156 = scmp.ne.s32.totalorder %s147, %s148
      %p157 = scmp.eq.s32.totalorder %s116, 0
      %p158 = por %p156, %p157
      %p159 = scmp.ne.s32.totalorder %s147, %s148
      %p160 = scmp.eq.s32.totalorder %s117, 1
      %p161 = por %p159, %p160
      %p163 = scmp.ne.s32.totalorder %s148, %s162
      %p164 = scmp.eq.s32.totalorder %s117, 0
      %p165 = por %p163, %p164
      %s167 = sadd.s32 %s166, 1
      %p170 = scmp.eq.s32.totalorder %s111, 1
      %p171 = scmp.ne.s32.totalorder %s166, %s168
      %p172 = scmp.eq.s32.totalorder %s111, 0
      %p173 = por %p171, %p172
      %p174 = scmp.ne.s32.totalorder %s166, %s168
      %p175 = scmp.eq.s32.totalorder %s116, 1
      %p176 = por %p174, %p175
      %p177 = scmp.ne.s32.totalorder %s168, %s169
      %p178 = scmp.eq.s32.totalorder %s116, 0
      %p179 = por %p177, %p178
      %p180 = scmp.ne.s32.totalorder %s168, %s169
      %p181 = scmp.eq.s32.totalorder %s117, 1
      %p182 = por %p180, %p181
      %p184 = scmp.ne.s32.totalorder %s169, %s183
      %p185 = scmp.eq.s32.totalorder %s117, 0
      %p186 = por %p184, %p185
      %s188 = sadd.s32 %s187, 1
      %p191 = scmp.eq.s32.totalorder %s111, 1
      %p192 = scmp.ne.s32.totalorder %s187, %s189
      %p193 = scmp.eq.s32.totalorder %s111, 0
      %p194 = por %p192, %p193
      %p195 = scmp.ne.s32.totalorder %s187, %s189
      %p196 = scmp.eq.s32.totalorder %s116, 1
      %p197 = por %p195, %p196
      %p198 = scmp.ne.s32.totalorder %s189, %s190
      %p199 = scmp.eq.s32.totalorder %s116, 0
      %p200 = por %p198, %p199
      %p201 = scmp.ne.s32.totalorder %s189, %s190
      %p202 = scmp.eq.s32.totalorder %s117, 1
      %p203 = por %p201, %p202
      %p205 = scmp.ne.s32.totalorder %s190, %s204
      %p206 = scmp.eq.s32.totalorder %s117, 0
      %p207 = por %p205, %p206
      %s209 = sadd.s32 %s208, 1
      %p212 = scmp.eq.s32.totalorder %s111, 1
      %p213 = scmp.ne.s32.totalorder %s208, %s210
      %p214 = scmp.eq.s32.totalorder %s111, 0
      %p215 = por %p213, %p214
      %p216 = scmp.ne.s32.totalorder %s208, %s210
      %p217 = scmp.eq.s32.totalorder %s116, 1
      %p218 = por %p216, %p217
      %p219 = scmp.ne.s32.totalorder %s210, %s211
      %p220 = scmp.eq.s32.totalorder %s116, 0
      %p221 = por %p219, %p220
      %p222 = scmp.ne.s32.totalorder %s210, %s211
      %p223 = scmp.eq.s32.totalorder %s117, 1
      %p224 = por %p222, %p223
      %p226 = scmp.ne.s32.totalorder %s211, %s225
      %p227 = scmp.eq.s32.totalorder %s117, 0
      %p228 = por %p226, %p227
      %s230 = sadd.s32 %s229, 1
      %p233 = scmp.eq.s32.totalorder %s111, 1
      %p234 = scmp.ne.s32.totalorder %s229, %s231
      %p235 = scmp.eq.s32.totalorder %s111, 0
      %p236 = por %p234, %p235
      %p237 = scmp.ne.s32.totalorder %s229, %s231
      %p238 = scmp.eq.s32.totalorder %s116, 1
      %p239 = por %p237, %p238
      %p240 = scmp.ne.s32.totalorder %s231, %s232
      %p241 = scmp.eq.s32.totalorder %s116, 0
      %p242 = por %p240, %p241
      %p243 = scmp.ne.s32.totalorder %s231, %s232
      %p244 = scmp.eq.s32.totalorder %s117, 1
      %p245 = por %p243, %p244
      %p247 = scmp.ne.s32.totalorder %s232, %s246
      %p248 = scmp.eq.s32.totalorder %s117, 0
      %p249 = por %p247, %p248
      %s251 = sadd.s32 %s250, 1
      %p254 = scmp.eq.s32.totalorder %s111, 1
      %p255 = scmp.ne.s32.totalorder %s250, %s252
      %p256 = scmp.eq.s32.totalorder %s111, 0
      %p257 = por %p255, %p256
      %p258 = scmp.ne.s32.totalorder %s250, %s252
      %p259 = scmp.eq.s32.totalorder %s116, 1
      %p260 = por %p258, %p259
      %p261 = scmp.ne.s32.totalorder %s252, %s253
      %p262 = scmp.eq.s32.totalorder %s116, 0
      %p263 = por %p261, %p262
      %p264 = scmp.ne.s32.totalorder %s252, %s253
      %p265 = scmp.eq.s32.totalorder %s117, 1
      %p266 = por %p264, %p265
      %p268 = scmp.ne.s32.totalorder %s253, %s267
      %p269 = scmp.eq.s32.totalorder %s117, 0
      %p270 = por %p268, %p269
      %s272 = sadd.s32 %s271, 1
      %p275 = scmp.eq.s32.totalorder %s111, 1
      %p276 = scmp.ne.s32.totalorder %s271, %s273
      %p277 = scmp.eq.s32.totalorder %s111, 0
      %p278 = por %p276, %p277
      %p279 = scmp.ne.s32.totalorder %s271, %s273
      %p280 = scmp.eq.s32.totalorder %s116, 1
      %p281 = por %p279, %p280
      %p282 = scmp.ne.s32.totalorder %s273, %s274
      %p283 = scmp.eq.s32.totalorder %s116, 0
      %p284 = por %p282, %p283
      %p285 = scmp.ne.s32.totalorder %s273, %s274
      %p286 = scmp.eq.s32.totalorder %s117, 1
      %p287 = por %p285, %p286
      %p289 = scmp.ne.s32.totalorder %s274, %s288
      %p290 = scmp.eq.s32.totalorder %s117, 0
      %p291 = por %p289, %p290
      %s293 = sadd.s32 %s292, 1
      %p296 = scmp.eq.s32.totalorder %s111, 1
      %p297 = scmp.ne.s32.totalorder %s292, %s294
      %p298 = scmp.eq.s32.totalorder %s111, 0
      %p299 = por %p297, %p298
      %p300 = scmp.ne.s32.totalorder %s292, %s294
      %p301 = scmp.eq.s32.totalorder %s116, 1
      %p302 = por %p300, %p301
      %p303 = scmp.ne.s32.totalorder %s294, %s295
      %p304 = scmp.eq.s32.totalorder %s116, 0
      %p305 = por %p303, %p304
      %p306 = scmp.ne.s32.totalorder %s294, %s295
      %p307 = scmp.eq.s32.totalorder %s117, 1
      %p308 = por %p306, %p307
      %p310 = scmp.ne.s32.totalorder %s295, %s309
      %p311 = scmp.eq.s32.totalorder %s117, 0
      %p312 = por %p310, %p311
      %s314 = sadd.s32 %s313, 1
      %p317 = scmp.eq.s32.totalorder %s111, 1
      %p318 = scmp.ne.s32.totalorder %s313, %s315
      %p319 = scmp.eq.s32.totalorder %s111, 0
      %p320 = por %p318, %p319
      %p321 = scmp.ne.s32.totalorder %s313, %s315
      %p322 = scmp.eq.s32.totalorder %s116, 1
      %p323 = por %p321, %p322
      %p324 = scmp.ne.s32.totalorder %s315, %s316
      %p325 = scmp.eq.s32.totalorder %s116, 0
      %p326 = por %p324, %p325
      %p327 = scmp.ne.s32.totalorder %s315, %s316
      %p328 = scmp.eq.s32.totalorder %s117, 1
      %p329 = por %p327, %p328
      %p331 = scmp.ne.s32.totalorder %s316, %s330
      %p332 = scmp.eq.s32.totalorder %s117, 0
      %p333 = por %p331, %p332
      %s335 = sadd.s32 %s334, 1
      %p338 = scmp.eq.s32.totalorder %s111, 1
      %p339 = scmp.ne.s32.totalorder %s334, %s336
      %p340 = scmp.eq.s32.totalorder %s111, 0
      %p341 = por %p339, %p340
      %p342 = scmp.ne.s32.totalorder %s334, %s336
      %p343 = scmp.eq.s32.totalorder %s116, 1
      %p344 = por %p342, %p343
      %p345 = scmp.ne.s32.totalorder %s336, %s337
      %p346 = scmp.eq.s32.totalorder %s116, 0
      %p347 = por %p345, %p346
      %p348 = scmp.ne.s32.totalorder %s336, %s337
      %p349 = scmp.eq.s32.totalorder %s117, 1
      %p350 = por %p348, %p349
      %p352 = scmp.ne.s32.totalorder %s337, %s351
      %p353 = scmp.eq.s32.totalorder %s117, 0
      %p354 = por %p352, %p353
      %s356 = sadd.s32 %s355, 1
      %p359 = scmp.eq.s32.totalorder %s111, 1
      %p360 = scmp.ne.s32.totalorder %s355, %s357
      %p361 = scmp.eq.s32.totalorder %s111, 0
      %p362 = por %p360, %p361
      %p363 = scmp.ne.s32.totalorder %s355, %s357
      %p364 = scmp.eq.s32.totalorder %s116, 1
      %p365 = por %p363, %p364
      %p366 = scmp.ne.s32.totalorder %s357, %s358
      %p367 = scmp.eq.s32.totalorder %s116, 0
      %p368 = por %p366, %p367
      %p369 = scmp.ne.s32.totalorder %s357, %s358
      %p370 = scmp.eq.s32.totalorder %s117, 1
      %p371 = por %p369, %p370
      %p373 = scmp.ne.s32.totalorder %s358, %s372
      %p374 = scmp.eq.s32.totalorder %s117, 0
      %p375 = por %p373, %p374
      %s377 = sadd.s32 %s376, 1
      %p380 = scmp.eq.s32.totalorder %s111, 1
      %p381 = scmp.ne.s32.totalorder %s376, %s378
      %p382 = scmp.eq.s32.totalorder %s111, 0
      %p383 = por %p381, %p382
      %p384 = scmp.ne.s32.totalorder %s376, %s378
      %p385 = scmp.eq.s32.totalorder %s116, 1
      %p386 = por %p384, %p385
      %p387 = scmp.ne.s32.totalorder %s378, %s379
      %p388 = scmp.eq.s32.totalorder %s116, 0
      %p389 = por %p387, %p388
      %p390 = scmp.ne.s32.totalorder %s378, %s379
      %p391 = scmp.eq.s32.totalorder %s117, 1
      %p392 = por %p390, %p391
      %p394 = scmp.ne.s32.totalorder %s379, %s393
      %p395 = scmp.eq.s32.totalorder %s117, 0
      %p396 = por %p394, %p395
      %s398 = sadd.s32 %s397, 1
      %p401 = scmp.eq.s32.totalorder %s111, 1
      %p402 = scmp.ne.s32.totalorder %s397, %s399
      %p403 = scmp.eq.s32.totalorder %s111, 0
      %p404 = por %p402, %p403
      %p405 = scmp.ne.s32.totalorder %s397, %s399
      %p406 = scmp.eq.s32.totalorder %s116, 1
      %p407 = por %p405, %p406
      %p408 = scmp.ne.s32.totalorder %s399, %s400
      %p409 = scmp.eq.s32.totalorder %s116, 0
      %p410 = por %p408, %p409
      %p411 = scmp.ne.s32.totalorder %s399, %s400
      %p412 = scmp.eq.s32.totalorder %s117, 1
      %p413 = por %p411, %p412
      %p415 = scmp.ne.s32.totalorder %s400, %s414
      %p416 = scmp.eq.s32.totalorder %s117, 0
      %p417 = por %p415, %p416
      %s419 = sadd.s32 %s418, 1
      %p422 = scmp.eq.s32.totalorder %s111, 1
      %p423 = scmp.ne.s32.totalorder %s418, %s420
      %p424 = scmp.eq.s32.totalorder %s111, 0
      %p425 = por %p423, %p424
      %p426 = scmp.ne.s32.totalorder %s418, %s420
      %p427 = scmp.eq.s32.totalorder %s116, 1
      %p428 = por %p426, %p427
      %p429 = scmp.ne.s32.totalorder %s420, %s421
      %p430 = scmp.eq.s32.totalorder %s116, 0
      %p431 = por %p429, %p430
      %p432 = scmp.ne.s32.totalorder %s420, %s421
      %p433 = scmp.eq.s32.totalorder %s117, 1
      %p434 = por %p432, %p433
      %p436 = scmp.ne.s32.totalorder %s421, %s435
      %p437 = scmp.eq.s32.totalorder %s117, 0
      %p438 = por %p436, %p437
      %s440 = sadd.s32 %s439, 1
      %p443 = scmp.eq.s32.totalorder %s111, 1
      %p444 = scmp.ne.s32.totalorder %s439, %s441
      %p445 = scmp.eq.s32.totalorder %s111, 0
      %p446 = por %p444, %p445
      %p447 = scmp.ne.s32.totalorder %s439, %s441
      %p448 = scmp.eq.s32.totalorder %s116, 1
      %p449 = por %p447, %p448
      %p450 = scmp.ne.s32.totalorder %s441, %s442
      %p451 = scmp.eq.s32.totalorder %s116, 0
      %p452 = por %p450, %p451
      %p453 = scmp.ne.s32.totalorder %s441, %s442
      %p454 = scmp.eq.s32.totalorder %s117, 1
      %p455 = por %p453, %p454
      %p457 = scmp.ne.s32.totalorder %s442, %s456
      %p458 = scmp.eq.s32.totalorder %s117, 0
      %p459 = por %p457, %p458
      %s461 = sadd.s32 %s460, 1
      %p464 = scmp.eq.s32.totalorder %s111, 1
      %p465 = scmp.ne.s32.totalorder %s460, %s462
      %p466 = scmp.eq.s32.totalorder %s111, 0
      %p467 = por %p465, %p466
      %p468 = scmp.ne.s32.totalorder %s460, %s462
      %p469 = scmp.eq.s32.totalorder %s116, 1
      %p470 = por %p468, %p469
      %p471 = scmp.ne.s32.totalorder %s462, %s463
      %p472 = scmp.eq.s32.totalorder %s116, 0
      %p473 = por %p471, %p472
      %p474 = scmp.ne.s32.totalorder %s462, %s463
      %p475 = scmp.eq.s32.totalorder %s117, 1
      %p476 = por %p474, %p475
      %p478 = scmp.ne.s32.totalorder %s463, %s477
      %p479 = scmp.eq.s32.totalorder %s117, 0
      %p480 = por %p478, %p479
      %s482 = sadd.s32 %s481, 1
      %p485 = scmp.eq.s32.totalorder %s111, 1
      %p486 = scmp.ne.s32.totalorder %s481, %s483
      %p487 = scmp.eq.s32.totalorder %s111, 0
      %p488 = por %p486, %p487
      %p489 = scmp.ne.s32.totalorder %s481, %s483
      %p490 = scmp.eq.s32.totalorder %s116, 1
      %p491 = por %p489, %p490
      %p492 = scmp.ne.s32.totalorder %s483, %s484
      %p493 = scmp.eq.s32.totalorder %s116, 0
      %p494 = por %p492, %p493
      %p495 = scmp.ne.s32.totalorder %s483, %s484
      %p496 = scmp.eq.s32.totalorder %s117, 1
      %p497 = por %p495, %p496
      %p499 = scmp.ne.s32.totalorder %s484, %s498
      %p500 = scmp.eq.s32.totalorder %s117, 0
      %p501 = por %p499, %p500
      %s503 = sadd.s32 %s502, 1
      %p506 = scmp.eq.s32.totalorder %s111, 1
      %p507 = scmp.ne.s32.totalorder %s502, %s504
      %p508 = scmp.eq.s32.totalorder %s111, 0
      %p509 = por %p507, %p508
      %p510 = scmp.ne.s32.totalorder %s502, %s504
      %p511 = scmp.eq.s32.totalorder %s116, 1
      %p512 = por %p510, %p511
      %p513 = scmp.ne.s32.totalorder %s504, %s505
      %p514 = scmp.eq.s32.totalorder %s116, 0
      %p515 = por %p513, %p514
      %p516 = scmp.ne.s32.totalorder %s504, %s505
      %p517 = scmp.eq.s32.totalorder %s117, 1
      %p518 = por %p516, %p517
      %p520 = scmp.ne.s32.totalorder %s505, %s519
      %p521 = scmp.eq.s32.totalorder %s117, 0
      %p522 = por %p520, %p521
      %s524 = sadd.s32 %s523, 1
      %p527 = scmp.eq.s32.totalorder %s111, 1
      %p528 = scmp.ne.s32.totalorder %s523, %s525
      %p529 = scmp.eq.s32.totalorder %s111, 0
      %p530 = por %p528, %p529
      %p531 = scmp.ne.s32.totalorder %s523, %s525
      %p532 = scmp.eq.s32.totalorder %s116, 1
      %p533 = por %p531, %p532
      %p534 = scmp.ne.s32.totalorder %s525, %s526
      %p535 = scmp.eq.s32.totalorder %s116, 0
      %p536 = por %p534, %p535
      %p537 = scmp.ne.s32.totalorder %s525, %s526
      %p538 = scmp.eq.s32.totalorder %s117, 1
      %p539 = por %p537, %p538
      %p541 = scmp.ne.s32.totalorder %s526, %s540
      %p542 = scmp.eq.s32.totalorder %s117, 0
      %p543 = por %p541, %p542
      %s545 = sadd.s32 %s544, 1
      %p548 = scmp.eq.s32.totalorder %s111, 1
      %p549 = scmp.ne.s32.totalorder %s544, %s546
      %p550 = scmp.eq.s32.totalorder %s111, 0
      %p551 = por %p549, %p550
      %p552 = scmp.ne.s32.totalorder %s544, %s546
      %p553 = scmp.eq.s32.totalorder %s116, 1
      %p554 = por %p552, %p553
      %p555 = scmp.ne.s32.totalorder %s546, %s547
      %p556 = scmp.eq.s32.totalorder %s116, 0
      %p557 = por %p555, %p556
      %p558 = scmp.ne.s32.totalorder %s546, %s547
      %p559 = scmp.eq.s32.totalorder %s117, 1
      %p560 = por %p558, %p559
      %p562 = scmp.ne.s32.totalorder %s547, %s561
      %p563 = scmp.eq.s32.totalorder %s117, 0
      %p564 = por %p562, %p563
      %s566 = sadd.s32 %s565, 1
      %p569 = scmp.eq.s32.totalorder %s111, 1
      %p570 = scmp.ne.s32.totalorder %s565, %s567
      %p571 = scmp.eq.s32.totalorder %s111, 0
      %p572 = por %p570, %p571
      %p573 = scmp.ne.s32.totalorder %s565, %s567
      %p574 = scmp.eq.s32.totalorder %s116, 1
      %p575 = por %p573, %p574
      %p576 = scmp.ne.s32.totalorder %s567, %s568
      %p577 = scmp.eq.s32.totalorder %s116, 0
      %p578 = por %p576, %p577
      %p579 = scmp.ne.s32.totalorder %s567, %s568
      %p580 = scmp.eq.s32.totalorder %s117, 1
      %p581 = por %p579, %p580
      %p583 = scmp.ne.s32.totalorder %s568, %s582
      %p584 = scmp.eq.s32.totalorder %s117, 0
      %p585 = por %p583, %p584
      %s587 = sadd.s32 %s586, 1
      %p590 = scmp.eq.s32.totalorder %s111, 1
      %p591 = scmp.ne.s32.totalorder %s586, %s588
      %p592 = scmp.eq.s32.totalorder %s111, 0
      %p593 = por %p591, %p592
      %p594 = scmp.ne.s32.totalorder %s586, %s588
      %p595 = scmp.eq.s32.totalorder %s116, 1
      %p596 = por %p594, %p595
      %p597 = scmp.ne.s32.totalorder %s588, %s589
      %p598 = scmp.eq.s32.totalorder %s116, 0
      %p599 = por %p597, %p598
      %p600 = scmp.ne.s32.totalorder %s588, %s589
      %p601 = scmp.eq.s32.totalorder %s117, 1
      %p602 = por %p600, %p601
      %p604 = scmp.ne.s32.totalorder %s589, %s603
      %p605 = scmp.eq.s32.totalorder %s117, 0
      %p606 = por %p604, %p605
      %s608 = sadd.s32 %s607, 1
      %p611 = scmp.eq.s32.totalorder %s111, 1
      %p612 = scmp.ne.s32.totalorder %s607, %s609
      %p613 = scmp.eq.s32.totalorder %s111, 0
      %p614 = por %p612, %p613
      %p615 = scmp.ne.s32.totalorder %s607, %s609
      %p616 = scmp.eq.s32.totalorder %s116, 1
      %p617 = por %p615, %p616
      %p618 = scmp.ne.s32.totalorder %s609, %s610
      %p619 = scmp.eq.s32.totalorder %s116, 0
      %p620 = por %p618, %p619
      %p621 = scmp.ne.s32.totalorder %s609, %s610
      %p622 = scmp.eq.s32.totalorder %s117, 1
      %p623 = por %p621, %p622
      %p625 = scmp.ne.s32.totalorder %s610, %s624
      %p626 = scmp.eq.s32.totalorder %s117, 0
      %p627 = por %p625, %p626
      %s629 = sadd.s32 %s628, 1
      %p632 = scmp.eq.s32.totalorder %s111, 1
      %p633 = scmp.ne.s32.totalorder %s628, %s630
      %p634 = scmp.eq.s32.totalorder %s111, 0
      %p635 = por %p633, %p634
      %p636 = scmp.ne.s32.totalorder %s628, %s630
      %p637 = scmp.eq.s32.totalorder %s116, 1
      %p638 = por %p636, %p637
      %p639 = scmp.ne.s32.totalorder %s630, %s631
      %p640 = scmp.eq.s32.totalorder %s116, 0
      %p641 = por %p639, %p640
      %p642 = scmp.ne.s32.totalorder %s630, %s631
      %p643 = scmp.eq.s32.totalorder %s117, 1
      %p644 = por %p642, %p643
      %p646 = scmp.ne.s32.totalorder %s631, %s645
      %p647 = scmp.eq.s32.totalorder %s117, 0
      %p648 = por %p646, %p647
      %s650 = sadd.s32 %s649, 1
      %p653 = scmp.eq.s32.totalorder %s111, 1
      %p654 = scmp.ne.s32.totalorder %s649, %s651
      %p655 = scmp.eq.s32.totalorder %s111, 0
      %p656 = por %p654, %p655
      %p657 = scmp.ne.s32.totalorder %s649, %s651
      %p658 = scmp.eq.s32.totalorder %s116, 1
      %p659 = por %p657, %p658
      %p660 = scmp.ne.s32.totalorder %s651, %s652
      %p661 = scmp.eq.s32.totalorder %s116, 0
      %p662 = por %p660, %p661
      %p663 = scmp.ne.s32.totalorder %s651, %s652
      %p664 = scmp.eq.s32.totalorder %s117, 1
      %p665 = por %p663, %p664
      %p667 = scmp.ne.s32.totalorder %s652, %s666
      %p668 = scmp.eq.s32.totalorder %s117, 0
      %p669 = por %p667, %p668
      %s671 = sadd.s32 %s670, 1
      %p674 = scmp.eq.s32.totalorder %s111, 1
      %p675 = scmp.ne.s32.totalorder %s670, %s672
      %p676 = scmp.eq.s32.totalorder %s111, 0
      %p677 = por %p675, %p676
      %p678 = scmp.ne.s32.totalorder %s670, %s672
      %p679 = scmp.eq.s32.totalorder %s116, 1
      %p680 = por %p678, %p679
      %p681 = scmp.ne.s32.totalorder %s672, %s673
      %p682 = scmp.eq.s32.totalorder %s116, 0
      %p683 = por %p681, %p682
      %p684 = scmp.ne.s32.totalorder %s672, %s673
      %p685 = scmp.eq.s32.totalorder %s117, 1
      %p686 = por %p684, %p685
      %p688 = scmp.ne.s32.totalorder %s673, %s687
      %p689 = scmp.eq.s32.totalorder %s117, 0
      %p690 = por %p688, %p689
      %s692 = sadd.s32 %s691, 1
      %p695 = scmp.eq.s32.totalorder %s111, 1
      %p696 = scmp.ne.s32.totalorder %s691, %s693
      %p697 = scmp.eq.s32.totalorder %s111, 0
      %p698 = por %p696, %p697
      %p699 = scmp.ne.s32.totalorder %s691, %s693
      %p700 = scmp.eq.s32.totalorder %s116, 1
      %p701 = por %p699, %p700
      %p702 = scmp.ne.s32.totalorder %s693, %s694
      %p703 = scmp.eq.s32.totalorder %s116, 0
      %p704 = por %p702, %p703
      %p705 = scmp.ne.s32.totalorder %s693, %s694
      %p706 = scmp.eq.s32.totalorder %s117, 1
      %p707 = por %p705, %p706
      %p709 = scmp.ne.s32.totalorder %s694, %s708
      %p710 = scmp.eq.s32.totalorder %s117, 0
      %p711 = por %p709, %p710
      %s713 = sadd.s32 %s712, 1
      %p716 = scmp.eq.s32.totalorder %s111, 1
      %p717 = scmp.ne.s32.totalorder %s712, %s714
      %p718 = scmp.eq.s32.totalorder %s111, 0
      %p719 = por %p717, %p718
      %p720 = scmp.ne.s32.totalorder %s712, %s714
      %p721 = scmp.eq.s32.totalorder %s116, 1
      %p722 = por %p720, %p721
      %p723 = scmp.ne.s32.totalorder %s714, %s715
      %p724 = scmp.eq.s32.totalorder %s116, 0
      %p725 = por %p723, %p724
      %p726 = scmp.ne.s32.totalorder %s714, %s715
      %p727 = scmp.eq.s32.totalorder %s117, 1
      %p728 = por %p726, %p727
      %p730 = scmp.ne.s32.totalorder %s715, %s729
      %p731 = scmp.eq.s32.totalorder %s117, 0
      %p732 = por %p730, %p731
      %s734 = sadd.s32 %s733, 1
      %p737 = scmp.eq.s32.totalorder %s111, 1
      %p738 = scmp.ne.s32.totalorder %s733, %s735
      %p739 = scmp.eq.s32.totalorder %s111, 0
      %p740 = por %p738, %p739
      %p741 = scmp.ne.s32.totalorder %s733, %s735
      %p742 = scmp.eq.s32.totalorder %s116, 1
      %p743 = por %p741, %p742
      %p744 = scmp.ne.s32.totalorder %s735, %s736
      %p745 = scmp.eq.s32.totalorder %s116, 0
      %p746 = por %p744, %p745
      %p747 = scmp.ne.s32.totalorder %s735, %s736
      %p748 = scmp.eq.s32.totalorder %s117, 1
      %p749 = por %p747, %p748
      %p751 = scmp.ne.s32.totalorder %s736, %s750
      %p752 = scmp.eq.s32.totalorder %s117, 0
      %p753 = por %p751, %p752
      %s755 = sadd.s32 %s754, 1
      %p758 = scmp.eq.s32.totalorder %s111, 1
      %p759 = scmp.ne.s32.totalorder %s754, %s756
      %p760 = scmp.eq.s32.totalorder %s111, 0
      %p761 = por %p759, %p760
      %p762 = scmp.ne.s32.totalorder %s754, %s756
      %p763 = scmp.eq.s32.totalorder %s116, 1
      %p764 = por %p762, %p763
      %p765 = scmp.ne.s32.totalorder %s756, %s757
      %p766 = scmp.eq.s32.totalorder %s116, 0
      %p767 = por %p765, %p766
      %p768 = scmp.ne.s32.totalorder %s756, %s757
      %p769 = scmp.eq.s32.totalorder %s117, 1
      %p770 = por %p768, %p769
      %p772 = scmp.ne.s32.totalorder %s757, %s771
      %p773 = scmp.eq.s32.totalorder %s117, 0
      %p774 = por %p772, %p773
      %s776 = sadd.s32 %s775, 1
      %p779 = scmp.eq.s32.totalorder %s111, 1
      %p780 = scmp.ne.s32.totalorder %s775, %s777
      %p781 = scmp.eq.s32.totalorder %s111, 0
      %p782 = por %p780, %p781
      %p783 = scmp.ne.s32.totalorder %s775, %s777
      %p784 = scmp.eq.s32.totalorder %s116, 1
      %p785 = por %p783, %p784
      %p786 = scmp.ne.s32.totalorder %s777, %s778
      %p787 = scmp.eq.s32.totalorder %s116, 0
      %p788 = por %p786, %p787
      %p789 = scmp.ne.s32.totalorder %s777, %s778
      %p790 = scmp.eq.s32.totalorder %s117, 1
      %p791 = por %p789, %p790
      %p793 = scmp.ne.s32.totalorder %s778, %s792
      %p794 = scmp.eq.s32.totalorder %s117, 0
      %p795 = por %p793, %p794
      %s797 = sadd.s32 %s796, 1
      %p800 = scmp.eq.s32.totalorder %s111, 1
      %p801 = scmp.ne.s32.totalorder %s796, %s798
      %p802 = scmp.eq.s32.totalorder %s111, 0
      %p803 = por %p801, %p802
      %p804 = scmp.ne.s32.totalorder %s796, %s798
      %p805 = scmp.eq.s32.totalorder %s116, 1
      %p806 = por %p804, %p805
      %p807 = scmp.ne.s32.totalorder %s798, %s799
      %p808 = scmp.eq.s32.totalorder %s116, 0
      %p809 = por %p807, %p808
      %p810 = scmp.ne.s32.totalorder %s798, %s799
      %p811 = scmp.eq.s32.totalorder %s117, 1
      %p812 = por %p810, %p811
      %p814 = scmp.ne.s32.totalorder %s799, %s813
      %p815 = scmp.eq.s32.totalorder %s117, 0
      %p816 = por %p814, %p815
      %s818 = sadd.s32 %s817, 1
      %p821 = scmp.eq.s32.totalorder %s111, 1
      %p822 = scmp.ne.s32.totalorder %s817, %s819
      %p823 = scmp.eq.s32.totalorder %s111, 0
      %p824 = por %p822, %p823
      %p825 = scmp.ne.s32.totalorder %s817, %s819
      %p826 = scmp.eq.s32.totalorder %s116, 1
      %p827 = por %p825, %p826
      %p828 = scmp.ne.s32.totalorder %s819, %s820
      %p829 = scmp.eq.s32.totalorder %s116, 0
      %p830 = por %p828, %p829
      %p831 = scmp.ne.s32.totalorder %s819, %s820
      %p832 = scmp.eq.s32.totalorder %s117, 1
      %p833 = por %p831, %p832
      %p835 = scmp.ne.s32.totalorder %s820, %s834
      %p836 = scmp.eq.s32.totalorder %s117, 0
      %p837 = por %p835, %p836
      %s839 = sadd.s32 %s838, 1
      %p842 = scmp.eq.s32.totalorder %s111, 1
      %p843 = scmp.ne.s32.totalorder %s838, %s840
      %p844 = scmp.eq.s32.totalorder %s111, 0
      %p845 = por %p843, %p844
      %p846 = scmp.ne.s32.totalorder %s838, %s840
      %p847 = scmp.eq.s32.totalorder %s116, 1
      %p848 = por %p846, %p847
      %p849 = scmp.ne.s32.totalorder %s840, %s841
      %p850 = scmp.eq.s32.totalorder %s116, 0
      %p851 = por %p849, %p850
      %p852 = scmp.ne.s32.totalorder %s840, %s841
      %p853 = scmp.eq.s32.totalorder %s117, 1
      %p854 = por %p852, %p853
      %p856 = scmp.ne.s32.totalorder %s841, %s855
      %p857 = scmp.eq.s32.totalorder %s117, 0
      %p858 = por %p856, %p857
      %s860 = sadd.s32 %s859, 1
      %p863 = scmp.eq.s32.totalorder %s111, 1
      %p864 = scmp.ne.s32.totalorder %s859, %s861
      %p865 = scmp.eq.s32.totalorder %s111, 0
      %p866 = por %p864, %p865
      %p867 = scmp.ne.s32.totalorder %s859, %s861
      %p868 = scmp.eq.s32.totalorder %s116, 1
      %p869 = por %p867, %p868
      %p870 = scmp.ne.s32.totalorder %s861, %s862
      %p871 = scmp.eq.s32.totalorder %s116, 0
      %p872 = por %p870, %p871
      %p873 = scmp.ne.s32.totalorder %s861, %s862
      %p874 = scmp.eq.s32.totalorder %s117, 1
      %p875 = por %p873, %p874
      %p877 = scmp.ne.s32.totalorder %s862, %s876
      %p878 = scmp.eq.s32.totalorder %s117, 0
      %p879 = por %p877, %p878
      %s881 = sadd.s32 %s880, 1
      %p884 = scmp.eq.s32.totalorder %s111, 1
      %p885 = scmp.ne.s32.totalorder %s880, %s882
      %p886 = scmp.eq.s32.totalorder %s111, 0
      %p887 = por %p885, %p886
      %p888 = scmp.ne.s32.totalorder %s880, %s882
      %p889 = scmp.eq.s32.totalorder %s116, 1
      %p890 = por %p888, %p889
      %p891 = scmp.ne.s32.totalorder %s882, %s883
      %p892 = scmp.eq.s32.totalorder %s116, 0
      %p893 = por %p891, %p892
      %p894 = scmp.ne.s32.totalorder %s882, %s883
      %p895 = scmp.eq.s32.totalorder %s117, 1
      %p896 = por %p894, %p895
      %p898 = scmp.ne.s32.totalorder %s883, %s897
      %p899 = scmp.eq.s32.totalorder %s117, 0
      %p900 = por %p898, %p899
      %s902 = sadd.s32 %s901, 1
      %p905 = scmp.eq.s32.totalorder %s111, 1
      %p906 = scmp.ne.s32.totalorder %s901, %s903
      %p907 = scmp.eq.s32.totalorder %s111, 0
      %p908 = por %p906, %p907
      %p909 = scmp.ne.s32.totalorder %s901, %s903
      %p910 = scmp.eq.s32.totalorder %s116, 1
      %p911 = por %p909, %p910
      %p912 = scmp.ne.s32.totalorder %s903, %s904
      %p913 = scmp.eq.s32.totalorder %s116, 0
      %p914 = por %p912, %p913
      %p915 = scmp.ne.s32.totalorder %s903, %s904
      %p916 = scmp.eq.s32.totalorder %s117, 1
      %p917 = por %p915, %p916
      %p919 = scmp.ne.s32.totalorder %s904, %s918
      %p920 = scmp.eq.s32.totalorder %s117, 0
      %p921 = por %p919, %p920
      %s923 = sadd.s32 %s922, 1
      %p926 = scmp.eq.s32.totalorder %s111, 1
      %p927 = scmp.ne.s32.totalorder %s922, %s924
      %p928 = scmp.eq.s32.totalorder %s111, 0
      %p929 = por %p927, %p928
      %p930 = scmp.ne.s32.totalorder %s922, %s924
      %p931 = scmp.eq.s32.totalorder %s116, 1
      %p932 = por %p930, %p931
      %p933 = scmp.ne.s32.totalorder %s924, %s925
      %p934 = scmp.eq.s32.totalorder %s116, 0
      %p935 = por %p933, %p934
      %p936 = scmp.ne.s32.totalorder %s924, %s925
      %p937 = scmp.eq.s32.totalorder %s117, 1
      %p938 = por %p936, %p937
      %p940 = scmp.ne.s32.totalorder %s925, %s939
      %p941 = scmp.eq.s32.totalorder %s117, 0
      %p942 = por %p940, %p941
      %s944 = sadd.s32 %s943, 1
      %p947 = scmp.eq.s32.totalorder %s111, 1
      %p948 = scmp.ne.s32.totalorder %s943, %s945
      %p949 = scmp.eq.s32.totalorder %s111, 0
      %p950 = por %p948, %p949
      %p951 = scmp.ne.s32.totalorder %s943, %s945
      %p952 = scmp.eq.s32.totalorder %s116, 1
      %p953 = por %p951, %p952
      %p954 = scmp.ne.s32.totalorder %s945, %s946
      %p955 = scmp.eq.s32.totalorder %s116, 0
      %p956 = por %p954, %p955
      %p957 = scmp.ne.s32.totalorder %s945, %s946
      %p958 = scmp.eq.s32.totalorder %s117, 1
      %p959 = por %p957, %p958
      %p961 = scmp.ne.s32.totalorder %s946, %s960
      %p962 = scmp.eq.s32.totalorder %s117, 0
      %p963 = por %p961, %p962
      %s965 = sadd.s32 %s964, 1
      %p968 = scmp.eq.s32.totalorder %s111, 1
      %p969 = scmp.ne.s32.totalorder %s964, %s966
      %p970 = scmp.eq.s32.totalorder %s111, 0
      %p971 = por %p969, %p970
      %p972 = scmp.ne.s32.totalorder %s964, %s966
      %p973 = scmp.eq.s32.totalorder %s116, 1
      %p974 = por %p972, %p973
      %p975 = scmp.ne.s32.totalorder %s966, %s967
      %p976 = scmp.eq.s32.totalorder %s116, 0
      %p977 = por %p975, %p976
      %p978 = scmp.ne.s32.totalorder %s966, %s967
      %p979 = scmp.eq.s32.totalorder %s117, 1
      %p980 = por %p978, %p979
      %p982 = scmp.ne.s32.totalorder %s967, %s981
      %p983 = scmp.eq.s32.totalorder %s117, 0
      %p984 = por %p982, %p983
      %s986 = sadd.s32 %s985, 1
      %p989 = scmp.eq.s32.totalorder %s111, 1
      %p990 = scmp.ne.s32.totalorder %s985, %s987
      %p991 = scmp.eq.s32.totalorder %s111, 0
      %p992 = por %p990, %p991
      %p993 = scmp.ne.s32.totalorder %s985, %s987
      %p994 = scmp.eq.s32.totalorder %s116, 1
      %p995 = por %p993, %p994
      %p996 = scmp.ne.s32.totalorder %s987, %s988
      %p997 = scmp.eq.s32.totalorder %s116, 0
      %p998 = por %p996, %p997
      %p999 = scmp.ne.s32.totalorder %s987, %s988
      %p1000 = scmp.eq.s32.totalorder %s117, 1
      %p1001 = por %p999, %p1000
      %p1003 = scmp.ne.s32.totalorder %s988, %s1002
      %p1004 = scmp.eq.s32.totalorder %s117, 0
      %p1005 = por %p1003, %p1004
      %s1007 = sadd.s32 %s1006, 1
      %p1010 = scmp.eq.s32.totalorder %s111, 1
      %p1011 = scmp.ne.s32.totalorder %s1006, %s1008
      %p1012 = scmp.eq.s32.totalorder %s111, 0
      %p1013 = por %p1011, %p1012
      %p1014 = scmp.ne.s32.totalorder %s1006, %s1008
      %p1015 = scmp.eq.s32.totalorder %s116, 1
      %p1016 = por %p1014, %p1015
      %p1017 = scmp.ne.s32.totalorder %s1008, %s1009
      %p1018 = scmp.eq.s32.totalorder %s116, 0
      %p1019 = por %p1017, %p1018
      %p1020 = scmp.ne.s32.totalorder %s1008, %s1009
      %p1021 = scmp.eq.s32.totalorder %s117, 1
      %p1022 = por %p1020, %p1021
      %p1024 = scmp.ne.s32.totalorder %s1009, %s1023
      %p1025 = scmp.eq.s32.totalorder %s117, 0
      %p1026 = por %p1024, %p1025
      %s1028 = sadd.s32 %s1027, 1
      %p1031 = scmp.eq.s32.totalorder %s111, 1
      %p1032 = scmp.ne.s32.totalorder %s1027, %s1029
      %p1033 = scmp.eq.s32.totalorder %s111, 0
      %p1034 = por %p1032, %p1033
      %p1035 = scmp.ne.s32.totalorder %s1027, %s1029
      %p1036 = scmp.eq.s32.totalorder %s116, 1
      %p1037 = por %p1035, %p1036
      %p1038 = scmp.ne.s32.totalorder %s1029, %s1030
      %p1039 = scmp.eq.s32.totalorder %s116, 0
      %p1040 = por %p1038, %p1039
      %p1041 = scmp.ne.s32.totalorder %s1029, %s1030
      %p1042 = scmp.eq.s32.totalorder %s117, 1
      %p1043 = por %p1041, %p1042
      %p1045 = scmp.ne.s32.totalorder %s1030, %s1044
      %p1046 = scmp.eq.s32.totalorder %s117, 0
      %p1047 = por %p1045, %p1046
      %s1049 = sadd.s32 %s1048, 1
      %p1052 = scmp.eq.s32.totalorder %s111, 1
      %p1053 = scmp.ne.s32.totalorder %s1048, %s1050
      %p1054 = scmp.eq.s32.totalorder %s111, 0
      %p1055 = por %p1053, %p1054
      %p1056 = scmp.ne.s32.totalorder %s1048, %s1050
      %p1057 = scmp.eq.s32.totalorder %s116, 1
      %p1058 = por %p1056, %p1057
      %p1059 = scmp.ne.s32.totalorder %s1050, %s1051
      %p1060 = scmp.eq.s32.totalorder %s116, 0
      %p1061 = por %p1059, %p1060
      %p1062 = scmp.ne.s32.totalorder %s1050, %s1051
      %p1063 = scmp.eq.s32.totalorder %s117, 1
      %p1064 = por %p1062, %p1063
      %p1066 = scmp.ne.s32.totalorder %s1051, %s1065
      %p1067 = scmp.eq.s32.totalorder %s117, 0
      %p1068 = por %p1066, %p1067
      %s1070 = sadd.s32 %s1069, 1
      %p1073 = scmp.eq.s32.totalorder %s111, 1
      %p1074 = scmp.ne.s32.totalorder %s1069, %s1071
      %p1075 = scmp.eq.s32.totalorder %s111, 0
      %p1076 = por %p1074, %p1075
      %p1077 = scmp.ne.s32.totalorder %s1069, %s1071
      %p1078 = scmp.eq.s32.totalorder %s116, 1
      %p1079 = por %p1077, %p1078
      %p1080 = scmp.ne.s32.totalorder %s1071, %s1072
      %p1081 = scmp.eq.s32.totalorder %s116, 0
      %p1082 = por %p1080, %p1081
      %p1083 = scmp.ne.s32.totalorder %s1071, %s1072
      %p1084 = scmp.eq.s32.totalorder %s117, 1
      %p1085 = por %p1083, %p1084
      %p1087 = scmp.ne.s32.totalorder %s1072, %s1086
      %p1088 = scmp.eq.s32.totalorder %s117, 0
      %p1089 = por %p1087, %p1088
      %s1091 = sadd.s32 %s1090, 1
      %p1094 = scmp.eq.s32.totalorder %s111, 1
      %p1095 = scmp.ne.s32.totalorder %s1090, %s1092
      %p1096 = scmp.eq.s32.totalorder %s111, 0
      %p1097 = por %p1095, %p1096
      %p1098 = scmp.ne.s32.totalorder %s1090, %s1092
      %p1099 = scmp.eq.s32.totalorder %s116, 1
      %p1100 = por %p1098, %p1099
      %p1101 = scmp.ne.s32.totalorder %s1092, %s1093
      %p1102 = scmp.eq.s32.totalorder %s116, 0
      %p1103 = por %p1101, %p1102
      %p1104 = scmp.ne.s32.totalorder %s1092, %s1093
      %p1105 = scmp.eq.s32.totalorder %s117, 1
      %p1106 = por %p1104, %p1105
      %p1108 = scmp.ne.s32.totalorder %s1093, %s1107
      %p1109 = scmp.eq.s32.totalorder %s117, 0
      %p1110 = por %p1108, %p1109
      %s1111 = ssub.s32 %s111, %s118
      %p1112 = scmp.eq.s32.totalorder %s1111, 0
      %s1114 = sadd.s32 %s1113, 1
      %s1115 = scalar_select %p1112, %s1113, %s1114
      %p1118 = pneg %p1112
      %p1119 = scmp.eq.s32.totalorder %s111, 1
      %p1120 = por %p1118, %p1119
      %p1121 = scmp.ne.s32.totalorder %s1113, %s1116
      %p1122 = scmp.eq.s32.totalorder %s111, 0
      %p1123 = por %p1121, %p1122
      %p1124 = scmp.ne.s32.totalorder %s1113, %s1116
      %p1125 = scmp.eq.s32.totalorder %s116, 1
      %p1126 = por %p1124, %p1125
      %p1127 = scmp.ne.s32.totalorder %s1116, %s1117
      %p1128 = scmp.eq.s32.totalorder %s116, 0
      %p1129 = por %p1127, %p1128
      %p1130 = scmp.ne.s32.totalorder %s1116, %s1117
      %p1131 = scmp.eq.s32.totalorder %s117, 1
      %p1132 = por %p1130, %p1131
      %p1134 = scmp.ne.s32.totalorder %s1117, %s1133
      %p1135 = scmp.eq.s32.totalorder %s117, 0
      %p1136 = por %p1134, %p1135
      %p1137 = scmp.le.s32.totalorder 1, %s111
      %p1138 = scmp.lt.s32.totalorder %s111, 3
      %p1139 = pnand %p1137, %p1138
      %p1140 = pneg %p1139
      // Predicated region
      $region9: #{aemad_forward.1} parent=5 // pred_check
        _
      $region10: #{aemad_forward.1} parent=5 // pred_check_branch
        %1142 = sbr.rel (%p1139) target = $region12
      $region11: #{aemad_forward.1} parent=5 // pred_region
        %s1143 = ssub.s32 %s111, 1
        // Predicated region
        $region13: #{aemad_forward.1} parent=11 // pred_check
          %p1144 = pneg %p158
        $region14: #{aemad_forward.1} parent=11 // pred_check_branch
          %1146 = sbr.rel (%p1144) target = $region16
        $region15: #{aemad_forward.1} parent=11 // pred_region
          _
        $region16: #{aemad_forward.1} parent=11 // pred_fallthru
          _
        // Predicated region
        $region17: #{aemad_forward.1} parent=11 // pred_check
          %p1147 = pneg %p179
        $region18: #{aemad_forward.1} parent=11 // pred_check_branch
          %1149 = sbr.rel (%p1147) target = $region20
        $region19: #{aemad_forward.1} parent=11 // pred_region
          %1151 = vsyncadd [#allocation3], 0
          %s1152 = sshll.u32 %s5, 4
          %s1153 = int_to_ptr.hbm [resolvable:$true] %s1152
          %s1154 = sshll.u32 [#allocation2], 4
          %s1155 = int_to_ptr.vmem [resolvable:$true] %s1154
          %1160 = dma.hbm_to_vmem [thread:$0]  %s1153, 256, %s1155, [#allocation3], 128, 128, 8
        $region20: #{aemad_forward.1} parent=11 // pred_fallthru
          _
        // Predicated region
        $region21: #{aemad_forward.1} parent=11 // pred_check
          %p1161 = pneg %p200
        $region22: #{aemad_forward.1} parent=11 // pred_check_branch
          %1163 = sbr.rel (%p1161) target = $region24
        $region23: #{aemad_forward.1} parent=11 // pred_region
          %1165 = vsyncadd [#allocation5], 0
          %s1166 = sshll.u32 %s7, 4
          %s1167 = int_to_ptr.hbm [resolvable:$true] %s1166
          %s1168 = sshll.u32 [#allocation4], 4
          %s1169 = int_to_ptr.vmem [resolvable:$true] %s1168
          %1174 = dma.hbm_to_vmem [thread:$0]  %s1167, 256, %s1169, [#allocation5], 128, 128, 8
        $region24: #{aemad_forward.1} parent=11 // pred_fallthru
          _
        // Predicated region
        $region25: #{aemad_forward.1} parent=11 // pred_check
          %p1175 = pneg %p221
        $region26: #{aemad_forward.1} parent=11 // pred_check_branch
          %1177 = sbr.rel (%p1175) target = $region28
        $region27: #{aemad_forward.1} parent=11 // pred_region
          %1179 = vsyncadd [#allocation5], 0
          %s1180 = sshll.u32 %s9, 4
          %s1181 = int_to_ptr.hbm [resolvable:$true] %s1180
          %s1182 = sshll.u32 [#allocation6], 4
          %s1183 = int_to_ptr.vmem [resolvable:$true] %s1182
          %1188 = dma.hbm_to_vmem [thread:$0]  %s1181, 256, %s1183, [#allocation5], 128, 128, 8
        $region28: #{aemad_forward.1} parent=11 // pred_fallthru
          _
        // Predicated region
        $region29: #{aemad_forward.1} parent=11 // pred_check
          %p1189 = pneg %p242
        $region30: #{aemad_forward.1} parent=11 // pred_check_branch
          %1191 = sbr.rel (%p1189) target = $region32
        $region31: #{aemad_forward.1} parent=11 // pred_region
          _
        $region32: #{aemad_forward.1} parent=11 // pred_fallthru
          _
        // Predicated region
        $region33: #{aemad_forward.1} parent=11 // pred_check
          %p1192 = pneg %p263
        $region34: #{aemad_forward.1} parent=11 // pred_check_branch
          %1194 = sbr.rel (%p1192) target = $region36
        $region35: #{aemad_forward.1} parent=11 // pred_region
          _
        $region36: #{aemad_forward.1} parent=11 // pred_fallthru
          _
        // Predicated region
        $region37: #{aemad_forward.1} parent=11 // pred_check
          %p1195 = pneg %p284
        $region38: #{aemad_forward.1} parent=11 // pred_check_branch
          %1197 = sbr.rel (%p1195) target = $region40
        $region39: #{aemad_forward.1} parent=11 // pred_region
          %1199 = vsyncadd [#allocation8], 0
          %s1201 = sshll.u32 %s15, 4
          %s1202 = int_to_ptr.hbm [resolvable:$true] %s1201
          %s1203 = sshll.u32 [#allocation7], 4
          %s1204 = int_to_ptr.vmem [resolvable:$true] %s1203
          %1206 = dma.hbm_to_vmem [thread:$0]  %s1202, 64, %s1204, [#allocation8]
        $region40: #{aemad_forward.1} parent=11 // pred_fallthru
          _
        // Predicated region
        $region41: #{aemad_forward.1} parent=11 // pred_check
          %p1207 = pneg %p305
        $region42: #{aemad_forward.1} parent=11 // pred_check_branch
          %1209 = sbr.rel (%p1207) target = $region44
        $region43: #{aemad_forward.1} parent=11 // pred_region
          _
        $region44: #{aemad_forward.1} parent=11 // pred_fallthru
          _
        // Predicated region
        $region45: #{aemad_forward.1} parent=11 // pred_check
          %p1210 = pneg %p326
        $region46: #{aemad_forward.1} parent=11 // pred_check_branch
          %1212 = sbr.rel (%p1210) target = $region48
        $region47: #{aemad_forward.1} parent=11 // pred_region
          _
        $region48: #{aemad_forward.1} parent=11 // pred_fallthru
          _
        // Predicated region
        $region49: #{aemad_forward.1} parent=11 // pred_check
          %p1213 = pneg %p347
        $region50: #{aemad_forward.1} parent=11 // pred_check_branch
          %1215 = sbr.rel (%p1213) target = $region52
        $region51: #{aemad_forward.1} parent=11 // pred_region
          %1217 = vsyncadd [#allocation8], 0
          %s1218 = sshll.u32 %s21, 4
          %s1219 = int_to_ptr.hbm [resolvable:$true] %s1218
          %s1220 = sshll.u32 [#allocation9], 4
          %s1221 = int_to_ptr.vmem [resolvable:$true] %s1220
          %1226 = dma.hbm_to_vmem [thread:$0]  %s1219, 128, %s1221, [#allocation8], 64, 64, 4
        $region52: #{aemad_forward.1} parent=11 // pred_fallthru
          _
        // Predicated region
        $region53: #{aemad_forward.1} parent=11 // pred_check
          %p1227 = pneg %p368
        $region54: #{aemad_forward.1} parent=11 // pred_check_branch
          %1229 = sbr.rel (%p1227) target = $region56
        $region55: #{aemad_forward.1} parent=11 // pred_region
          _
        $region56: #{aemad_forward.1} parent=11 // pred_fallthru
          _
        // Predicated region
        $region57: #{aemad_forward.1} parent=11 // pred_check
          %p1230 = pneg %p389
        $region58: #{aemad_forward.1} parent=11 // pred_check_branch
          %1232 = sbr.rel (%p1230) target = $region60
        $region59: #{aemad_forward.1} parent=11 // pred_region
          %1234 = vsyncadd [#allocation11], 0
          %s1235 = sshll.u32 %s25, 4
          %s1236 = int_to_ptr.hbm [resolvable:$true] %s1235
          %s1237 = sshll.u32 [#allocation10], 4
          %s1238 = int_to_ptr.vmem [resolvable:$true] %s1237
          %1243 = dma.hbm_to_vmem [thread:$0]  %s1236, 256, %s1238, [#allocation11], 128, 128, 8
        $region60: #{aemad_forward.1} parent=11 // pred_fallthru
          _
        // Predicated region
        $region61: #{aemad_forward.1} parent=11 // pred_check
          %p1244 = pneg %p410
        $region62: #{aemad_forward.1} parent=11 // pred_check_branch
          %1246 = sbr.rel (%p1244) target = $region64
        $region63: #{aemad_forward.1} parent=11 // pred_region
          _
        $region64: #{aemad_forward.1} parent=11 // pred_fallthru
          _
        // Predicated region
        $region65: #{aemad_forward.1} parent=11 // pred_check
          %p1247 = pneg %p431
        $region66: #{aemad_forward.1} parent=11 // pred_check_branch
          %1249 = sbr.rel (%p1247) target = $region68
        $region67: #{aemad_forward.1} parent=11 // pred_region
          _
        $region68: #{aemad_forward.1} parent=11 // pred_fallthru
          _
        // Predicated region
        $region69: #{aemad_forward.1} parent=11 // pred_check
          %p1250 = pneg %p452
        $region70: #{aemad_forward.1} parent=11 // pred_check_branch
          %1252 = sbr.rel (%p1250) target = $region72
        $region71: #{aemad_forward.1} parent=11 // pred_region
          _
        $region72: #{aemad_forward.1} parent=11 // pred_fallthru
          _
        // Predicated region
        $region73: #{aemad_forward.1} parent=11 // pred_check
          %p1253 = pneg %p473
        $region74: #{aemad_forward.1} parent=11 // pred_check_branch
          %1255 = sbr.rel (%p1253) target = $region76
        $region75: #{aemad_forward.1} parent=11 // pred_region
          _
        $region76: #{aemad_forward.1} parent=11 // pred_fallthru
          _
        // Predicated region
        $region77: #{aemad_forward.1} parent=11 // pred_check
          %p1256 = pneg %p494
        $region78: #{aemad_forward.1} parent=11 // pred_check_branch
          %1258 = sbr.rel (%p1256) target = $region80
        $region79: #{aemad_forward.1} parent=11 // pred_region
          %1260 = vsyncadd [#allocation11], 0
          %s1261 = sshll.u32 %s35, 4
          %s1262 = int_to_ptr.hbm [resolvable:$true] %s1261
          %s1263 = sshll.u32 [#allocation12], 4
          %s1264 = int_to_ptr.vmem [resolvable:$true] %s1263
          %1269 = dma.hbm_to_vmem [thread:$0]  %s1262, 768, %s1264, [#allocation11], 192, 192, 12
        $region80: #{aemad_forward.1} parent=11 // pred_fallthru
          _
        // Predicated region
        $region81: #{aemad_forward.1} parent=11 // pred_check
          %p1270 = pneg %p515
        $region82: #{aemad_forward.1} parent=11 // pred_check_branch
          %1272 = sbr.rel (%p1270) target = $region84
        $region83: #{aemad_forward.1} parent=11 // pred_region
          _
        $region84: #{aemad_forward.1} parent=11 // pred_fallthru
          _
        // Predicated region
        $region85: #{aemad_forward.1} parent=11 // pred_check
          %p1273 = pneg %p536
        $region86: #{aemad_forward.1} parent=11 // pred_check_branch
          %1275 = sbr.rel (%p1273) target = $region88
        $region87: #{aemad_forward.1} parent=11 // pred_region
          _
        $region88: #{aemad_forward.1} parent=11 // pred_fallthru
          _
        // Predicated region
        $region89: #{aemad_forward.1} parent=11 // pred_check
          %p1276 = pneg %p557
        $region90: #{aemad_forward.1} parent=11 // pred_check_branch
          %1278 = sbr.rel (%p1276) target = $region92
        $region91: #{aemad_forward.1} parent=11 // pred_region
          %1280 = vsyncadd [#allocation14], 0
          %s1281 = sshll.u32 %s41, 4
          %s1282 = int_to_ptr.hbm [resolvable:$true] %s1281
          %s1283 = sshll.u32 [#allocation13], 4
          %s1284 = int_to_ptr.vmem [resolvable:$true] %s1283
          %1289 = dma.hbm_to_vmem [thread:$0]  %s1282, 1536, %s1284, [#allocation14], 192, 192, 12
        $region92: #{aemad_forward.1} parent=11 // pred_fallthru
          _
        // Predicated region
        $region93: #{aemad_forward.1} parent=11 // pred_check
          %p1290 = pneg %p578
        $region94: #{aemad_forward.1} parent=11 // pred_check_branch
          %1292 = sbr.rel (%p1290) target = $region96
        $region95: #{aemad_forward.1} parent=11 // pred_region
          _
        $region96: #{aemad_forward.1} parent=11 // pred_fallthru
          _
        // Predicated region
        $region97: #{aemad_forward.1} parent=11 // pred_check
          %p1293 = pneg %p599
        $region98: #{aemad_forward.1} parent=11 // pred_check_branch
          %1295 = sbr.rel (%p1293) target = $region100
        $region99: #{aemad_forward.1} parent=11 // pred_region
          _
        $region100: #{aemad_forward.1} parent=11 // pred_fallthru
          _
        // Predicated region
        $region101: #{aemad_forward.1} parent=11 // pred_check
          %p1296 = pneg %p620
        $region102: #{aemad_forward.1} parent=11 // pred_check_branch
          %1298 = sbr.rel (%p1296) target = $region104
        $region103: #{aemad_forward.1} parent=11 // pred_region
          _
        $region104: #{aemad_forward.1} parent=11 // pred_fallthru
          _
        // Predicated region
        $region105: #{aemad_forward.1} parent=11 // pred_check
          %p1299 = pneg %p641
        $region106: #{aemad_forward.1} parent=11 // pred_check_branch
          %1301 = sbr.rel (%p1299) target = $region108
        $region107: #{aemad_forward.1} parent=11 // pred_region
          _
        $region108: #{aemad_forward.1} parent=11 // pred_fallthru
          _
        // Predicated region
        $region109: #{aemad_forward.1} parent=11 // pred_check
          %p1302 = pneg %p662
        $region110: #{aemad_forward.1} parent=11 // pred_check_branch
          %1304 = sbr.rel (%p1302) target = $region112
        $region111: #{aemad_forward.1} parent=11 // pred_region
          %1306 = vsyncadd [#allocation14], 0
          %s1307 = sshll.u32 %s51, 4
          %s1308 = int_to_ptr.hbm [resolvable:$true] %s1307
          %s1309 = sshll.u32 [#allocation15], 4
          %s1310 = int_to_ptr.vmem [resolvable:$true] %s1309
          %1315 = dma.hbm_to_vmem [thread:$0]  %s1308, 2560, %s1310, [#allocation14], 320, 320, 20
        $region112: #{aemad_forward.1} parent=11 // pred_fallthru
          _
        // Predicated region
        $region113: #{aemad_forward.1} parent=11 // pred_check
          %p1316 = pneg %p683
        $region114: #{aemad_forward.1} parent=11 // pred_check_branch
          %1318 = sbr.rel (%p1316) target = $region116
        $region115: #{aemad_forward.1} parent=11 // pred_region
          _
        $region116: #{aemad_forward.1} parent=11 // pred_fallthru
          _
        // Predicated region
        $region117: #{aemad_forward.1} parent=11 // pred_check
          %p1319 = pneg %p704
        $region118: #{aemad_forward.1} parent=11 // pred_check_branch
          %1321 = sbr.rel (%p1319) target = $region120
        $region119: #{aemad_forward.1} parent=11 // pred_region
          %1323 = vsyncadd [#allocation17], 0
          %s1324 = sshll.u32 %s55, 4
          %s1325 = int_to_ptr.hbm [resolvable:$true] %s1324
          %s1326 = sshll.u32 [#allocation16], 4
          %s1327 = int_to_ptr.vmem [resolvable:$true] %s1326
          %1332 = dma.hbm_to_vmem [thread:$0]  %s1325, 1280, %s1327, [#allocation17], 320, 320, 20
        $region120: #{aemad_forward.1} parent=11 // pred_fallthru
          _
        // Predicated region
        $region121: #{aemad_forward.1} parent=11 // pred_check
          %p1333 = pneg %p725
        $region122: #{aemad_forward.1} parent=11 // pred_check_branch
          %1335 = sbr.rel (%p1333) target = $region124
        $region123: #{aemad_forward.1} parent=11 // pred_region
          _
        $region124: #{aemad_forward.1} parent=11 // pred_fallthru
          _
        // Predicated region
        $region125: #{aemad_forward.1} parent=11 // pred_check
          %p1336 = pneg %p746
        $region126: #{aemad_forward.1} parent=11 // pred_check_branch
          %1338 = sbr.rel (%p1336) target = $region128
        $region127: #{aemad_forward.1} parent=11 // pred_region
          %1340 = vsyncadd [#allocation17], 0
          %s1341 = sshll.u32 %s59, 4
          %s1342 = int_to_ptr.hbm [resolvable:$true] %s1341
          %s1343 = sshll.u32 [#allocation18], 4
          %s1344 = int_to_ptr.vmem [resolvable:$true] %s1343
          %1349 = dma.hbm_to_vmem [thread:$0]  %s1342, 768, %s1344, [#allocation17], 192, 192, 12
        $region128: #{aemad_forward.1} parent=11 // pred_fallthru
          _
        // Predicated region
        $region129: #{aemad_forward.1} parent=11 // pred_check
          %p1350 = pneg %p767
        $region130: #{aemad_forward.1} parent=11 // pred_check_branch
          %1352 = sbr.rel (%p1350) target = $region132
        $region131: #{aemad_forward.1} parent=11 // pred_region
          _
        $region132: #{aemad_forward.1} parent=11 // pred_fallthru
          _
        // Predicated region
        $region133: #{aemad_forward.1} parent=11 // pred_check
          %p1353 = pneg %p788
        $region134: #{aemad_forward.1} parent=11 // pred_check_branch
          %1355 = sbr.rel (%p1353) target = $region136
        $region135: #{aemad_forward.1} parent=11 // pred_region
          %1357 = vsyncadd [#allocation20], 0
          %s1358 = sshll.u32 %s63, 4
          %s1359 = int_to_ptr.hbm [resolvable:$true] %s1358
          %s1360 = sshll.u32 [#allocation19], 4
          %s1361 = int_to_ptr.vmem [resolvable:$true] %s1360
          %1366 = dma.hbm_to_vmem [thread:$0]  %s1359, 1024, %s1361, [#allocation20], 64, 64, 4
        $region136: #{aemad_forward.1} parent=11 // pred_fallthru
          _
        // Predicated region
        $region137: #{aemad_forward.1} parent=11 // pred_check
          %p1367 = pneg %p809
        $region138: #{aemad_forward.1} parent=11 // pred_check_branch
          %1369 = sbr.rel (%p1367) target = $region140
        $region139: #{aemad_forward.1} parent=11 // pred_region
          %1371 = vsyncadd [#allocation20], 0
          %s1372 = sshll.u32 %s65, 4
          %s1373 = int_to_ptr.hbm [resolvable:$true] %s1372
          %s1374 = sshll.u32 [#allocation21], 4
          %s1375 = int_to_ptr.vmem [resolvable:$true] %s1374
          %1380 = dma.hbm_to_vmem [thread:$0]  %s1373, 768, %s1375, [#allocation20], 192, 192, 12
        $region140: #{aemad_forward.1} parent=11 // pred_fallthru
          _
        // Predicated region
        $region141: #{aemad_forward.1} parent=11 // pred_check
          %p1381 = pneg %p830
        $region142: #{aemad_forward.1} parent=11 // pred_check_branch
          %1383 = sbr.rel (%p1381) target = $region144
        $region143: #{aemad_forward.1} parent=11 // pred_region
          _
        $region144: #{aemad_forward.1} parent=11 // pred_fallthru
          _
        // Predicated region
        $region145: #{aemad_forward.1} parent=11 // pred_check
          %p1384 = pneg %p851
        $region146: #{aemad_forward.1} parent=11 // pred_check_branch
          %1386 = sbr.rel (%p1384) target = $region148
        $region147: #{aemad_forward.1} parent=11 // pred_region
          _
        $region148: #{aemad_forward.1} parent=11 // pred_fallthru
          _
        // Predicated region
        $region149: #{aemad_forward.1} parent=11 // pred_check
          %p1387 = pneg %p872
        $region150: #{aemad_forward.1} parent=11 // pred_check_branch
          %1389 = sbr.rel (%p1387) target = $region152
        $region151: #{aemad_forward.1} parent=11 // pred_region
          _
        $region152: #{aemad_forward.1} parent=11 // pred_fallthru
          _
        // Predicated region
        $region153: #{aemad_forward.1} parent=11 // pred_check
          %p1390 = pneg %p893
        $region154: #{aemad_forward.1} parent=11 // pred_check_branch
          %1392 = sbr.rel (%p1390) target = $region156
        $region155: #{aemad_forward.1} parent=11 // pred_region
          %1394 = vsyncadd [#allocation23], 0
          %s1395 = sshll.u32 %s73, 4
          %s1396 = int_to_ptr.hbm [resolvable:$true] %s1395
          %s1397 = sshll.u32 [#allocation22], 4
          %s1398 = int_to_ptr.vmem [resolvable:$true] %s1397
          %1403 = dma.hbm_to_vmem [thread:$0]  %s1396, 256, %s1398, [#allocation23], 128, 128, 8
        $region156: #{aemad_forward.1} parent=11 // pred_fallthru
          _
        // Predicated region
        $region157: #{aemad_forward.1} parent=11 // pred_check
          %p1404 = pneg %p914
        $region158: #{aemad_forward.1} parent=11 // pred_check_branch
          %1406 = sbr.rel (%p1404) target = $region160
        $region159: #{aemad_forward.1} parent=11 // pred_region
          _
        $region160: #{aemad_forward.1} parent=11 // pred_fallthru
          _
        // Predicated region
        $region161: #{aemad_forward.1} parent=11 // pred_check
          %p1407 = pneg %p935
        $region162: #{aemad_forward.1} parent=11 // pred_check_branch
          %1409 = sbr.rel (%p1407) target = $region164
        $region163: #{aemad_forward.1} parent=11 // pred_region
          %1411 = vsyncadd [#allocation23], 0
          %s1412 = sshll.u32 %s77, 4
          %s1413 = int_to_ptr.hbm [resolvable:$true] %s1412
          %s1414 = sshll.u32 [#allocation24], 4
          %s1415 = int_to_ptr.vmem [resolvable:$true] %s1414
          %1420 = dma.hbm_to_vmem [thread:$0]  %s1413, 2048, %s1415, [#allocation23], 128, 128, 8
        $region164: #{aemad_forward.1} parent=11 // pred_fallthru
          _
        // Predicated region
        $region165: #{aemad_forward.1} parent=11 // pred_check
          %p1421 = pneg %p956
        $region166: #{aemad_forward.1} parent=11 // pred_check_branch
          %1423 = sbr.rel (%p1421) target = $region168
        $region167: #{aemad_forward.1} parent=11 // pred_region
          %1425 = vsyncadd [#allocation26], 0
          %s1426 = sshll.u32 %s79, 4
          %s1427 = int_to_ptr.hbm [resolvable:$true] %s1426
          %s1428 = sshll.u32 [#allocation25], 4
          %s1429 = int_to_ptr.vmem [resolvable:$true] %s1428
          %1434 = dma.hbm_to_vmem [thread:$0]  %s1427, 256, %s1429, [#allocation26], 128, 128, 8
        $region168: #{aemad_forward.1} parent=11 // pred_fallthru
          _
        // Predicated region
        $region169: #{aemad_forward.1} parent=11 // pred_check
          %p1435 = pneg %p977
        $region170: #{aemad_forward.1} parent=11 // pred_check_branch
          %1437 = sbr.rel (%p1435) target = $region172
        $region171: #{aemad_forward.1} parent=11 // pred_region
          _
        $region172: #{aemad_forward.1} parent=11 // pred_fallthru
          _
        // Predicated region
        $region173: #{aemad_forward.1} parent=11 // pred_check
          %p1438 = pneg %p998
        $region174: #{aemad_forward.1} parent=11 // pred_check_branch
          %1440 = sbr.rel (%p1438) target = $region176
        $region175: #{aemad_forward.1} parent=11 // pred_region
          %1442 = vsyncadd [#allocation26], 0
          %s1444 = sshll.u32 %s83, 4
          %s1445 = int_to_ptr.hbm [resolvable:$true] %s1444
          %s1446 = sshll.u32 [#allocation27], 4
          %s1447 = int_to_ptr.vmem [resolvable:$true] %s1446
          %1449 = dma.hbm_to_vmem [thread:$0]  %s1445, 128, %s1447, [#allocation26]
        $region176: #{aemad_forward.1} parent=11 // pred_fallthru
          _
        // Predicated region
        $region177: #{aemad_forward.1} parent=11 // pred_check
          %p1450 = pneg %p1019
        $region178: #{aemad_forward.1} parent=11 // pred_check_branch
          %1452 = sbr.rel (%p1450) target = $region180
        $region179: #{aemad_forward.1} parent=11 // pred_region
          _
        $region180: #{aemad_forward.1} parent=11 // pred_fallthru
          _
        // Predicated region
        $region181: #{aemad_forward.1} parent=11 // pred_check
          %p1453 = pneg %p1040
        $region182: #{aemad_forward.1} parent=11 // pred_check_branch
          %1455 = sbr.rel (%p1453) target = $region184
        $region183: #{aemad_forward.1} parent=11 // pred_region
          %1457 = vsyncadd [#allocation29], 0
          %s1459 = sshll.u32 %s87, 4
          %s1460 = int_to_ptr.hbm [resolvable:$true] %s1459
          %s1461 = sshll.u32 [#allocation28], 4
          %s1462 = int_to_ptr.vmem [resolvable:$true] %s1461
          %1464 = dma.hbm_to_vmem [thread:$0]  %s1460, 64, %s1462, [#allocation29]
        $region184: #{aemad_forward.1} parent=11 // pred_fallthru
          _
        // Predicated region
        $region185: #{aemad_forward.1} parent=11 // pred_check
          %p1465 = pneg %p1061
        $region186: #{aemad_forward.1} parent=11 // pred_check_branch
          %1467 = sbr.rel (%p1465) target = $region188
        $region187: #{aemad_forward.1} parent=11 // pred_region
          _
        $region188: #{aemad_forward.1} parent=11 // pred_fallthru
          _
        // Predicated region
        $region189: #{aemad_forward.1} parent=11 // pred_check
          %p1468 = pneg %p1082
        $region190: #{aemad_forward.1} parent=11 // pred_check_branch
          %1470 = sbr.rel (%p1468) target = $region192
        $region191: #{aemad_forward.1} parent=11 // pred_region
          %1472 = vsyncadd [#allocation29], 0
          %s1474 = sshll.u32 %s91, 4
          %s1475 = int_to_ptr.hbm [resolvable:$true] %s1474
          %s1476 = sshll.u32 [#allocation30], 4
          %s1477 = int_to_ptr.vmem [resolvable:$true] %s1476
          %1479 = dma.hbm_to_vmem [thread:$0]  %s1475, 32, %s1477, [#allocation29]
        $region192: #{aemad_forward.1} parent=11 // pred_fallthru
          _
        // Predicated region
        $region193: #{aemad_forward.1} parent=11 // pred_check
          %p1480 = pneg %p1103
        $region194: #{aemad_forward.1} parent=11 // pred_check_branch
          %1482 = sbr.rel (%p1480) target = $region196
        $region195: #{aemad_forward.1} parent=11 // pred_region
          _
        $region196: #{aemad_forward.1} parent=11 // pred_fallthru
          _
      $region12: #{aemad_forward.1} parent=5 // pred_fallthru
        _
      %p1483 = scmp.lt.s32.totalorder %s111, 2
      // Predicated region
      $region197: #{aemad_forward.1} parent=5 // pred_check
        %p1484 = pneg %p1483
      $region198: #{aemad_forward.1} parent=5 // pred_check_branch
        %1486 = sbr.rel (%p1484) target = $region200
      $region199: #{aemad_forward.1} parent=5 // pred_region
        // Predicated region
        $region201: #{aemad_forward.1} parent=199 // pred_check
          %p1487 = pneg %p131
        $region202: #{aemad_forward.1} parent=199 // pred_check_branch
          %1489 = sbr.rel (%p1487) target = $region204
        $region203: #{aemad_forward.1} parent=199 // pred_region
          %p1490 = scmp.lt.s32.totalorder %s111, 1
          %s1491 = scalar_select %p1490, %s111, 1
          %s1492 = smul.addr %s1491, 2
          %s1493 = smul.addr %s1492, 8
          %s1494 = scalar_lea.vmem %s1, %s1493
        $region204: #{aemad_forward.1} parent=199 // pred_fallthru
          _
      $region200: #{aemad_forward.1} parent=5 // pred_fallthru
        _
      %p1495 = scmp.le.s32.totalorder 1, %s111
      %p1496 = scmp.lt.s32.totalorder %s111, 3
      %p1497 = pnand %p1495, %p1496
      %p1498 = pneg %p1497
      // Predicated region
      $region205: #{aemad_forward.1} parent=5 // pred_check
        _
      $region206: #{aemad_forward.1} parent=5 // pred_check_branch
        %1500 = sbr.rel (%p1497) target = $region208
      $region207: #{aemad_forward.1} parent=5 // pred_region
        %s1501 = ssub.s32 %s111, 1
        // Predicated region
        $region209: #{aemad_forward.1} parent=207 // pred_check
          %p1502 = pneg %p179
        $region210: #{aemad_forward.1} parent=207 // pred_check_branch
          %1504 = sbr.rel (%p1502) target = $region212
        $region211: #{aemad_forward.1} parent=207 // pred_region
          %1506 = dma.done [#allocation3], 256
        $region212: #{aemad_forward.1} parent=207 // pred_fallthru
          _
        // Predicated region
        $region213: #{aemad_forward.1} parent=207 // pred_check
          %p1507 = pneg %p200
        $region214: #{aemad_forward.1} parent=207 // pred_check_branch
          %1509 = sbr.rel (%p1507) target = $region216
        $region215: #{aemad_forward.1} parent=207 // pred_region
          %1511 = dma.done [#allocation5], 256
        $region216: #{aemad_forward.1} parent=207 // pred_fallthru
          _
        // Predicated region
        $region217: #{aemad_forward.1} parent=207 // pred_check
          %p1512 = pneg %p221
        $region218: #{aemad_forward.1} parent=207 // pred_check_branch
          %1514 = sbr.rel (%p1512) target = $region220
        $region219: #{aemad_forward.1} parent=207 // pred_region
          %1516 = dma.done [#allocation5], 256
        $region220: #{aemad_forward.1} parent=207 // pred_fallthru
          _
        // Predicated region
        $region221: #{aemad_forward.1} parent=207 // pred_check
          %p1517 = pneg %p284
        $region222: #{aemad_forward.1} parent=207 // pred_check_branch
          %1519 = sbr.rel (%p1517) target = $region224
        $region223: #{aemad_forward.1} parent=207 // pred_region
          %1521 = dma.done [#allocation8], 64
        $region224: #{aemad_forward.1} parent=207 // pred_fallthru
          _
        // Predicated region
        $region225: #{aemad_forward.1} parent=207 // pred_check
          %p1522 = pneg %p347
        $region226: #{aemad_forward.1} parent=207 // pred_check_branch
          %1524 = sbr.rel (%p1522) target = $region228
        $region227: #{aemad_forward.1} parent=207 // pred_region
          %1526 = dma.done [#allocation8], 128
        $region228: #{aemad_forward.1} parent=207 // pred_fallthru
          _
        // Predicated region
        $region229: #{aemad_forward.1} parent=207 // pred_check
          %p1527 = pneg %p389
        $region230: #{aemad_forward.1} parent=207 // pred_check_branch
          %1529 = sbr.rel (%p1527) target = $region232
        $region231: #{aemad_forward.1} parent=207 // pred_region
          %1531 = dma.done [#allocation11], 256
        $region232: #{aemad_forward.1} parent=207 // pred_fallthru
          _
        // Predicated region
        $region233: #{aemad_forward.1} parent=207 // pred_check
          %p1532 = pneg %p494
        $region234: #{aemad_forward.1} parent=207 // pred_check_branch
          %1534 = sbr.rel (%p1532) target = $region236
        $region235: #{aemad_forward.1} parent=207 // pred_region
          %1536 = dma.done [#allocation11], 768
        $region236: #{aemad_forward.1} parent=207 // pred_fallthru
          _
        // Predicated region
        $region237: #{aemad_forward.1} parent=207 // pred_check
          %p1537 = pneg %p557
        $region238: #{aemad_forward.1} parent=207 // pred_check_branch
          %1539 = sbr.rel (%p1537) target = $region240
        $region239: #{aemad_forward.1} parent=207 // pred_region
          %1541 = dma.done [#allocation14], 1536
        $region240: #{aemad_forward.1} parent=207 // pred_fallthru
          _
        // Predicated region
        $region241: #{aemad_forward.1} parent=207 // pred_check
          %p1542 = pneg %p662
        $region242: #{aemad_forward.1} parent=207 // pred_check_branch
          %1544 = sbr.rel (%p1542) target = $region244
        $region243: #{aemad_forward.1} parent=207 // pred_region
          %1546 = dma.done [#allocation14], 2560
        $region244: #{aemad_forward.1} parent=207 // pred_fallthru
          _
        // Predicated region
        $region245: #{aemad_forward.1} parent=207 // pred_check
          %p1547 = pneg %p704
        $region246: #{aemad_forward.1} parent=207 // pred_check_branch
          %1549 = sbr.rel (%p1547) target = $region248
        $region247: #{aemad_forward.1} parent=207 // pred_region
          %1551 = dma.done [#allocation17], 1280
        $region248: #{aemad_forward.1} parent=207 // pred_fallthru
          _
        // Predicated region
        $region249: #{aemad_forward.1} parent=207 // pred_check
          %p1552 = pneg %p746
        $region250: #{aemad_forward.1} parent=207 // pred_check_branch
          %1554 = sbr.rel (%p1552) target = $region252
        $region251: #{aemad_forward.1} parent=207 // pred_region
          %1556 = dma.done [#allocation17], 768
        $region252: #{aemad_forward.1} parent=207 // pred_fallthru
          _
        // Predicated region
        $region253: #{aemad_forward.1} parent=207 // pred_check
          %p1557 = pneg %p788
        $region254: #{aemad_forward.1} parent=207 // pred_check_branch
          %1559 = sbr.rel (%p1557) target = $region256
        $region255: #{aemad_forward.1} parent=207 // pred_region
          %1561 = dma.done [#allocation20], 1024
        $region256: #{aemad_forward.1} parent=207 // pred_fallthru
          _
        // Predicated region
        $region257: #{aemad_forward.1} parent=207 // pred_check
          %p1562 = pneg %p809
        $region258: #{aemad_forward.1} parent=207 // pred_check_branch
          %1564 = sbr.rel (%p1562) target = $region260
        $region259: #{aemad_forward.1} parent=207 // pred_region
          %1566 = dma.done [#allocation20], 768
        $region260: #{aemad_forward.1} parent=207 // pred_fallthru
          _
        // Predicated region
        $region261: #{aemad_forward.1} parent=207 // pred_check
          %p1567 = pneg %p893
        $region262: #{aemad_forward.1} parent=207 // pred_check_branch
          %1569 = sbr.rel (%p1567) target = $region264
        $region263: #{aemad_forward.1} parent=207 // pred_region
          %1571 = dma.done [#allocation23], 256
        $region264: #{aemad_forward.1} parent=207 // pred_fallthru
          _
        // Predicated region
        $region265: #{aemad_forward.1} parent=207 // pred_check
          %p1572 = pneg %p935
        $region266: #{aemad_forward.1} parent=207 // pred_check_branch
          %1574 = sbr.rel (%p1572) target = $region268
        $region267: #{aemad_forward.1} parent=207 // pred_region
          %1576 = dma.done [#allocation23], 2048
        $region268: #{aemad_forward.1} parent=207 // pred_fallthru
          _
        // Predicated region
        $region269: #{aemad_forward.1} parent=207 // pred_check
          %p1577 = pneg %p956
        $region270: #{aemad_forward.1} parent=207 // pred_check_branch
          %1579 = sbr.rel (%p1577) target = $region272
        $region271: #{aemad_forward.1} parent=207 // pred_region
          %1581 = dma.done [#allocation26], 256
        $region272: #{aemad_forward.1} parent=207 // pred_fallthru
          _
        // Predicated region
        $region273: #{aemad_forward.1} parent=207 // pred_check
          %p1582 = pneg %p998
        $region274: #{aemad_forward.1} parent=207 // pred_check_branch
          %1584 = sbr.rel (%p1582) target = $region276
        $region275: #{aemad_forward.1} parent=207 // pred_region
          %1586 = dma.done [#allocation26], 128
        $region276: #{aemad_forward.1} parent=207 // pred_fallthru
          _
        // Predicated region
        $region277: #{aemad_forward.1} parent=207 // pred_check
          %p1587 = pneg %p1040
        $region278: #{aemad_forward.1} parent=207 // pred_check_branch
          %1589 = sbr.rel (%p1587) target = $region280
        $region279: #{aemad_forward.1} parent=207 // pred_region
          %1591 = dma.done [#allocation29], 64
        $region280: #{aemad_forward.1} parent=207 // pred_fallthru
          _
        // Predicated region
        $region281: #{aemad_forward.1} parent=207 // pred_check
          %p1592 = pneg %p1082
        $region282: #{aemad_forward.1} parent=207 // pred_check_branch
          %1594 = sbr.rel (%p1592) target = $region284
        $region283: #{aemad_forward.1} parent=207 // pred_region
          %1596 = dma.done [#allocation29], 32
        $region284: #{aemad_forward.1} parent=207 // pred_fallthru
          _
        %p1597 = scmp.lt.s32.totalorder %s116, 1
        %s1598 = scalar_select %p1597, %s116, 1
        %s1599 = smul.addr %s1598, 2
        %s1600 = smul.addr %s1599, 8
        %s1601 = scalar_lea.vmem %s1, %s1600
        %p1602 = pneg %p137
        %p1603 = pneg %p134
        %p1604 = pneg %p158
        %p1605 = pneg %p155
        %p1606 = pneg %p179
        %p1607 = pneg %p176
        %p1608 = pneg %p200
        %p1609 = pneg %p197
        %p1610 = pneg %p221
        %p1611 = pneg %p218
        %p1612 = pneg %p242
        %p1613 = pneg %p239
        %p1614 = pneg %p263
        %p1615 = pneg %p260
        %p1616 = pneg %p284
        %p1617 = pneg %p281
        %p1618 = pneg %p305
        %p1619 = pneg %p302
        %p1620 = pneg %p326
        %p1621 = pneg %p323
        %p1622 = pneg %p347
        %p1623 = pneg %p344
        %p1624 = pneg %p368
        %p1625 = pneg %p365
        %p1626 = pneg %p389
        %p1627 = pneg %p386
        %p1628 = pneg %p410
        %p1629 = pneg %p407
        %p1630 = pneg %p431
        %p1631 = pneg %p428
        %p1632 = pneg %p452
        %p1633 = pneg %p449
        %p1634 = pneg %p473
        %p1635 = pneg %p470
        %p1636 = pneg %p494
        %p1637 = pneg %p491
        %p1638 = pneg %p515
        %p1639 = pneg %p512
        %p1640 = pneg %p536
        %p1641 = pneg %p533
        %p1642 = pneg %p557
        %p1643 = pneg %p554
        %p1644 = pneg %p578
        %p1645 = pneg %p575
        %p1646 = pneg %p599
        %p1647 = pneg %p596
        %p1648 = pneg %p620
        %p1649 = pneg %p617
        %p1650 = pneg %p641
        %p1651 = pneg %p638
        %p1652 = pneg %p662
        %p1653 = pneg %p659
        %p1654 = pneg %p683
        %p1655 = pneg %p680
        %p1656 = pneg %p704
        %p1657 = pneg %p701
        %p1658 = pneg %p725
        %p1659 = pneg %p722
        %p1660 = pneg %p746
        %p1661 = pneg %p743
        %p1662 = pneg %p767
        %p1663 = pneg %p764
        %p1664 = pneg %p788
        %p1665 = pneg %p785
        %p1666 = pneg %p809
        %p1667 = pneg %p806
        %p1668 = pneg %p830
        %p1669 = pneg %p827
        %p1670 = pneg %p851
        %p1671 = pneg %p848
        %p1672 = pneg %p872
        %p1673 = pneg %p869
        %p1674 = pneg %p893
        %p1675 = pneg %p890
        %p1676 = pneg %p914
        %p1677 = pneg %p911
        %p1678 = pneg %p935
        %p1679 = pneg %p932
        %p1680 = pneg %p956
        %p1681 = pneg %p953
        %p1682 = pneg %p977
        %p1683 = pneg %p974
        %p1684 = pneg %p998
        %p1685 = pneg %p995
        %p1686 = pneg %p1019
        %p1687 = pneg %p1016
        %p1688 = pneg %p1040
        %p1689 = pneg %p1037
        %p1690 = pneg %p1061
        %p1691 = pneg %p1058
        %p1692 = pneg %p1082
        %p1693 = pneg %p1079
        %p1694 = pneg %p1103
        %p1695 = pneg %p1100
        %p1696 = pneg %p1129
        %p1697 = pneg %p1126
        %p1698 = scmp.lt.s32.totalorder %s116, 1
        %s1699 = scalar_select %p1698, %s116, 1
        %s1700 = smul.addr %s1699, 2
        %s1701 = smul.addr %s1700, 4
        %s1702 = scalar_lea.vmem %s95, %s1701
        %p1703 = scmp.lt.s32.totalorder %s116, 1
        %s1704 = scalar_select %p1703, %s116, 1
        %s1705 = smul.addr %s1704, 2
        %s1706 = smul.addr %s1705, 8
        %s1707 = scalar_lea.vmem %s1, %s1706
        %p1708 = scmp.lt.s32.totalorder %s116, 1
        %s1709 = scalar_select %p1708, %s116, 1
        %s1710 = smul.addr %s1709, 2
        %s1711 = smul.addr %s1710, 4
        %s1712 = scalar_lea.vmem %s95, %s1711
        %v1714 = vld [vmem:[%s1707] sm:$0xff]
        %v1715 = vld [vmem:[%s1707 + $0x8] sm:$0xff]
        %1716 = vrot.lane.b32.xlu0 %v1714, 17
        %v1717 = vpop.permute.xlu0 %1716
        %1718 = vrot.lane.b32.xlu0 %v1715, 17
        %v1719 = vpop.permute.xlu0 %1718
        %v1720 = vlaneseq
        %v1721 = vand.u32 %v1720, 127
        %vm1722 = vcmp.lt.s32.totalorder %v1721, 17
        %v1723 = vsel %vm1722, %v1717, %v1719
        %v1724 = vsel %vm1722, %v1719, %v1717
        %v1725 = vld [vmem:[%s3] ss:$8 sm:$0x3]
        %v1727 = vperm.slane %v1725, 0
        %v1728 = vperm.slane %v1725, 1
        %v1731 = vmul.f32 %v1724, %v1727
        %v1732 = vmul.f32 %v1723, %v1728
        %1733 = vrot.lane.b32.xlu0 %v1714, 16
        %v1734 = vpop.permute.xlu0 %1733
        %1735 = vrot.lane.b32.xlu0 %v1715, 16
        %v1736 = vpop.permute.xlu0 %1735
        %vm1737 = vcmp.lt.s32.totalorder %v1721, 16
        %v1738 = vsel %vm1737, %v1734, %v1736
        %v1739 = vsel %vm1737, %v1736, %v1734
        %s1740 = scalar_lea.vmem %s3, 1
        %v1741 = vld [vmem:[%s1740] ss:$8 sm:$0x3]
        %v1743 = vperm.slane %v1741, 0
        %v1744 = vperm.slane %v1741, 1
        %v1747 = vmul.f32 %v1739, %v1743
        %v1748 = vmul.f32 %v1738, %v1744
        %1749 = vrot.lane.b32.xlu0 %v1714, 15
        %v1750 = vpop.permute.xlu0 %1749
        %1751 = vrot.lane.b32.xlu0 %v1715, 15
        %v1752 = vpop.permute.xlu0 %1751
        %vm1753 = vcmp.lt.s32.totalorder %v1721, 15
        %v1754 = vsel %vm1753, %v1750, %v1752
        %v1755 = vsel %vm1753, %v1752, %v1750
        %s1756 = scalar_lea.vmem %s3, 2
        %v1757 = vld [vmem:[%s1756] ss:$8 sm:$0x3]
        %v1759 = vperm.slane %v1757, 0
        %v1760 = vperm.slane %v1757, 1
        %v1763 = vmul.f32 %v1755, %v1759
        %v1764 = vmul.f32 %v1754, %v1760
        %1765 = vrot.lane.b32.xlu0 %v1714, 1
        %v1766 = vpop.permute.xlu0 %1765
        %1767 = vrot.lane.b32.xlu0 %v1715, 1
        %v1768 = vpop.permute.xlu0 %1767
        %vm1769 = vcmp.lt.s32.totalorder %v1721, 1
        %v1770 = vsel %vm1769, %v1766, %v1768
        %v1771 = vsel %vm1769, %v1768, %v1766
        %s1772 = scalar_lea.vmem %s3, 3
        %v1773 = vld [vmem:[%s1772] ss:$8 sm:$0x3]
        %v1775 = vperm.slane %v1773, 0
        %v1776 = vperm.slane %v1773, 1
        %v1779 = vmul.f32 %v1771, %v1775
        %v1780 = vmul.f32 %v1770, %v1776
        %s1781 = scalar_lea.vmem %s3, 4
        %v1782 = vld [vmem:[%s1781] ss:$8 sm:$0x3]
        %v1784 = vperm.slane %v1782, 0
        %v1785 = vperm.slane %v1782, 1
        %v1788 = vmul.f32 %v1714, %v1784
        %v1789 = vmul.f32 %v1715, %v1785
        %1790 = vrot.lane.b32.xlu0 %v1714, 127
        %v1791 = vpop.permute.xlu0 %1790
        %1792 = vrot.lane.b32.xlu0 %v1715, 127
        %v1793 = vpop.permute.xlu0 %1792
        %vm1794 = vcmp.lt.s32.totalorder %v1721, 127
        %v1795 = vsel %vm1794, %v1791, %v1793
        %v1796 = vsel %vm1794, %v1793, %v1791
        %s1797 = scalar_lea.vmem %s3, 5
        %v1798 = vld [vmem:[%s1797] ss:$8 sm:$0x3]
        %v1800 = vperm.slane %v1798, 0
        %v1801 = vperm.slane %v1798, 1
        %v1804 = vmul.f32 %v1795, %v1800
        %v1805 = vmul.f32 %v1796, %v1801
        %1806 = vrot.lane.b32.xlu0 %v1714, 113
        %v1807 = vpop.permute.xlu0 %1806
        %1808 = vrot.lane.b32.xlu0 %v1715, 113
        %v1809 = vpop.permute.xlu0 %1808
        %vm1810 = vcmp.lt.s32.totalorder %v1721, 113
        %v1811 = vsel %vm1810, %v1807, %v1809
        %v1812 = vsel %vm1810, %v1809, %v1807
        %s1813 = scalar_lea.vmem %s3, 6
        %v1814 = vld [vmem:[%s1813] ss:$8 sm:$0x3]
        %v1816 = vperm.slane %v1814, 0
        %v1817 = vperm.slane %v1814, 1
        %v1820 = vmul.f32 %v1811, %v1816
        %v1821 = vmul.f32 %v1812, %v1817
        %1822 = vrot.lane.b32.xlu0 %v1714, 112
        %v1823 = vpop.permute.xlu0 %1822
        %1824 = vrot.lane.b32.xlu0 %v1715, 112
        %v1825 = vpop.permute.xlu0 %1824
        %vm1826 = vcmp.lt.s32.totalorder %v1721, 112
        %v1827 = vsel %vm1826, %v1823, %v1825
        %v1828 = vsel %vm1826, %v1825, %v1823
        %s1829 = scalar_lea.vmem %s3, 7
        %v1830 = vld [vmem:[%s1829] ss:$8 sm:$0x3]
        %v1832 = vperm.slane %v1830, 0
        %v1833 = vperm.slane %v1830, 1
        %v1836 = vmul.f32 %v1827, %v1832
        %v1837 = vmul.f32 %v1828, %v1833
        %1838 = vrot.lane.b32.xlu0 %v1714, 111
        %v1839 = vpop.permute.xlu0 %1838
        %1840 = vrot.lane.b32.xlu0 %v1715, 111
        %v1841 = vpop.permute.xlu0 %1840
        %vm1842 = vcmp.lt.s32.totalorder %v1721, 111
        %v1843 = vsel %vm1842, %v1839, %v1841
        %v1844 = vsel %vm1842, %v1841, %v1839
        %s1845 = scalar_lea.vmem %s3, 16
        %v1846 = vld [vmem:[%s1845] ss:$8 sm:$0x3]
        %v1848 = vperm.slane %v1846, 0
        %v1849 = vperm.slane %v1846, 1
        %v1852 = vmul.f32 %v1843, %v1848
        %v1853 = vmul.f32 %v1844, %v1849
        %v1854 = vpack.c.bf16 %v1747, %v1731
        %v1855 = vpack.c.bf16 %v1748, %v1732
        %v1856 = vpack.c.bf16 %v1779, %v1763
        %v1857 = vpack.c.bf16 %v1780, %v1764
        %v1858 = vpack.c.bf16 %v1804, %v1788
        %v1859 = vpack.c.bf16 %v1805, %v1789
        %v1860 = vpack.c.bf16 %v1836, %v1820
        %v1861 = vpack.c.bf16 %v1837, %v1821
        %v1862 = vpack.c.bf16 %v1852, %v1852
        %v1863 = vpack.c.bf16 %v1853, %v1853
        %v1864 = vld [vmem:[%s11] sm:$0xf]
        %v1865 = vld [vmem:[%s13] sm:$0xff]
        %1867 = vset.pattern.permute.xlu0 0
        %1868 = vperm.xlu0 %1867, %v1865
        %v1869 = vpop.permute.xlu0 %1868
        %vm1871 = vcmask 588800
        %v1873 = vsel %vm1871, %v1864, 0
        %vm1875 = vcmask 1043456
        %v1877 = vsel %vm1875, %v1862, 0
        %v1880 = vsel %vm1875, %v1863, 0
        %1882 = vmatpush.bf16.msra.mxu0 0
        %1883 = vmatpush.bf16.msra.mxu0 0
        %1884 = vmatpush.bf16.msra.mxu0 0
        %1885 = vmatpush.bf16.msra.mxu0 %v1877
        %1886 = vmatpush.bf16.msra.mxu0 %v1860
        %1887 = vmatpush.bf16.msra.mxu0 %v1858
        %1888 = vmatpush.bf16.msra.mxu0 %v1856
        %1889 = vmatpush.bf16.msra.mxu0 %v1854
        %1890 = vmatmul.bf16.gmra.mxu0 %v1873
        %v1891 = vpop.f32.mrf.mxu0
        %v1892 = vadd.f32 %v1869, %v1891
        %v1893 = vpop.f32.mrf.mxu0
        %1894 = vdwg.mxu0
        %1895 = vmatpush.bf16.msra.mxu0 0
        %1896 = vmatpush.bf16.msra.mxu0 0
        %1897 = vmatpush.bf16.msra.mxu0 0
        %1898 = vmatpush.bf16.msra.mxu0 %v1880
        %1899 = vmatpush.bf16.msra.mxu0 %v1861
        %1900 = vmatpush.bf16.msra.mxu0 %v1859
        %1901 = vmatpush.bf16.msra.mxu0 %v1857
        %1902 = vmatpush.bf16.msra.mxu0 %v1855
        %1903 = vmatmul.bf16.gmra.mxu0 %v1873
        %v1904 = vpop.f32.mrf.mxu0
        %v1905 = vadd.f32 %v1869, %v1904
        %v1906 = vpop.f32.mrf.mxu0
        %1907 = vdwg.mxu0
        %v1908 = vmax.f32 %v1892, 0.0
        %v1909 = vmax.f32 %v1905, 0.0
        %1910 = vrot.lane.b32.xlu0 %v1908, 17
        %v1911 = vpop.permute.xlu0 %1910
        %1912 = vrot.lane.b32.xlu0 %v1909, 17
        %v1913 = vpop.permute.xlu0 %1912
        %v1914 = vsel %vm1722, %v1911, %v1913
        %v1915 = vsel %vm1722, %v1913, %v1911
        %v1916 = vmul.f32 %v1915, %v1727
        %v1917 = vmul.f32 %v1914, %v1728
        %1918 = vrot.lane.b32.xlu0 %v1908, 16
        %v1919 = vpop.permute.xlu0 %1918
        %1920 = vrot.lane.b32.xlu0 %v1909, 16
        %v1921 = vpop.permute.xlu0 %1920
        %v1922 = vsel %vm1737, %v1919, %v1921
        %v1923 = vsel %vm1737, %v1921, %v1919
        %v1924 = vmul.f32 %v1923, %v1743
        %v1925 = vmul.f32 %v1922, %v1744
        %1926 = vrot.lane.b32.xlu0 %v1908, 15
        %v1927 = vpop.permute.xlu0 %1926
        %1928 = vrot.lane.b32.xlu0 %v1909, 15
        %v1929 = vpop.permute.xlu0 %1928
        %v1930 = vsel %vm1753, %v1927, %v1929
        %v1931 = vsel %vm1753, %v1929, %v1927
        %v1932 = vmul.f32 %v1931, %v1759
        %v1933 = vmul.f32 %v1930, %v1760
        %1934 = vrot.lane.b32.xlu0 %v1908, 1
        %v1935 = vpop.permute.xlu0 %1934
        %1936 = vrot.lane.b32.xlu0 %v1909, 1
        %v1937 = vpop.permute.xlu0 %1936
        %v1938 = vsel %vm1769, %v1935, %v1937
        %v1939 = vsel %vm1769, %v1937, %v1935
        %v1940 = vmul.f32 %v1939, %v1775
        %v1941 = vmul.f32 %v1938, %v1776
        %v1942 = vmul.f32 %v1908, %v1784
        %v1943 = vmul.f32 %v1909, %v1785
        %1944 = vrot.lane.b32.xlu0 %v1908, 127
        %v1945 = vpop.permute.xlu0 %1944
        %1946 = vrot.lane.b32.xlu0 %v1909, 127
        %v1947 = vpop.permute.xlu0 %1946
        %v1948 = vsel %vm1794, %v1945, %v1947
        %v1949 = vsel %vm1794, %v1947, %v1945
        %v1950 = vmul.f32 %v1948, %v1800
        %v1951 = vmul.f32 %v1949, %v1801
        %1952 = vrot.lane.b32.xlu0 %v1908, 113
        %v1953 = vpop.permute.xlu0 %1952
        %1954 = vrot.lane.b32.xlu0 %v1909, 113
        %v1955 = vpop.permute.xlu0 %1954
        %v1956 = vsel %vm1810, %v1953, %v1955
        %v1957 = vsel %vm1810, %v1955, %v1953
        %v1958 = vmul.f32 %v1956, %v1816
        %v1959 = vmul.f32 %v1957, %v1817
        %1960 = vrot.lane.b32.xlu0 %v1908, 112
        %v1961 = vpop.permute.xlu0 %1960
        %1962 = vrot.lane.b32.xlu0 %v1909, 112
        %v1963 = vpop.permute.xlu0 %1962
        %v1964 = vsel %vm1826, %v1961, %v1963
        %v1965 = vsel %vm1826, %v1963, %v1961
        %v1966 = vmul.f32 %v1964, %v1832
        %v1967 = vmul.f32 %v1965, %v1833
        %1968 = vrot.lane.b32.xlu0 %v1908, 111
        %v1969 = vpop.permute.xlu0 %1968
        %1970 = vrot.lane.b32.xlu0 %v1909, 111
        %v1971 = vpop.permute.xlu0 %1970
        %v1972 = vsel %vm1842, %v1969, %v1971
        %v1973 = vsel %vm1842, %v1971, %v1969
        %v1974 = vmul.f32 %v1972, %v1848
        %v1975 = vmul.f32 %v1973, %v1849
        %v1976 = vpack.c.bf16 %v1924, %v1916
        %v1977 = vpack.c.bf16 %v1925, %v1917
        %v1978 = vpack.c.bf16 %v1940, %v1932
        %v1979 = vpack.c.bf16 %v1941, %v1933
        %v1980 = vpack.c.bf16 %v1950, %v1942
        %v1981 = vpack.c.bf16 %v1951, %v1943
        %v1982 = vpack.c.bf16 %v1966, %v1958
        %v1983 = vpack.c.bf16 %v1967, %v1959
        %v1984 = vpack.c.bf16 %v1974, %v1974
        %v1985 = vpack.c.bf16 %v1975, %v1975
        %v1986 = vld [vmem:[#allocation7] sm:$0xf]
        %v1987 = vld [vmem:[%s17] sm:$0xff]
        %1989 = vset.pattern.permute.xlu0 0
        %1990 = vperm.xlu0 %1989, %v1987
        %v1991 = vpop.permute.xlu0 %1990
        %v1994 = vsel %vm1871, %v1986, 0
        %v1997 = vsel %vm1875, %v1984, 0
        %v2000 = vsel %vm1875, %v1985, 0
        %2002 = vmatpush.bf16.msra.mxu0 0
        %2003 = vmatpush.bf16.msra.mxu0 0
        %2004 = vmatpush.bf16.msra.mxu0 0
        %2005 = vmatpush.bf16.msra.mxu0 %v1997
        %2006 = vmatpush.bf16.msra.mxu0 %v1982
        %2007 = vmatpush.bf16.msra.mxu0 %v1980
        %2008 = vmatpush.bf16.msra.mxu0 %v1978
        %2009 = vmatpush.bf16.msra.mxu0 %v1976
        %2010 = vmatmul.bf16.gmra.mxu0 %v1994
        %v2011 = vpop.f32.mrf.mxu0
        %v2012 = vadd.f32 %v1991, %v2011
        %v2013 = vpop.f32.mrf.mxu0
        %2014 = vdwg.mxu0
        %2015 = vmatpush.bf16.msra.mxu0 0
        %2016 = vmatpush.bf16.msra.mxu0 0
        %2017 = vmatpush.bf16.msra.mxu0 0
        %2018 = vmatpush.bf16.msra.mxu0 %v2000
        %2019 = vmatpush.bf16.msra.mxu0 %v1983
        %2020 = vmatpush.bf16.msra.mxu0 %v1981
        %2021 = vmatpush.bf16.msra.mxu0 %v1979
        %2022 = vmatpush.bf16.msra.mxu0 %v1977
        %2023 = vmatmul.bf16.gmra.mxu0 %v1994
        %v2024 = vpop.f32.mrf.mxu0
        %v2025 = vadd.f32 %v1991, %v2024
        %v2026 = vpop.f32.mrf.mxu0
        %2027 = vdwg.mxu0
        %v2028 = vmax.f32 %v2012, 0.0
        %v2029 = vmax.f32 %v2025, 0.0
        %2030 = vrot.lane.b32.xlu0 %v2028, 127
        %v2031 = vpop.permute.xlu0 %2030
        %2032 = vrot.lane.b32.xlu0 %v2029, 127
        %v2033 = vpop.permute.xlu0 %2032
        %v2034 = vsel %vm1794, %v2031, %v2033
        %v2035 = vsel %vm1794, %v2033, %v2031
        %v2036 = vmax.f32 %v2028, %v2034
        %v2037 = vmax.f32 %v2029, %v2035
        %2038 = vrot.lane.b32.xlu0 %v2036, 112
        %v2039 = vpop.permute.xlu0 %2038
        %2040 = vrot.lane.b32.xlu0 %v2037, 112
        %v2041 = vpop.permute.xlu0 %2040
        %v2042 = vsel %vm1826, %v2039, %v2041
        %v2043 = vsel %vm1826, %v2041, %v2039
        %v2044 = vmax.f32 %v2036, %v2042
        %v2045 = vmax.f32 %v2037, %v2043
        %v2046 = vpack.c.bf16 %v2044, %v2044
        %v2047 = vpack.c.bf16 %v2045, %v2045
        %v2048 = vld [vmem:[%s19] sm:$0xf]
        %v2049 = vld [vmem:[%s19 + $0x4] sm:$0xf]
        %v2050 = vld [vmem:[%s19 + $0x8] sm:$0xf]
        %v2051 = vld [vmem:[%s19 + $0xc] sm:$0xf]
        %v2052 = vld [vmem:[%s19 + $0x10] sm:$0xf]
        %v2053 = vld [vmem:[%s19 + $0x14] sm:$0xf]
        %v2054 = vld [vmem:[%s19 + $0x18] sm:$0xf]
        %v2055 = vld [vmem:[%s19 + $0x1c] sm:$0xf]
        %v2056 = vld [vmem:[%s19 + $0x20] sm:$0xf]
        %v2057 = vld [vmem:[%s19 + $0x24] sm:$0xf]
        %v2058 = vld [vmem:[%s19 + $0x28] sm:$0xf]
        %v2059 = vld [vmem:[%s19 + $0x2c] sm:$0xf]
        %v2060 = vld [vmem:[%s19 + $0x30] sm:$0xf]
        %v2061 = vld [vmem:[%s19 + $0x34] sm:$0xf]
        %v2062 = vld [vmem:[%s19 + $0x38] sm:$0xf]
        %v2063 = vld [vmem:[%s19 + $0x3c] sm:$0xf]
        %v2064 = vld [vmem:[%s19 + $0x40] sm:$0xf]
        %v2065 = vld [vmem:[%s19 + $0x44] sm:$0xf]
        %v2066 = vld [vmem:[%s19 + $0x48] sm:$0xf]
        %v2067 = vld [vmem:[%s19 + $0x4c] sm:$0xf]
        %v2068 = vld [vmem:[%s19 + $0x50] sm:$0xf]
        %v2069 = vld [vmem:[%s19 + $0x54] sm:$0xf]
        %v2070 = vld [vmem:[%s19 + $0x58] sm:$0xf]
        %v2071 = vld [vmem:[%s19 + $0x5c] sm:$0xf]
        %v2072 = vld [vmem:[%s19 + $0x60] sm:$0xf]
        %v2073 = vld [vmem:[%s19 + $0x64] sm:$0xf]
        %v2074 = vld [vmem:[%s19 + $0x68] sm:$0xf]
        %v2075 = vld [vmem:[%s19 + $0x6c] sm:$0xf]
        %v2076 = vld [vmem:[%s19 + $0x70] sm:$0xf]
        %v2077 = vld [vmem:[%s19 + $0x74] sm:$0xf]
        %v2078 = vld [vmem:[%s19 + $0x78] sm:$0xf]
        %v2079 = vld [vmem:[%s19 + $0x7c] sm:$0xf]
        %v2112 = vunpack.c.l.b16 %v2048
        %v2113 = vunpack.c.l.b16 %v2049
        %v2114 = vunpack.c.l.b16 %v2050
        %v2115 = vunpack.c.l.b16 %v2051
        %v2116 = vunpack.c.l.b16 %v2052
        %v2117 = vunpack.c.l.b16 %v2053
        %v2118 = vunpack.c.l.b16 %v2054
        %v2119 = vunpack.c.l.b16 %v2055
        %v2120 = vunpack.c.l.b16 %v2056
        %v2121 = vunpack.c.l.b16 %v2057
        %v2122 = vunpack.c.l.b16 %v2058
        %v2123 = vunpack.c.l.b16 %v2059
        %v2124 = vunpack.c.l.b16 %v2060
        %v2125 = vunpack.c.l.b16 %v2061
        %v2126 = vunpack.c.l.b16 %v2062
        %v2127 = vunpack.c.l.b16 %v2063
        %v2128 = vunpack.c.l.b16 %v2064
        %v2129 = vunpack.c.l.b16 %v2065
        %v2130 = vunpack.c.l.b16 %v2066
        %v2131 = vunpack.c.l.b16 %v2067
        %v2132 = vunpack.c.l.b16 %v2068
        %v2133 = vunpack.c.l.b16 %v2069
        %v2134 = vunpack.c.l.b16 %v2070
        %v2135 = vunpack.c.l.b16 %v2071
        %v2136 = vunpack.c.l.b16 %v2072
        %v2137 = vunpack.c.l.b16 %v2073
        %v2138 = vunpack.c.l.b16 %v2074
        %v2139 = vunpack.c.l.b16 %v2075
        %v2140 = vunpack.c.l.b16 %v2076
        %v2141 = vunpack.c.l.b16 %v2077
        %v2142 = vunpack.c.l.b16 %v2078
        %v2143 = vunpack.c.l.b16 %v2079
        %v2144 = vpack.c.b16 %v2113, %v2112
        %v2145 = vpack.c.b16 %v2115, %v2114
        %v2146 = vpack.c.b16 %v2117, %v2116
        %v2147 = vpack.c.b16 %v2119, %v2118
        %v2148 = vpack.c.b16 %v2121, %v2120
        %v2149 = vpack.c.b16 %v2123, %v2122
        %v2150 = vpack.c.b16 %v2125, %v2124
        %v2151 = vpack.c.b16 %v2127, %v2126
        %v2152 = vpack.c.b16 %v2129, %v2128
        %v2153 = vpack.c.b16 %v2131, %v2130
        %v2154 = vpack.c.b16 %v2133, %v2132
        %v2155 = vpack.c.b16 %v2135, %v2134
        %v2156 = vpack.c.b16 %v2137, %v2136
        %v2157 = vpack.c.b16 %v2139, %v2138
        %v2158 = vpack.c.b16 %v2141, %v2140
        %v2159 = vpack.c.b16 %v2143, %v2142
        %2176 = vmatpush.bf16.msra.mxu0 %v2151
        %2177 = vmatpush.bf16.msra.mxu0 %v2150
        %2178 = vmatpush.bf16.msra.mxu0 %v2149
        %2179 = vmatpush.bf16.msra.mxu0 %v2148
        %2180 = vmatpush.bf16.msra.mxu0 %v2147
        %2181 = vmatpush.bf16.msra.mxu0 %v2146
        %2182 = vmatpush.bf16.msra.mxu0 %v2145
        %2183 = vmatpush.bf16.msra.mxu0 %v2144
        %2184 = vmatmul.bf16.gmra.mxu0 %v2046
        %v2185 = vpop.f32.mrf.mxu0
        %v2186 = vadd.f32 0.0, %v2185
        %v2187 = vpop.f32.mrf.mxu0
        %2188 = vdwg.mxu0
        %2189 = vmatpush.bf16.msra.mxu0 %v2159
        %2190 = vmatpush.bf16.msra.mxu0 %v2158
        %2191 = vmatpush.bf16.msra.mxu0 %v2157
        %2192 = vmatpush.bf16.msra.mxu0 %v2156
        %2193 = vmatpush.bf16.msra.mxu0 %v2155
        %2194 = vmatpush.bf16.msra.mxu0 %v2154
        %2195 = vmatpush.bf16.msra.mxu0 %v2153
        %2196 = vmatpush.bf16.msra.mxu0 %v2152
        %2197 = vmatmul.bf16.gmra.mxu0 %v2047
        %v2198 = vpop.f32.mrf.mxu0
        %v2199 = vadd.f32 %v2186, %v2198
        %v2200 = vpop.f32.mrf.mxu0
        %2201 = vdwg.mxu0
        %2202 = vrot.lane.b32.xlu0 %v2199, 9
        %v2203 = vpop.permute.xlu0 %2202
        %v2204 = vld [vmem:[#allocation2] sm:$0x1]
        %v2205 = vperm.slane %v2204, 0
        %v2206 = vmul.f32 %v2203, %v2205
        %2207 = vrot.lane.b32.xlu0 %v2199, 8
        %v2208 = vpop.permute.xlu0 %2207
        %v2209 = vld [vmem:[#allocation2 + $0x1] sm:$0x1]
        %v2210 = vperm.slane %v2209, 0
        %v2211 = vmul.f32 %v2208, %v2210
        %2212 = vrot.lane.b32.xlu0 %v2199, 7
        %v2213 = vpop.permute.xlu0 %2212
        %v2214 = vld [vmem:[#allocation2 + $0x2] sm:$0x1]
        %v2215 = vperm.slane %v2214, 0
        %v2216 = vmul.f32 %v2213, %v2215
        %2217 = vrot.lane.b32.xlu0 %v2199, 1
        %v2218 = vpop.permute.xlu0 %2217
        %v2219 = vld [vmem:[#allocation2 + $0x3] sm:$0x1]
        %v2220 = vperm.slane %v2219, 0
        %v2221 = vmul.f32 %v2218, %v2220
        %v2222 = vld [vmem:[#allocation2 + $0x4] sm:$0x1]
        %v2223 = vperm.slane %v2222, 0
        %v2224 = vmul.f32 %v2199, %v2223
        %2225 = vrot.lane.b32.xlu0 %v2199, 127
        %v2226 = vpop.permute.xlu0 %2225
        %v2227 = vld [vmem:[#allocation2 + $0x5] sm:$0x1]
        %v2228 = vperm.slane %v2227, 0
        %v2229 = vmul.f32 %v2226, %v2228
        %2230 = vrot.lane.b32.xlu0 %v2199, 121
        %v2231 = vpop.permute.xlu0 %2230
        %v2232 = vld [vmem:[#allocation2 + $0x6] sm:$0x1]
        %v2233 = vperm.slane %v2232, 0
        %v2234 = vmul.f32 %v2231, %v2233
        %2235 = vrot.lane.b32.xlu0 %v2199, 120
        %v2236 = vpop.permute.xlu0 %2235
        %v2237 = vld [vmem:[#allocation2 + $0x7] sm:$0x1]
        %v2238 = vperm.slane %v2237, 0
        %v2239 = vmul.f32 %v2236, %v2238
        %2240 = vrot.lane.b32.xlu0 %v2199, 119
        %v2241 = vpop.permute.xlu0 %2240
        %v2242 = vld [vmem:[#allocation2 + $0x8] sm:$0x1]
        %v2243 = vperm.slane %v2242, 0
        %v2244 = vmul.f32 %v2241, %v2243
        %v2245 = vpack.c.bf16 %v2211, %v2206
        %v2246 = vpack.c.bf16 %v2221, %v2216
        %v2247 = vpack.c.bf16 %v2229, %v2224
        %v2248 = vpack.c.bf16 %v2239, %v2234
        %v2249 = vpack.c.bf16 %v2244, %v2244
        %v2250 = vld [vmem:[#allocation9] sm:$0xf]
        %v2251 = vld [vmem:[#allocation9 + $0x4] sm:$0xf]
        %v2252 = vld [vmem:[%s23] sm:$0xff]
        %v2253 = vld [vmem:[%s23 + $0x8] sm:$0xff]
        %2255 = vset.pattern.permute.xlu0 0
        %2256 = vperm.xlu0 %2255, %v2252
        %v2257 = vpop.permute.xlu0 %2256
        %2260 = vset.pattern.permute.xlu0 0
        %2261 = vperm.xlu0 %2260, %v2253
        %v2262 = vpop.permute.xlu0 %2261
        %v2266 = vunpack.c.l.b16 %v2250
        %v2267 = vunpack.c.l.b16 %v2251
        %v2268 = vpack.c.b16 %v2267, %v2266
        %v2270 = vsel %vm1871, %v2268, 0
        %v2273 = vsel %vm1875, %v2249, 0
        %2275 = vmatpush.bf16.msra.mxu0 0
        %2276 = vmatpush.bf16.msra.mxu0 0
        %2277 = vmatpush.bf16.msra.mxu0 0
        %2278 = vmatpush.bf16.msra.mxu0 %v2273
        %2279 = vmatpush.bf16.msra.mxu0 %v2248
        %2280 = vmatpush.bf16.msra.mxu0 %v2247
        %2281 = vmatpush.bf16.msra.mxu0 %v2246
        %2282 = vmatpush.bf16.msra.mxu0 %v2245
        %2283 = vmatmul.bf16.gmra.mxu0 %v2270
        %v2284 = vpop.f32.mrf.mxu0
        %v2285 = vadd.f32 %v2257, %v2284
        %v2286 = vpop.f32.mrf.mxu0
        %v2287 = vadd.f32 %v2262, %v2286
        %2288 = vdwg.mxu0
        %v2289 = vmax.f32 %v2285, 0.0
        %v2290 = vmax.f32 %v2287, 0.0
        %2291 = vrot.lane.b32.xlu0 %v2289, 9
        %v2292 = vpop.permute.xlu0 %2291
        %2293 = vrot.lane.b32.xlu0 %v2290, 9
        %v2294 = vpop.permute.xlu0 %2293
        %v2295 = vmul.f32 %v2292, %v2205
        %v2296 = vmul.f32 %v2294, %v2205
        %2297 = vrot.lane.b32.xlu0 %v2289, 8
        %v2298 = vpop.permute.xlu0 %2297
        %2299 = vrot.lane.b32.xlu0 %v2290, 8
        %v2300 = vpop.permute.xlu0 %2299
        %v2301 = vmul.f32 %v2298, %v2210
        %v2302 = vmul.f32 %v2300, %v2210
        %2303 = vrot.lane.b32.xlu0 %v2289, 7
        %v2304 = vpop.permute.xlu0 %2303
        %2305 = vrot.lane.b32.xlu0 %v2290, 7
        %v2306 = vpop.permute.xlu0 %2305
        %v2307 = vmul.f32 %v2304, %v2215
        %v2308 = vmul.f32 %v2306, %v2215
        %2309 = vrot.lane.b32.xlu0 %v2289, 1
        %v2310 = vpop.permute.xlu0 %2309
        %2311 = vrot.lane.b32.xlu0 %v2290, 1
        %v2312 = vpop.permute.xlu0 %2311
        %v2313 = vmul.f32 %v2310, %v2220
        %v2314 = vmul.f32 %v2312, %v2220
        %v2315 = vmul.f32 %v2289, %v2223
        %v2316 = vmul.f32 %v2290, %v2223
        %2317 = vrot.lane.b32.xlu0 %v2289, 127
        %v2318 = vpop.permute.xlu0 %2317
        %2319 = vrot.lane.b32.xlu0 %v2290, 127
        %v2320 = vpop.permute.xlu0 %2319
        %v2321 = vmul.f32 %v2318, %v2228
        %v2322 = vmul.f32 %v2320, %v2228
        %2323 = vrot.lane.b32.xlu0 %v2289, 121
        %v2324 = vpop.permute.xlu0 %2323
        %2325 = vrot.lane.b32.xlu0 %v2290, 121
        %v2326 = vpop.permute.xlu0 %2325
        %v2327 = vmul.f32 %v2324, %v2233
        %v2328 = vmul.f32 %v2326, %v2233
        %2329 = vrot.lane.b32.xlu0 %v2289, 120
        %v2330 = vpop.permute.xlu0 %2329
        %2331 = vrot.lane.b32.xlu0 %v2290, 120
        %v2332 = vpop.permute.xlu0 %2331
        %v2333 = vmul.f32 %v2330, %v2238
        %v2334 = vmul.f32 %v2332, %v2238
        %2335 = vrot.lane.b32.xlu0 %v2289, 119
        %v2336 = vpop.permute.xlu0 %2335
        %2337 = vrot.lane.b32.xlu0 %v2290, 119
        %v2338 = vpop.permute.xlu0 %2337
        %v2339 = vmul.f32 %v2336, %v2243
        %v2340 = vmul.f32 %v2338, %v2243
        %v2341 = vpack.c.bf16 %v2296, %v2295
        %v2342 = vpack.c.bf16 %v2302, %v2301
        %v2343 = vpack.c.bf16 %v2308, %v2307
        %v2344 = vpack.c.bf16 %v2314, %v2313
        %v2345 = vpack.c.bf16 %v2316, %v2315
        %v2346 = vpack.c.bf16 %v2322, %v2321
        %v2347 = vpack.c.bf16 %v2328, %v2327
        %v2348 = vpack.c.bf16 %v2334, %v2333
        %v2349 = vpack.c.bf16 %v2340, %v2339
        %v2350 = vld [vmem:[#allocation10] sm:$0xff]
        %v2351 = vld [vmem:[#allocation10 + $0x8] sm:$0xff]
        %v2352 = vld [vmem:[%s27] sm:$0xff]
        %v2353 = vld [vmem:[%s27 + $0x8] sm:$0xff]
        %2355 = vset.pattern.permute.xlu0 0
        %2356 = vperm.xlu0 %2355, %v2352
        %v2357 = vpop.permute.xlu0 %2356
        %2360 = vset.pattern.permute.xlu0 0
        %2361 = vperm.xlu0 %2360, %v2353
        %v2362 = vpop.permute.xlu0 %2361
        %v2366 = vunpack.c.l.b16 %v2350
        %v2367 = vunpack.c.h.b16 %v2350
        %v2368 = vunpack.c.l.b16 %v2351
        %v2369 = vunpack.c.h.b16 %v2351
        %v2370 = vpack.c.b16 %v2368, %v2366
        %v2371 = vpack.c.b16 %v2369, %v2367
        %vm2373 = vcmask 130048
        %v2375 = vsel %vm2373, %v2371, 0
        %2377 = vmatpush.bf16.msra.mxu0 %v2348
        %2378 = vmatpush.bf16.msra.mxu0 %v2347
        %2379 = vmatpush.bf16.msra.mxu0 %v2346
        %2380 = vmatpush.bf16.msra.mxu0 %v2345
        %2381 = vmatpush.bf16.msra.mxu0 %v2344
        %2382 = vmatpush.bf16.msra.mxu0 %v2343
        %2383 = vmatpush.bf16.msra.mxu0 %v2342
        %2384 = vmatpush.bf16.msra.mxu0 %v2341
        %2385 = vmatmul.bf16.gmra.mxu0 %v2370
        %v2386 = vpop.f32.mrf.mxu0
        %v2387 = vadd.f32 %v2357, %v2386
        %v2388 = vpop.f32.mrf.mxu0
        %v2389 = vadd.f32 %v2362, %v2388
        %2390 = vdwg.mxu0
        %2391 = vmatpush.bf16.msra.mxu0 0
        %2392 = vmatpush.bf16.msra.mxu0 0
        %2393 = vmatpush.bf16.msra.mxu0 0
        %2394 = vmatpush.bf16.msra.mxu0 0
        %2395 = vmatpush.bf16.msra.mxu0 0
        %2396 = vmatpush.bf16.msra.mxu0 0
        %2397 = vmatpush.bf16.msra.mxu0 0
        %2398 = vmatpush.bf16.msra.mxu0 %v2349
        %2399 = vmatmul.bf16.gmra.mxu0 %v2375
        %v2400 = vpop.f32.mrf.mxu0
        %v2401 = vadd.f32 %v2387, %v2400
        %v2402 = vpop.f32.mrf.mxu0
        %v2403 = vadd.f32 %v2389, %v2402
        %2404 = vdwg.mxu0
        %v2405 = vmax.f32 %v2401, 0.0
        %v2406 = vmax.f32 %v2403, 0.0
        %2407 = vrot.lane.b32.xlu0 %v2405, 127
        %v2408 = vpop.permute.xlu0 %2407
        %2409 = vrot.lane.b32.xlu0 %v2406, 127
        %v2410 = vpop.permute.xlu0 %2409
        %v2411 = vmax.f32 %v2405, %v2408
        %v2412 = vmax.f32 %v2406, %v2410
        %2413 = vrot.lane.b32.xlu0 %v2411, 120
        %v2414 = vpop.permute.xlu0 %2413
        %2415 = vrot.lane.b32.xlu0 %v2412, 120
        %v2416 = vpop.permute.xlu0 %2415
        %v2417 = vmax.f32 %v2411, %v2414
        %v2418 = vmax.f32 %v2412, %v2416
        %v2419 = vpack.c.bf16 %v2418, %v2417
        %v2420 = vld [vmem:[%s29] sm:$0xf]
        %v2421 = vld [vmem:[%s29 + $0x4] sm:$0xf]
        %v2422 = vld [vmem:[%s29 + $0x8] sm:$0xf]
        %v2423 = vld [vmem:[%s29 + $0xc] sm:$0xf]
        %v2424 = vld [vmem:[%s29 + $0x10] sm:$0xf]
        %v2425 = vld [vmem:[%s29 + $0x14] sm:$0xf]
        %v2426 = vld [vmem:[%s29 + $0x18] sm:$0xf]
        %v2427 = vld [vmem:[%s29 + $0x1c] sm:$0xf]
        %v2428 = vld [vmem:[%s29 + $0x20] sm:$0xf]
        %v2429 = vld [vmem:[%s29 + $0x24] sm:$0xf]
        %v2430 = vld [vmem:[%s29 + $0x28] sm:$0xf]
        %v2431 = vld [vmem:[%s29 + $0x2c] sm:$0xf]
        %v2432 = vld [vmem:[%s29 + $0x30] sm:$0xf]
        %v2433 = vld [vmem:[%s29 + $0x34] sm:$0xf]
        %v2434 = vld [vmem:[%s29 + $0x38] sm:$0xf]
        %v2435 = vld [vmem:[%s29 + $0x3c] sm:$0xf]
        %v2452 = vunpack.c.l.b16 %v2420
        %v2453 = vunpack.c.l.b16 %v2421
        %v2454 = vunpack.c.l.b16 %v2422
        %v2455 = vunpack.c.l.b16 %v2423
        %v2456 = vunpack.c.l.b16 %v2424
        %v2457 = vunpack.c.l.b16 %v2425
        %v2458 = vunpack.c.l.b16 %v2426
        %v2459 = vunpack.c.l.b16 %v2427
        %v2460 = vunpack.c.l.b16 %v2428
        %v2461 = vunpack.c.l.b16 %v2429
        %v2462 = vunpack.c.l.b16 %v2430
        %v2463 = vunpack.c.l.b16 %v2431
        %v2464 = vunpack.c.l.b16 %v2432
        %v2465 = vunpack.c.l.b16 %v2433
        %v2466 = vunpack.c.l.b16 %v2434
        %v2467 = vunpack.c.l.b16 %v2435
        %v2468 = vpack.c.b16 %v2453, %v2452
        %v2469 = vpack.c.b16 %v2455, %v2454
        %v2470 = vpack.c.b16 %v2457, %v2456
        %v2471 = vpack.c.b16 %v2459, %v2458
        %v2472 = vpack.c.b16 %v2461, %v2460
        %v2473 = vpack.c.b16 %v2463, %v2462
        %v2474 = vpack.c.b16 %v2465, %v2464
        %v2475 = vpack.c.b16 %v2467, %v2466
        %2484 = vmatpush.bf16.msra.mxu0 %v2475
        %2485 = vmatpush.bf16.msra.mxu0 %v2474
        %2486 = vmatpush.bf16.msra.mxu0 %v2473
        %2487 = vmatpush.bf16.msra.mxu0 %v2472
        %2488 = vmatpush.bf16.msra.mxu0 %v2471
        %2489 = vmatpush.bf16.msra.mxu0 %v2470
        %2490 = vmatpush.bf16.msra.mxu0 %v2469
        %2491 = vmatpush.bf16.msra.mxu0 %v2468
        %2492 = vmatmul.bf16.gmra.mxu0 %v2419
        %v2493 = vpop.f32.mrf.mxu0
        %v2494 = vadd.f32 0.0, %v2493
        %v2495 = vpop.f32.mrf.mxu0
        %v2496 = vadd.f32 0.0, %v2495
        %2497 = vdwg.mxu0
        %2498 = vrot.lane.b32.xlu0 %v2494, 5
        %v2499 = vpop.permute.xlu0 %2498
        %2500 = vrot.lane.b32.xlu0 %v2496, 5
        %v2501 = vpop.permute.xlu0 %2500
        %v2502 = vld [vmem:[#allocation4] sm:$0x1]
        %v2503 = vperm.slane %v2502, 0
        %v2504 = vmul.f32 %v2499, %v2503
        %v2505 = vmul.f32 %v2501, %v2503
        %2506 = vrot.lane.b32.xlu0 %v2494, 4
        %v2507 = vpop.permute.xlu0 %2506
        %2508 = vrot.lane.b32.xlu0 %v2496, 4
        %v2509 = vpop.permute.xlu0 %2508
        %v2510 = vld [vmem:[#allocation4 + $0x1] sm:$0x1]
        %v2511 = vperm.slane %v2510, 0
        %v2512 = vmul.f32 %v2507, %v2511
        %v2513 = vmul.f32 %v2509, %v2511
        %2514 = vrot.lane.b32.xlu0 %v2494, 3
        %v2515 = vpop.permute.xlu0 %2514
        %2516 = vrot.lane.b32.xlu0 %v2496, 3
        %v2517 = vpop.permute.xlu0 %2516
        %v2518 = vld [vmem:[#allocation4 + $0x2] sm:$0x1]
        %v2519 = vperm.slane %v2518, 0
        %v2520 = vmul.f32 %v2515, %v2519
        %v2521 = vmul.f32 %v2517, %v2519
        %2522 = vrot.lane.b32.xlu0 %v2494, 1
        %v2523 = vpop.permute.xlu0 %2522
        %2524 = vrot.lane.b32.xlu0 %v2496, 1
        %v2525 = vpop.permute.xlu0 %2524
        %v2526 = vld [vmem:[#allocation4 + $0x3] sm:$0x1]
        %v2527 = vperm.slane %v2526, 0
        %v2528 = vmul.f32 %v2523, %v2527
        %v2529 = vmul.f32 %v2525, %v2527
        %v2530 = vld [vmem:[#allocation4 + $0x4] sm:$0x1]
        %v2531 = vperm.slane %v2530, 0
        %v2532 = vmul.f32 %v2494, %v2531
        %v2533 = vmul.f32 %v2496, %v2531
        %2534 = vrot.lane.b32.xlu0 %v2494, 127
        %v2535 = vpop.permute.xlu0 %2534
        %2536 = vrot.lane.b32.xlu0 %v2496, 127
        %v2537 = vpop.permute.xlu0 %2536
        %v2538 = vld [vmem:[#allocation4 + $0x5] sm:$0x1]
        %v2539 = vperm.slane %v2538, 0
        %v2540 = vmul.f32 %v2535, %v2539
        %v2541 = vmul.f32 %v2537, %v2539
        %2542 = vrot.lane.b32.xlu0 %v2494, 125
        %v2543 = vpop.permute.xlu0 %2542
        %2544 = vrot.lane.b32.xlu0 %v2496, 125
        %v2545 = vpop.permute.xlu0 %2544
        %v2546 = vld [vmem:[#allocation4 + $0x6] sm:$0x1]
        %v2547 = vperm.slane %v2546, 0
        %v2548 = vmul.f32 %v2543, %v2547
        %v2549 = vmul.f32 %v2545, %v2547
        %2550 = vrot.lane.b32.xlu0 %v2494, 124
        %v2551 = vpop.permute.xlu0 %2550
        %2552 = vrot.lane.b32.xlu0 %v2496, 124
        %v2553 = vpop.permute.xlu0 %2552
        %v2554 = vld [vmem:[#allocation4 + $0x7] sm:$0x1]
        %v2555 = vperm.slane %v2554, 0
        %v2556 = vmul.f32 %v2551, %v2555
        %v2557 = vmul.f32 %v2553, %v2555
        %2558 = vrot.lane.b32.xlu0 %v2494, 123
        %v2559 = vpop.permute.xlu0 %2558
        %2560 = vrot.lane.b32.xlu0 %v2496, 123
        %v2561 = vpop.permute.xlu0 %2560
        %v2562 = vld [vmem:[#allocation4 + $0x8] sm:$0x1]
        %v2563 = vperm.slane %v2562, 0
        %v2564 = vmul.f32 %v2559, %v2563
        %v2565 = vmul.f32 %v2561, %v2563
        %v2566 = vpack.c.bf16 %v2505, %v2504
        %v2567 = vpack.c.bf16 %v2513, %v2512
        %v2568 = vpack.c.bf16 %v2521, %v2520
        %v2569 = vpack.c.bf16 %v2529, %v2528
        %v2570 = vpack.c.bf16 %v2533, %v2532
        %v2571 = vpack.c.bf16 %v2541, %v2540
        %v2572 = vpack.c.bf16 %v2549, %v2548
        %v2573 = vpack.c.bf16 %v2557, %v2556
        %v2574 = vpack.c.bf16 %v2565, %v2564
        %v2575 = vld [vmem:[%s31] sm:$0xff]
        %v2576 = vld [vmem:[%s31 + $0x8] sm:$0xff]
        %v2577 = vld [vmem:[%s31 + $0x10] sm:$0xff]
        %v2578 = vld [vmem:[%s31 + $0x18] sm:$0xff]
        %v2579 = vld [vmem:[%s33] sm:$0xff]
        %v2580 = vld [vmem:[%s33 + $0x8] sm:$0xff]
        %v2581 = vld [vmem:[%s33 + $0x10] sm:$0xff]
        %v2582 = vld [vmem:[%s33 + $0x18] sm:$0xff]
        %2584 = vset.pattern.permute.xlu0 0
        %2585 = vperm.xlu0 %2584, %v2579
        %v2586 = vpop.permute.xlu0 %2585
        %2589 = vset.pattern.permute.xlu0 0
        %2590 = vperm.xlu0 %2589, %v2580
        %v2591 = vpop.permute.xlu0 %2590
        %2594 = vset.pattern.permute.xlu0 0
        %2595 = vperm.xlu0 %2594, %v2581
        %v2596 = vpop.permute.xlu0 %2595
        %2599 = vset.pattern.permute.xlu0 0
        %2600 = vperm.xlu0 %2599, %v2582
        %v2601 = vpop.permute.xlu0 %2600
        %v2607 = vunpack.c.l.b16 %v2575
        %v2608 = vunpack.c.h.b16 %v2575
        %v2609 = vunpack.c.l.b16 %v2576
        %v2610 = vunpack.c.h.b16 %v2576
        %v2611 = vunpack.c.l.b16 %v2577
        %v2612 = vunpack.c.h.b16 %v2577
        %v2613 = vunpack.c.l.b16 %v2578
        %v2614 = vunpack.c.h.b16 %v2578
        %v2615 = vpack.c.b16 %v2609, %v2607
        %v2616 = vpack.c.b16 %v2610, %v2608
        %v2617 = vpack.c.b16 %v2613, %v2611
        %v2618 = vpack.c.b16 %v2614, %v2612
        %v2622 = vsel %vm2373, %v2616, 0
        %v2625 = vsel %vm2373, %v2618, 0
        %2627 = vmatpush.bf16.msra.mxu0 %v2573
        %2628 = vmatpush.bf16.msra.mxu0 %v2572
        %2629 = vmatpush.bf16.msra.mxu0 %v2571
        %2630 = vmatpush.bf16.msra.mxu0 %v2570
        %2631 = vmatpush.bf16.msra.mxu0 %v2569
        %2632 = vmatpush.bf16.msra.mxu0 %v2568
        %2633 = vmatpush.bf16.msra.mxu0 %v2567
        %2634 = vmatpush.bf16.msra.mxu0 %v2566
        %2635 = vmatmul.bf16.gmra.mxu0 %v2615
        %v2636 = vpop.f32.mrf.mxu0
        %v2637 = vadd.f32 %v2586, %v2636
        %v2638 = vpop.f32.mrf.mxu0
        %v2639 = vadd.f32 %v2591, %v2638
        %2640 = vmatmul.bf16.gmra.mxu0 %v2617
        %v2641 = vpop.f32.mrf.mxu0
        %v2642 = vadd.f32 %v2596, %v2641
        %v2643 = vpop.f32.mrf.mxu0
        %v2644 = vadd.f32 %v2601, %v2643
        %2645 = vdwg.mxu0
        %2646 = vmatpush.bf16.msra.mxu0 0
        %2647 = vmatpush.bf16.msra.mxu0 0
        %2648 = vmatpush.bf16.msra.mxu0 0
        %2649 = vmatpush.bf16.msra.mxu0 0
        %2650 = vmatpush.bf16.msra.mxu0 0
        %2651 = vmatpush.bf16.msra.mxu0 0
        %2652 = vmatpush.bf16.msra.mxu0 0
        %2653 = vmatpush.bf16.msra.mxu0 %v2574
        %2654 = vmatmul.bf16.gmra.mxu0 %v2622
        %v2655 = vpop.f32.mrf.mxu0
        %v2656 = vadd.f32 %v2637, %v2655
        %v2657 = vpop.f32.mrf.mxu0
        %v2658 = vadd.f32 %v2639, %v2657
        %2659 = vmatmul.bf16.gmra.mxu0 %v2625
        %v2660 = vpop.f32.mrf.mxu0
        %v2661 = vadd.f32 %v2642, %v2660
        %v2662 = vpop.f32.mrf.mxu0
        %v2663 = vadd.f32 %v2644, %v2662
        %2664 = vdwg.mxu0
        %v2665 = vmax.f32 %v2656, 0.0
        %v2666 = vmax.f32 %v2658, 0.0
        %v2667 = vmax.f32 %v2661, 0.0
        %v2668 = vmax.f32 %v2663, 0.0
        %2669 = vrot.lane.b32.xlu0 %v2665, 5
        %v2670 = vpop.permute.xlu0 %2669
        %2671 = vrot.lane.b32.xlu0 %v2666, 5
        %v2672 = vpop.permute.xlu0 %2671
        %2673 = vrot.lane.b32.xlu0 %v2667, 5
        %v2674 = vpop.permute.xlu0 %2673
        %2675 = vrot.lane.b32.xlu0 %v2668, 5
        %v2676 = vpop.permute.xlu0 %2675
        %v2677 = vmul.f32 %v2670, %v2503
        %v2678 = vmul.f32 %v2672, %v2503
        %v2679 = vmul.f32 %v2674, %v2503
        %v2680 = vmul.f32 %v2676, %v2503
        %2681 = vrot.lane.b32.xlu0 %v2665, 4
        %v2682 = vpop.permute.xlu0 %2681
        %2683 = vrot.lane.b32.xlu0 %v2666, 4
        %v2684 = vpop.permute.xlu0 %2683
        %2685 = vrot.lane.b32.xlu0 %v2667, 4
        %v2686 = vpop.permute.xlu0 %2685
        %2687 = vrot.lane.b32.xlu0 %v2668, 4
        %v2688 = vpop.permute.xlu0 %2687
        %v2689 = vmul.f32 %v2682, %v2511
        %v2690 = vmul.f32 %v2684, %v2511
        %v2691 = vmul.f32 %v2686, %v2511
        %v2692 = vmul.f32 %v2688, %v2511
        %2693 = vrot.lane.b32.xlu0 %v2665, 3
        %v2694 = vpop.permute.xlu0 %2693
        %2695 = vrot.lane.b32.xlu0 %v2666, 3
        %v2696 = vpop.permute.xlu0 %2695
        %2697 = vrot.lane.b32.xlu0 %v2667, 3
        %v2698 = vpop.permute.xlu0 %2697
        %2699 = vrot.lane.b32.xlu0 %v2668, 3
        %v2700 = vpop.permute.xlu0 %2699
        %v2701 = vmul.f32 %v2694, %v2519
        %v2702 = vmul.f32 %v2696, %v2519
        %v2703 = vmul.f32 %v2698, %v2519
        %v2704 = vmul.f32 %v2700, %v2519
        %2705 = vrot.lane.b32.xlu0 %v2665, 1
        %v2706 = vpop.permute.xlu0 %2705
        %2707 = vrot.lane.b32.xlu0 %v2666, 1
        %v2708 = vpop.permute.xlu0 %2707
        %2709 = vrot.lane.b32.xlu0 %v2667, 1
        %v2710 = vpop.permute.xlu0 %2709
        %2711 = vrot.lane.b32.xlu0 %v2668, 1
        %v2712 = vpop.permute.xlu0 %2711
        %v2713 = vmul.f32 %v2706, %v2527
        %v2714 = vmul.f32 %v2708, %v2527
        %v2715 = vmul.f32 %v2710, %v2527
        %v2716 = vmul.f32 %v2712, %v2527
        %v2717 = vmul.f32 %v2665, %v2531
        %v2718 = vmul.f32 %v2666, %v2531
        %v2719 = vmul.f32 %v2667, %v2531
        %v2720 = vmul.f32 %v2668, %v2531
        %2721 = vrot.lane.b32.xlu0 %v2665, 127
        %v2722 = vpop.permute.xlu0 %2721
        %2723 = vrot.lane.b32.xlu0 %v2666, 127
        %v2724 = vpop.permute.xlu0 %2723
        %2725 = vrot.lane.b32.xlu0 %v2667, 127
        %v2726 = vpop.permute.xlu0 %2725
        %2727 = vrot.lane.b32.xlu0 %v2668, 127
        %v2728 = vpop.permute.xlu0 %2727
        %v2729 = vmul.f32 %v2722, %v2539
        %v2730 = vmul.f32 %v2724, %v2539
        %v2731 = vmul.f32 %v2726, %v2539
        %v2732 = vmul.f32 %v2728, %v2539
        %2733 = vrot.lane.b32.xlu0 %v2665, 125
        %v2734 = vpop.permute.xlu0 %2733
        %2735 = vrot.lane.b32.xlu0 %v2666, 125
        %v2736 = vpop.permute.xlu0 %2735
        %2737 = vrot.lane.b32.xlu0 %v2667, 125
        %v2738 = vpop.permute.xlu0 %2737
        %2739 = vrot.lane.b32.xlu0 %v2668, 125
        %v2740 = vpop.permute.xlu0 %2739
        %v2741 = vmul.f32 %v2734, %v2547
        %v2742 = vmul.f32 %v2736, %v2547
        %v2743 = vmul.f32 %v2738, %v2547
        %v2744 = vmul.f32 %v2740, %v2547
        %2745 = vrot.lane.b32.xlu0 %v2665, 124
        %v2746 = vpop.permute.xlu0 %2745
        %2747 = vrot.lane.b32.xlu0 %v2666, 124
        %v2748 = vpop.permute.xlu0 %2747
        %2749 = vrot.lane.b32.xlu0 %v2667, 124
        %v2750 = vpop.permute.xlu0 %2749
        %2751 = vrot.lane.b32.xlu0 %v2668, 124
        %v2752 = vpop.permute.xlu0 %2751
        %v2753 = vmul.f32 %v2746, %v2555
        %v2754 = vmul.f32 %v2748, %v2555
        %v2755 = vmul.f32 %v2750, %v2555
        %v2756 = vmul.f32 %v2752, %v2555
        %2757 = vrot.lane.b32.xlu0 %v2665, 123
        %v2758 = vpop.permute.xlu0 %2757
        %2759 = vrot.lane.b32.xlu0 %v2666, 123
        %v2760 = vpop.permute.xlu0 %2759
        %2761 = vrot.lane.b32.xlu0 %v2667, 123
        %v2762 = vpop.permute.xlu0 %2761
        %2763 = vrot.lane.b32.xlu0 %v2668, 123
        %v2764 = vpop.permute.xlu0 %2763
        %v2765 = vmul.f32 %v2758, %v2563
        %v2766 = vmul.f32 %v2760, %v2563
        %v2767 = vmul.f32 %v2762, %v2563
        %v2768 = vmul.f32 %v2764, %v2563
        %v2769 = vpack.c.bf16 %v2678, %v2677
        %v2770 = vpack.c.bf16 %v2680, %v2679
        %v2771 = vpack.c.bf16 %v2690, %v2689
        %v2772 = vpack.c.bf16 %v2692, %v2691
        %v2773 = vpack.c.bf16 %v2702, %v2701
        %v2774 = vpack.c.bf16 %v2704, %v2703
        %v2775 = vpack.c.bf16 %v2714, %v2713
        %v2776 = vpack.c.bf16 %v2716, %v2715
        %v2777 = vpack.c.bf16 %v2718, %v2717
        %v2778 = vpack.c.bf16 %v2720, %v2719
        %v2779 = vpack.c.bf16 %v2730, %v2729
        %v2780 = vpack.c.bf16 %v2732, %v2731
        %v2781 = vpack.c.bf16 %v2742, %v2741
        %v2782 = vpack.c.bf16 %v2744, %v2743
        %v2783 = vpack.c.bf16 %v2754, %v2753
        %v2784 = vpack.c.bf16 %v2756, %v2755
        %v2785 = vpack.c.bf16 %v2766, %v2765
        %v2786 = vpack.c.bf16 %v2768, %v2767
        %v2787 = vld [vmem:[#allocation12] sm:$0xff]
        %v2788 = vld [vmem:[#allocation12 + $0x8] sm:$0xf]
        %v2789 = vld [vmem:[#allocation12 + $0xc] sm:$0xff]
        %v2790 = vld [vmem:[#allocation12 + $0x14] sm:$0xf]
        %v2791 = vld [vmem:[#allocation12 + $0x18] sm:$0xff]
        %v2792 = vld [vmem:[#allocation12 + $0x20] sm:$0xf]
        %v2793 = vld [vmem:[#allocation12 + $0x24] sm:$0xff]
        %v2794 = vld [vmem:[#allocation12 + $0x2c] sm:$0xf]
        %v2795 = vld [vmem:[%s37] sm:$0xff]
        %v2796 = vld [vmem:[%s37 + $0x8] sm:$0xff]
        %v2797 = vld [vmem:[%s37 + $0x10] sm:$0xff]
        %v2798 = vld [vmem:[%s37 + $0x18] sm:$0xff]
        %2800 = vset.pattern.permute.xlu0 0
        %2801 = vperm.xlu0 %2800, %v2795
        %v2802 = vpop.permute.xlu0 %2801
        %2805 = vset.pattern.permute.xlu0 0
        %2806 = vperm.xlu0 %2805, %v2796
        %v2807 = vpop.permute.xlu0 %2806
        %2810 = vset.pattern.permute.xlu0 0
        %2811 = vperm.xlu0 %2810, %v2797
        %v2812 = vpop.permute.xlu0 %2811
        %2815 = vset.pattern.permute.xlu0 0
        %2816 = vperm.xlu0 %2815, %v2798
        %v2817 = vpop.permute.xlu0 %2816
        %v2827 = vunpack.c.l.b16 %v2787
        %v2828 = vunpack.c.h.b16 %v2787
        %v2829 = vunpack.c.l.b16 %v2788
        %v2830 = vunpack.c.l.b16 %v2789
        %v2831 = vunpack.c.h.b16 %v2789
        %v2832 = vunpack.c.l.b16 %v2790
        %v2833 = vunpack.c.l.b16 %v2791
        %v2834 = vunpack.c.h.b16 %v2791
        %v2835 = vunpack.c.l.b16 %v2792
        %v2836 = vunpack.c.l.b16 %v2793
        %v2837 = vunpack.c.h.b16 %v2793
        %v2838 = vunpack.c.l.b16 %v2794
        %v2839 = vpack.c.b16 %v2830, %v2827
        %v2840 = vpack.c.b16 %v2831, %v2828
        %v2841 = vpack.c.b16 %v2832, %v2829
        %v2842 = vpack.c.b16 %v2836, %v2833
        %v2843 = vpack.c.b16 %v2837, %v2834
        %v2844 = vpack.c.b16 %v2838, %v2835
        %vm2849 = vcmask 261120
        %v2851 = vsel %vm2849, %v2841, 0
        %v2854 = vsel %vm2849, %v2844, 0
        %2856 = vmatpush.bf16.msra.mxu0 %v2776
        %2857 = vmatpush.bf16.msra.mxu0 %v2775
        %2858 = vmatpush.bf16.msra.mxu0 %v2774
        %2859 = vmatpush.bf16.msra.mxu0 %v2773
        %2860 = vmatpush.bf16.msra.mxu0 %v2772
        %2861 = vmatpush.bf16.msra.mxu0 %v2771
        %2862 = vmatpush.bf16.msra.mxu0 %v2770
        %2863 = vmatpush.bf16.msra.mxu0 %v2769
        %2864 = vmatmul.bf16.gmra.mxu0 %v2839
        %v2865 = vpop.f32.mrf.mxu0
        %v2866 = vadd.f32 %v2802, %v2865
        %v2867 = vpop.f32.mrf.mxu0
        %v2868 = vadd.f32 %v2807, %v2867
        %2869 = vmatmul.bf16.gmra.mxu0 %v2842
        %v2870 = vpop.f32.mrf.mxu0
        %v2871 = vadd.f32 %v2812, %v2870
        %v2872 = vpop.f32.mrf.mxu0
        %v2873 = vadd.f32 %v2817, %v2872
        %2874 = vdwg.mxu0
        %2875 = vmatpush.bf16.msra.mxu0 %v2784
        %2876 = vmatpush.bf16.msra.mxu0 %v2783
        %2877 = vmatpush.bf16.msra.mxu0 %v2782
        %2878 = vmatpush.bf16.msra.mxu0 %v2781
        %2879 = vmatpush.bf16.msra.mxu0 %v2780
        %2880 = vmatpush.bf16.msra.mxu0 %v2779
        %2881 = vmatpush.bf16.msra.mxu0 %v2778
        %2882 = vmatpush.bf16.msra.mxu0 %v2777
        %2883 = vmatmul.bf16.gmra.mxu0 %v2840
        %v2884 = vpop.f32.mrf.mxu0
        %v2885 = vadd.f32 %v2866, %v2884
        %v2886 = vpop.f32.mrf.mxu0
        %v2887 = vadd.f32 %v2868, %v2886
        %2888 = vmatmul.bf16.gmra.mxu0 %v2843
        %v2889 = vpop.f32.mrf.mxu0
        %v2890 = vadd.f32 %v2871, %v2889
        %v2891 = vpop.f32.mrf.mxu0
        %v2892 = vadd.f32 %v2873, %v2891
        %2893 = vdwg.mxu0
        %2894 = vmatpush.bf16.msra.mxu0 0
        %2895 = vmatpush.bf16.msra.mxu0 0
        %2896 = vmatpush.bf16.msra.mxu0 0
        %2897 = vmatpush.bf16.msra.mxu0 0
        %2898 = vmatpush.bf16.msra.mxu0 0
        %2899 = vmatpush.bf16.msra.mxu0 0
        %2900 = vmatpush.bf16.msra.mxu0 %v2786
        %2901 = vmatpush.bf16.msra.mxu0 %v2785
        %2902 = vmatmul.bf16.gmra.mxu0 %v2851
        %v2903 = vpop.f32.mrf.mxu0
        %v2904 = vadd.f32 %v2885, %v2903
        %v2905 = vpop.f32.mrf.mxu0
        %v2906 = vadd.f32 %v2887, %v2905
        %2907 = vmatmul.bf16.gmra.mxu0 %v2854
        %v2908 = vpop.f32.mrf.mxu0
        %v2909 = vadd.f32 %v2890, %v2908
        %v2910 = vpop.f32.mrf.mxu0
        %v2911 = vadd.f32 %v2892, %v2910
        %2912 = vdwg.mxu0
        %v2913 = vmax.f32 %v2904, 0.0
        %v2914 = vmax.f32 %v2906, 0.0
        %v2915 = vmax.f32 %v2909, 0.0
        %v2916 = vmax.f32 %v2911, 0.0
        %2917 = vrot.lane.b32.xlu0 %v2913, 127
        %v2918 = vpop.permute.xlu0 %2917
        %2919 = vrot.lane.b32.xlu0 %v2914, 127
        %v2920 = vpop.permute.xlu0 %2919
        %2921 = vrot.lane.b32.xlu0 %v2915, 127
        %v2922 = vpop.permute.xlu0 %2921
        %2923 = vrot.lane.b32.xlu0 %v2916, 127
        %v2924 = vpop.permute.xlu0 %2923
        %v2925 = vmax.f32 %v2913, %v2918
        %v2926 = vmax.f32 %v2914, %v2920
        %v2927 = vmax.f32 %v2915, %v2922
        %v2928 = vmax.f32 %v2916, %v2924
        %2929 = vrot.lane.b32.xlu0 %v2925, 124
        %v2930 = vpop.permute.xlu0 %2929
        %2931 = vrot.lane.b32.xlu0 %v2926, 124
        %v2932 = vpop.permute.xlu0 %2931
        %2933 = vrot.lane.b32.xlu0 %v2927, 124
        %v2934 = vpop.permute.xlu0 %2933
        %2935 = vrot.lane.b32.xlu0 %v2928, 124
        %v2936 = vpop.permute.xlu0 %2935
        %v2937 = vmax.f32 %v2925, %v2930
        %v2938 = vmax.f32 %v2926, %v2932
        %v2939 = vmax.f32 %v2927, %v2934
        %v2940 = vmax.f32 %v2928, %v2936
        %v2941 = vpack.c.bf16 %v2938, %v2937
        %v2942 = vpack.c.bf16 %v2940, %v2939
        %v2943 = vld [vmem:[%s39] sm:$0xf]
        %v2944 = vld [vmem:[%s39 + $0x4] sm:$0xf]
        %v2945 = vld [vmem:[%s39 + $0x8] sm:$0xf]
        %v2946 = vld [vmem:[%s39 + $0xc] sm:$0xf]
        %v2947 = vld [vmem:[%s39 + $0x10] sm:$0xf]
        %v2948 = vld [vmem:[%s39 + $0x14] sm:$0xf]
        %v2949 = vld [vmem:[%s39 + $0x18] sm:$0xf]
        %v2950 = vld [vmem:[%s39 + $0x1c] sm:$0xf]
        %v2951 = vld [vmem:[%s39 + $0x20] sm:$0xf]
        %v2952 = vld [vmem:[%s39 + $0x24] sm:$0xf]
        %v2953 = vld [vmem:[%s39 + $0x28] sm:$0xf]
        %v2954 = vld [vmem:[%s39 + $0x2c] sm:$0xf]
        %v2955 = vld [vmem:[%s39 + $0x30] sm:$0xf]
        %v2956 = vld [vmem:[%s39 + $0x34] sm:$0xf]
        %v2957 = vld [vmem:[%s39 + $0x38] sm:$0xf]
        %v2958 = vld [vmem:[%s39 + $0x3c] sm:$0xf]
        %v2975 = vunpack.c.l.b16 %v2943
        %v2976 = vunpack.c.l.b16 %v2944
        %v2977 = vunpack.c.l.b16 %v2945
        %v2978 = vunpack.c.l.b16 %v2946
        %v2979 = vunpack.c.l.b16 %v2947
        %v2980 = vunpack.c.l.b16 %v2948
        %v2981 = vunpack.c.l.b16 %v2949
        %v2982 = vunpack.c.l.b16 %v2950
        %v2983 = vunpack.c.l.b16 %v2951
        %v2984 = vunpack.c.l.b16 %v2952
        %v2985 = vunpack.c.l.b16 %v2953
        %v2986 = vunpack.c.l.b16 %v2954
        %v2987 = vunpack.c.l.b16 %v2955
        %v2988 = vunpack.c.l.b16 %v2956
        %v2989 = vunpack.c.l.b16 %v2957
        %v2990 = vunpack.c.l.b16 %v2958
        %v2991 = vpack.c.b16 %v2976, %v2975
        %v2992 = vpack.c.b16 %v2978, %v2977
        %v2993 = vpack.c.b16 %v2980, %v2979
        %v2994 = vpack.c.b16 %v2982, %v2981
        %v2995 = vpack.c.b16 %v2984, %v2983
        %v2996 = vpack.c.b16 %v2986, %v2985
        %v2997 = vpack.c.b16 %v2988, %v2987
        %v2998 = vpack.c.b16 %v2990, %v2989
        %3007 = vmatpush.bf16.msra.mxu0 %v2998
        %3008 = vmatpush.bf16.msra.mxu0 %v2997
        %3009 = vmatpush.bf16.msra.mxu0 %v2996
        %3010 = vmatpush.bf16.msra.mxu0 %v2995
        %3011 = vmatpush.bf16.msra.mxu0 %v2994
        %3012 = vmatpush.bf16.msra.mxu0 %v2993
        %3013 = vmatpush.bf16.msra.mxu0 %v2992
        %3014 = vmatpush.bf16.msra.mxu0 %v2991
        %3015 = vmatmul.bf16.gmra.mxu0 %v2941
        %v3016 = vpop.f32.mrf.mxu0
        %v3017 = vadd.f32 0.0, %v3016
        %v3018 = vpop.f32.mrf.mxu0
        %v3019 = vadd.f32 0.0, %v3018
        %3020 = vmatmul.bf16.gmra.mxu0 %v2942
        %v3021 = vpop.f32.mrf.mxu0
        %v3022 = vadd.f32 0.0, %v3021
        %v3023 = vpop.f32.mrf.mxu0
        %v3024 = vadd.f32 0.0, %v3023
        %3025 = vdwg.mxu0
        %3026 = vrot.lane.b32.xlu0 %v3017, 3
        %v3027 = vpop.permute.xlu0 %3026
        %3028 = vrot.lane.b32.xlu0 %v3019, 3
        %v3029 = vpop.permute.xlu0 %3028
        %3030 = vrot.lane.b32.xlu0 %v3022, 3
        %v3031 = vpop.permute.xlu0 %3030
        %3032 = vrot.lane.b32.xlu0 %v3024, 3
        %v3033 = vpop.permute.xlu0 %3032
        %v3034 = vld [vmem:[#allocation6] sm:$0x1]
        %v3035 = vperm.slane %v3034, 0
        %v3036 = vmul.f32 %v3027, %v3035
        %v3037 = vmul.f32 %v3029, %v3035
        %v3038 = vmul.f32 %v3031, %v3035
        %v3039 = vmul.f32 %v3033, %v3035
        %3040 = vrot.lane.b32.xlu0 %v3017, 2
        %v3041 = vpop.permute.xlu0 %3040
        %3042 = vrot.lane.b32.xlu0 %v3019, 2
        %v3043 = vpop.permute.xlu0 %3042
        %3044 = vrot.lane.b32.xlu0 %v3022, 2
        %v3045 = vpop.permute.xlu0 %3044
        %3046 = vrot.lane.b32.xlu0 %v3024, 2
        %v3047 = vpop.permute.xlu0 %3046
        %v3048 = vld [vmem:[#allocation6 + $0x1] sm:$0x1]
        %v3049 = vperm.slane %v3048, 0
        %v3050 = vmul.f32 %v3041, %v3049
        %v3051 = vmul.f32 %v3043, %v3049
        %v3052 = vmul.f32 %v3045, %v3049
        %v3053 = vmul.f32 %v3047, %v3049
        %3054 = vrot.lane.b32.xlu0 %v3017, 1
        %v3055 = vpop.permute.xlu0 %3054
        %3056 = vrot.lane.b32.xlu0 %v3019, 1
        %v3057 = vpop.permute.xlu0 %3056
        %3058 = vrot.lane.b32.xlu0 %v3022, 1
        %v3059 = vpop.permute.xlu0 %3058
        %3060 = vrot.lane.b32.xlu0 %v3024, 1
        %v3061 = vpop.permute.xlu0 %3060
        %v3062 = vld [vmem:[#allocation6 + $0x2] sm:$0x1]
        %v3063 = vperm.slane %v3062, 0
        %v3064 = vmul.f32 %v3055, %v3063
        %v3065 = vmul.f32 %v3057, %v3063
        %v3066 = vmul.f32 %v3059, %v3063
        %v3067 = vmul.f32 %v3061, %v3063
        %v3068 = vld [vmem:[#allocation6 + $0x3] sm:$0x1]
        %v3069 = vperm.slane %v3068, 0
        %v3070 = vmul.f32 %v3055, %v3069
        %v3071 = vmul.f32 %v3057, %v3069
        %v3072 = vmul.f32 %v3059, %v3069
        %v3073 = vmul.f32 %v3061, %v3069
        %v3074 = vld [vmem:[#allocation6 + $0x4] sm:$0x1]
        %v3075 = vperm.slane %v3074, 0
        %v3076 = vmul.f32 %v3017, %v3075
        %v3077 = vmul.f32 %v3019, %v3075
        %v3078 = vmul.f32 %v3022, %v3075
        %v3079 = vmul.f32 %v3024, %v3075
        %3080 = vrot.lane.b32.xlu0 %v3017, 127
        %v3081 = vpop.permute.xlu0 %3080
        %3082 = vrot.lane.b32.xlu0 %v3019, 127
        %v3083 = vpop.permute.xlu0 %3082
        %3084 = vrot.lane.b32.xlu0 %v3022, 127
        %v3085 = vpop.permute.xlu0 %3084
        %3086 = vrot.lane.b32.xlu0 %v3024, 127
        %v3087 = vpop.permute.xlu0 %3086
        %v3088 = vld [vmem:[#allocation6 + $0x5] sm:$0x1]
        %v3089 = vperm.slane %v3088, 0
        %v3090 = vmul.f32 %v3081, %v3089
        %v3091 = vmul.f32 %v3083, %v3089
        %v3092 = vmul.f32 %v3085, %v3089
        %v3093 = vmul.f32 %v3087, %v3089
        %v3094 = vld [vmem:[#allocation6 + $0x6] sm:$0x1]
        %v3095 = vperm.slane %v3094, 0
        %v3096 = vmul.f32 %v3081, %v3095
        %v3097 = vmul.f32 %v3083, %v3095
        %v3098 = vmul.f32 %v3085, %v3095
        %v3099 = vmul.f32 %v3087, %v3095
        %3100 = vrot.lane.b32.xlu0 %v3017, 126
        %v3101 = vpop.permute.xlu0 %3100
        %3102 = vrot.lane.b32.xlu0 %v3019, 126
        %v3103 = vpop.permute.xlu0 %3102
        %3104 = vrot.lane.b32.xlu0 %v3022, 126
        %v3105 = vpop.permute.xlu0 %3104
        %3106 = vrot.lane.b32.xlu0 %v3024, 126
        %v3107 = vpop.permute.xlu0 %3106
        %v3108 = vld [vmem:[#allocation6 + $0x7] sm:$0x1]
        %v3109 = vperm.slane %v3108, 0
        %v3110 = vmul.f32 %v3101, %v3109
        %v3111 = vmul.f32 %v3103, %v3109
        %v3112 = vmul.f32 %v3105, %v3109
        %v3113 = vmul.f32 %v3107, %v3109
        %3114 = vrot.lane.b32.xlu0 %v3017, 125
        %v3115 = vpop.permute.xlu0 %3114
        %3116 = vrot.lane.b32.xlu0 %v3019, 125
        %v3117 = vpop.permute.xlu0 %3116
        %3118 = vrot.lane.b32.xlu0 %v3022, 125
        %v3119 = vpop.permute.xlu0 %3118
        %3120 = vrot.lane.b32.xlu0 %v3024, 125
        %v3121 = vpop.permute.xlu0 %3120
        %v3122 = vld [vmem:[#allocation6 + $0x8] sm:$0x1]
        %v3123 = vperm.slane %v3122, 0
        %v3124 = vmul.f32 %v3115, %v3123
        %v3125 = vmul.f32 %v3117, %v3123
        %v3126 = vmul.f32 %v3119, %v3123
        %v3127 = vmul.f32 %v3121, %v3123
        %v3128 = vpack.c.bf16 %v3037, %v3036
        %v3129 = vpack.c.bf16 %v3039, %v3038
        %v3130 = vpack.c.bf16 %v3051, %v3050
        %v3131 = vpack.c.bf16 %v3053, %v3052
        %v3132 = vpack.c.bf16 %v3065, %v3064
        %v3133 = vpack.c.bf16 %v3067, %v3066
        %v3134 = vpack.c.bf16 %v3071, %v3070
        %v3135 = vpack.c.bf16 %v3073, %v3072
        %v3136 = vpack.c.bf16 %v3077, %v3076
        %v3137 = vpack.c.bf16 %v3079, %v3078
        %v3138 = vpack.c.bf16 %v3091, %v3090
        %v3139 = vpack.c.bf16 %v3093, %v3092
        %v3140 = vpack.c.bf16 %v3097, %v3096
        %v3141 = vpack.c.bf16 %v3099, %v3098
        %v3142 = vpack.c.bf16 %v3111, %v3110
        %v3143 = vpack.c.bf16 %v3113, %v3112
        %v3144 = vpack.c.bf16 %v3125, %v3124
        %v3145 = vpack.c.bf16 %v3127, %v3126
        %v3146 = vld [vmem:[#allocation13] sm:$0xff]
        %v3147 = vld [vmem:[#allocation13 + $0x8] sm:$0xf]
        %v3148 = vld [vmem:[#allocation13 + $0xc] sm:$0xff]
        %v3149 = vld [vmem:[#allocation13 + $0x14] sm:$0xf]
        %v3150 = vld [vmem:[#allocation13 + $0x18] sm:$0xff]
        %v3151 = vld [vmem:[#allocation13 + $0x20] sm:$0xf]
        %v3152 = vld [vmem:[#allocation13 + $0x24] sm:$0xff]
        %v3153 = vld [vmem:[#allocation13 + $0x2c] sm:$0xf]
        %v3154 = vld [vmem:[#allocation13 + $0x30] sm:$0xff]
        %v3155 = vld [vmem:[#allocation13 + $0x38] sm:$0xf]
        %v3156 = vld [vmem:[#allocation13 + $0x3c] sm:$0xff]
        %v3157 = vld [vmem:[#allocation13 + $0x44] sm:$0xf]
        %v3158 = vld [vmem:[#allocation13 + $0x48] sm:$0xff]
        %v3159 = vld [vmem:[#allocation13 + $0x50] sm:$0xf]
        %v3160 = vld [vmem:[#allocation13 + $0x54] sm:$0xff]
        %v3161 = vld [vmem:[#allocation13 + $0x5c] sm:$0xf]
        %v3162 = vld [vmem:[%s43] sm:$0xff]
        %v3163 = vld [vmem:[%s43 + $0x8] sm:$0xff]
        %v3164 = vld [vmem:[%s43 + $0x10] sm:$0xff]
        %v3165 = vld [vmem:[%s43 + $0x18] sm:$0xff]
        %v3166 = vld [vmem:[%s43 + $0x20] sm:$0xff]
        %v3167 = vld [vmem:[%s43 + $0x28] sm:$0xff]
        %v3168 = vld [vmem:[%s43 + $0x30] sm:$0xff]
        %v3169 = vld [vmem:[%s43 + $0x38] sm:$0xff]
        %3171 = vset.pattern.permute.xlu0 0
        %3172 = vperm.xlu0 %3171, %v3162
        %v3173 = vpop.permute.xlu0 %3172
        %3176 = vset.pattern.permute.xlu0 0
        %3177 = vperm.xlu0 %3176, %v3163
        %v3178 = vpop.permute.xlu0 %3177
        %3181 = vset.pattern.permute.xlu0 0
        %3182 = vperm.xlu0 %3181, %v3164
        %v3183 = vpop.permute.xlu0 %3182
        %3186 = vset.pattern.permute.xlu0 0
        %3187 = vperm.xlu0 %3186, %v3165
        %v3188 = vpop.permute.xlu0 %3187
        %3191 = vset.pattern.permute.xlu0 0
        %3192 = vperm.xlu0 %3191, %v3166
        %v3193 = vpop.permute.xlu0 %3192
        %3196 = vset.pattern.permute.xlu0 0
        %3197 = vperm.xlu0 %3196, %v3167
        %v3198 = vpop.permute.xlu0 %3197
        %3201 = vset.pattern.permute.xlu0 0
        %3202 = vperm.xlu0 %3201, %v3168
        %v3203 = vpop.permute.xlu0 %3202
        %3206 = vset.pattern.permute.xlu0 0
        %3207 = vperm.xlu0 %3206, %v3169
        %v3208 = vpop.permute.xlu0 %3207
        %v3226 = vunpack.c.l.b16 %v3146
        %v3227 = vunpack.c.h.b16 %v3146
        %v3228 = vunpack.c.l.b16 %v3147
        %v3229 = vunpack.c.l.b16 %v3148
        %v3230 = vunpack.c.h.b16 %v3148
        %v3231 = vunpack.c.l.b16 %v3149
        %v3232 = vunpack.c.l.b16 %v3150
        %v3233 = vunpack.c.h.b16 %v3150
        %v3234 = vunpack.c.l.b16 %v3151
        %v3235 = vunpack.c.l.b16 %v3152
        %v3236 = vunpack.c.h.b16 %v3152
        %v3237 = vunpack.c.l.b16 %v3153
        %v3238 = vunpack.c.l.b16 %v3154
        %v3239 = vunpack.c.h.b16 %v3154
        %v3240 = vunpack.c.l.b16 %v3155
        %v3241 = vunpack.c.l.b16 %v3156
        %v3242 = vunpack.c.h.b16 %v3156
        %v3243 = vunpack.c.l.b16 %v3157
        %v3244 = vunpack.c.l.b16 %v3158
        %v3245 = vunpack.c.h.b16 %v3158
        %v3246 = vunpack.c.l.b16 %v3159
        %v3247 = vunpack.c.l.b16 %v3160
        %v3248 = vunpack.c.h.b16 %v3160
        %v3249 = vunpack.c.l.b16 %v3161
        %v3250 = vpack.c.b16 %v3229, %v3226
        %v3251 = vpack.c.b16 %v3230, %v3227
        %v3252 = vpack.c.b16 %v3231, %v3228
        %v3253 = vpack.c.b16 %v3235, %v3232
        %v3254 = vpack.c.b16 %v3236, %v3233
        %v3255 = vpack.c.b16 %v3237, %v3234
        %v3256 = vpack.c.b16 %v3241, %v3238
        %v3257 = vpack.c.b16 %v3242, %v3239
        %v3258 = vpack.c.b16 %v3243, %v3240
        %v3259 = vpack.c.b16 %v3247, %v3244
        %v3260 = vpack.c.b16 %v3248, %v3245
        %v3261 = vpack.c.b16 %v3249, %v3246
        %v3271 = vsel %vm2849, %v3252, 0
        %v3274 = vsel %vm2849, %v3255, 0
        %v3277 = vsel %vm2849, %v3258, 0
        %v3280 = vsel %vm2849, %v3261, 0
        %3282 = vmatpush.bf16.msra.mxu0 %v3135
        %3283 = vmatpush.bf16.msra.mxu0 %v3134
        %3284 = vmatpush.bf16.msra.mxu0 %v3133
        %3285 = vmatpush.bf16.msra.mxu0 %v3132
        %3286 = vmatpush.bf16.msra.mxu0 %v3131
        %3287 = vmatpush.bf16.msra.mxu0 %v3130
        %3288 = vmatpush.bf16.msra.mxu0 %v3129
        %3289 = vmatpush.bf16.msra.mxu0 %v3128
        %3290 = vmatmul.bf16.gmra.mxu0 %v3250
        %v3291 = vpop.f32.mrf.mxu0
        %v3292 = vadd.f32 %v3173, %v3291
        %v3293 = vpop.f32.mrf.mxu0
        %v3294 = vadd.f32 %v3178, %v3293
        %3295 = vmatmul.bf16.gmra.mxu0 %v3253
        %v3296 = vpop.f32.mrf.mxu0
        %v3297 = vadd.f32 %v3183, %v3296
        %v3298 = vpop.f32.mrf.mxu0
        %v3299 = vadd.f32 %v3188, %v3298
        %3300 = vmatmul.bf16.gmra.mxu0 %v3256
        %v3301 = vpop.f32.mrf.mxu0
        %v3302 = vadd.f32 %v3193, %v3301
        %v3303 = vpop.f32.mrf.mxu0
        %v3304 = vadd.f32 %v3198, %v3303
        %3305 = vmatmul.bf16.gmra.mxu0 %v3259
        %v3306 = vpop.f32.mrf.mxu0
        %v3307 = vadd.f32 %v3203, %v3306
        %v3308 = vpop.f32.mrf.mxu0
        %v3309 = vadd.f32 %v3208, %v3308
        %3310 = vdwg.mxu0
        %3311 = vmatpush.bf16.msra.mxu0 %v3143
        %3312 = vmatpush.bf16.msra.mxu0 %v3142
        %3313 = vmatpush.bf16.msra.mxu0 %v3141
        %3314 = vmatpush.bf16.msra.mxu0 %v3140
        %3315 = vmatpush.bf16.msra.mxu0 %v3139
        %3316 = vmatpush.bf16.msra.mxu0 %v3138
        %3317 = vmatpush.bf16.msra.mxu0 %v3137
        %3318 = vmatpush.bf16.msra.mxu0 %v3136
        %3319 = vmatmul.bf16.gmra.mxu0 %v3251
        %v3320 = vpop.f32.mrf.mxu0
        %v3321 = vadd.f32 %v3292, %v3320
        %v3322 = vpop.f32.mrf.mxu0
        %v3323 = vadd.f32 %v3294, %v3322
        %3324 = vmatmul.bf16.gmra.mxu0 %v3254
        %v3325 = vpop.f32.mrf.mxu0
        %v3326 = vadd.f32 %v3297, %v3325
        %v3327 = vpop.f32.mrf.mxu0
        %v3328 = vadd.f32 %v3299, %v3327
        %3329 = vmatmul.bf16.gmra.mxu0 %v3257
        %v3330 = vpop.f32.mrf.mxu0
        %v3331 = vadd.f32 %v3302, %v3330
        %v3332 = vpop.f32.mrf.mxu0
        %v3333 = vadd.f32 %v3304, %v3332
        %3334 = vmatmul.bf16.gmra.mxu0 %v3260
        %v3335 = vpop.f32.mrf.mxu0
        %v3336 = vadd.f32 %v3307, %v3335
        %v3337 = vpop.f32.mrf.mxu0
        %v3338 = vadd.f32 %v3309, %v3337
        %3339 = vdwg.mxu0
        %3340 = vmatpush.bf16.msra.mxu0 0
        %3341 = vmatpush.bf16.msra.mxu0 0
        %3342 = vmatpush.bf16.msra.mxu0 0
        %3343 = vmatpush.bf16.msra.mxu0 0
        %3344 = vmatpush.bf16.msra.mxu0 0
        %3345 = vmatpush.bf16.msra.mxu0 0
        %3346 = vmatpush.bf16.msra.mxu0 %v3145
        %3347 = vmatpush.bf16.msra.mxu0 %v3144
        %3348 = vmatmul.bf16.gmra.mxu0 %v3271
        %v3349 = vpop.f32.mrf.mxu0
        %v3350 = vadd.f32 %v3321, %v3349
        %v3351 = vpop.f32.mrf.mxu0
        %v3352 = vadd.f32 %v3323, %v3351
        %3353 = vmatmul.bf16.gmra.mxu0 %v3274
        %v3354 = vpop.f32.mrf.mxu0
        %v3355 = vadd.f32 %v3326, %v3354
        %v3356 = vpop.f32.mrf.mxu0
        %v3357 = vadd.f32 %v3328, %v3356
        %3358 = vmatmul.bf16.gmra.mxu0 %v3277
        %v3359 = vpop.f32.mrf.mxu0
        %v3360 = vadd.f32 %v3331, %v3359
        %v3361 = vpop.f32.mrf.mxu0
        %v3362 = vadd.f32 %v3333, %v3361
        %3363 = vmatmul.bf16.gmra.mxu0 %v3280
        %v3364 = vpop.f32.mrf.mxu0
        %v3365 = vadd.f32 %v3336, %v3364
        %v3366 = vpop.f32.mrf.mxu0
        %v3367 = vadd.f32 %v3338, %v3366
        %3368 = vdwg.mxu0
        %v3369 = vmax.f32 %v3350, 0.0
        %v3370 = vmax.f32 %v3352, 0.0
        %v3371 = vmax.f32 %v3355, 0.0
        %v3372 = vmax.f32 %v3357, 0.0
        %v3373 = vmax.f32 %v3360, 0.0
        %v3374 = vmax.f32 %v3362, 0.0
        %v3375 = vmax.f32 %v3365, 0.0
        %v3376 = vmax.f32 %v3367, 0.0
        %3377 = vrot.lane.b32.xlu0 %v3369, 3
        %v3378 = vpop.permute.xlu0 %3377
        %3379 = vrot.lane.b32.xlu0 %v3370, 3
        %v3380 = vpop.permute.xlu0 %3379
        %3381 = vrot.lane.b32.xlu0 %v3371, 3
        %v3382 = vpop.permute.xlu0 %3381
        %3383 = vrot.lane.b32.xlu0 %v3372, 3
        %v3384 = vpop.permute.xlu0 %3383
        %3385 = vrot.lane.b32.xlu0 %v3373, 3
        %v3386 = vpop.permute.xlu0 %3385
        %3387 = vrot.lane.b32.xlu0 %v3374, 3
        %v3388 = vpop.permute.xlu0 %3387
        %3389 = vrot.lane.b32.xlu0 %v3375, 3
        %v3390 = vpop.permute.xlu0 %3389
        %3391 = vrot.lane.b32.xlu0 %v3376, 3
        %v3392 = vpop.permute.xlu0 %3391
        %v3393 = vmul.f32 %v3378, %v3035
        %v3394 = vmul.f32 %v3380, %v3035
        %v3395 = vmul.f32 %v3382, %v3035
        %v3396 = vmul.f32 %v3384, %v3035
        %v3397 = vmul.f32 %v3386, %v3035
        %v3398 = vmul.f32 %v3388, %v3035
        %v3399 = vmul.f32 %v3390, %v3035
        %v3400 = vmul.f32 %v3392, %v3035
        %3401 = vrot.lane.b32.xlu0 %v3369, 2
        %v3402 = vpop.permute.xlu0 %3401
        %3403 = vrot.lane.b32.xlu0 %v3370, 2
        %v3404 = vpop.permute.xlu0 %3403
        %3405 = vrot.lane.b32.xlu0 %v3371, 2
        %v3406 = vpop.permute.xlu0 %3405
        %3407 = vrot.lane.b32.xlu0 %v3372, 2
        %v3408 = vpop.permute.xlu0 %3407
        %3409 = vrot.lane.b32.xlu0 %v3373, 2
        %v3410 = vpop.permute.xlu0 %3409
        %3411 = vrot.lane.b32.xlu0 %v3374, 2
        %v3412 = vpop.permute.xlu0 %3411
        %3413 = vrot.lane.b32.xlu0 %v3375, 2
        %v3414 = vpop.permute.xlu0 %3413
        %3415 = vrot.lane.b32.xlu0 %v3376, 2
        %v3416 = vpop.permute.xlu0 %3415
        %v3417 = vmul.f32 %v3402, %v3049
        %v3418 = vmul.f32 %v3404, %v3049
        %v3419 = vmul.f32 %v3406, %v3049
        %v3420 = vmul.f32 %v3408, %v3049
        %v3421 = vmul.f32 %v3410, %v3049
        %v3422 = vmul.f32 %v3412, %v3049
        %v3423 = vmul.f32 %v3414, %v3049
        %v3424 = vmul.f32 %v3416, %v3049
        %3425 = vrot.lane.b32.xlu0 %v3369, 1
        %v3426 = vpop.permute.xlu0 %3425
        %3427 = vrot.lane.b32.xlu0 %v3370, 1
        %v3428 = vpop.permute.xlu0 %3427
        %3429 = vrot.lane.b32.xlu0 %v3371, 1
        %v3430 = vpop.permute.xlu0 %3429
        %3431 = vrot.lane.b32.xlu0 %v3372, 1
        %v3432 = vpop.permute.xlu0 %3431
        %3433 = vrot.lane.b32.xlu0 %v3373, 1
        %v3434 = vpop.permute.xlu0 %3433
        %3435 = vrot.lane.b32.xlu0 %v3374, 1
        %v3436 = vpop.permute.xlu0 %3435
        %3437 = vrot.lane.b32.xlu0 %v3375, 1
        %v3438 = vpop.permute.xlu0 %3437
        %3439 = vrot.lane.b32.xlu0 %v3376, 1
        %v3440 = vpop.permute.xlu0 %3439
        %v3441 = vmul.f32 %v3426, %v3063
        %v3442 = vmul.f32 %v3428, %v3063
        %v3443 = vmul.f32 %v3430, %v3063
        %v3444 = vmul.f32 %v3432, %v3063
        %v3445 = vmul.f32 %v3434, %v3063
        %v3446 = vmul.f32 %v3436, %v3063
        %v3447 = vmul.f32 %v3438, %v3063
        %v3448 = vmul.f32 %v3440, %v3063
        %v3449 = vmul.f32 %v3426, %v3069
        %v3450 = vmul.f32 %v3428, %v3069
        %v3451 = vmul.f32 %v3430, %v3069
        %v3452 = vmul.f32 %v3432, %v3069
        %v3453 = vmul.f32 %v3434, %v3069
        %v3454 = vmul.f32 %v3436, %v3069
        %v3455 = vmul.f32 %v3438, %v3069
        %v3456 = vmul.f32 %v3440, %v3069
        %v3457 = vmul.f32 %v3369, %v3075
        %v3458 = vmul.f32 %v3370, %v3075
        %v3459 = vmul.f32 %v3371, %v3075
        %v3460 = vmul.f32 %v3372, %v3075
        %v3461 = vmul.f32 %v3373, %v3075
        %v3462 = vmul.f32 %v3374, %v3075
        %v3463 = vmul.f32 %v3375, %v3075
        %v3464 = vmul.f32 %v3376, %v3075
        %3465 = vrot.lane.b32.xlu0 %v3369, 127
        %v3466 = vpop.permute.xlu0 %3465
        %3467 = vrot.lane.b32.xlu0 %v3370, 127
        %v3468 = vpop.permute.xlu0 %3467
        %3469 = vrot.lane.b32.xlu0 %v3371, 127
        %v3470 = vpop.permute.xlu0 %3469
        %3471 = vrot.lane.b32.xlu0 %v3372, 127
        %v3472 = vpop.permute.xlu0 %3471
        %3473 = vrot.lane.b32.xlu0 %v3373, 127
        %v3474 = vpop.permute.xlu0 %3473
        %3475 = vrot.lane.b32.xlu0 %v3374, 127
        %v3476 = vpop.permute.xlu0 %3475
        %3477 = vrot.lane.b32.xlu0 %v3375, 127
        %v3478 = vpop.permute.xlu0 %3477
        %3479 = vrot.lane.b32.xlu0 %v3376, 127
        %v3480 = vpop.permute.xlu0 %3479
        %v3481 = vmul.f32 %v3466, %v3089
        %v3482 = vmul.f32 %v3468, %v3089
        %v3483 = vmul.f32 %v3470, %v3089
        %v3484 = vmul.f32 %v3472, %v3089
        %v3485 = vmul.f32 %v3474, %v3089
        %v3486 = vmul.f32 %v3476, %v3089
        %v3487 = vmul.f32 %v3478, %v3089
        %v3488 = vmul.f32 %v3480, %v3089
        %v3489 = vmul.f32 %v3466, %v3095
        %v3490 = vmul.f32 %v3468, %v3095
        %v3491 = vmul.f32 %v3470, %v3095
        %v3492 = vmul.f32 %v3472, %v3095
        %v3493 = vmul.f32 %v3474, %v3095
        %v3494 = vmul.f32 %v3476, %v3095
        %v3495 = vmul.f32 %v3478, %v3095
        %v3496 = vmul.f32 %v3480, %v3095
        %3497 = vrot.lane.b32.xlu0 %v3369, 126
        %v3498 = vpop.permute.xlu0 %3497
        %3499 = vrot.lane.b32.xlu0 %v3370, 126
        %v3500 = vpop.permute.xlu0 %3499
        %3501 = vrot.lane.b32.xlu0 %v3371, 126
        %v3502 = vpop.permute.xlu0 %3501
        %3503 = vrot.lane.b32.xlu0 %v3372, 126
        %v3504 = vpop.permute.xlu0 %3503
        %3505 = vrot.lane.b32.xlu0 %v3373, 126
        %v3506 = vpop.permute.xlu0 %3505
        %3507 = vrot.lane.b32.xlu0 %v3374, 126
        %v3508 = vpop.permute.xlu0 %3507
        %3509 = vrot.lane.b32.xlu0 %v3375, 126
        %v3510 = vpop.permute.xlu0 %3509
        %3511 = vrot.lane.b32.xlu0 %v3376, 126
        %v3512 = vpop.permute.xlu0 %3511
        %v3513 = vmul.f32 %v3498, %v3109
        %v3514 = vmul.f32 %v3500, %v3109
        %v3515 = vmul.f32 %v3502, %v3109
        %v3516 = vmul.f32 %v3504, %v3109
        %v3517 = vmul.f32 %v3506, %v3109
        %v3518 = vmul.f32 %v3508, %v3109
        %v3519 = vmul.f32 %v3510, %v3109
        %v3520 = vmul.f32 %v3512, %v3109
        %3521 = vrot.lane.b32.xlu0 %v3369, 125
        %v3522 = vpop.permute.xlu0 %3521
        %3523 = vrot.lane.b32.xlu0 %v3370, 125
        %v3524 = vpop.permute.xlu0 %3523
        %3525 = vrot.lane.b32.xlu0 %v3371, 125
        %v3526 = vpop.permute.xlu0 %3525
        %3527 = vrot.lane.b32.xlu0 %v3372, 125
        %v3528 = vpop.permute.xlu0 %3527
        %3529 = vrot.lane.b32.xlu0 %v3373, 125
        %v3530 = vpop.permute.xlu0 %3529
        %3531 = vrot.lane.b32.xlu0 %v3374, 125
        %v3532 = vpop.permute.xlu0 %3531
        %3533 = vrot.lane.b32.xlu0 %v3375, 125
        %v3534 = vpop.permute.xlu0 %3533
        %3535 = vrot.lane.b32.xlu0 %v3376, 125
        %v3536 = vpop.permute.xlu0 %3535
        %v3537 = vmul.f32 %v3522, %v3123
        %v3538 = vmul.f32 %v3524, %v3123
        %v3539 = vmul.f32 %v3526, %v3123
        %v3540 = vmul.f32 %v3528, %v3123
        %v3541 = vmul.f32 %v3530, %v3123
        %v3542 = vmul.f32 %v3532, %v3123
        %v3543 = vmul.f32 %v3534, %v3123
        %v3544 = vmul.f32 %v3536, %v3123
        %v3545 = vpack.c.bf16 %v3394, %v3393
        %v3546 = vpack.c.bf16 %v3396, %v3395
        %v3547 = vpack.c.bf16 %v3398, %v3397
        %v3548 = vpack.c.bf16 %v3400, %v3399
        %v3549 = vpack.c.bf16 %v3418, %v3417
        %v3550 = vpack.c.bf16 %v3420, %v3419
        %v3551 = vpack.c.bf16 %v3422, %v3421
        %v3552 = vpack.c.bf16 %v3424, %v3423
        %v3553 = vpack.c.bf16 %v3442, %v3441
        %v3554 = vpack.c.bf16 %v3444, %v3443
        %v3555 = vpack.c.bf16 %v3446, %v3445
        %v3556 = vpack.c.bf16 %v3448, %v3447
        %v3557 = vpack.c.bf16 %v3450, %v3449
        %v3558 = vpack.c.bf16 %v3452, %v3451
        %v3559 = vpack.c.bf16 %v3454, %v3453
        %v3560 = vpack.c.bf16 %v3456, %v3455
        %v3561 = vpack.c.bf16 %v3458, %v3457
        %v3562 = vpack.c.bf16 %v3460, %v3459
        %v3563 = vpack.c.bf16 %v3462, %v3461
        %v3564 = vpack.c.bf16 %v3464, %v3463
        %v3565 = vpack.c.bf16 %v3482, %v3481
        %v3566 = vpack.c.bf16 %v3484, %v3483
        %v3567 = vpack.c.bf16 %v3486, %v3485
        %v3568 = vpack.c.bf16 %v3488, %v3487
        %v3569 = vpack.c.bf16 %v3490, %v3489
        %v3570 = vpack.c.bf16 %v3492, %v3491
        %v3571 = vpack.c.bf16 %v3494, %v3493
        %v3572 = vpack.c.bf16 %v3496, %v3495
        %v3573 = vpack.c.bf16 %v3514, %v3513
        %v3574 = vpack.c.bf16 %v3516, %v3515
        %v3575 = vpack.c.bf16 %v3518, %v3517
        %v3576 = vpack.c.bf16 %v3520, %v3519
        %v3577 = vpack.c.bf16 %v3538, %v3537
        %v3578 = vpack.c.bf16 %v3540, %v3539
        %v3579 = vpack.c.bf16 %v3542, %v3541
        %v3580 = vpack.c.bf16 %v3544, %v3543
        %v3581 = vld [vmem:[%s45] sm:$0xff]
        %v3582 = vld [vmem:[%s45 + $0x8] sm:$0xff]
        %v3583 = vld [vmem:[%s45 + $0x10] sm:$0xf]
        %v3584 = vld [vmem:[%s45 + $0x14] sm:$0xff]
        %v3585 = vld [vmem:[%s45 + $0x1c] sm:$0xff]
        %v3586 = vld [vmem:[%s45 + $0x24] sm:$0xf]
        %v3587 = vld [vmem:[%s45 + $0x28] sm:$0xff]
        %v3588 = vld [vmem:[%s45 + $0x30] sm:$0xff]
        %v3589 = vld [vmem:[%s45 + $0x38] sm:$0xf]
        %v3590 = vld [vmem:[%s45 + $0x3c] sm:$0xff]
        %v3591 = vld [vmem:[%s45 + $0x44] sm:$0xff]
        %v3592 = vld [vmem:[%s45 + $0x4c] sm:$0xf]
        %v3593 = vld [vmem:[%s45 + $0x50] sm:$0xff]
        %v3594 = vld [vmem:[%s45 + $0x58] sm:$0xff]
        %v3595 = vld [vmem:[%s45 + $0x60] sm:$0xf]
        %v3596 = vld [vmem:[%s45 + $0x64] sm:$0xff]
        %v3597 = vld [vmem:[%s45 + $0x6c] sm:$0xff]
        %v3598 = vld [vmem:[%s45 + $0x74] sm:$0xf]
        %v3599 = vld [vmem:[%s45 + $0x78] sm:$0xff]
        %v3600 = vld [vmem:[%s45 + $0x80] sm:$0xff]
        %v3601 = vld [vmem:[%s45 + $0x88] sm:$0xf]
        %v3602 = vld [vmem:[%s45 + $0x8c] sm:$0xff]
        %v3603 = vld [vmem:[%s45 + $0x94] sm:$0xff]
        %v3604 = vld [vmem:[%s45 + $0x9c] sm:$0xf]
        %v3605 = vld [vmem:[%s47] sm:$0xff]
        %v3606 = vld [vmem:[%s47 + $0x8] sm:$0xff]
        %v3607 = vld [vmem:[%s47 + $0x10] sm:$0xff]
        %v3608 = vld [vmem:[%s47 + $0x18] sm:$0xff]
        %v3609 = vld [vmem:[%s47 + $0x20] sm:$0xff]
        %v3610 = vld [vmem:[%s47 + $0x28] sm:$0xff]
        %v3611 = vld [vmem:[%s47 + $0x30] sm:$0xff]
        %v3612 = vld [vmem:[%s47 + $0x38] sm:$0xff]
        %3614 = vset.pattern.permute.xlu0 0
        %3615 = vperm.xlu0 %3614, %v3605
        %v3616 = vpop.permute.xlu0 %3615
        %3619 = vset.pattern.permute.xlu0 0
        %3620 = vperm.xlu0 %3619, %v3606
        %v3621 = vpop.permute.xlu0 %3620
        %3624 = vset.pattern.permute.xlu0 0
        %3625 = vperm.xlu0 %3624, %v3607
        %v3626 = vpop.permute.xlu0 %3625
        %3629 = vset.pattern.permute.xlu0 0
        %3630 = vperm.xlu0 %3629, %v3608
        %v3631 = vpop.permute.xlu0 %3630
        %3634 = vset.pattern.permute.xlu0 0
        %3635 = vperm.xlu0 %3634, %v3609
        %v3636 = vpop.permute.xlu0 %3635
        %3639 = vset.pattern.permute.xlu0 0
        %3640 = vperm.xlu0 %3639, %v3610
        %v3641 = vpop.permute.xlu0 %3640
        %3644 = vset.pattern.permute.xlu0 0
        %3645 = vperm.xlu0 %3644, %v3611
        %v3646 = vpop.permute.xlu0 %3645
        %3649 = vset.pattern.permute.xlu0 0
        %3650 = vperm.xlu0 %3649, %v3612
        %v3651 = vpop.permute.xlu0 %3650
        %v3677 = vunpack.c.l.b16 %v3581
        %v3678 = vunpack.c.h.b16 %v3581
        %v3679 = vunpack.c.l.b16 %v3582
        %v3680 = vunpack.c.h.b16 %v3582
        %v3681 = vunpack.c.l.b16 %v3583
        %v3682 = vunpack.c.l.b16 %v3584
        %v3683 = vunpack.c.h.b16 %v3584
        %v3684 = vunpack.c.l.b16 %v3585
        %v3685 = vunpack.c.h.b16 %v3585
        %v3686 = vunpack.c.l.b16 %v3586
        %v3687 = vunpack.c.l.b16 %v3587
        %v3688 = vunpack.c.h.b16 %v3587
        %v3689 = vunpack.c.l.b16 %v3588
        %v3690 = vunpack.c.h.b16 %v3588
        %v3691 = vunpack.c.l.b16 %v3589
        %v3692 = vunpack.c.l.b16 %v3590
        %v3693 = vunpack.c.h.b16 %v3590
        %v3694 = vunpack.c.l.b16 %v3591
        %v3695 = vunpack.c.h.b16 %v3591
        %v3696 = vunpack.c.l.b16 %v3592
        %v3697 = vunpack.c.l.b16 %v3593
        %v3698 = vunpack.c.h.b16 %v3593
        %v3699 = vunpack.c.l.b16 %v3594
        %v3700 = vunpack.c.h.b16 %v3594
        %v3701 = vunpack.c.l.b16 %v3595
        %v3702 = vunpack.c.l.b16 %v3596
        %v3703 = vunpack.c.h.b16 %v3596
        %v3704 = vunpack.c.l.b16 %v3597
        %v3705 = vunpack.c.h.b16 %v3597
        %v3706 = vunpack.c.l.b16 %v3598
        %v3707 = vunpack.c.l.b16 %v3599
        %v3708 = vunpack.c.h.b16 %v3599
        %v3709 = vunpack.c.l.b16 %v3600
        %v3710 = vunpack.c.h.b16 %v3600
        %v3711 = vunpack.c.l.b16 %v3601
        %v3712 = vunpack.c.l.b16 %v3602
        %v3713 = vunpack.c.h.b16 %v3602
        %v3714 = vunpack.c.l.b16 %v3603
        %v3715 = vunpack.c.h.b16 %v3603
        %v3716 = vunpack.c.l.b16 %v3604
        %v3717 = vpack.c.b16 %v3682, %v3677
        %v3718 = vpack.c.b16 %v3683, %v3678
        %v3719 = vpack.c.b16 %v3684, %v3679
        %v3720 = vpack.c.b16 %v3685, %v3680
        %v3721 = vpack.c.b16 %v3686, %v3681
        %v3722 = vpack.c.b16 %v3692, %v3687
        %v3723 = vpack.c.b16 %v3693, %v3688
        %v3724 = vpack.c.b16 %v3694, %v3689
        %v3725 = vpack.c.b16 %v3695, %v3690
        %v3726 = vpack.c.b16 %v3696, %v3691
        %v3727 = vpack.c.b16 %v3702, %v3697
        %v3728 = vpack.c.b16 %v3703, %v3698
        %v3729 = vpack.c.b16 %v3704, %v3699
        %v3730 = vpack.c.b16 %v3705, %v3700
        %v3731 = vpack.c.b16 %v3706, %v3701
        %v3732 = vpack.c.b16 %v3712, %v3707
        %v3733 = vpack.c.b16 %v3713, %v3708
        %v3734 = vpack.c.b16 %v3714, %v3709
        %v3735 = vpack.c.b16 %v3715, %v3710
        %v3736 = vpack.c.b16 %v3716, %v3711
        %vm3753 = vcmask 523264
        %v3755 = vsel %vm3753, %v3721, 0
        %v3758 = vsel %vm3753, %v3726, 0
        %v3761 = vsel %vm3753, %v3731, 0
        %v3764 = vsel %vm3753, %v3736, 0
        %3766 = vmatpush.bf16.msra.mxu0 %v3552
        %3767 = vmatpush.bf16.msra.mxu0 %v3551
        %3768 = vmatpush.bf16.msra.mxu0 %v3550
        %3769 = vmatpush.bf16.msra.mxu0 %v3549
        %3770 = vmatpush.bf16.msra.mxu0 %v3548
        %3771 = vmatpush.bf16.msra.mxu0 %v3547
        %3772 = vmatpush.bf16.msra.mxu0 %v3546
        %3773 = vmatpush.bf16.msra.mxu0 %v3545
        %3774 = vmatmul.bf16.gmra.mxu0 %v3717
        %v3775 = vpop.f32.mrf.mxu0
        %v3776 = vadd.f32 %v3616, %v3775
        %v3777 = vpop.f32.mrf.mxu0
        %v3778 = vadd.f32 %v3621, %v3777
        %3779 = vmatmul.bf16.gmra.mxu0 %v3722
        %v3780 = vpop.f32.mrf.mxu0
        %v3781 = vadd.f32 %v3626, %v3780
        %v3782 = vpop.f32.mrf.mxu0
        %v3783 = vadd.f32 %v3631, %v3782
        %3784 = vmatmul.bf16.gmra.mxu0 %v3727
        %v3785 = vpop.f32.mrf.mxu0
        %v3786 = vadd.f32 %v3636, %v3785
        %v3787 = vpop.f32.mrf.mxu0
        %v3788 = vadd.f32 %v3641, %v3787
        %3789 = vmatmul.bf16.gmra.mxu0 %v3732
        %v3790 = vpop.f32.mrf.mxu0
        %v3791 = vadd.f32 %v3646, %v3790
        %v3792 = vpop.f32.mrf.mxu0
        %v3793 = vadd.f32 %v3651, %v3792
        %3794 = vdwg.mxu0
        %3795 = vmatpush.bf16.msra.mxu0 %v3560
        %3796 = vmatpush.bf16.msra.mxu0 %v3559
        %3797 = vmatpush.bf16.msra.mxu0 %v3558
        %3798 = vmatpush.bf16.msra.mxu0 %v3557
        %3799 = vmatpush.bf16.msra.mxu0 %v3556
        %3800 = vmatpush.bf16.msra.mxu0 %v3555
        %3801 = vmatpush.bf16.msra.mxu0 %v3554
        %3802 = vmatpush.bf16.msra.mxu0 %v3553
        %3803 = vmatmul.bf16.gmra.mxu0 %v3718
        %v3804 = vpop.f32.mrf.mxu0
        %v3805 = vadd.f32 %v3776, %v3804
        %v3806 = vpop.f32.mrf.mxu0
        %v3807 = vadd.f32 %v3778, %v3806
        %3808 = vmatmul.bf16.gmra.mxu0 %v3723
        %v3809 = vpop.f32.mrf.mxu0
        %v3810 = vadd.f32 %v3781, %v3809
        %v3811 = vpop.f32.mrf.mxu0
        %v3812 = vadd.f32 %v3783, %v3811
        %3813 = vmatmul.bf16.gmra.mxu0 %v3728
        %v3814 = vpop.f32.mrf.mxu0
        %v3815 = vadd.f32 %v3786, %v3814
        %v3816 = vpop.f32.mrf.mxu0
        %v3817 = vadd.f32 %v3788, %v3816
        %3818 = vmatmul.bf16.gmra.mxu0 %v3733
        %v3819 = vpop.f32.mrf.mxu0
        %v3820 = vadd.f32 %v3791, %v3819
        %v3821 = vpop.f32.mrf.mxu0
        %v3822 = vadd.f32 %v3793, %v3821
        %3823 = vdwg.mxu0
        %3824 = vmatpush.bf16.msra.mxu0 %v3568
        %3825 = vmatpush.bf16.msra.mxu0 %v3567
        %3826 = vmatpush.bf16.msra.mxu0 %v3566
        %3827 = vmatpush.bf16.msra.mxu0 %v3565
        %3828 = vmatpush.bf16.msra.mxu0 %v3564
        %3829 = vmatpush.bf16.msra.mxu0 %v3563
        %3830 = vmatpush.bf16.msra.mxu0 %v3562
        %3831 = vmatpush.bf16.msra.mxu0 %v3561
        %3832 = vmatmul.bf16.gmra.mxu0 %v3719
        %v3833 = vpop.f32.mrf.mxu0
        %v3834 = vadd.f32 %v3805, %v3833
        %v3835 = vpop.f32.mrf.mxu0
        %v3836 = vadd.f32 %v3807, %v3835
        %3837 = vmatmul.bf16.gmra.mxu0 %v3724
        %v3838 = vpop.f32.mrf.mxu0
        %v3839 = vadd.f32 %v3810, %v3838
        %v3840 = vpop.f32.mrf.mxu0
        %v3841 = vadd.f32 %v3812, %v3840
        %3842 = vmatmul.bf16.gmra.mxu0 %v3729
        %v3843 = vpop.f32.mrf.mxu0
        %v3844 = vadd.f32 %v3815, %v3843
        %v3845 = vpop.f32.mrf.mxu0
        %v3846 = vadd.f32 %v3817, %v3845
        %3847 = vmatmul.bf16.gmra.mxu0 %v3734
        %v3848 = vpop.f32.mrf.mxu0
        %v3849 = vadd.f32 %v3820, %v3848
        %v3850 = vpop.f32.mrf.mxu0
        %v3851 = vadd.f32 %v3822, %v3850
        %3852 = vdwg.mxu0
        %3853 = vmatpush.bf16.msra.mxu0 %v3576
        %3854 = vmatpush.bf16.msra.mxu0 %v3575
        %3855 = vmatpush.bf16.msra.mxu0 %v3574
        %3856 = vmatpush.bf16.msra.mxu0 %v3573
        %3857 = vmatpush.bf16.msra.mxu0 %v3572
        %3858 = vmatpush.bf16.msra.mxu0 %v3571
        %3859 = vmatpush.bf16.msra.mxu0 %v3570
        %3860 = vmatpush.bf16.msra.mxu0 %v3569
        %3861 = vmatmul.bf16.gmra.mxu0 %v3720
        %v3862 = vpop.f32.mrf.mxu0
        %v3863 = vadd.f32 %v3834, %v3862
        %v3864 = vpop.f32.mrf.mxu0
        %v3865 = vadd.f32 %v3836, %v3864
        %3866 = vmatmul.bf16.gmra.mxu0 %v3725
        %v3867 = vpop.f32.mrf.mxu0
        %v3868 = vadd.f32 %v3839, %v3867
        %v3869 = vpop.f32.mrf.mxu0
        %v3870 = vadd.f32 %v3841, %v3869
        %3871 = vmatmul.bf16.gmra.mxu0 %v3730
        %v3872 = vpop.f32.mrf.mxu0
        %v3873 = vadd.f32 %v3844, %v3872
        %v3874 = vpop.f32.mrf.mxu0
        %v3875 = vadd.f32 %v3846, %v3874
        %3876 = vmatmul.bf16.gmra.mxu0 %v3735
        %v3877 = vpop.f32.mrf.mxu0
        %v3878 = vadd.f32 %v3849, %v3877
        %v3879 = vpop.f32.mrf.mxu0
        %v3880 = vadd.f32 %v3851, %v3879
        %3881 = vdwg.mxu0
        %3882 = vmatpush.bf16.msra.mxu0 0
        %3883 = vmatpush.bf16.msra.mxu0 0
        %3884 = vmatpush.bf16.msra.mxu0 0
        %3885 = vmatpush.bf16.msra.mxu0 0
        %3886 = vmatpush.bf16.msra.mxu0 %v3580
        %3887 = vmatpush.bf16.msra.mxu0 %v3579
        %3888 = vmatpush.bf16.msra.mxu0 %v3578
        %3889 = vmatpush.bf16.msra.mxu0 %v3577
        %3890 = vmatmul.bf16.gmra.mxu0 %v3755
        %v3891 = vpop.f32.mrf.mxu0
        %v3892 = vadd.f32 %v3863, %v3891
        %v3893 = vpop.f32.mrf.mxu0
        %v3894 = vadd.f32 %v3865, %v3893
        %3895 = vmatmul.bf16.gmra.mxu0 %v3758
        %v3896 = vpop.f32.mrf.mxu0
        %v3897 = vadd.f32 %v3868, %v3896
        %v3898 = vpop.f32.mrf.mxu0
        %v3899 = vadd.f32 %v3870, %v3898
        %3900 = vmatmul.bf16.gmra.mxu0 %v3761
        %v3901 = vpop.f32.mrf.mxu0
        %v3902 = vadd.f32 %v3873, %v3901
        %v3903 = vpop.f32.mrf.mxu0
        %v3904 = vadd.f32 %v3875, %v3903
        %3905 = vmatmul.bf16.gmra.mxu0 %v3764
        %v3906 = vpop.f32.mrf.mxu0
        %v3907 = vadd.f32 %v3878, %v3906
        %v3908 = vpop.f32.mrf.mxu0
        %v3909 = vadd.f32 %v3880, %v3908
        %3910 = vdwg.mxu0
        %v3911 = vmax.f32 %v3892, 0.0
        %v3912 = vmax.f32 %v3894, 0.0
        %v3913 = vmax.f32 %v3897, 0.0
        %v3914 = vmax.f32 %v3899, 0.0
        %v3915 = vmax.f32 %v3902, 0.0
        %v3916 = vmax.f32 %v3904, 0.0
        %v3917 = vmax.f32 %v3907, 0.0
        %v3918 = vmax.f32 %v3909, 0.0
        %v3919 = vpack.c.bf16 %v3912, %v3911
        %v3920 = vpack.c.bf16 %v3914, %v3913
        %v3921 = vpack.c.bf16 %v3916, %v3915
        %v3922 = vpack.c.bf16 %v3918, %v3917
        %v3923 = vld [vmem:[%s49] sm:$0xf]
        %v3924 = vld [vmem:[%s49 + $0x4] sm:$0xf]
        %v3925 = vld [vmem:[%s49 + $0x8] sm:$0xf]
        %v3926 = vld [vmem:[%s49 + $0xc] sm:$0xf]
        %v3927 = vld [vmem:[%s49 + $0x10] sm:$0xf]
        %v3928 = vld [vmem:[%s49 + $0x14] sm:$0xf]
        %v3929 = vld [vmem:[%s49 + $0x18] sm:$0xf]
        %v3930 = vld [vmem:[%s49 + $0x1c] sm:$0xf]
        %v3931 = vld [vmem:[%s49 + $0x20] sm:$0xf]
        %v3932 = vld [vmem:[%s49 + $0x24] sm:$0xf]
        %v3933 = vld [vmem:[%s49 + $0x28] sm:$0xf]
        %v3934 = vld [vmem:[%s49 + $0x2c] sm:$0xf]
        %v3935 = vld [vmem:[%s49 + $0x30] sm:$0xf]
        %v3936 = vld [vmem:[%s49 + $0x34] sm:$0xf]
        %v3937 = vld [vmem:[%s49 + $0x38] sm:$0xf]
        %v3938 = vld [vmem:[%s49 + $0x3c] sm:$0xf]
        %v3955 = vunpack.c.l.b16 %v3923
        %v3956 = vunpack.c.l.b16 %v3924
        %v3957 = vunpack.c.l.b16 %v3925
        %v3958 = vunpack.c.l.b16 %v3926
        %v3959 = vunpack.c.l.b16 %v3927
        %v3960 = vunpack.c.l.b16 %v3928
        %v3961 = vunpack.c.l.b16 %v3929
        %v3962 = vunpack.c.l.b16 %v3930
        %v3963 = vunpack.c.l.b16 %v3931
        %v3964 = vunpack.c.l.b16 %v3932
        %v3965 = vunpack.c.l.b16 %v3933
        %v3966 = vunpack.c.l.b16 %v3934
        %v3967 = vunpack.c.l.b16 %v3935
        %v3968 = vunpack.c.l.b16 %v3936
        %v3969 = vunpack.c.l.b16 %v3937
        %v3970 = vunpack.c.l.b16 %v3938
        %v3971 = vpack.c.b16 %v3956, %v3955
        %v3972 = vpack.c.b16 %v3958, %v3957
        %v3973 = vpack.c.b16 %v3960, %v3959
        %v3974 = vpack.c.b16 %v3962, %v3961
        %v3975 = vpack.c.b16 %v3964, %v3963
        %v3976 = vpack.c.b16 %v3966, %v3965
        %v3977 = vpack.c.b16 %v3968, %v3967
        %v3978 = vpack.c.b16 %v3970, %v3969
        %3987 = vmatpush.bf16.msra.mxu0 %v3978
        %3988 = vmatpush.bf16.msra.mxu0 %v3977
        %3989 = vmatpush.bf16.msra.mxu0 %v3976
        %3990 = vmatpush.bf16.msra.mxu0 %v3975
        %3991 = vmatpush.bf16.msra.mxu0 %v3974
        %3992 = vmatpush.bf16.msra.mxu0 %v3973
        %3993 = vmatpush.bf16.msra.mxu0 %v3972
        %3994 = vmatpush.bf16.msra.mxu0 %v3971
        %3995 = vmatmul.bf16.gmra.mxu0 %v3919
        %v3996 = vpop.f32.mrf.mxu0
        %v3997 = vadd.f32 0.0, %v3996
        %v3998 = vpop.f32.mrf.mxu0
        %v3999 = vadd.f32 0.0, %v3998
        %4000 = vmatmul.bf16.gmra.mxu0 %v3920
        %v4001 = vpop.f32.mrf.mxu0
        %v4002 = vadd.f32 0.0, %v4001
        %v4003 = vpop.f32.mrf.mxu0
        %v4004 = vadd.f32 0.0, %v4003
        %4005 = vmatmul.bf16.gmra.mxu0 %v3921
        %v4006 = vpop.f32.mrf.mxu0
        %v4007 = vadd.f32 0.0, %v4006
        %v4008 = vpop.f32.mrf.mxu0
        %v4009 = vadd.f32 0.0, %v4008
        %4010 = vmatmul.bf16.gmra.mxu0 %v3922
        %v4011 = vpop.f32.mrf.mxu0
        %v4012 = vadd.f32 0.0, %v4011
        %v4013 = vpop.f32.mrf.mxu0
        %v4014 = vadd.f32 0.0, %v4013
        %4015 = vdwg.mxu0
        %4016 = vrot.lane.b32.xlu0 %v3997, 5
        %v4017 = vpop.permute.xlu0 %4016
        %4018 = vrot.lane.b32.xlu0 %v3999, 5
        %v4019 = vpop.permute.xlu0 %4018
        %4020 = vrot.lane.b32.xlu0 %v4002, 5
        %v4021 = vpop.permute.xlu0 %4020
        %4022 = vrot.lane.b32.xlu0 %v4004, 5
        %v4023 = vpop.permute.xlu0 %4022
        %4024 = vrot.lane.b32.xlu0 %v4007, 5
        %v4025 = vpop.permute.xlu0 %4024
        %4026 = vrot.lane.b32.xlu0 %v4009, 5
        %v4027 = vpop.permute.xlu0 %4026
        %4028 = vrot.lane.b32.xlu0 %v4012, 5
        %v4029 = vpop.permute.xlu0 %4028
        %4030 = vrot.lane.b32.xlu0 %v4014, 5
        %v4031 = vpop.permute.xlu0 %4030
        %v4032 = vmul.f32 %v4017, %v2503
        %v4033 = vmul.f32 %v4019, %v2503
        %v4034 = vmul.f32 %v4021, %v2503
        %v4035 = vmul.f32 %v4023, %v2503
        %v4036 = vmul.f32 %v4025, %v2503
        %v4037 = vmul.f32 %v4027, %v2503
        %v4038 = vmul.f32 %v4029, %v2503
        %v4039 = vmul.f32 %v4031, %v2503
        %4040 = vrot.lane.b32.xlu0 %v3997, 4
        %v4041 = vpop.permute.xlu0 %4040
        %4042 = vrot.lane.b32.xlu0 %v3999, 4
        %v4043 = vpop.permute.xlu0 %4042
        %4044 = vrot.lane.b32.xlu0 %v4002, 4
        %v4045 = vpop.permute.xlu0 %4044
        %4046 = vrot.lane.b32.xlu0 %v4004, 4
        %v4047 = vpop.permute.xlu0 %4046
        %4048 = vrot.lane.b32.xlu0 %v4007, 4
        %v4049 = vpop.permute.xlu0 %4048
        %4050 = vrot.lane.b32.xlu0 %v4009, 4
        %v4051 = vpop.permute.xlu0 %4050
        %4052 = vrot.lane.b32.xlu0 %v4012, 4
        %v4053 = vpop.permute.xlu0 %4052
        %4054 = vrot.lane.b32.xlu0 %v4014, 4
        %v4055 = vpop.permute.xlu0 %4054
        %v4056 = vmul.f32 %v4041, %v2511
        %v4057 = vmul.f32 %v4043, %v2511
        %v4058 = vmul.f32 %v4045, %v2511
        %v4059 = vmul.f32 %v4047, %v2511
        %v4060 = vmul.f32 %v4049, %v2511
        %v4061 = vmul.f32 %v4051, %v2511
        %v4062 = vmul.f32 %v4053, %v2511
        %v4063 = vmul.f32 %v4055, %v2511
        %4064 = vrot.lane.b32.xlu0 %v3997, 3
        %v4065 = vpop.permute.xlu0 %4064
        %4066 = vrot.lane.b32.xlu0 %v3999, 3
        %v4067 = vpop.permute.xlu0 %4066
        %4068 = vrot.lane.b32.xlu0 %v4002, 3
        %v4069 = vpop.permute.xlu0 %4068
        %4070 = vrot.lane.b32.xlu0 %v4004, 3
        %v4071 = vpop.permute.xlu0 %4070
        %4072 = vrot.lane.b32.xlu0 %v4007, 3
        %v4073 = vpop.permute.xlu0 %4072
        %4074 = vrot.lane.b32.xlu0 %v4009, 3
        %v4075 = vpop.permute.xlu0 %4074
        %4076 = vrot.lane.b32.xlu0 %v4012, 3
        %v4077 = vpop.permute.xlu0 %4076
        %4078 = vrot.lane.b32.xlu0 %v4014, 3
        %v4079 = vpop.permute.xlu0 %4078
        %v4080 = vmul.f32 %v4065, %v2519
        %v4081 = vmul.f32 %v4067, %v2519
        %v4082 = vmul.f32 %v4069, %v2519
        %v4083 = vmul.f32 %v4071, %v2519
        %v4084 = vmul.f32 %v4073, %v2519
        %v4085 = vmul.f32 %v4075, %v2519
        %v4086 = vmul.f32 %v4077, %v2519
        %v4087 = vmul.f32 %v4079, %v2519
        %4088 = vrot.lane.b32.xlu0 %v3997, 1
        %v4089 = vpop.permute.xlu0 %4088
        %4090 = vrot.lane.b32.xlu0 %v3999, 1
        %v4091 = vpop.permute.xlu0 %4090
        %4092 = vrot.lane.b32.xlu0 %v4002, 1
        %v4093 = vpop.permute.xlu0 %4092
        %4094 = vrot.lane.b32.xlu0 %v4004, 1
        %v4095 = vpop.permute.xlu0 %4094
        %4096 = vrot.lane.b32.xlu0 %v4007, 1
        %v4097 = vpop.permute.xlu0 %4096
        %4098 = vrot.lane.b32.xlu0 %v4009, 1
        %v4099 = vpop.permute.xlu0 %4098
        %4100 = vrot.lane.b32.xlu0 %v4012, 1
        %v4101 = vpop.permute.xlu0 %4100
        %4102 = vrot.lane.b32.xlu0 %v4014, 1
        %v4103 = vpop.permute.xlu0 %4102
        %v4104 = vmul.f32 %v4089, %v2527
        %v4105 = vmul.f32 %v4091, %v2527
        %v4106 = vmul.f32 %v4093, %v2527
        %v4107 = vmul.f32 %v4095, %v2527
        %v4108 = vmul.f32 %v4097, %v2527
        %v4109 = vmul.f32 %v4099, %v2527
        %v4110 = vmul.f32 %v4101, %v2527
        %v4111 = vmul.f32 %v4103, %v2527
        %v4112 = vmul.f32 %v3997, %v2531
        %v4113 = vmul.f32 %v3999, %v2531
        %v4114 = vmul.f32 %v4002, %v2531
        %v4115 = vmul.f32 %v4004, %v2531
        %v4116 = vmul.f32 %v4007, %v2531
        %v4117 = vmul.f32 %v4009, %v2531
        %v4118 = vmul.f32 %v4012, %v2531
        %v4119 = vmul.f32 %v4014, %v2531
        %4120 = vrot.lane.b32.xlu0 %v3997, 127
        %v4121 = vpop.permute.xlu0 %4120
        %4122 = vrot.lane.b32.xlu0 %v3999, 127
        %v4123 = vpop.permute.xlu0 %4122
        %4124 = vrot.lane.b32.xlu0 %v4002, 127
        %v4125 = vpop.permute.xlu0 %4124
        %4126 = vrot.lane.b32.xlu0 %v4004, 127
        %v4127 = vpop.permute.xlu0 %4126
        %4128 = vrot.lane.b32.xlu0 %v4007, 127
        %v4129 = vpop.permute.xlu0 %4128
        %4130 = vrot.lane.b32.xlu0 %v4009, 127
        %v4131 = vpop.permute.xlu0 %4130
        %4132 = vrot.lane.b32.xlu0 %v4012, 127
        %v4133 = vpop.permute.xlu0 %4132
        %4134 = vrot.lane.b32.xlu0 %v4014, 127
        %v4135 = vpop.permute.xlu0 %4134
        %v4136 = vmul.f32 %v4121, %v2539
        %v4137 = vmul.f32 %v4123, %v2539
        %v4138 = vmul.f32 %v4125, %v2539
        %v4139 = vmul.f32 %v4127, %v2539
        %v4140 = vmul.f32 %v4129, %v2539
        %v4141 = vmul.f32 %v4131, %v2539
        %v4142 = vmul.f32 %v4133, %v2539
        %v4143 = vmul.f32 %v4135, %v2539
        %4144 = vrot.lane.b32.xlu0 %v3997, 125
        %v4145 = vpop.permute.xlu0 %4144
        %4146 = vrot.lane.b32.xlu0 %v3999, 125
        %v4147 = vpop.permute.xlu0 %4146
        %4148 = vrot.lane.b32.xlu0 %v4002, 125
        %v4149 = vpop.permute.xlu0 %4148
        %4150 = vrot.lane.b32.xlu0 %v4004, 125
        %v4151 = vpop.permute.xlu0 %4150
        %4152 = vrot.lane.b32.xlu0 %v4007, 125
        %v4153 = vpop.permute.xlu0 %4152
        %4154 = vrot.lane.b32.xlu0 %v4009, 125
        %v4155 = vpop.permute.xlu0 %4154
        %4156 = vrot.lane.b32.xlu0 %v4012, 125
        %v4157 = vpop.permute.xlu0 %4156
        %4158 = vrot.lane.b32.xlu0 %v4014, 125
        %v4159 = vpop.permute.xlu0 %4158
        %v4160 = vmul.f32 %v4145, %v2547
        %v4161 = vmul.f32 %v4147, %v2547
        %v4162 = vmul.f32 %v4149, %v2547
        %v4163 = vmul.f32 %v4151, %v2547
        %v4164 = vmul.f32 %v4153, %v2547
        %v4165 = vmul.f32 %v4155, %v2547
        %v4166 = vmul.f32 %v4157, %v2547
        %v4167 = vmul.f32 %v4159, %v2547
        %4168 = vrot.lane.b32.xlu0 %v3997, 124
        %v4169 = vpop.permute.xlu0 %4168
        %4170 = vrot.lane.b32.xlu0 %v3999, 124
        %v4171 = vpop.permute.xlu0 %4170
        %4172 = vrot.lane.b32.xlu0 %v4002, 124
        %v4173 = vpop.permute.xlu0 %4172
        %4174 = vrot.lane.b32.xlu0 %v4004, 124
        %v4175 = vpop.permute.xlu0 %4174
        %4176 = vrot.lane.b32.xlu0 %v4007, 124
        %v4177 = vpop.permute.xlu0 %4176
        %4178 = vrot.lane.b32.xlu0 %v4009, 124
        %v4179 = vpop.permute.xlu0 %4178
        %4180 = vrot.lane.b32.xlu0 %v4012, 124
        %v4181 = vpop.permute.xlu0 %4180
        %4182 = vrot.lane.b32.xlu0 %v4014, 124
        %v4183 = vpop.permute.xlu0 %4182
        %v4184 = vmul.f32 %v4169, %v2555
        %v4185 = vmul.f32 %v4171, %v2555
        %v4186 = vmul.f32 %v4173, %v2555
        %v4187 = vmul.f32 %v4175, %v2555
        %v4188 = vmul.f32 %v4177, %v2555
        %v4189 = vmul.f32 %v4179, %v2555
        %v4190 = vmul.f32 %v4181, %v2555
        %v4191 = vmul.f32 %v4183, %v2555
        %4192 = vrot.lane.b32.xlu0 %v3997, 123
        %v4193 = vpop.permute.xlu0 %4192
        %4194 = vrot.lane.b32.xlu0 %v3999, 123
        %v4195 = vpop.permute.xlu0 %4194
        %4196 = vrot.lane.b32.xlu0 %v4002, 123
        %v4197 = vpop.permute.xlu0 %4196
        %4198 = vrot.lane.b32.xlu0 %v4004, 123
        %v4199 = vpop.permute.xlu0 %4198
        %4200 = vrot.lane.b32.xlu0 %v4007, 123
        %v4201 = vpop.permute.xlu0 %4200
        %4202 = vrot.lane.b32.xlu0 %v4009, 123
        %v4203 = vpop.permute.xlu0 %4202
        %4204 = vrot.lane.b32.xlu0 %v4012, 123
        %v4205 = vpop.permute.xlu0 %4204
        %4206 = vrot.lane.b32.xlu0 %v4014, 123
        %v4207 = vpop.permute.xlu0 %4206
        %v4208 = vmul.f32 %v4193, %v2563
        %v4209 = vmul.f32 %v4195, %v2563
        %v4210 = vmul.f32 %v4197, %v2563
        %v4211 = vmul.f32 %v4199, %v2563
        %v4212 = vmul.f32 %v4201, %v2563
        %v4213 = vmul.f32 %v4203, %v2563
        %v4214 = vmul.f32 %v4205, %v2563
        %v4215 = vmul.f32 %v4207, %v2563
        %v4216 = vpack.c.bf16 %v4033, %v4032
        %v4217 = vpack.c.bf16 %v4035, %v4034
        %v4218 = vpack.c.bf16 %v4037, %v4036
        %v4219 = vpack.c.bf16 %v4039, %v4038
        %v4220 = vpack.c.bf16 %v4057, %v4056
        %v4221 = vpack.c.bf16 %v4059, %v4058
        %v4222 = vpack.c.bf16 %v4061, %v4060
        %v4223 = vpack.c.bf16 %v4063, %v4062
        %v4224 = vpack.c.bf16 %v4081, %v4080
        %v4225 = vpack.c.bf16 %v4083, %v4082
        %v4226 = vpack.c.bf16 %v4085, %v4084
        %v4227 = vpack.c.bf16 %v4087, %v4086
        %v4228 = vpack.c.bf16 %v4105, %v4104
        %v4229 = vpack.c.bf16 %v4107, %v4106
        %v4230 = vpack.c.bf16 %v4109, %v4108
        %v4231 = vpack.c.bf16 %v4111, %v4110
        %v4232 = vpack.c.bf16 %v4113, %v4112
        %v4233 = vpack.c.bf16 %v4115, %v4114
        %v4234 = vpack.c.bf16 %v4117, %v4116
        %v4235 = vpack.c.bf16 %v4119, %v4118
        %v4236 = vpack.c.bf16 %v4137, %v4136
        %v4237 = vpack.c.bf16 %v4139, %v4138
        %v4238 = vpack.c.bf16 %v4141, %v4140
        %v4239 = vpack.c.bf16 %v4143, %v4142
        %v4240 = vpack.c.bf16 %v4161, %v4160
        %v4241 = vpack.c.bf16 %v4163, %v4162
        %v4242 = vpack.c.bf16 %v4165, %v4164
        %v4243 = vpack.c.bf16 %v4167, %v4166
        %v4244 = vpack.c.bf16 %v4185, %v4184
        %v4245 = vpack.c.bf16 %v4187, %v4186
        %v4246 = vpack.c.bf16 %v4189, %v4188
        %v4247 = vpack.c.bf16 %v4191, %v4190
        %v4248 = vpack.c.bf16 %v4209, %v4208
        %v4249 = vpack.c.bf16 %v4211, %v4210
        %v4250 = vpack.c.bf16 %v4213, %v4212
        %v4251 = vpack.c.bf16 %v4215, %v4214
        %v4252 = vld [vmem:[#allocation15] sm:$0xff]
        %v4253 = vld [vmem:[#allocation15 + $0x8] sm:$0xff]
        %v4254 = vld [vmem:[#allocation15 + $0x10] sm:$0xf]
        %v4255 = vld [vmem:[#allocation15 + $0x14] sm:$0xff]
        %v4256 = vld [vmem:[#allocation15 + $0x1c] sm:$0xff]
        %v4257 = vld [vmem:[#allocation15 + $0x24] sm:$0xf]
        %v4258 = vld [vmem:[#allocation15 + $0x28] sm:$0xff]
        %v4259 = vld [vmem:[#allocation15 + $0x30] sm:$0xff]
        %v4260 = vld [vmem:[#allocation15 + $0x38] sm:$0xf]
        %v4261 = vld [vmem:[#allocation15 + $0x3c] sm:$0xff]
        %v4262 = vld [vmem:[#allocation15 + $0x44] sm:$0xff]
        %v4263 = vld [vmem:[#allocation15 + $0x4c] sm:$0xf]
        %v4264 = vld [vmem:[#allocation15 + $0x50] sm:$0xff]
        %v4265 = vld [vmem:[#allocation15 + $0x58] sm:$0xff]
        %v4266 = vld [vmem:[#allocation15 + $0x60] sm:$0xf]
        %v4267 = vld [vmem:[#allocation15 + $0x64] sm:$0xff]
        %v4268 = vld [vmem:[#allocation15 + $0x6c] sm:$0xff]
        %v4269 = vld [vmem:[#allocation15 + $0x74] sm:$0xf]
        %v4270 = vld [vmem:[#allocation15 + $0x78] sm:$0xff]
        %v4271 = vld [vmem:[#allocation15 + $0x80] sm:$0xff]
        %v4272 = vld [vmem:[#allocation15 + $0x88] sm:$0xf]
        %v4273 = vld [vmem:[#allocation15 + $0x8c] sm:$0xff]
        %v4274 = vld [vmem:[#allocation15 + $0x94] sm:$0xff]
        %v4275 = vld [vmem:[#allocation15 + $0x9c] sm:$0xf]
        %v4276 = vld [vmem:[%s53] sm:$0xff]
        %v4277 = vld [vmem:[%s53 + $0x8] sm:$0xff]
        %v4278 = vld [vmem:[%s53 + $0x10] sm:$0xff]
        %v4279 = vld [vmem:[%s53 + $0x18] sm:$0xff]
        %v4280 = vld [vmem:[%s53 + $0x20] sm:$0xff]
        %v4281 = vld [vmem:[%s53 + $0x28] sm:$0xff]
        %v4282 = vld [vmem:[%s53 + $0x30] sm:$0xff]
        %v4283 = vld [vmem:[%s53 + $0x38] sm:$0xff]
        %4285 = vset.pattern.permute.xlu0 0
        %4286 = vperm.xlu0 %4285, %v4276
        %v4287 = vpop.permute.xlu0 %4286
        %4290 = vset.pattern.permute.xlu0 0
        %4291 = vperm.xlu0 %4290, %v4277
        %v4292 = vpop.permute.xlu0 %4291
        %4295 = vset.pattern.permute.xlu0 0
        %4296 = vperm.xlu0 %4295, %v4278
        %v4297 = vpop.permute.xlu0 %4296
        %4300 = vset.pattern.permute.xlu0 0
        %4301 = vperm.xlu0 %4300, %v4279
        %v4302 = vpop.permute.xlu0 %4301
        %4305 = vset.pattern.permute.xlu0 0
        %4306 = vperm.xlu0 %4305, %v4280
        %v4307 = vpop.permute.xlu0 %4306
        %4310 = vset.pattern.permute.xlu0 0
        %4311 = vperm.xlu0 %4310, %v4281
        %v4312 = vpop.permute.xlu0 %4311
        %4315 = vset.pattern.permute.xlu0 0
        %4316 = vperm.xlu0 %4315, %v4282
        %v4317 = vpop.permute.xlu0 %4316
        %4320 = vset.pattern.permute.xlu0 0
        %4321 = vperm.xlu0 %4320, %v4283
        %v4322 = vpop.permute.xlu0 %4321
        %v4348 = vunpack.c.l.b16 %v4252
        %v4349 = vunpack.c.h.b16 %v4252
        %v4350 = vunpack.c.l.b16 %v4253
        %v4351 = vunpack.c.h.b16 %v4253
        %v4352 = vunpack.c.l.b16 %v4254
        %v4353 = vunpack.c.l.b16 %v4255
        %v4354 = vunpack.c.h.b16 %v4255
        %v4355 = vunpack.c.l.b16 %v4256
        %v4356 = vunpack.c.h.b16 %v4256
        %v4357 = vunpack.c.l.b16 %v4257
        %v4358 = vunpack.c.l.b16 %v4258
        %v4359 = vunpack.c.h.b16 %v4258
        %v4360 = vunpack.c.l.b16 %v4259
        %v4361 = vunpack.c.h.b16 %v4259
        %v4362 = vunpack.c.l.b16 %v4260
        %v4363 = vunpack.c.l.b16 %v4261
        %v4364 = vunpack.c.h.b16 %v4261
        %v4365 = vunpack.c.l.b16 %v4262
        %v4366 = vunpack.c.h.b16 %v4262
        %v4367 = vunpack.c.l.b16 %v4263
        %v4368 = vunpack.c.l.b16 %v4264
        %v4369 = vunpack.c.h.b16 %v4264
        %v4370 = vunpack.c.l.b16 %v4265
        %v4371 = vunpack.c.h.b16 %v4265
        %v4372 = vunpack.c.l.b16 %v4266
        %v4373 = vunpack.c.l.b16 %v4267
        %v4374 = vunpack.c.h.b16 %v4267
        %v4375 = vunpack.c.l.b16 %v4268
        %v4376 = vunpack.c.h.b16 %v4268
        %v4377 = vunpack.c.l.b16 %v4269
        %v4378 = vunpack.c.l.b16 %v4270
        %v4379 = vunpack.c.h.b16 %v4270
        %v4380 = vunpack.c.l.b16 %v4271
        %v4381 = vunpack.c.h.b16 %v4271
        %v4382 = vunpack.c.l.b16 %v4272
        %v4383 = vunpack.c.l.b16 %v4273
        %v4384 = vunpack.c.h.b16 %v4273
        %v4385 = vunpack.c.l.b16 %v4274
        %v4386 = vunpack.c.h.b16 %v4274
        %v4387 = vunpack.c.l.b16 %v4275
        %v4388 = vpack.c.b16 %v4353, %v4348
        %v4389 = vpack.c.b16 %v4354, %v4349
        %v4390 = vpack.c.b16 %v4355, %v4350
        %v4391 = vpack.c.b16 %v4356, %v4351
        %v4392 = vpack.c.b16 %v4357, %v4352
        %v4393 = vpack.c.b16 %v4363, %v4358
        %v4394 = vpack.c.b16 %v4364, %v4359
        %v4395 = vpack.c.b16 %v4365, %v4360
        %v4396 = vpack.c.b16 %v4366, %v4361
        %v4397 = vpack.c.b16 %v4367, %v4362
        %v4398 = vpack.c.b16 %v4373, %v4368
        %v4399 = vpack.c.b16 %v4374, %v4369
        %v4400 = vpack.c.b16 %v4375, %v4370
        %v4401 = vpack.c.b16 %v4376, %v4371
        %v4402 = vpack.c.b16 %v4377, %v4372
        %v4403 = vpack.c.b16 %v4383, %v4378
        %v4404 = vpack.c.b16 %v4384, %v4379
        %v4405 = vpack.c.b16 %v4385, %v4380
        %v4406 = vpack.c.b16 %v4386, %v4381
        %v4407 = vpack.c.b16 %v4387, %v4382
        %v4425 = vsel %vm3753, %v4392, 0
        %v4428 = vsel %vm3753, %v4397, 0
        %v4431 = vsel %vm3753, %v4402, 0
        %v4434 = vsel %vm3753, %v4407, 0
        %4436 = vmatpush.bf16.msra.mxu0 %v4223
        %4437 = vmatpush.bf16.msra.mxu0 %v4222
        %4438 = vmatpush.bf16.msra.mxu0 %v4221
        %4439 = vmatpush.bf16.msra.mxu0 %v4220
        %4440 = vmatpush.bf16.msra.mxu0 %v4219
        %4441 = vmatpush.bf16.msra.mxu0 %v4218
        %4442 = vmatpush.bf16.msra.mxu0 %v4217
        %4443 = vmatpush.bf16.msra.mxu0 %v4216
        %4444 = vmatmul.bf16.gmra.mxu0 %v4388
        %v4445 = vpop.f32.mrf.mxu0
        %v4446 = vadd.f32 %v4287, %v4445
        %v4447 = vpop.f32.mrf.mxu0
        %v4448 = vadd.f32 %v4292, %v4447
        %4449 = vmatmul.bf16.gmra.mxu0 %v4393
        %v4450 = vpop.f32.mrf.mxu0
        %v4451 = vadd.f32 %v4297, %v4450
        %v4452 = vpop.f32.mrf.mxu0
        %v4453 = vadd.f32 %v4302, %v4452
        %4454 = vmatmul.bf16.gmra.mxu0 %v4398
        %v4455 = vpop.f32.mrf.mxu0
        %v4456 = vadd.f32 %v4307, %v4455
        %v4457 = vpop.f32.mrf.mxu0
        %v4458 = vadd.f32 %v4312, %v4457
        %4459 = vmatmul.bf16.gmra.mxu0 %v4403
        %v4460 = vpop.f32.mrf.mxu0
        %v4461 = vadd.f32 %v4317, %v4460
        %v4462 = vpop.f32.mrf.mxu0
        %v4463 = vadd.f32 %v4322, %v4462
        %4464 = vdwg.mxu0
        %4465 = vmatpush.bf16.msra.mxu0 %v4231
        %4466 = vmatpush.bf16.msra.mxu0 %v4230
        %4467 = vmatpush.bf16.msra.mxu0 %v4229
        %4468 = vmatpush.bf16.msra.mxu0 %v4228
        %4469 = vmatpush.bf16.msra.mxu0 %v4227
        %4470 = vmatpush.bf16.msra.mxu0 %v4226
        %4471 = vmatpush.bf16.msra.mxu0 %v4225
        %4472 = vmatpush.bf16.msra.mxu0 %v4224
        %4473 = vmatmul.bf16.gmra.mxu0 %v4389
        %v4474 = vpop.f32.mrf.mxu0
        %v4475 = vadd.f32 %v4446, %v4474
        %v4476 = vpop.f32.mrf.mxu0
        %v4477 = vadd.f32 %v4448, %v4476
        %4478 = vmatmul.bf16.gmra.mxu0 %v4394
        %v4479 = vpop.f32.mrf.mxu0
        %v4480 = vadd.f32 %v4451, %v4479
        %v4481 = vpop.f32.mrf.mxu0
        %v4482 = vadd.f32 %v4453, %v4481
        %4483 = vmatmul.bf16.gmra.mxu0 %v4399
        %v4484 = vpop.f32.mrf.mxu0
        %v4485 = vadd.f32 %v4456, %v4484
        %v4486 = vpop.f32.mrf.mxu0
        %v4487 = vadd.f32 %v4458, %v4486
        %4488 = vmatmul.bf16.gmra.mxu0 %v4404
        %v4489 = vpop.f32.mrf.mxu0
        %v4490 = vadd.f32 %v4461, %v4489
        %v4491 = vpop.f32.mrf.mxu0
        %v4492 = vadd.f32 %v4463, %v4491
        %4493 = vdwg.mxu0
        %4494 = vmatpush.bf16.msra.mxu0 %v4239
        %4495 = vmatpush.bf16.msra.mxu0 %v4238
        %4496 = vmatpush.bf16.msra.mxu0 %v4237
        %4497 = vmatpush.bf16.msra.mxu0 %v4236
        %4498 = vmatpush.bf16.msra.mxu0 %v4235
        %4499 = vmatpush.bf16.msra.mxu0 %v4234
        %4500 = vmatpush.bf16.msra.mxu0 %v4233
        %4501 = vmatpush.bf16.msra.mxu0 %v4232
        %4502 = vmatmul.bf16.gmra.mxu0 %v4390
        %v4503 = vpop.f32.mrf.mxu0
        %v4504 = vadd.f32 %v4475, %v4503
        %v4505 = vpop.f32.mrf.mxu0
        %v4506 = vadd.f32 %v4477, %v4505
        %4507 = vmatmul.bf16.gmra.mxu0 %v4395
        %v4508 = vpop.f32.mrf.mxu0
        %v4509 = vadd.f32 %v4480, %v4508
        %v4510 = vpop.f32.mrf.mxu0
        %v4511 = vadd.f32 %v4482, %v4510
        %4512 = vmatmul.bf16.gmra.mxu0 %v4400
        %v4513 = vpop.f32.mrf.mxu0
        %v4514 = vadd.f32 %v4485, %v4513
        %v4515 = vpop.f32.mrf.mxu0
        %v4516 = vadd.f32 %v4487, %v4515
        %4517 = vmatmul.bf16.gmra.mxu0 %v4405
        %v4518 = vpop.f32.mrf.mxu0
        %v4519 = vadd.f32 %v4490, %v4518
        %v4520 = vpop.f32.mrf.mxu0
        %v4521 = vadd.f32 %v4492, %v4520
        %4522 = vdwg.mxu0
        %4523 = vmatpush.bf16.msra.mxu0 %v4247
        %4524 = vmatpush.bf16.msra.mxu0 %v4246
        %4525 = vmatpush.bf16.msra.mxu0 %v4245
        %4526 = vmatpush.bf16.msra.mxu0 %v4244
        %4527 = vmatpush.bf16.msra.mxu0 %v4243
        %4528 = vmatpush.bf16.msra.mxu0 %v4242
        %4529 = vmatpush.bf16.msra.mxu0 %v4241
        %4530 = vmatpush.bf16.msra.mxu0 %v4240
        %4531 = vmatmul.bf16.gmra.mxu0 %v4391
        %v4532 = vpop.f32.mrf.mxu0
        %v4533 = vadd.f32 %v4504, %v4532
        %v4534 = vpop.f32.mrf.mxu0
        %v4535 = vadd.f32 %v4506, %v4534
        %4536 = vmatmul.bf16.gmra.mxu0 %v4396
        %v4537 = vpop.f32.mrf.mxu0
        %v4538 = vadd.f32 %v4509, %v4537
        %v4539 = vpop.f32.mrf.mxu0
        %v4540 = vadd.f32 %v4511, %v4539
        %4541 = vmatmul.bf16.gmra.mxu0 %v4401
        %v4542 = vpop.f32.mrf.mxu0
        %v4543 = vadd.f32 %v4514, %v4542
        %v4544 = vpop.f32.mrf.mxu0
        %v4545 = vadd.f32 %v4516, %v4544
        %4546 = vmatmul.bf16.gmra.mxu0 %v4406
        %v4547 = vpop.f32.mrf.mxu0
        %v4548 = vadd.f32 %v4519, %v4547
        %v4549 = vpop.f32.mrf.mxu0
        %v4550 = vadd.f32 %v4521, %v4549
        %4551 = vdwg.mxu0
        %4552 = vmatpush.bf16.msra.mxu0 0
        %4553 = vmatpush.bf16.msra.mxu0 0
        %4554 = vmatpush.bf16.msra.mxu0 0
        %4555 = vmatpush.bf16.msra.mxu0 0
        %4556 = vmatpush.bf16.msra.mxu0 %v4251
        %4557 = vmatpush.bf16.msra.mxu0 %v4250
        %4558 = vmatpush.bf16.msra.mxu0 %v4249
        %4559 = vmatpush.bf16.msra.mxu0 %v4248
        %4560 = vmatmul.bf16.gmra.mxu0 %v4425
        %v4561 = vpop.f32.mrf.mxu0
        %v4562 = vadd.f32 %v4533, %v4561
        %v4563 = vpop.f32.mrf.mxu0
        %v4564 = vadd.f32 %v4535, %v4563
        %4565 = vmatmul.bf16.gmra.mxu0 %v4428
        %v4566 = vpop.f32.mrf.mxu0
        %v4567 = vadd.f32 %v4538, %v4566
        %v4568 = vpop.f32.mrf.mxu0
        %v4569 = vadd.f32 %v4540, %v4568
        %4570 = vmatmul.bf16.gmra.mxu0 %v4431
        %v4571 = vpop.f32.mrf.mxu0
        %v4572 = vadd.f32 %v4543, %v4571
        %v4573 = vpop.f32.mrf.mxu0
        %v4574 = vadd.f32 %v4545, %v4573
        %4575 = vmatmul.bf16.gmra.mxu0 %v4434
        %v4576 = vpop.f32.mrf.mxu0
        %v4577 = vadd.f32 %v4548, %v4576
        %v4578 = vpop.f32.mrf.mxu0
        %v4579 = vadd.f32 %v4550, %v4578
        %4580 = vdwg.mxu0
        %4581 = vrot.lane.b32.xlu0 %v4562, 5
        %v4582 = vpop.permute.xlu0 %4581
        %4583 = vrot.lane.b32.xlu0 %v4564, 5
        %v4584 = vpop.permute.xlu0 %4583
        %4585 = vrot.lane.b32.xlu0 %v4567, 5
        %v4586 = vpop.permute.xlu0 %4585
        %4587 = vrot.lane.b32.xlu0 %v4569, 5
        %v4588 = vpop.permute.xlu0 %4587
        %4589 = vrot.lane.b32.xlu0 %v4572, 5
        %v4590 = vpop.permute.xlu0 %4589
        %4591 = vrot.lane.b32.xlu0 %v4574, 5
        %v4592 = vpop.permute.xlu0 %4591
        %4593 = vrot.lane.b32.xlu0 %v4577, 5
        %v4594 = vpop.permute.xlu0 %4593
        %4595 = vrot.lane.b32.xlu0 %v4579, 5
        %v4596 = vpop.permute.xlu0 %4595
        %v4597 = vmul.f32 %v4582, %v2503
        %v4598 = vmul.f32 %v4584, %v2503
        %v4599 = vmul.f32 %v4586, %v2503
        %v4600 = vmul.f32 %v4588, %v2503
        %v4601 = vmul.f32 %v4590, %v2503
        %v4602 = vmul.f32 %v4592, %v2503
        %v4603 = vmul.f32 %v4594, %v2503
        %v4604 = vmul.f32 %v4596, %v2503
        %4605 = vrot.lane.b32.xlu0 %v4562, 4
        %v4606 = vpop.permute.xlu0 %4605
        %4607 = vrot.lane.b32.xlu0 %v4564, 4
        %v4608 = vpop.permute.xlu0 %4607
        %4609 = vrot.lane.b32.xlu0 %v4567, 4
        %v4610 = vpop.permute.xlu0 %4609
        %4611 = vrot.lane.b32.xlu0 %v4569, 4
        %v4612 = vpop.permute.xlu0 %4611
        %4613 = vrot.lane.b32.xlu0 %v4572, 4
        %v4614 = vpop.permute.xlu0 %4613
        %4615 = vrot.lane.b32.xlu0 %v4574, 4
        %v4616 = vpop.permute.xlu0 %4615
        %4617 = vrot.lane.b32.xlu0 %v4577, 4
        %v4618 = vpop.permute.xlu0 %4617
        %4619 = vrot.lane.b32.xlu0 %v4579, 4
        %v4620 = vpop.permute.xlu0 %4619
        %v4621 = vmul.f32 %v4606, %v2511
        %v4622 = vmul.f32 %v4608, %v2511
        %v4623 = vmul.f32 %v4610, %v2511
        %v4624 = vmul.f32 %v4612, %v2511
        %v4625 = vmul.f32 %v4614, %v2511
        %v4626 = vmul.f32 %v4616, %v2511
        %v4627 = vmul.f32 %v4618, %v2511
        %v4628 = vmul.f32 %v4620, %v2511
        %4629 = vrot.lane.b32.xlu0 %v4562, 3
        %v4630 = vpop.permute.xlu0 %4629
        %4631 = vrot.lane.b32.xlu0 %v4564, 3
        %v4632 = vpop.permute.xlu0 %4631
        %4633 = vrot.lane.b32.xlu0 %v4567, 3
        %v4634 = vpop.permute.xlu0 %4633
        %4635 = vrot.lane.b32.xlu0 %v4569, 3
        %v4636 = vpop.permute.xlu0 %4635
        %4637 = vrot.lane.b32.xlu0 %v4572, 3
        %v4638 = vpop.permute.xlu0 %4637
        %4639 = vrot.lane.b32.xlu0 %v4574, 3
        %v4640 = vpop.permute.xlu0 %4639
        %4641 = vrot.lane.b32.xlu0 %v4577, 3
        %v4642 = vpop.permute.xlu0 %4641
        %4643 = vrot.lane.b32.xlu0 %v4579, 3
        %v4644 = vpop.permute.xlu0 %4643
        %v4645 = vmul.f32 %v4630, %v2519
        %v4646 = vmul.f32 %v4632, %v2519
        %v4647 = vmul.f32 %v4634, %v2519
        %v4648 = vmul.f32 %v4636, %v2519
        %v4649 = vmul.f32 %v4638, %v2519
        %v4650 = vmul.f32 %v4640, %v2519
        %v4651 = vmul.f32 %v4642, %v2519
        %v4652 = vmul.f32 %v4644, %v2519
        %4653 = vrot.lane.b32.xlu0 %v4562, 1
        %v4654 = vpop.permute.xlu0 %4653
        %4655 = vrot.lane.b32.xlu0 %v4564, 1
        %v4656 = vpop.permute.xlu0 %4655
        %4657 = vrot.lane.b32.xlu0 %v4567, 1
        %v4658 = vpop.permute.xlu0 %4657
        %4659 = vrot.lane.b32.xlu0 %v4569, 1
        %v4660 = vpop.permute.xlu0 %4659
        %4661 = vrot.lane.b32.xlu0 %v4572, 1
        %v4662 = vpop.permute.xlu0 %4661
        %4663 = vrot.lane.b32.xlu0 %v4574, 1
        %v4664 = vpop.permute.xlu0 %4663
        %4665 = vrot.lane.b32.xlu0 %v4577, 1
        %v4666 = vpop.permute.xlu0 %4665
        %4667 = vrot.lane.b32.xlu0 %v4579, 1
        %v4668 = vpop.permute.xlu0 %4667
        %v4669 = vmul.f32 %v4654, %v2527
        %v4670 = vmul.f32 %v4656, %v2527
        %v4671 = vmul.f32 %v4658, %v2527
        %v4672 = vmul.f32 %v4660, %v2527
        %v4673 = vmul.f32 %v4662, %v2527
        %v4674 = vmul.f32 %v4664, %v2527
        %v4675 = vmul.f32 %v4666, %v2527
        %v4676 = vmul.f32 %v4668, %v2527
        %v4677 = vmul.f32 %v4562, %v2531
        %v4678 = vmul.f32 %v4564, %v2531
        %v4679 = vmul.f32 %v4567, %v2531
        %v4680 = vmul.f32 %v4569, %v2531
        %v4681 = vmul.f32 %v4572, %v2531
        %v4682 = vmul.f32 %v4574, %v2531
        %v4683 = vmul.f32 %v4577, %v2531
        %v4684 = vmul.f32 %v4579, %v2531
        %4685 = vrot.lane.b32.xlu0 %v4562, 127
        %v4686 = vpop.permute.xlu0 %4685
        %4687 = vrot.lane.b32.xlu0 %v4564, 127
        %v4688 = vpop.permute.xlu0 %4687
        %4689 = vrot.lane.b32.xlu0 %v4567, 127
        %v4690 = vpop.permute.xlu0 %4689
        %4691 = vrot.lane.b32.xlu0 %v4569, 127
        %v4692 = vpop.permute.xlu0 %4691
        %4693 = vrot.lane.b32.xlu0 %v4572, 127
        %v4694 = vpop.permute.xlu0 %4693
        %4695 = vrot.lane.b32.xlu0 %v4574, 127
        %v4696 = vpop.permute.xlu0 %4695
        %4697 = vrot.lane.b32.xlu0 %v4577, 127
        %v4698 = vpop.permute.xlu0 %4697
        %4699 = vrot.lane.b32.xlu0 %v4579, 127
        %v4700 = vpop.permute.xlu0 %4699
        %v4701 = vmul.f32 %v4686, %v2539
        %v4702 = vmul.f32 %v4688, %v2539
        %v4703 = vmul.f32 %v4690, %v2539
        %v4704 = vmul.f32 %v4692, %v2539
        %v4705 = vmul.f32 %v4694, %v2539
        %v4706 = vmul.f32 %v4696, %v2539
        %v4707 = vmul.f32 %v4698, %v2539
        %v4708 = vmul.f32 %v4700, %v2539
        %4709 = vrot.lane.b32.xlu0 %v4562, 125
        %v4710 = vpop.permute.xlu0 %4709
        %4711 = vrot.lane.b32.xlu0 %v4564, 125
        %v4712 = vpop.permute.xlu0 %4711
        %4713 = vrot.lane.b32.xlu0 %v4567, 125
        %v4714 = vpop.permute.xlu0 %4713
        %4715 = vrot.lane.b32.xlu0 %v4569, 125
        %v4716 = vpop.permute.xlu0 %4715
        %4717 = vrot.lane.b32.xlu0 %v4572, 125
        %v4718 = vpop.permute.xlu0 %4717
        %4719 = vrot.lane.b32.xlu0 %v4574, 125
        %v4720 = vpop.permute.xlu0 %4719
        %4721 = vrot.lane.b32.xlu0 %v4577, 125
        %v4722 = vpop.permute.xlu0 %4721
        %4723 = vrot.lane.b32.xlu0 %v4579, 125
        %v4724 = vpop.permute.xlu0 %4723
        %v4725 = vmul.f32 %v4710, %v2547
        %v4726 = vmul.f32 %v4712, %v2547
        %v4727 = vmul.f32 %v4714, %v2547
        %v4728 = vmul.f32 %v4716, %v2547
        %v4729 = vmul.f32 %v4718, %v2547
        %v4730 = vmul.f32 %v4720, %v2547
        %v4731 = vmul.f32 %v4722, %v2547
        %v4732 = vmul.f32 %v4724, %v2547
        %4733 = vrot.lane.b32.xlu0 %v4562, 124
        %v4734 = vpop.permute.xlu0 %4733
        %4735 = vrot.lane.b32.xlu0 %v4564, 124
        %v4736 = vpop.permute.xlu0 %4735
        %4737 = vrot.lane.b32.xlu0 %v4567, 124
        %v4738 = vpop.permute.xlu0 %4737
        %4739 = vrot.lane.b32.xlu0 %v4569, 124
        %v4740 = vpop.permute.xlu0 %4739
        %4741 = vrot.lane.b32.xlu0 %v4572, 124
        %v4742 = vpop.permute.xlu0 %4741
        %4743 = vrot.lane.b32.xlu0 %v4574, 124
        %v4744 = vpop.permute.xlu0 %4743
        %4745 = vrot.lane.b32.xlu0 %v4577, 124
        %v4746 = vpop.permute.xlu0 %4745
        %4747 = vrot.lane.b32.xlu0 %v4579, 124
        %v4748 = vpop.permute.xlu0 %4747
        %v4749 = vmul.f32 %v4734, %v2555
        %v4750 = vmul.f32 %v4736, %v2555
        %v4751 = vmul.f32 %v4738, %v2555
        %v4752 = vmul.f32 %v4740, %v2555
        %v4753 = vmul.f32 %v4742, %v2555
        %v4754 = vmul.f32 %v4744, %v2555
        %v4755 = vmul.f32 %v4746, %v2555
        %v4756 = vmul.f32 %v4748, %v2555
        %4757 = vrot.lane.b32.xlu0 %v4562, 123
        %v4758 = vpop.permute.xlu0 %4757
        %4759 = vrot.lane.b32.xlu0 %v4564, 123
        %v4760 = vpop.permute.xlu0 %4759
        %4761 = vrot.lane.b32.xlu0 %v4567, 123
        %v4762 = vpop.permute.xlu0 %4761
        %4763 = vrot.lane.b32.xlu0 %v4569, 123
        %v4764 = vpop.permute.xlu0 %4763
        %4765 = vrot.lane.b32.xlu0 %v4572, 123
        %v4766 = vpop.permute.xlu0 %4765
        %4767 = vrot.lane.b32.xlu0 %v4574, 123
        %v4768 = vpop.permute.xlu0 %4767
        %4769 = vrot.lane.b32.xlu0 %v4577, 123
        %v4770 = vpop.permute.xlu0 %4769
        %4771 = vrot.lane.b32.xlu0 %v4579, 123
        %v4772 = vpop.permute.xlu0 %4771
        %v4773 = vmul.f32 %v4758, %v2563
        %v4774 = vmul.f32 %v4760, %v2563
        %v4775 = vmul.f32 %v4762, %v2563
        %v4776 = vmul.f32 %v4764, %v2563
        %v4777 = vmul.f32 %v4766, %v2563
        %v4778 = vmul.f32 %v4768, %v2563
        %v4779 = vmul.f32 %v4770, %v2563
        %v4780 = vmul.f32 %v4772, %v2563
        %v4781 = vpack.c.bf16 %v4598, %v4597
        %v4782 = vpack.c.bf16 %v4600, %v4599
        %v4783 = vpack.c.bf16 %v4602, %v4601
        %v4784 = vpack.c.bf16 %v4604, %v4603
        %v4785 = vpack.c.bf16 %v4622, %v4621
        %v4786 = vpack.c.bf16 %v4624, %v4623
        %v4787 = vpack.c.bf16 %v4626, %v4625
        %v4788 = vpack.c.bf16 %v4628, %v4627
        %v4789 = vpack.c.bf16 %v4646, %v4645
        %v4790 = vpack.c.bf16 %v4648, %v4647
        %v4791 = vpack.c.bf16 %v4650, %v4649
        %v4792 = vpack.c.bf16 %v4652, %v4651
        %v4793 = vpack.c.bf16 %v4670, %v4669
        %v4794 = vpack.c.bf16 %v4672, %v4671
        %v4795 = vpack.c.bf16 %v4674, %v4673
        %v4796 = vpack.c.bf16 %v4676, %v4675
        %v4797 = vpack.c.bf16 %v4678, %v4677
        %v4798 = vpack.c.bf16 %v4680, %v4679
        %v4799 = vpack.c.bf16 %v4682, %v4681
        %v4800 = vpack.c.bf16 %v4684, %v4683
        %v4801 = vpack.c.bf16 %v4702, %v4701
        %v4802 = vpack.c.bf16 %v4704, %v4703
        %v4803 = vpack.c.bf16 %v4706, %v4705
        %v4804 = vpack.c.bf16 %v4708, %v4707
        %v4805 = vpack.c.bf16 %v4726, %v4725
        %v4806 = vpack.c.bf16 %v4728, %v4727
        %v4807 = vpack.c.bf16 %v4730, %v4729
        %v4808 = vpack.c.bf16 %v4732, %v4731
        %v4809 = vpack.c.bf16 %v4750, %v4749
        %v4810 = vpack.c.bf16 %v4752, %v4751
        %v4811 = vpack.c.bf16 %v4754, %v4753
        %v4812 = vpack.c.bf16 %v4756, %v4755
        %v4813 = vpack.c.bf16 %v4774, %v4773
        %v4814 = vpack.c.bf16 %v4776, %v4775
        %v4815 = vpack.c.bf16 %v4778, %v4777
        %v4816 = vpack.c.bf16 %v4780, %v4779
        %v4817 = vld [vmem:[#allocation16] sm:$0xff]
        %v4818 = vld [vmem:[#allocation16 + $0x8] sm:$0xff]
        %v4819 = vld [vmem:[#allocation16 + $0x10] sm:$0xf]
        %v4820 = vld [vmem:[#allocation16 + $0x14] sm:$0xff]
        %v4821 = vld [vmem:[#allocation16 + $0x1c] sm:$0xff]
        %v4822 = vld [vmem:[#allocation16 + $0x24] sm:$0xf]
        %v4823 = vld [vmem:[#allocation16 + $0x28] sm:$0xff]
        %v4824 = vld [vmem:[#allocation16 + $0x30] sm:$0xff]
        %v4825 = vld [vmem:[#allocation16 + $0x38] sm:$0xf]
        %v4826 = vld [vmem:[#allocation16 + $0x3c] sm:$0xff]
        %v4827 = vld [vmem:[#allocation16 + $0x44] sm:$0xff]
        %v4828 = vld [vmem:[#allocation16 + $0x4c] sm:$0xf]
        %v4829 = vld [vmem:[%s57] sm:$0xff]
        %v4830 = vld [vmem:[%s57 + $0x8] sm:$0xff]
        %v4831 = vld [vmem:[%s57 + $0x10] sm:$0xff]
        %v4832 = vld [vmem:[%s57 + $0x18] sm:$0xff]
        %4834 = vset.pattern.permute.xlu0 0
        %4835 = vperm.xlu0 %4834, %v4829
        %v4836 = vpop.permute.xlu0 %4835
        %4839 = vset.pattern.permute.xlu0 0
        %4840 = vperm.xlu0 %4839, %v4830
        %v4841 = vpop.permute.xlu0 %4840
        %4844 = vset.pattern.permute.xlu0 0
        %4845 = vperm.xlu0 %4844, %v4831
        %v4846 = vpop.permute.xlu0 %4845
        %4849 = vset.pattern.permute.xlu0 0
        %4850 = vperm.xlu0 %4849, %v4832
        %v4851 = vpop.permute.xlu0 %4850
        %v4865 = vunpack.c.l.b16 %v4817
        %v4866 = vunpack.c.h.b16 %v4817
        %v4867 = vunpack.c.l.b16 %v4818
        %v4868 = vunpack.c.h.b16 %v4818
        %v4869 = vunpack.c.l.b16 %v4819
        %v4870 = vunpack.c.l.b16 %v4820
        %v4871 = vunpack.c.h.b16 %v4820
        %v4872 = vunpack.c.l.b16 %v4821
        %v4873 = vunpack.c.h.b16 %v4821
        %v4874 = vunpack.c.l.b16 %v4822
        %v4875 = vunpack.c.l.b16 %v4823
        %v4876 = vunpack.c.h.b16 %v4823
        %v4877 = vunpack.c.l.b16 %v4824
        %v4878 = vunpack.c.h.b16 %v4824
        %v4879 = vunpack.c.l.b16 %v4825
        %v4880 = vunpack.c.l.b16 %v4826
        %v4881 = vunpack.c.h.b16 %v4826
        %v4882 = vunpack.c.l.b16 %v4827
        %v4883 = vunpack.c.h.b16 %v4827
        %v4884 = vunpack.c.l.b16 %v4828
        %v4885 = vpack.c.b16 %v4870, %v4865
        %v4886 = vpack.c.b16 %v4871, %v4866
        %v4887 = vpack.c.b16 %v4872, %v4867
        %v4888 = vpack.c.b16 %v4873, %v4868
        %v4889 = vpack.c.b16 %v4874, %v4869
        %v4890 = vpack.c.b16 %v4880, %v4875
        %v4891 = vpack.c.b16 %v4881, %v4876
        %v4892 = vpack.c.b16 %v4882, %v4877
        %v4893 = vpack.c.b16 %v4883, %v4878
        %v4894 = vpack.c.b16 %v4884, %v4879
        %v4904 = vsel %vm3753, %v4889, 0
        %v4907 = vsel %vm3753, %v4894, 0
        %4909 = vmatpush.bf16.msra.mxu0 %v4788
        %4910 = vmatpush.bf16.msra.mxu0 %v4787
        %4911 = vmatpush.bf16.msra.mxu0 %v4786
        %4912 = vmatpush.bf16.msra.mxu0 %v4785
        %4913 = vmatpush.bf16.msra.mxu0 %v4784
        %4914 = vmatpush.bf16.msra.mxu0 %v4783
        %4915 = vmatpush.bf16.msra.mxu0 %v4782
        %4916 = vmatpush.bf16.msra.mxu0 %v4781
        %4917 = vmatmul.bf16.gmra.mxu0 %v4885
        %v4918 = vpop.f32.mrf.mxu0
        %v4919 = vadd.f32 %v4836, %v4918
        %v4920 = vpop.f32.mrf.mxu0
        %v4921 = vadd.f32 %v4841, %v4920
        %4922 = vmatmul.bf16.gmra.mxu0 %v4890
        %v4923 = vpop.f32.mrf.mxu0
        %v4924 = vadd.f32 %v4846, %v4923
        %v4925 = vpop.f32.mrf.mxu0
        %v4926 = vadd.f32 %v4851, %v4925
        %4927 = vdwg.mxu0
        %4928 = vmatpush.bf16.msra.mxu0 %v4796
        %4929 = vmatpush.bf16.msra.mxu0 %v4795
        %4930 = vmatpush.bf16.msra.mxu0 %v4794
        %4931 = vmatpush.bf16.msra.mxu0 %v4793
        %4932 = vmatpush.bf16.msra.mxu0 %v4792
        %4933 = vmatpush.bf16.msra.mxu0 %v4791
        %4934 = vmatpush.bf16.msra.mxu0 %v4790
        %4935 = vmatpush.bf16.msra.mxu0 %v4789
        %4936 = vmatmul.bf16.gmra.mxu0 %v4886
        %v4937 = vpop.f32.mrf.mxu0
        %v4938 = vadd.f32 %v4919, %v4937
        %v4939 = vpop.f32.mrf.mxu0
        %v4940 = vadd.f32 %v4921, %v4939
        %4941 = vmatmul.bf16.gmra.mxu0 %v4891
        %v4942 = vpop.f32.mrf.mxu0
        %v4943 = vadd.f32 %v4924, %v4942
        %v4944 = vpop.f32.mrf.mxu0
        %v4945 = vadd.f32 %v4926, %v4944
        %4946 = vdwg.mxu0
        %4947 = vmatpush.bf16.msra.mxu0 %v4804
        %4948 = vmatpush.bf16.msra.mxu0 %v4803
        %4949 = vmatpush.bf16.msra.mxu0 %v4802
        %4950 = vmatpush.bf16.msra.mxu0 %v4801
        %4951 = vmatpush.bf16.msra.mxu0 %v4800
        %4952 = vmatpush.bf16.msra.mxu0 %v4799
        %4953 = vmatpush.bf16.msra.mxu0 %v4798
        %4954 = vmatpush.bf16.msra.mxu0 %v4797
        %4955 = vmatmul.bf16.gmra.mxu0 %v4887
        %v4956 = vpop.f32.mrf.mxu0
        %v4957 = vadd.f32 %v4938, %v4956
        %v4958 = vpop.f32.mrf.mxu0
        %v4959 = vadd.f32 %v4940, %v4958
        %4960 = vmatmul.bf16.gmra.mxu0 %v4892
        %v4961 = vpop.f32.mrf.mxu0
        %v4962 = vadd.f32 %v4943, %v4961
        %v4963 = vpop.f32.mrf.mxu0
        %v4964 = vadd.f32 %v4945, %v4963
        %4965 = vdwg.mxu0
        %4966 = vmatpush.bf16.msra.mxu0 %v4812
        %4967 = vmatpush.bf16.msra.mxu0 %v4811
        %4968 = vmatpush.bf16.msra.mxu0 %v4810
        %4969 = vmatpush.bf16.msra.mxu0 %v4809
        %4970 = vmatpush.bf16.msra.mxu0 %v4808
        %4971 = vmatpush.bf16.msra.mxu0 %v4807
        %4972 = vmatpush.bf16.msra.mxu0 %v4806
        %4973 = vmatpush.bf16.msra.mxu0 %v4805
        %4974 = vmatmul.bf16.gmra.mxu0 %v4888
        %v4975 = vpop.f32.mrf.mxu0
        %v4976 = vadd.f32 %v4957, %v4975
        %v4977 = vpop.f32.mrf.mxu0
        %v4978 = vadd.f32 %v4959, %v4977
        %4979 = vmatmul.bf16.gmra.mxu0 %v4893
        %v4980 = vpop.f32.mrf.mxu0
        %v4981 = vadd.f32 %v4962, %v4980
        %v4982 = vpop.f32.mrf.mxu0
        %v4983 = vadd.f32 %v4964, %v4982
        %4984 = vdwg.mxu0
        %4985 = vmatpush.bf16.msra.mxu0 0
        %4986 = vmatpush.bf16.msra.mxu0 0
        %4987 = vmatpush.bf16.msra.mxu0 0
        %4988 = vmatpush.bf16.msra.mxu0 0
        %4989 = vmatpush.bf16.msra.mxu0 %v4816
        %4990 = vmatpush.bf16.msra.mxu0 %v4815
        %4991 = vmatpush.bf16.msra.mxu0 %v4814
        %4992 = vmatpush.bf16.msra.mxu0 %v4813
        %4993 = vmatmul.bf16.gmra.mxu0 %v4904
        %v4994 = vpop.f32.mrf.mxu0
        %v4995 = vadd.f32 %v4976, %v4994
        %v4996 = vpop.f32.mrf.mxu0
        %v4997 = vadd.f32 %v4978, %v4996
        %4998 = vmatmul.bf16.gmra.mxu0 %v4907
        %v4999 = vpop.f32.mrf.mxu0
        %v5000 = vadd.f32 %v4981, %v4999
        %v5001 = vpop.f32.mrf.mxu0
        %v5002 = vadd.f32 %v4983, %v5001
        %5003 = vdwg.mxu0
        %v5004 = vmax.f32 %v4995, 0.0
        %v5005 = vmax.f32 %v4997, 0.0
        %v5006 = vmax.f32 %v5000, 0.0
        %v5007 = vmax.f32 %v5002, 0.0
        %5008 = vrot.lane.b32.xlu0 %v5004, 5
        %v5009 = vpop.permute.xlu0 %5008
        %5010 = vrot.lane.b32.xlu0 %v5005, 5
        %v5011 = vpop.permute.xlu0 %5010
        %5012 = vrot.lane.b32.xlu0 %v5006, 5
        %v5013 = vpop.permute.xlu0 %5012
        %5014 = vrot.lane.b32.xlu0 %v5007, 5
        %v5015 = vpop.permute.xlu0 %5014
        %v5016 = vmul.f32 %v5009, %v2503
        %v5017 = vmul.f32 %v5011, %v2503
        %v5018 = vmul.f32 %v5013, %v2503
        %v5019 = vmul.f32 %v5015, %v2503
        %5020 = vrot.lane.b32.xlu0 %v5004, 4
        %v5021 = vpop.permute.xlu0 %5020
        %5022 = vrot.lane.b32.xlu0 %v5005, 4
        %v5023 = vpop.permute.xlu0 %5022
        %5024 = vrot.lane.b32.xlu0 %v5006, 4
        %v5025 = vpop.permute.xlu0 %5024
        %5026 = vrot.lane.b32.xlu0 %v5007, 4
        %v5027 = vpop.permute.xlu0 %5026
        %v5028 = vmul.f32 %v5021, %v2511
        %v5029 = vmul.f32 %v5023, %v2511
        %v5030 = vmul.f32 %v5025, %v2511
        %v5031 = vmul.f32 %v5027, %v2511
        %5032 = vrot.lane.b32.xlu0 %v5004, 3
        %v5033 = vpop.permute.xlu0 %5032
        %5034 = vrot.lane.b32.xlu0 %v5005, 3
        %v5035 = vpop.permute.xlu0 %5034
        %5036 = vrot.lane.b32.xlu0 %v5006, 3
        %v5037 = vpop.permute.xlu0 %5036
        %5038 = vrot.lane.b32.xlu0 %v5007, 3
        %v5039 = vpop.permute.xlu0 %5038
        %v5040 = vmul.f32 %v5033, %v2519
        %v5041 = vmul.f32 %v5035, %v2519
        %v5042 = vmul.f32 %v5037, %v2519
        %v5043 = vmul.f32 %v5039, %v2519
        %5044 = vrot.lane.b32.xlu0 %v5004, 1
        %v5045 = vpop.permute.xlu0 %5044
        %5046 = vrot.lane.b32.xlu0 %v5005, 1
        %v5047 = vpop.permute.xlu0 %5046
        %5048 = vrot.lane.b32.xlu0 %v5006, 1
        %v5049 = vpop.permute.xlu0 %5048
        %5050 = vrot.lane.b32.xlu0 %v5007, 1
        %v5051 = vpop.permute.xlu0 %5050
        %v5052 = vmul.f32 %v5045, %v2527
        %v5053 = vmul.f32 %v5047, %v2527
        %v5054 = vmul.f32 %v5049, %v2527
        %v5055 = vmul.f32 %v5051, %v2527
        %v5056 = vmul.f32 %v5004, %v2531
        %v5057 = vmul.f32 %v5005, %v2531
        %v5058 = vmul.f32 %v5006, %v2531
        %v5059 = vmul.f32 %v5007, %v2531
        %5060 = vrot.lane.b32.xlu0 %v5004, 127
        %v5061 = vpop.permute.xlu0 %5060
        %5062 = vrot.lane.b32.xlu0 %v5005, 127
        %v5063 = vpop.permute.xlu0 %5062
        %5064 = vrot.lane.b32.xlu0 %v5006, 127
        %v5065 = vpop.permute.xlu0 %5064
        %5066 = vrot.lane.b32.xlu0 %v5007, 127
        %v5067 = vpop.permute.xlu0 %5066
        %v5068 = vmul.f32 %v5061, %v2539
        %v5069 = vmul.f32 %v5063, %v2539
        %v5070 = vmul.f32 %v5065, %v2539
        %v5071 = vmul.f32 %v5067, %v2539
        %5072 = vrot.lane.b32.xlu0 %v5004, 125
        %v5073 = vpop.permute.xlu0 %5072
        %5074 = vrot.lane.b32.xlu0 %v5005, 125
        %v5075 = vpop.permute.xlu0 %5074
        %5076 = vrot.lane.b32.xlu0 %v5006, 125
        %v5077 = vpop.permute.xlu0 %5076
        %5078 = vrot.lane.b32.xlu0 %v5007, 125
        %v5079 = vpop.permute.xlu0 %5078
        %v5080 = vmul.f32 %v5073, %v2547
        %v5081 = vmul.f32 %v5075, %v2547
        %v5082 = vmul.f32 %v5077, %v2547
        %v5083 = vmul.f32 %v5079, %v2547
        %5084 = vrot.lane.b32.xlu0 %v5004, 124
        %v5085 = vpop.permute.xlu0 %5084
        %5086 = vrot.lane.b32.xlu0 %v5005, 124
        %v5087 = vpop.permute.xlu0 %5086
        %5088 = vrot.lane.b32.xlu0 %v5006, 124
        %v5089 = vpop.permute.xlu0 %5088
        %5090 = vrot.lane.b32.xlu0 %v5007, 124
        %v5091 = vpop.permute.xlu0 %5090
        %v5092 = vmul.f32 %v5085, %v2555
        %v5093 = vmul.f32 %v5087, %v2555
        %v5094 = vmul.f32 %v5089, %v2555
        %v5095 = vmul.f32 %v5091, %v2555
        %5096 = vrot.lane.b32.xlu0 %v5004, 123
        %v5097 = vpop.permute.xlu0 %5096
        %5098 = vrot.lane.b32.xlu0 %v5005, 123
        %v5099 = vpop.permute.xlu0 %5098
        %5100 = vrot.lane.b32.xlu0 %v5006, 123
        %v5101 = vpop.permute.xlu0 %5100
        %5102 = vrot.lane.b32.xlu0 %v5007, 123
        %v5103 = vpop.permute.xlu0 %5102
        %v5104 = vmul.f32 %v5097, %v2563
        %v5105 = vmul.f32 %v5099, %v2563
        %v5106 = vmul.f32 %v5101, %v2563
        %v5107 = vmul.f32 %v5103, %v2563
        %v5108 = vpack.c.bf16 %v5017, %v5016
        %v5109 = vpack.c.bf16 %v5019, %v5018
        %v5110 = vpack.c.bf16 %v5029, %v5028
        %v5111 = vpack.c.bf16 %v5031, %v5030
        %v5112 = vpack.c.bf16 %v5041, %v5040
        %v5113 = vpack.c.bf16 %v5043, %v5042
        %v5114 = vpack.c.bf16 %v5053, %v5052
        %v5115 = vpack.c.bf16 %v5055, %v5054
        %v5116 = vpack.c.bf16 %v5057, %v5056
        %v5117 = vpack.c.bf16 %v5059, %v5058
        %v5118 = vpack.c.bf16 %v5069, %v5068
        %v5119 = vpack.c.bf16 %v5071, %v5070
        %v5120 = vpack.c.bf16 %v5081, %v5080
        %v5121 = vpack.c.bf16 %v5083, %v5082
        %v5122 = vpack.c.bf16 %v5093, %v5092
        %v5123 = vpack.c.bf16 %v5095, %v5094
        %v5124 = vpack.c.bf16 %v5105, %v5104
        %v5125 = vpack.c.bf16 %v5107, %v5106
        %v5126 = vld [vmem:[#allocation18] sm:$0xff]
        %v5127 = vld [vmem:[#allocation18 + $0x8] sm:$0xf]
        %v5128 = vld [vmem:[#allocation18 + $0xc] sm:$0xff]
        %v5129 = vld [vmem:[#allocation18 + $0x14] sm:$0xf]
        %v5130 = vld [vmem:[#allocation18 + $0x18] sm:$0xff]
        %v5131 = vld [vmem:[#allocation18 + $0x20] sm:$0xf]
        %v5132 = vld [vmem:[#allocation18 + $0x24] sm:$0xff]
        %v5133 = vld [vmem:[#allocation18 + $0x2c] sm:$0xf]
        %v5134 = vld [vmem:[%s61] sm:$0xff]
        %v5135 = vld [vmem:[%s61 + $0x8] sm:$0xff]
        %v5136 = vld [vmem:[%s61 + $0x10] sm:$0xff]
        %v5137 = vld [vmem:[%s61 + $0x18] sm:$0xff]
        %5139 = vset.pattern.permute.xlu0 0
        %5140 = vperm.xlu0 %5139, %v5134
        %v5141 = vpop.permute.xlu0 %5140
        %5144 = vset.pattern.permute.xlu0 0
        %5145 = vperm.xlu0 %5144, %v5135
        %v5146 = vpop.permute.xlu0 %5145
        %5149 = vset.pattern.permute.xlu0 0
        %5150 = vperm.xlu0 %5149, %v5136
        %v5151 = vpop.permute.xlu0 %5150
        %5154 = vset.pattern.permute.xlu0 0
        %5155 = vperm.xlu0 %5154, %v5137
        %v5156 = vpop.permute.xlu0 %5155
        %v5166 = vunpack.c.l.b16 %v5126
        %v5167 = vunpack.c.h.b16 %v5126
        %v5168 = vunpack.c.l.b16 %v5127
        %v5169 = vunpack.c.l.b16 %v5128
        %v5170 = vunpack.c.h.b16 %v5128
        %v5171 = vunpack.c.l.b16 %v5129
        %v5172 = vunpack.c.l.b16 %v5130
        %v5173 = vunpack.c.h.b16 %v5130
        %v5174 = vunpack.c.l.b16 %v5131
        %v5175 = vunpack.c.l.b16 %v5132
        %v5176 = vunpack.c.h.b16 %v5132
        %v5177 = vunpack.c.l.b16 %v5133
        %v5178 = vpack.c.b16 %v5169, %v5166
        %v5179 = vpack.c.b16 %v5170, %v5167
        %v5180 = vpack.c.b16 %v5171, %v5168
        %v5181 = vpack.c.b16 %v5175, %v5172
        %v5182 = vpack.c.b16 %v5176, %v5173
        %v5183 = vpack.c.b16 %v5177, %v5174
        %v5189 = vsel %vm2849, %v5180, 0
        %v5192 = vsel %vm2849, %v5183, 0
        %5194 = vmatpush.bf16.msra.mxu0 %v5115
        %5195 = vmatpush.bf16.msra.mxu0 %v5114
        %5196 = vmatpush.bf16.msra.mxu0 %v5113
        %5197 = vmatpush.bf16.msra.mxu0 %v5112
        %5198 = vmatpush.bf16.msra.mxu0 %v5111
        %5199 = vmatpush.bf16.msra.mxu0 %v5110
        %5200 = vmatpush.bf16.msra.mxu0 %v5109
        %5201 = vmatpush.bf16.msra.mxu0 %v5108
        %5202 = vmatmul.bf16.gmra.mxu0 %v5178
        %v5203 = vpop.f32.mrf.mxu0
        %v5204 = vadd.f32 %v5141, %v5203
        %v5205 = vpop.f32.mrf.mxu0
        %v5206 = vadd.f32 %v5146, %v5205
        %5207 = vmatmul.bf16.gmra.mxu0 %v5181
        %v5208 = vpop.f32.mrf.mxu0
        %v5209 = vadd.f32 %v5151, %v5208
        %v5210 = vpop.f32.mrf.mxu0
        %v5211 = vadd.f32 %v5156, %v5210
        %5212 = vdwg.mxu0
        %5213 = vmatpush.bf16.msra.mxu0 %v5123
        %5214 = vmatpush.bf16.msra.mxu0 %v5122
        %5215 = vmatpush.bf16.msra.mxu0 %v5121
        %5216 = vmatpush.bf16.msra.mxu0 %v5120
        %5217 = vmatpush.bf16.msra.mxu0 %v5119
        %5218 = vmatpush.bf16.msra.mxu0 %v5118
        %5219 = vmatpush.bf16.msra.mxu0 %v5117
        %5220 = vmatpush.bf16.msra.mxu0 %v5116
        %5221 = vmatmul.bf16.gmra.mxu0 %v5179
        %v5222 = vpop.f32.mrf.mxu0
        %v5223 = vadd.f32 %v5204, %v5222
        %v5224 = vpop.f32.mrf.mxu0
        %v5225 = vadd.f32 %v5206, %v5224
        %5226 = vmatmul.bf16.gmra.mxu0 %v5182
        %v5227 = vpop.f32.mrf.mxu0
        %v5228 = vadd.f32 %v5209, %v5227
        %v5229 = vpop.f32.mrf.mxu0
        %v5230 = vadd.f32 %v5211, %v5229
        %5231 = vdwg.mxu0
        %5232 = vmatpush.bf16.msra.mxu0 0
        %5233 = vmatpush.bf16.msra.mxu0 0
        %5234 = vmatpush.bf16.msra.mxu0 0
        %5235 = vmatpush.bf16.msra.mxu0 0
        %5236 = vmatpush.bf16.msra.mxu0 0
        %5237 = vmatpush.bf16.msra.mxu0 0
        %5238 = vmatpush.bf16.msra.mxu0 %v5125
        %5239 = vmatpush.bf16.msra.mxu0 %v5124
        %5240 = vmatmul.bf16.gmra.mxu0 %v5189
        %v5241 = vpop.f32.mrf.mxu0
        %v5242 = vadd.f32 %v5223, %v5241
        %v5243 = vpop.f32.mrf.mxu0
        %v5244 = vadd.f32 %v5225, %v5243
        %5245 = vmatmul.bf16.gmra.mxu0 %v5192
        %v5246 = vpop.f32.mrf.mxu0
        %v5247 = vadd.f32 %v5228, %v5246
        %v5248 = vpop.f32.mrf.mxu0
        %v5249 = vadd.f32 %v5230, %v5248
        %5250 = vdwg.mxu0
        %v5251 = vmax.f32 %v5242, 0.0
        %v5252 = vmax.f32 %v5244, 0.0
        %v5253 = vmax.f32 %v5247, 0.0
        %v5254 = vmax.f32 %v5249, 0.0
        %v5255 = vpack.c.bf16 %v5252, %v5251
        %v5256 = vpack.c.bf16 %v5254, %v5253
        %v5257 = vld [vmem:[#allocation19] sm:$0xf]
        %v5258 = vld [vmem:[#allocation19 + $0x4] sm:$0xf]
        %v5259 = vld [vmem:[#allocation19 + $0x8] sm:$0xf]
        %v5260 = vld [vmem:[#allocation19 + $0xc] sm:$0xf]
        %v5261 = vld [vmem:[#allocation19 + $0x10] sm:$0xf]
        %v5262 = vld [vmem:[#allocation19 + $0x14] sm:$0xf]
        %v5263 = vld [vmem:[#allocation19 + $0x18] sm:$0xf]
        %v5264 = vld [vmem:[#allocation19 + $0x1c] sm:$0xf]
        %v5265 = vld [vmem:[#allocation19 + $0x20] sm:$0xf]
        %v5266 = vld [vmem:[#allocation19 + $0x24] sm:$0xf]
        %v5267 = vld [vmem:[#allocation19 + $0x28] sm:$0xf]
        %v5268 = vld [vmem:[#allocation19 + $0x2c] sm:$0xf]
        %v5269 = vld [vmem:[#allocation19 + $0x30] sm:$0xf]
        %v5270 = vld [vmem:[#allocation19 + $0x34] sm:$0xf]
        %v5271 = vld [vmem:[#allocation19 + $0x38] sm:$0xf]
        %v5272 = vld [vmem:[#allocation19 + $0x3c] sm:$0xf]
        %v5289 = vunpack.c.l.b16 %v5257
        %v5290 = vunpack.c.l.b16 %v5258
        %v5291 = vunpack.c.l.b16 %v5259
        %v5292 = vunpack.c.l.b16 %v5260
        %v5293 = vunpack.c.l.b16 %v5261
        %v5294 = vunpack.c.l.b16 %v5262
        %v5295 = vunpack.c.l.b16 %v5263
        %v5296 = vunpack.c.l.b16 %v5264
        %v5297 = vunpack.c.l.b16 %v5265
        %v5298 = vunpack.c.l.b16 %v5266
        %v5299 = vunpack.c.l.b16 %v5267
        %v5300 = vunpack.c.l.b16 %v5268
        %v5301 = vunpack.c.l.b16 %v5269
        %v5302 = vunpack.c.l.b16 %v5270
        %v5303 = vunpack.c.l.b16 %v5271
        %v5304 = vunpack.c.l.b16 %v5272
        %v5305 = vpack.c.b16 %v5290, %v5289
        %v5306 = vpack.c.b16 %v5292, %v5291
        %v5307 = vpack.c.b16 %v5294, %v5293
        %v5308 = vpack.c.b16 %v5296, %v5295
        %v5309 = vpack.c.b16 %v5298, %v5297
        %v5310 = vpack.c.b16 %v5300, %v5299
        %v5311 = vpack.c.b16 %v5302, %v5301
        %v5312 = vpack.c.b16 %v5304, %v5303
        %5321 = vmatpush.bf16.msra.mxu0 %v5312
        %5322 = vmatpush.bf16.msra.mxu0 %v5311
        %5323 = vmatpush.bf16.msra.mxu0 %v5310
        %5324 = vmatpush.bf16.msra.mxu0 %v5309
        %5325 = vmatpush.bf16.msra.mxu0 %v5308
        %5326 = vmatpush.bf16.msra.mxu0 %v5307
        %5327 = vmatpush.bf16.msra.mxu0 %v5306
        %5328 = vmatpush.bf16.msra.mxu0 %v5305
        %5329 = vmatmul.bf16.gmra.mxu0 %v5255
        %v5330 = vpop.f32.mrf.mxu0
        %v5331 = vadd.f32 0.0, %v5330
        %v5332 = vpop.f32.mrf.mxu0
        %v5333 = vadd.f32 0.0, %v5332
        %5334 = vmatmul.bf16.gmra.mxu0 %v5256
        %v5335 = vpop.f32.mrf.mxu0
        %v5336 = vadd.f32 0.0, %v5335
        %v5337 = vpop.f32.mrf.mxu0
        %v5338 = vadd.f32 0.0, %v5337
        %5339 = vdwg.mxu0
        %5340 = vrot.lane.b32.xlu0 %v5331, 9
        %v5341 = vpop.permute.xlu0 %5340
        %5342 = vrot.lane.b32.xlu0 %v5333, 9
        %v5343 = vpop.permute.xlu0 %5342
        %5344 = vrot.lane.b32.xlu0 %v5336, 9
        %v5345 = vpop.permute.xlu0 %5344
        %5346 = vrot.lane.b32.xlu0 %v5338, 9
        %v5347 = vpop.permute.xlu0 %5346
        %v5348 = vmul.f32 %v5341, %v2205
        %v5349 = vmul.f32 %v5343, %v2205
        %v5350 = vmul.f32 %v5345, %v2205
        %v5351 = vmul.f32 %v5347, %v2205
        %5352 = vrot.lane.b32.xlu0 %v5331, 8
        %v5353 = vpop.permute.xlu0 %5352
        %5354 = vrot.lane.b32.xlu0 %v5333, 8
        %v5355 = vpop.permute.xlu0 %5354
        %5356 = vrot.lane.b32.xlu0 %v5336, 8
        %v5357 = vpop.permute.xlu0 %5356
        %5358 = vrot.lane.b32.xlu0 %v5338, 8
        %v5359 = vpop.permute.xlu0 %5358
        %v5360 = vmul.f32 %v5353, %v2210
        %v5361 = vmul.f32 %v5355, %v2210
        %v5362 = vmul.f32 %v5357, %v2210
        %v5363 = vmul.f32 %v5359, %v2210
        %5364 = vrot.lane.b32.xlu0 %v5331, 7
        %v5365 = vpop.permute.xlu0 %5364
        %5366 = vrot.lane.b32.xlu0 %v5333, 7
        %v5367 = vpop.permute.xlu0 %5366
        %5368 = vrot.lane.b32.xlu0 %v5336, 7
        %v5369 = vpop.permute.xlu0 %5368
        %5370 = vrot.lane.b32.xlu0 %v5338, 7
        %v5371 = vpop.permute.xlu0 %5370
        %v5372 = vmul.f32 %v5365, %v2215
        %v5373 = vmul.f32 %v5367, %v2215
        %v5374 = vmul.f32 %v5369, %v2215
        %v5375 = vmul.f32 %v5371, %v2215
        %5376 = vrot.lane.b32.xlu0 %v5331, 1
        %v5377 = vpop.permute.xlu0 %5376
        %5378 = vrot.lane.b32.xlu0 %v5333, 1
        %v5379 = vpop.permute.xlu0 %5378
        %5380 = vrot.lane.b32.xlu0 %v5336, 1
        %v5381 = vpop.permute.xlu0 %5380
        %5382 = vrot.lane.b32.xlu0 %v5338, 1
        %v5383 = vpop.permute.xlu0 %5382
        %v5384 = vmul.f32 %v5377, %v2220
        %v5385 = vmul.f32 %v5379, %v2220
        %v5386 = vmul.f32 %v5381, %v2220
        %v5387 = vmul.f32 %v5383, %v2220
        %v5388 = vmul.f32 %v5331, %v2223
        %v5389 = vmul.f32 %v5333, %v2223
        %v5390 = vmul.f32 %v5336, %v2223
        %v5391 = vmul.f32 %v5338, %v2223
        %5392 = vrot.lane.b32.xlu0 %v5331, 127
        %v5393 = vpop.permute.xlu0 %5392
        %5394 = vrot.lane.b32.xlu0 %v5333, 127
        %v5395 = vpop.permute.xlu0 %5394
        %5396 = vrot.lane.b32.xlu0 %v5336, 127
        %v5397 = vpop.permute.xlu0 %5396
        %5398 = vrot.lane.b32.xlu0 %v5338, 127
        %v5399 = vpop.permute.xlu0 %5398
        %v5400 = vmul.f32 %v5393, %v2228
        %v5401 = vmul.f32 %v5395, %v2228
        %v5402 = vmul.f32 %v5397, %v2228
        %v5403 = vmul.f32 %v5399, %v2228
        %5404 = vrot.lane.b32.xlu0 %v5331, 121
        %v5405 = vpop.permute.xlu0 %5404
        %5406 = vrot.lane.b32.xlu0 %v5333, 121
        %v5407 = vpop.permute.xlu0 %5406
        %5408 = vrot.lane.b32.xlu0 %v5336, 121
        %v5409 = vpop.permute.xlu0 %5408
        %5410 = vrot.lane.b32.xlu0 %v5338, 121
        %v5411 = vpop.permute.xlu0 %5410
        %v5412 = vmul.f32 %v5405, %v2233
        %v5413 = vmul.f32 %v5407, %v2233
        %v5414 = vmul.f32 %v5409, %v2233
        %v5415 = vmul.f32 %v5411, %v2233
        %5416 = vrot.lane.b32.xlu0 %v5331, 120
        %v5417 = vpop.permute.xlu0 %5416
        %5418 = vrot.lane.b32.xlu0 %v5333, 120
        %v5419 = vpop.permute.xlu0 %5418
        %5420 = vrot.lane.b32.xlu0 %v5336, 120
        %v5421 = vpop.permute.xlu0 %5420
        %5422 = vrot.lane.b32.xlu0 %v5338, 120
        %v5423 = vpop.permute.xlu0 %5422
        %v5424 = vmul.f32 %v5417, %v2238
        %v5425 = vmul.f32 %v5419, %v2238
        %v5426 = vmul.f32 %v5421, %v2238
        %v5427 = vmul.f32 %v5423, %v2238
        %5428 = vrot.lane.b32.xlu0 %v5331, 119
        %v5429 = vpop.permute.xlu0 %5428
        %5430 = vrot.lane.b32.xlu0 %v5333, 119
        %v5431 = vpop.permute.xlu0 %5430
        %5432 = vrot.lane.b32.xlu0 %v5336, 119
        %v5433 = vpop.permute.xlu0 %5432
        %5434 = vrot.lane.b32.xlu0 %v5338, 119
        %v5435 = vpop.permute.xlu0 %5434
        %v5436 = vmul.f32 %v5429, %v2243
        %v5437 = vmul.f32 %v5431, %v2243
        %v5438 = vmul.f32 %v5433, %v2243
        %v5439 = vmul.f32 %v5435, %v2243
        %v5440 = vpack.c.bf16 %v5349, %v5348
        %v5441 = vpack.c.bf16 %v5351, %v5350
        %v5442 = vpack.c.bf16 %v5361, %v5360
        %v5443 = vpack.c.bf16 %v5363, %v5362
        %v5444 = vpack.c.bf16 %v5373, %v5372
        %v5445 = vpack.c.bf16 %v5375, %v5374
        %v5446 = vpack.c.bf16 %v5385, %v5384
        %v5447 = vpack.c.bf16 %v5387, %v5386
        %v5448 = vpack.c.bf16 %v5389, %v5388
        %v5449 = vpack.c.bf16 %v5391, %v5390
        %v5450 = vpack.c.bf16 %v5401, %v5400
        %v5451 = vpack.c.bf16 %v5403, %v5402
        %v5452 = vpack.c.bf16 %v5413, %v5412
        %v5453 = vpack.c.bf16 %v5415, %v5414
        %v5454 = vpack.c.bf16 %v5425, %v5424
        %v5455 = vpack.c.bf16 %v5427, %v5426
        %v5456 = vpack.c.bf16 %v5437, %v5436
        %v5457 = vpack.c.bf16 %v5439, %v5438
        %v5458 = vld [vmem:[#allocation21] sm:$0xff]
        %v5459 = vld [vmem:[#allocation21 + $0x8] sm:$0xf]
        %v5460 = vld [vmem:[#allocation21 + $0xc] sm:$0xff]
        %v5461 = vld [vmem:[#allocation21 + $0x14] sm:$0xf]
        %v5462 = vld [vmem:[#allocation21 + $0x18] sm:$0xff]
        %v5463 = vld [vmem:[#allocation21 + $0x20] sm:$0xf]
        %v5464 = vld [vmem:[#allocation21 + $0x24] sm:$0xff]
        %v5465 = vld [vmem:[#allocation21 + $0x2c] sm:$0xf]
        %v5466 = vld [vmem:[%s67] sm:$0xff]
        %v5467 = vld [vmem:[%s67 + $0x8] sm:$0xff]
        %v5468 = vld [vmem:[%s67 + $0x10] sm:$0xff]
        %v5469 = vld [vmem:[%s67 + $0x18] sm:$0xff]
        %5471 = vset.pattern.permute.xlu0 0
        %5472 = vperm.xlu0 %5471, %v5466
        %v5473 = vpop.permute.xlu0 %5472
        %5476 = vset.pattern.permute.xlu0 0
        %5477 = vperm.xlu0 %5476, %v5467
        %v5478 = vpop.permute.xlu0 %5477
        %5481 = vset.pattern.permute.xlu0 0
        %5482 = vperm.xlu0 %5481, %v5468
        %v5483 = vpop.permute.xlu0 %5482
        %5486 = vset.pattern.permute.xlu0 0
        %5487 = vperm.xlu0 %5486, %v5469
        %v5488 = vpop.permute.xlu0 %5487
        %v5498 = vunpack.c.l.b16 %v5458
        %v5499 = vunpack.c.h.b16 %v5458
        %v5500 = vunpack.c.l.b16 %v5459
        %v5501 = vunpack.c.l.b16 %v5460
        %v5502 = vunpack.c.h.b16 %v5460
        %v5503 = vunpack.c.l.b16 %v5461
        %v5504 = vunpack.c.l.b16 %v5462
        %v5505 = vunpack.c.h.b16 %v5462
        %v5506 = vunpack.c.l.b16 %v5463
        %v5507 = vunpack.c.l.b16 %v5464
        %v5508 = vunpack.c.h.b16 %v5464
        %v5509 = vunpack.c.l.b16 %v5465
        %v5510 = vpack.c.b16 %v5501, %v5498
        %v5511 = vpack.c.b16 %v5502, %v5499
        %v5512 = vpack.c.b16 %v5503, %v5500
        %v5513 = vpack.c.b16 %v5507, %v5504
        %v5514 = vpack.c.b16 %v5508, %v5505
        %v5515 = vpack.c.b16 %v5509, %v5506
        %v5521 = vsel %vm2849, %v5512, 0
        %v5524 = vsel %vm2849, %v5515, 0
        %5526 = vmatpush.bf16.msra.mxu0 %v5447
        %5527 = vmatpush.bf16.msra.mxu0 %v5446
        %5528 = vmatpush.bf16.msra.mxu0 %v5445
        %5529 = vmatpush.bf16.msra.mxu0 %v5444
        %5530 = vmatpush.bf16.msra.mxu0 %v5443
        %5531 = vmatpush.bf16.msra.mxu0 %v5442
        %5532 = vmatpush.bf16.msra.mxu0 %v5441
        %5533 = vmatpush.bf16.msra.mxu0 %v5440
        %5534 = vmatmul.bf16.gmra.mxu0 %v5510
        %v5535 = vpop.f32.mrf.mxu0
        %v5536 = vadd.f32 %v5473, %v5535
        %v5537 = vpop.f32.mrf.mxu0
        %v5538 = vadd.f32 %v5478, %v5537
        %5539 = vmatmul.bf16.gmra.mxu0 %v5513
        %v5540 = vpop.f32.mrf.mxu0
        %v5541 = vadd.f32 %v5483, %v5540
        %v5542 = vpop.f32.mrf.mxu0
        %v5543 = vadd.f32 %v5488, %v5542
        %5544 = vdwg.mxu0
        %5545 = vmatpush.bf16.msra.mxu0 %v5455
        %5546 = vmatpush.bf16.msra.mxu0 %v5454
        %5547 = vmatpush.bf16.msra.mxu0 %v5453
        %5548 = vmatpush.bf16.msra.mxu0 %v5452
        %5549 = vmatpush.bf16.msra.mxu0 %v5451
        %5550 = vmatpush.bf16.msra.mxu0 %v5450
        %5551 = vmatpush.bf16.msra.mxu0 %v5449
        %5552 = vmatpush.bf16.msra.mxu0 %v5448
        %5553 = vmatmul.bf16.gmra.mxu0 %v5511
        %v5554 = vpop.f32.mrf.mxu0
        %v5555 = vadd.f32 %v5536, %v5554
        %v5556 = vpop.f32.mrf.mxu0
        %v5557 = vadd.f32 %v5538, %v5556
        %5558 = vmatmul.bf16.gmra.mxu0 %v5514
        %v5559 = vpop.f32.mrf.mxu0
        %v5560 = vadd.f32 %v5541, %v5559
        %v5561 = vpop.f32.mrf.mxu0
        %v5562 = vadd.f32 %v5543, %v5561
        %5563 = vdwg.mxu0
        %5564 = vmatpush.bf16.msra.mxu0 0
        %5565 = vmatpush.bf16.msra.mxu0 0
        %5566 = vmatpush.bf16.msra.mxu0 0
        %5567 = vmatpush.bf16.msra.mxu0 0
        %5568 = vmatpush.bf16.msra.mxu0 0
        %5569 = vmatpush.bf16.msra.mxu0 0
        %5570 = vmatpush.bf16.msra.mxu0 %v5457
        %5571 = vmatpush.bf16.msra.mxu0 %v5456
        %5572 = vmatmul.bf16.gmra.mxu0 %v5521
        %v5573 = vpop.f32.mrf.mxu0
        %v5574 = vadd.f32 %v5555, %v5573
        %v5575 = vpop.f32.mrf.mxu0
        %v5576 = vadd.f32 %v5557, %v5575
        %5577 = vmatmul.bf16.gmra.mxu0 %v5524
        %v5578 = vpop.f32.mrf.mxu0
        %v5579 = vadd.f32 %v5560, %v5578
        %v5580 = vpop.f32.mrf.mxu0
        %v5581 = vadd.f32 %v5562, %v5580
        %5582 = vdwg.mxu0
        %5583 = vrot.lane.b32.xlu0 %v5574, 9
        %v5584 = vpop.permute.xlu0 %5583
        %5585 = vrot.lane.b32.xlu0 %v5576, 9
        %v5586 = vpop.permute.xlu0 %5585
        %5587 = vrot.lane.b32.xlu0 %v5579, 9
        %v5588 = vpop.permute.xlu0 %5587
        %5589 = vrot.lane.b32.xlu0 %v5581, 9
        %v5590 = vpop.permute.xlu0 %5589
        %v5591 = vmul.f32 %v5584, %v2205
        %v5592 = vmul.f32 %v5586, %v2205
        %v5593 = vmul.f32 %v5588, %v2205
        %v5594 = vmul.f32 %v5590, %v2205
        %5595 = vrot.lane.b32.xlu0 %v5574, 8
        %v5596 = vpop.permute.xlu0 %5595
        %5597 = vrot.lane.b32.xlu0 %v5576, 8
        %v5598 = vpop.permute.xlu0 %5597
        %5599 = vrot.lane.b32.xlu0 %v5579, 8
        %v5600 = vpop.permute.xlu0 %5599
        %5601 = vrot.lane.b32.xlu0 %v5581, 8
        %v5602 = vpop.permute.xlu0 %5601
        %v5603 = vmul.f32 %v5596, %v2210
        %v5604 = vmul.f32 %v5598, %v2210
        %v5605 = vmul.f32 %v5600, %v2210
        %v5606 = vmul.f32 %v5602, %v2210
        %5607 = vrot.lane.b32.xlu0 %v5574, 7
        %v5608 = vpop.permute.xlu0 %5607
        %5609 = vrot.lane.b32.xlu0 %v5576, 7
        %v5610 = vpop.permute.xlu0 %5609
        %5611 = vrot.lane.b32.xlu0 %v5579, 7
        %v5612 = vpop.permute.xlu0 %5611
        %5613 = vrot.lane.b32.xlu0 %v5581, 7
        %v5614 = vpop.permute.xlu0 %5613
        %v5615 = vmul.f32 %v5608, %v2215
        %v5616 = vmul.f32 %v5610, %v2215
        %v5617 = vmul.f32 %v5612, %v2215
        %v5618 = vmul.f32 %v5614, %v2215
        %5619 = vrot.lane.b32.xlu0 %v5574, 1
        %v5620 = vpop.permute.xlu0 %5619
        %5621 = vrot.lane.b32.xlu0 %v5576, 1
        %v5622 = vpop.permute.xlu0 %5621
        %5623 = vrot.lane.b32.xlu0 %v5579, 1
        %v5624 = vpop.permute.xlu0 %5623
        %5625 = vrot.lane.b32.xlu0 %v5581, 1
        %v5626 = vpop.permute.xlu0 %5625
        %v5627 = vmul.f32 %v5620, %v2220
        %v5628 = vmul.f32 %v5622, %v2220
        %v5629 = vmul.f32 %v5624, %v2220
        %v5630 = vmul.f32 %v5626, %v2220
        %v5631 = vmul.f32 %v5574, %v2223
        %v5632 = vmul.f32 %v5576, %v2223
        %v5633 = vmul.f32 %v5579, %v2223
        %v5634 = vmul.f32 %v5581, %v2223
        %5635 = vrot.lane.b32.xlu0 %v5574, 127
        %v5636 = vpop.permute.xlu0 %5635
        %5637 = vrot.lane.b32.xlu0 %v5576, 127
        %v5638 = vpop.permute.xlu0 %5637
        %5639 = vrot.lane.b32.xlu0 %v5579, 127
        %v5640 = vpop.permute.xlu0 %5639
        %5641 = vrot.lane.b32.xlu0 %v5581, 127
        %v5642 = vpop.permute.xlu0 %5641
        %v5643 = vmul.f32 %v5636, %v2228
        %v5644 = vmul.f32 %v5638, %v2228
        %v5645 = vmul.f32 %v5640, %v2228
        %v5646 = vmul.f32 %v5642, %v2228
        %5647 = vrot.lane.b32.xlu0 %v5574, 121
        %v5648 = vpop.permute.xlu0 %5647
        %5649 = vrot.lane.b32.xlu0 %v5576, 121
        %v5650 = vpop.permute.xlu0 %5649
        %5651 = vrot.lane.b32.xlu0 %v5579, 121
        %v5652 = vpop.permute.xlu0 %5651
        %5653 = vrot.lane.b32.xlu0 %v5581, 121
        %v5654 = vpop.permute.xlu0 %5653
        %v5655 = vmul.f32 %v5648, %v2233
        %v5656 = vmul.f32 %v5650, %v2233
        %v5657 = vmul.f32 %v5652, %v2233
        %v5658 = vmul.f32 %v5654, %v2233
        %5659 = vrot.lane.b32.xlu0 %v5574, 120
        %v5660 = vpop.permute.xlu0 %5659
        %5661 = vrot.lane.b32.xlu0 %v5576, 120
        %v5662 = vpop.permute.xlu0 %5661
        %5663 = vrot.lane.b32.xlu0 %v5579, 120
        %v5664 = vpop.permute.xlu0 %5663
        %5665 = vrot.lane.b32.xlu0 %v5581, 120
        %v5666 = vpop.permute.xlu0 %5665
        %v5667 = vmul.f32 %v5660, %v2238
        %v5668 = vmul.f32 %v5662, %v2238
        %v5669 = vmul.f32 %v5664, %v2238
        %v5670 = vmul.f32 %v5666, %v2238
        %5671 = vrot.lane.b32.xlu0 %v5574, 119
        %v5672 = vpop.permute.xlu0 %5671
        %5673 = vrot.lane.b32.xlu0 %v5576, 119
        %v5674 = vpop.permute.xlu0 %5673
        %5675 = vrot.lane.b32.xlu0 %v5579, 119
        %v5676 = vpop.permute.xlu0 %5675
        %5677 = vrot.lane.b32.xlu0 %v5581, 119
        %v5678 = vpop.permute.xlu0 %5677
        %v5679 = vmul.f32 %v5672, %v2243
        %v5680 = vmul.f32 %v5674, %v2243
        %v5681 = vmul.f32 %v5676, %v2243
        %v5682 = vmul.f32 %v5678, %v2243
        %v5683 = vpack.c.bf16 %v5592, %v5591
        %v5684 = vpack.c.bf16 %v5594, %v5593
        %v5685 = vpack.c.bf16 %v5604, %v5603
        %v5686 = vpack.c.bf16 %v5606, %v5605
        %v5687 = vpack.c.bf16 %v5616, %v5615
        %v5688 = vpack.c.bf16 %v5618, %v5617
        %v5689 = vpack.c.bf16 %v5628, %v5627
        %v5690 = vpack.c.bf16 %v5630, %v5629
        %v5691 = vpack.c.bf16 %v5632, %v5631
        %v5692 = vpack.c.bf16 %v5634, %v5633
        %v5693 = vpack.c.bf16 %v5644, %v5643
        %v5694 = vpack.c.bf16 %v5646, %v5645
        %v5695 = vpack.c.bf16 %v5656, %v5655
        %v5696 = vpack.c.bf16 %v5658, %v5657
        %v5697 = vpack.c.bf16 %v5668, %v5667
        %v5698 = vpack.c.bf16 %v5670, %v5669
        %v5699 = vpack.c.bf16 %v5680, %v5679
        %v5700 = vpack.c.bf16 %v5682, %v5681
        %v5701 = vld [vmem:[%s69] sm:$0xff]
        %v5702 = vld [vmem:[%s69 + $0x8] sm:$0xf]
        %v5703 = vld [vmem:[%s69 + $0xc] sm:$0xff]
        %v5704 = vld [vmem:[%s69 + $0x14] sm:$0xf]
        %v5705 = vld [vmem:[%s71] sm:$0xff]
        %v5706 = vld [vmem:[%s71 + $0x8] sm:$0xff]
        %5708 = vset.pattern.permute.xlu0 0
        %5709 = vperm.xlu0 %5708, %v5705
        %v5710 = vpop.permute.xlu0 %5709
        %5713 = vset.pattern.permute.xlu0 0
        %5714 = vperm.xlu0 %5713, %v5706
        %v5715 = vpop.permute.xlu0 %5714
        %v5721 = vunpack.c.l.b16 %v5701
        %v5722 = vunpack.c.h.b16 %v5701
        %v5723 = vunpack.c.l.b16 %v5702
        %v5724 = vunpack.c.l.b16 %v5703
        %v5725 = vunpack.c.h.b16 %v5703
        %v5726 = vunpack.c.l.b16 %v5704
        %v5727 = vpack.c.b16 %v5724, %v5721
        %v5728 = vpack.c.b16 %v5725, %v5722
        %v5729 = vpack.c.b16 %v5726, %v5723
        %v5733 = vsel %vm2849, %v5729, 0
        %5735 = vmatpush.bf16.msra.mxu0 %v5690
        %5736 = vmatpush.bf16.msra.mxu0 %v5689
        %5737 = vmatpush.bf16.msra.mxu0 %v5688
        %5738 = vmatpush.bf16.msra.mxu0 %v5687
        %5739 = vmatpush.bf16.msra.mxu0 %v5686
        %5740 = vmatpush.bf16.msra.mxu0 %v5685
        %5741 = vmatpush.bf16.msra.mxu0 %v5684
        %5742 = vmatpush.bf16.msra.mxu0 %v5683
        %5743 = vmatmul.bf16.gmra.mxu0 %v5727
        %v5744 = vpop.f32.mrf.mxu0
        %v5745 = vadd.f32 %v5710, %v5744
        %v5746 = vpop.f32.mrf.mxu0
        %v5747 = vadd.f32 %v5715, %v5746
        %5748 = vdwg.mxu0
        %5749 = vmatpush.bf16.msra.mxu0 %v5698
        %5750 = vmatpush.bf16.msra.mxu0 %v5697
        %5751 = vmatpush.bf16.msra.mxu0 %v5696
        %5752 = vmatpush.bf16.msra.mxu0 %v5695
        %5753 = vmatpush.bf16.msra.mxu0 %v5694
        %5754 = vmatpush.bf16.msra.mxu0 %v5693
        %5755 = vmatpush.bf16.msra.mxu0 %v5692
        %5756 = vmatpush.bf16.msra.mxu0 %v5691
        %5757 = vmatmul.bf16.gmra.mxu0 %v5728
        %v5758 = vpop.f32.mrf.mxu0
        %v5759 = vadd.f32 %v5745, %v5758
        %v5760 = vpop.f32.mrf.mxu0
        %v5761 = vadd.f32 %v5747, %v5760
        %5762 = vdwg.mxu0
        %5763 = vmatpush.bf16.msra.mxu0 0
        %5764 = vmatpush.bf16.msra.mxu0 0
        %5765 = vmatpush.bf16.msra.mxu0 0
        %5766 = vmatpush.bf16.msra.mxu0 0
        %5767 = vmatpush.bf16.msra.mxu0 0
        %5768 = vmatpush.bf16.msra.mxu0 0
        %5769 = vmatpush.bf16.msra.mxu0 %v5700
        %5770 = vmatpush.bf16.msra.mxu0 %v5699
        %5771 = vmatmul.bf16.gmra.mxu0 %v5733
        %v5772 = vpop.f32.mrf.mxu0
        %v5773 = vadd.f32 %v5759, %v5772
        %v5774 = vpop.f32.mrf.mxu0
        %v5775 = vadd.f32 %v5761, %v5774
        %5776 = vdwg.mxu0
        %v5777 = vmax.f32 %v5773, 0.0
        %v5778 = vmax.f32 %v5775, 0.0
        %5779 = vrot.lane.b32.xlu0 %v5777, 9
        %v5780 = vpop.permute.xlu0 %5779
        %5781 = vrot.lane.b32.xlu0 %v5778, 9
        %v5782 = vpop.permute.xlu0 %5781
        %v5783 = vmul.f32 %v5780, %v2205
        %v5784 = vmul.f32 %v5782, %v2205
        %5785 = vrot.lane.b32.xlu0 %v5777, 8
        %v5786 = vpop.permute.xlu0 %5785
        %5787 = vrot.lane.b32.xlu0 %v5778, 8
        %v5788 = vpop.permute.xlu0 %5787
        %v5789 = vmul.f32 %v5786, %v2210
        %v5790 = vmul.f32 %v5788, %v2210
        %5791 = vrot.lane.b32.xlu0 %v5777, 7
        %v5792 = vpop.permute.xlu0 %5791
        %5793 = vrot.lane.b32.xlu0 %v5778, 7
        %v5794 = vpop.permute.xlu0 %5793
        %v5795 = vmul.f32 %v5792, %v2215
        %v5796 = vmul.f32 %v5794, %v2215
        %5797 = vrot.lane.b32.xlu0 %v5777, 1
        %v5798 = vpop.permute.xlu0 %5797
        %5799 = vrot.lane.b32.xlu0 %v5778, 1
        %v5800 = vpop.permute.xlu0 %5799
        %v5801 = vmul.f32 %v5798, %v2220
        %v5802 = vmul.f32 %v5800, %v2220
        %v5803 = vmul.f32 %v5777, %v2223
        %v5804 = vmul.f32 %v5778, %v2223
        %5805 = vrot.lane.b32.xlu0 %v5777, 127
        %v5806 = vpop.permute.xlu0 %5805
        %5807 = vrot.lane.b32.xlu0 %v5778, 127
        %v5808 = vpop.permute.xlu0 %5807
        %v5809 = vmul.f32 %v5806, %v2228
        %v5810 = vmul.f32 %v5808, %v2228
        %5811 = vrot.lane.b32.xlu0 %v5777, 121
        %v5812 = vpop.permute.xlu0 %5811
        %5813 = vrot.lane.b32.xlu0 %v5778, 121
        %v5814 = vpop.permute.xlu0 %5813
        %v5815 = vmul.f32 %v5812, %v2233
        %v5816 = vmul.f32 %v5814, %v2233
        %5817 = vrot.lane.b32.xlu0 %v5777, 120
        %v5818 = vpop.permute.xlu0 %5817
        %5819 = vrot.lane.b32.xlu0 %v5778, 120
        %v5820 = vpop.permute.xlu0 %5819
        %v5821 = vmul.f32 %v5818, %v2238
        %v5822 = vmul.f32 %v5820, %v2238
        %5823 = vrot.lane.b32.xlu0 %v5777, 119
        %v5824 = vpop.permute.xlu0 %5823
        %5825 = vrot.lane.b32.xlu0 %v5778, 119
        %v5826 = vpop.permute.xlu0 %5825
        %v5827 = vmul.f32 %v5824, %v2243
        %v5828 = vmul.f32 %v5826, %v2243
        %v5829 = vpack.c.bf16 %v5784, %v5783
        %v5830 = vpack.c.bf16 %v5790, %v5789
        %v5831 = vpack.c.bf16 %v5796, %v5795
        %v5832 = vpack.c.bf16 %v5802, %v5801
        %v5833 = vpack.c.bf16 %v5804, %v5803
        %v5834 = vpack.c.bf16 %v5810, %v5809
        %v5835 = vpack.c.bf16 %v5816, %v5815
        %v5836 = vpack.c.bf16 %v5822, %v5821
        %v5837 = vpack.c.bf16 %v5828, %v5827
        %v5838 = vld [vmem:[#allocation22] sm:$0xff]
        %v5839 = vld [vmem:[#allocation22 + $0x8] sm:$0xff]
        %v5840 = vld [vmem:[%s75] sm:$0xff]
        %v5841 = vld [vmem:[%s75 + $0x8] sm:$0xff]
        %5843 = vset.pattern.permute.xlu0 0
        %5844 = vperm.xlu0 %5843, %v5840
        %v5845 = vpop.permute.xlu0 %5844
        %5848 = vset.pattern.permute.xlu0 0
        %5849 = vperm.xlu0 %5848, %v5841
        %v5850 = vpop.permute.xlu0 %5849
        %v5854 = vunpack.c.l.b16 %v5838
        %v5855 = vunpack.c.h.b16 %v5838
        %v5856 = vunpack.c.l.b16 %v5839
        %v5857 = vunpack.c.h.b16 %v5839
        %v5858 = vpack.c.b16 %v5856, %v5854
        %v5859 = vpack.c.b16 %v5857, %v5855
        %v5862 = vsel %vm2373, %v5859, 0
        %5864 = vmatpush.bf16.msra.mxu0 %v5836
        %5865 = vmatpush.bf16.msra.mxu0 %v5835
        %5866 = vmatpush.bf16.msra.mxu0 %v5834
        %5867 = vmatpush.bf16.msra.mxu0 %v5833
        %5868 = vmatpush.bf16.msra.mxu0 %v5832
        %5869 = vmatpush.bf16.msra.mxu0 %v5831
        %5870 = vmatpush.bf16.msra.mxu0 %v5830
        %5871 = vmatpush.bf16.msra.mxu0 %v5829
        %5872 = vmatmul.bf16.gmra.mxu0 %v5858
        %v5873 = vpop.f32.mrf.mxu0
        %v5874 = vadd.f32 %v5845, %v5873
        %v5875 = vpop.f32.mrf.mxu0
        %v5876 = vadd.f32 %v5850, %v5875
        %5877 = vdwg.mxu0
        %5878 = vmatpush.bf16.msra.mxu0 0
        %5879 = vmatpush.bf16.msra.mxu0 0
        %5880 = vmatpush.bf16.msra.mxu0 0
        %5881 = vmatpush.bf16.msra.mxu0 0
        %5882 = vmatpush.bf16.msra.mxu0 0
        %5883 = vmatpush.bf16.msra.mxu0 0
        %5884 = vmatpush.bf16.msra.mxu0 0
        %5885 = vmatpush.bf16.msra.mxu0 %v5837
        %5886 = vmatmul.bf16.gmra.mxu0 %v5862
        %v5887 = vpop.f32.mrf.mxu0
        %v5888 = vadd.f32 %v5874, %v5887
        %v5889 = vpop.f32.mrf.mxu0
        %v5890 = vadd.f32 %v5876, %v5889
        %5891 = vdwg.mxu0
        %v5892 = vmax.f32 %v5888, 0.0
        %v5893 = vmax.f32 %v5890, 0.0
        %v5894 = vpack.c.bf16 %v5893, %v5892
        %v5895 = vld [vmem:[#allocation24] sm:$0xff]
        %v5896 = vld [vmem:[#allocation24 + $0x8] sm:$0xff]
        %v5897 = vld [vmem:[#allocation24 + $0x10] sm:$0xff]
        %v5898 = vld [vmem:[#allocation24 + $0x18] sm:$0xff]
        %v5899 = vld [vmem:[#allocation24 + $0x20] sm:$0xff]
        %v5900 = vld [vmem:[#allocation24 + $0x28] sm:$0xff]
        %v5901 = vld [vmem:[#allocation24 + $0x30] sm:$0xff]
        %v5902 = vld [vmem:[#allocation24 + $0x38] sm:$0xff]
        %v5903 = vld [vmem:[#allocation24 + $0x40] sm:$0xff]
        %v5904 = vld [vmem:[#allocation24 + $0x48] sm:$0xff]
        %v5905 = vld [vmem:[#allocation24 + $0x50] sm:$0xff]
        %v5906 = vld [vmem:[#allocation24 + $0x58] sm:$0xff]
        %v5907 = vld [vmem:[#allocation24 + $0x60] sm:$0xff]
        %v5908 = vld [vmem:[#allocation24 + $0x68] sm:$0xff]
        %v5909 = vld [vmem:[#allocation24 + $0x70] sm:$0xff]
        %v5910 = vld [vmem:[#allocation24 + $0x78] sm:$0xff]
        %v5927 = vunpack.c.l.b16 %v5895
        %v5928 = vunpack.c.h.b16 %v5895
        %v5929 = vunpack.c.l.b16 %v5896
        %v5930 = vunpack.c.h.b16 %v5896
        %v5931 = vunpack.c.l.b16 %v5897
        %v5932 = vunpack.c.h.b16 %v5897
        %v5933 = vunpack.c.l.b16 %v5898
        %v5934 = vunpack.c.h.b16 %v5898
        %v5935 = vunpack.c.l.b16 %v5899
        %v5936 = vunpack.c.h.b16 %v5899
        %v5937 = vunpack.c.l.b16 %v5900
        %v5938 = vunpack.c.h.b16 %v5900
        %v5939 = vunpack.c.l.b16 %v5901
        %v5940 = vunpack.c.h.b16 %v5901
        %v5941 = vunpack.c.l.b16 %v5902
        %v5942 = vunpack.c.h.b16 %v5902
        %v5943 = vunpack.c.l.b16 %v5903
        %v5944 = vunpack.c.h.b16 %v5903
        %v5945 = vunpack.c.l.b16 %v5904
        %v5946 = vunpack.c.h.b16 %v5904
        %v5947 = vunpack.c.l.b16 %v5905
        %v5948 = vunpack.c.h.b16 %v5905
        %v5949 = vunpack.c.l.b16 %v5906
        %v5950 = vunpack.c.h.b16 %v5906
        %v5951 = vunpack.c.l.b16 %v5907
        %v5952 = vunpack.c.h.b16 %v5907
        %v5953 = vunpack.c.l.b16 %v5908
        %v5954 = vunpack.c.h.b16 %v5908
        %v5955 = vunpack.c.l.b16 %v5909
        %v5956 = vunpack.c.h.b16 %v5909
        %v5957 = vunpack.c.l.b16 %v5910
        %v5958 = vunpack.c.h.b16 %v5910
        %v5959 = vpack.c.b16 %v5929, %v5927
        %v5960 = vpack.c.b16 %v5930, %v5928
        %v5961 = vpack.c.b16 %v5933, %v5931
        %v5962 = vpack.c.b16 %v5934, %v5932
        %v5963 = vpack.c.b16 %v5937, %v5935
        %v5964 = vpack.c.b16 %v5938, %v5936
        %v5965 = vpack.c.b16 %v5941, %v5939
        %v5966 = vpack.c.b16 %v5942, %v5940
        %v5967 = vpack.c.b16 %v5945, %v5943
        %v5968 = vpack.c.b16 %v5946, %v5944
        %v5969 = vpack.c.b16 %v5949, %v5947
        %v5970 = vpack.c.b16 %v5950, %v5948
        %v5971 = vpack.c.b16 %v5953, %v5951
        %v5972 = vpack.c.b16 %v5954, %v5952
        %v5973 = vpack.c.b16 %v5957, %v5955
        %v5974 = vpack.c.b16 %v5958, %v5956
        %5991 = vmatpush.bf16.msra.mxu0 %v5973
        %5992 = vmatpush.bf16.msra.mxu0 %v5971
        %5993 = vmatpush.bf16.msra.mxu0 %v5969
        %5994 = vmatpush.bf16.msra.mxu0 %v5967
        %5995 = vmatpush.bf16.msra.mxu0 %v5965
        %5996 = vmatpush.bf16.msra.mxu0 %v5963
        %5997 = vmatpush.bf16.msra.mxu0 %v5961
        %5998 = vmatpush.bf16.msra.mxu0 %v5959
        %5999 = vmatmul.bf16.gmra.mxu0 %v5894
        %v6000 = vpop.f32.mrf.mxu0
        %v6001 = vadd.f32 0.0, %v6000
        %v6002 = vpop.f32.mrf.mxu0
        %v6003 = vadd.f32 0.0, %v6002
        %6004 = vdwg.mxu0
        %6005 = vmatpush.bf16.msra.mxu0 %v5974
        %6006 = vmatpush.bf16.msra.mxu0 %v5972
        %6007 = vmatpush.bf16.msra.mxu0 %v5970
        %6008 = vmatpush.bf16.msra.mxu0 %v5968
        %6009 = vmatpush.bf16.msra.mxu0 %v5966
        %6010 = vmatpush.bf16.msra.mxu0 %v5964
        %6011 = vmatpush.bf16.msra.mxu0 %v5962
        %6012 = vmatpush.bf16.msra.mxu0 %v5960
        %6013 = vmatmul.bf16.gmra.mxu0 %v5894
        %v6014 = vpop.f32.mrf.mxu0
        %v6015 = vadd.f32 0.0, %v6014
        %v6016 = vpop.f32.mrf.mxu0
        %v6017 = vadd.f32 0.0, %v6016
        %6018 = vdwg.mxu0
        %6019 = vrot.lane.b32.xlu0 %v6001, 17
        %v6020 = vpop.permute.xlu0 %6019
        %6021 = vrot.lane.b32.xlu0 %v6003, 17
        %v6022 = vpop.permute.xlu0 %6021
        %6023 = vrot.lane.b32.xlu0 %v6015, 17
        %v6024 = vpop.permute.xlu0 %6023
        %6025 = vrot.lane.b32.xlu0 %v6017, 17
        %v6026 = vpop.permute.xlu0 %6025
        %v6027 = vsel %vm1722, %v6020, %v6024
        %v6028 = vsel %vm1722, %v6022, %v6026
        %v6029 = vsel %vm1722, %v6024, %v6020
        %v6030 = vsel %vm1722, %v6026, %v6022
        %v6031 = vmul.f32 %v6029, %v1727
        %v6032 = vmul.f32 %v6027, %v1728
        %v6033 = vmul.f32 %v6030, %v1727
        %v6034 = vmul.f32 %v6028, %v1728
        %6035 = vrot.lane.b32.xlu0 %v6001, 16
        %v6036 = vpop.permute.xlu0 %6035
        %6037 = vrot.lane.b32.xlu0 %v6003, 16
        %v6038 = vpop.permute.xlu0 %6037
        %6039 = vrot.lane.b32.xlu0 %v6015, 16
        %v6040 = vpop.permute.xlu0 %6039
        %6041 = vrot.lane.b32.xlu0 %v6017, 16
        %v6042 = vpop.permute.xlu0 %6041
        %v6043 = vsel %vm1737, %v6036, %v6040
        %v6044 = vsel %vm1737, %v6038, %v6042
        %v6045 = vsel %vm1737, %v6040, %v6036
        %v6046 = vsel %vm1737, %v6042, %v6038
        %v6047 = vmul.f32 %v6045, %v1743
        %v6048 = vmul.f32 %v6043, %v1744
        %v6049 = vmul.f32 %v6046, %v1743
        %v6050 = vmul.f32 %v6044, %v1744
        %6051 = vrot.lane.b32.xlu0 %v6001, 15
        %v6052 = vpop.permute.xlu0 %6051
        %6053 = vrot.lane.b32.xlu0 %v6003, 15
        %v6054 = vpop.permute.xlu0 %6053
        %6055 = vrot.lane.b32.xlu0 %v6015, 15
        %v6056 = vpop.permute.xlu0 %6055
        %6057 = vrot.lane.b32.xlu0 %v6017, 15
        %v6058 = vpop.permute.xlu0 %6057
        %v6059 = vsel %vm1753, %v6052, %v6056
        %v6060 = vsel %vm1753, %v6054, %v6058
        %v6061 = vsel %vm1753, %v6056, %v6052
        %v6062 = vsel %vm1753, %v6058, %v6054
        %v6063 = vmul.f32 %v6061, %v1759
        %v6064 = vmul.f32 %v6059, %v1760
        %v6065 = vmul.f32 %v6062, %v1759
        %v6066 = vmul.f32 %v6060, %v1760
        %6067 = vrot.lane.b32.xlu0 %v6001, 1
        %v6068 = vpop.permute.xlu0 %6067
        %6069 = vrot.lane.b32.xlu0 %v6003, 1
        %v6070 = vpop.permute.xlu0 %6069
        %6071 = vrot.lane.b32.xlu0 %v6015, 1
        %v6072 = vpop.permute.xlu0 %6071
        %6073 = vrot.lane.b32.xlu0 %v6017, 1
        %v6074 = vpop.permute.xlu0 %6073
        %v6075 = vsel %vm1769, %v6068, %v6072
        %v6076 = vsel %vm1769, %v6070, %v6074
        %v6077 = vsel %vm1769, %v6072, %v6068
        %v6078 = vsel %vm1769, %v6074, %v6070
        %v6079 = vmul.f32 %v6077, %v1775
        %v6080 = vmul.f32 %v6075, %v1776
        %v6081 = vmul.f32 %v6078, %v1775
        %v6082 = vmul.f32 %v6076, %v1776
        %v6083 = vmul.f32 %v6001, %v1784
        %v6084 = vmul.f32 %v6015, %v1785
        %v6085 = vmul.f32 %v6003, %v1784
        %v6086 = vmul.f32 %v6017, %v1785
        %6087 = vrot.lane.b32.xlu0 %v6001, 127
        %v6088 = vpop.permute.xlu0 %6087
        %6089 = vrot.lane.b32.xlu0 %v6003, 127
        %v6090 = vpop.permute.xlu0 %6089
        %6091 = vrot.lane.b32.xlu0 %v6015, 127
        %v6092 = vpop.permute.xlu0 %6091
        %6093 = vrot.lane.b32.xlu0 %v6017, 127
        %v6094 = vpop.permute.xlu0 %6093
        %v6095 = vsel %vm1794, %v6088, %v6092
        %v6096 = vsel %vm1794, %v6090, %v6094
        %v6097 = vsel %vm1794, %v6092, %v6088
        %v6098 = vsel %vm1794, %v6094, %v6090
        %v6099 = vmul.f32 %v6095, %v1800
        %v6100 = vmul.f32 %v6097, %v1801
        %v6101 = vmul.f32 %v6096, %v1800
        %v6102 = vmul.f32 %v6098, %v1801
        %6103 = vrot.lane.b32.xlu0 %v6001, 113
        %v6104 = vpop.permute.xlu0 %6103
        %6105 = vrot.lane.b32.xlu0 %v6003, 113
        %v6106 = vpop.permute.xlu0 %6105
        %6107 = vrot.lane.b32.xlu0 %v6015, 113
        %v6108 = vpop.permute.xlu0 %6107
        %6109 = vrot.lane.b32.xlu0 %v6017, 113
        %v6110 = vpop.permute.xlu0 %6109
        %v6111 = vsel %vm1810, %v6104, %v6108
        %v6112 = vsel %vm1810, %v6106, %v6110
        %v6113 = vsel %vm1810, %v6108, %v6104
        %v6114 = vsel %vm1810, %v6110, %v6106
        %v6115 = vmul.f32 %v6111, %v1816
        %v6116 = vmul.f32 %v6113, %v1817
        %v6117 = vmul.f32 %v6112, %v1816
        %v6118 = vmul.f32 %v6114, %v1817
        %6119 = vrot.lane.b32.xlu0 %v6001, 112
        %v6120 = vpop.permute.xlu0 %6119
        %6121 = vrot.lane.b32.xlu0 %v6003, 112
        %v6122 = vpop.permute.xlu0 %6121
        %6123 = vrot.lane.b32.xlu0 %v6015, 112
        %v6124 = vpop.permute.xlu0 %6123
        %6125 = vrot.lane.b32.xlu0 %v6017, 112
        %v6126 = vpop.permute.xlu0 %6125
        %v6127 = vsel %vm1826, %v6120, %v6124
        %v6128 = vsel %vm1826, %v6122, %v6126
        %v6129 = vsel %vm1826, %v6124, %v6120
        %v6130 = vsel %vm1826, %v6126, %v6122
        %v6131 = vmul.f32 %v6127, %v1832
        %v6132 = vmul.f32 %v6129, %v1833
        %v6133 = vmul.f32 %v6128, %v1832
        %v6134 = vmul.f32 %v6130, %v1833
        %6135 = vrot.lane.b32.xlu0 %v6001, 111
        %v6136 = vpop.permute.xlu0 %6135
        %6137 = vrot.lane.b32.xlu0 %v6003, 111
        %v6138 = vpop.permute.xlu0 %6137
        %6139 = vrot.lane.b32.xlu0 %v6015, 111
        %v6140 = vpop.permute.xlu0 %6139
        %6141 = vrot.lane.b32.xlu0 %v6017, 111
        %v6142 = vpop.permute.xlu0 %6141
        %v6143 = vsel %vm1842, %v6136, %v6140
        %v6144 = vsel %vm1842, %v6138, %v6142
        %v6145 = vsel %vm1842, %v6140, %v6136
        %v6146 = vsel %vm1842, %v6142, %v6138
        %v6147 = vmul.f32 %v6143, %v1848
        %v6148 = vmul.f32 %v6145, %v1849
        %v6149 = vmul.f32 %v6144, %v1848
        %v6150 = vmul.f32 %v6146, %v1849
        %v6151 = vpack.c.bf16 %v6033, %v6031
        %v6152 = vpack.c.bf16 %v6034, %v6032
        %v6153 = vpack.c.bf16 %v6049, %v6047
        %v6154 = vpack.c.bf16 %v6050, %v6048
        %v6155 = vpack.c.bf16 %v6065, %v6063
        %v6156 = vpack.c.bf16 %v6066, %v6064
        %v6157 = vpack.c.bf16 %v6081, %v6079
        %v6158 = vpack.c.bf16 %v6082, %v6080
        %v6159 = vpack.c.bf16 %v6085, %v6083
        %v6160 = vpack.c.bf16 %v6086, %v6084
        %v6161 = vpack.c.bf16 %v6101, %v6099
        %v6162 = vpack.c.bf16 %v6102, %v6100
        %v6163 = vpack.c.bf16 %v6117, %v6115
        %v6164 = vpack.c.bf16 %v6118, %v6116
        %v6165 = vpack.c.bf16 %v6133, %v6131
        %v6166 = vpack.c.bf16 %v6134, %v6132
        %v6167 = vpack.c.bf16 %v6149, %v6147
        %v6168 = vpack.c.bf16 %v6150, %v6148
        %v6169 = vld [vmem:[#allocation25] sm:$0xff]
        %v6170 = vld [vmem:[#allocation25 + $0x8] sm:$0xff]
        %v6171 = vld [vmem:[%s81] sm:$0xff]
        %v6172 = vld [vmem:[%s81 + $0x8] sm:$0xff]
        %6174 = vset.pattern.permute.xlu0 0
        %6175 = vperm.xlu0 %6174, %v6171
        %v6176 = vpop.permute.xlu0 %6175
        %6179 = vset.pattern.permute.xlu0 0
        %6180 = vperm.xlu0 %6179, %v6172
        %v6181 = vpop.permute.xlu0 %6180
        %v6185 = vunpack.c.l.b16 %v6169
        %v6186 = vunpack.c.h.b16 %v6169
        %v6187 = vunpack.c.l.b16 %v6170
        %v6188 = vunpack.c.h.b16 %v6170
        %v6189 = vpack.c.b16 %v6187, %v6185
        %v6190 = vpack.c.b16 %v6188, %v6186
        %v6193 = vsel %vm2373, %v6190, 0
        %6195 = vmatpush.bf16.msra.mxu0 %v6165
        %6196 = vmatpush.bf16.msra.mxu0 %v6163
        %6197 = vmatpush.bf16.msra.mxu0 %v6161
        %6198 = vmatpush.bf16.msra.mxu0 %v6159
        %6199 = vmatpush.bf16.msra.mxu0 %v6157
        %6200 = vmatpush.bf16.msra.mxu0 %v6155
        %6201 = vmatpush.bf16.msra.mxu0 %v6153
        %6202 = vmatpush.bf16.msra.mxu0 %v6151
        %6203 = vmatmul.bf16.gmra.mxu0 %v6189
        %v6204 = vpop.f32.mrf.mxu0
        %v6205 = vadd.f32 %v6176, %v6204
        %v6206 = vpop.f32.mrf.mxu0
        %v6207 = vadd.f32 %v6181, %v6206
        %6208 = vdwg.mxu0
        %6209 = vmatpush.bf16.msra.mxu0 0
        %6210 = vmatpush.bf16.msra.mxu0 0
        %6211 = vmatpush.bf16.msra.mxu0 0
        %6212 = vmatpush.bf16.msra.mxu0 0
        %6213 = vmatpush.bf16.msra.mxu0 0
        %6214 = vmatpush.bf16.msra.mxu0 0
        %6215 = vmatpush.bf16.msra.mxu0 0
        %6216 = vmatpush.bf16.msra.mxu0 %v6167
        %6217 = vmatmul.bf16.gmra.mxu0 %v6193
        %v6218 = vpop.f32.mrf.mxu0
        %v6219 = vadd.f32 %v6205, %v6218
        %v6220 = vpop.f32.mrf.mxu0
        %v6221 = vadd.f32 %v6207, %v6220
        %6222 = vdwg.mxu0
        %6223 = vmatpush.bf16.msra.mxu0 %v6166
        %6224 = vmatpush.bf16.msra.mxu0 %v6164
        %6225 = vmatpush.bf16.msra.mxu0 %v6162
        %6226 = vmatpush.bf16.msra.mxu0 %v6160
        %6227 = vmatpush.bf16.msra.mxu0 %v6158
        %6228 = vmatpush.bf16.msra.mxu0 %v6156
        %6229 = vmatpush.bf16.msra.mxu0 %v6154
        %6230 = vmatpush.bf16.msra.mxu0 %v6152
        %6231 = vmatmul.bf16.gmra.mxu0 %v6189
        %v6232 = vpop.f32.mrf.mxu0
        %v6233 = vadd.f32 %v6176, %v6232
        %v6234 = vpop.f32.mrf.mxu0
        %v6235 = vadd.f32 %v6181, %v6234
        %6236 = vdwg.mxu0
        %6237 = vmatpush.bf16.msra.mxu0 0
        %6238 = vmatpush.bf16.msra.mxu0 0
        %6239 = vmatpush.bf16.msra.mxu0 0
        %6240 = vmatpush.bf16.msra.mxu0 0
        %6241 = vmatpush.bf16.msra.mxu0 0
        %6242 = vmatpush.bf16.msra.mxu0 0
        %6243 = vmatpush.bf16.msra.mxu0 0
        %6244 = vmatpush.bf16.msra.mxu0 %v6168
        %6245 = vmatmul.bf16.gmra.mxu0 %v6193
        %v6246 = vpop.f32.mrf.mxu0
        %v6247 = vadd.f32 %v6233, %v6246
        %v6248 = vpop.f32.mrf.mxu0
        %v6249 = vadd.f32 %v6235, %v6248
        %6250 = vdwg.mxu0
        %6251 = vrot.lane.b32.xlu0 %v6219, 17
        %v6252 = vpop.permute.xlu0 %6251
        %6253 = vrot.lane.b32.xlu0 %v6221, 17
        %v6254 = vpop.permute.xlu0 %6253
        %6255 = vrot.lane.b32.xlu0 %v6247, 17
        %v6256 = vpop.permute.xlu0 %6255
        %6257 = vrot.lane.b32.xlu0 %v6249, 17
        %v6258 = vpop.permute.xlu0 %6257
        %v6259 = vsel %vm1722, %v6252, %v6256
        %v6260 = vsel %vm1722, %v6254, %v6258
        %v6261 = vsel %vm1722, %v6256, %v6252
        %v6262 = vsel %vm1722, %v6258, %v6254
        %v6263 = vmul.f32 %v6261, %v1727
        %v6264 = vmul.f32 %v6259, %v1728
        %v6265 = vmul.f32 %v6262, %v1727
        %v6266 = vmul.f32 %v6260, %v1728
        %6267 = vrot.lane.b32.xlu0 %v6219, 16
        %v6268 = vpop.permute.xlu0 %6267
        %6269 = vrot.lane.b32.xlu0 %v6221, 16
        %v6270 = vpop.permute.xlu0 %6269
        %6271 = vrot.lane.b32.xlu0 %v6247, 16
        %v6272 = vpop.permute.xlu0 %6271
        %6273 = vrot.lane.b32.xlu0 %v6249, 16
        %v6274 = vpop.permute.xlu0 %6273
        %v6275 = vsel %vm1737, %v6268, %v6272
        %v6276 = vsel %vm1737, %v6270, %v6274
        %v6277 = vsel %vm1737, %v6272, %v6268
        %v6278 = vsel %vm1737, %v6274, %v6270
        %v6279 = vmul.f32 %v6277, %v1743
        %v6280 = vmul.f32 %v6275, %v1744
        %v6281 = vmul.f32 %v6278, %v1743
        %v6282 = vmul.f32 %v6276, %v1744
        %6283 = vrot.lane.b32.xlu0 %v6219, 15
        %v6284 = vpop.permute.xlu0 %6283
        %6285 = vrot.lane.b32.xlu0 %v6221, 15
        %v6286 = vpop.permute.xlu0 %6285
        %6287 = vrot.lane.b32.xlu0 %v6247, 15
        %v6288 = vpop.permute.xlu0 %6287
        %6289 = vrot.lane.b32.xlu0 %v6249, 15
        %v6290 = vpop.permute.xlu0 %6289
        %v6291 = vsel %vm1753, %v6284, %v6288
        %v6292 = vsel %vm1753, %v6286, %v6290
        %v6293 = vsel %vm1753, %v6288, %v6284
        %v6294 = vsel %vm1753, %v6290, %v6286
        %v6295 = vmul.f32 %v6293, %v1759
        %v6296 = vmul.f32 %v6291, %v1760
        %v6297 = vmul.f32 %v6294, %v1759
        %v6298 = vmul.f32 %v6292, %v1760
        %6299 = vrot.lane.b32.xlu0 %v6219, 1
        %v6300 = vpop.permute.xlu0 %6299
        %6301 = vrot.lane.b32.xlu0 %v6221, 1
        %v6302 = vpop.permute.xlu0 %6301
        %6303 = vrot.lane.b32.xlu0 %v6247, 1
        %v6304 = vpop.permute.xlu0 %6303
        %6305 = vrot.lane.b32.xlu0 %v6249, 1
        %v6306 = vpop.permute.xlu0 %6305
        %v6307 = vsel %vm1769, %v6300, %v6304
        %v6308 = vsel %vm1769, %v6302, %v6306
        %v6309 = vsel %vm1769, %v6304, %v6300
        %v6310 = vsel %vm1769, %v6306, %v6302
        %v6311 = vmul.f32 %v6309, %v1775
        %v6312 = vmul.f32 %v6307, %v1776
        %v6313 = vmul.f32 %v6310, %v1775
        %v6314 = vmul.f32 %v6308, %v1776
        %v6315 = vmul.f32 %v6219, %v1784
        %v6316 = vmul.f32 %v6247, %v1785
        %v6317 = vmul.f32 %v6221, %v1784
        %v6318 = vmul.f32 %v6249, %v1785
        %6319 = vrot.lane.b32.xlu0 %v6219, 127
        %v6320 = vpop.permute.xlu0 %6319
        %6321 = vrot.lane.b32.xlu0 %v6221, 127
        %v6322 = vpop.permute.xlu0 %6321
        %6323 = vrot.lane.b32.xlu0 %v6247, 127
        %v6324 = vpop.permute.xlu0 %6323
        %6325 = vrot.lane.b32.xlu0 %v6249, 127
        %v6326 = vpop.permute.xlu0 %6325
        %v6327 = vsel %vm1794, %v6320, %v6324
        %v6328 = vsel %vm1794, %v6322, %v6326
        %v6329 = vsel %vm1794, %v6324, %v6320
        %v6330 = vsel %vm1794, %v6326, %v6322
        %v6331 = vmul.f32 %v6327, %v1800
        %v6332 = vmul.f32 %v6329, %v1801
        %v6333 = vmul.f32 %v6328, %v1800
        %v6334 = vmul.f32 %v6330, %v1801
        %6335 = vrot.lane.b32.xlu0 %v6219, 113
        %v6336 = vpop.permute.xlu0 %6335
        %6337 = vrot.lane.b32.xlu0 %v6221, 113
        %v6338 = vpop.permute.xlu0 %6337
        %6339 = vrot.lane.b32.xlu0 %v6247, 113
        %v6340 = vpop.permute.xlu0 %6339
        %6341 = vrot.lane.b32.xlu0 %v6249, 113
        %v6342 = vpop.permute.xlu0 %6341
        %v6343 = vsel %vm1810, %v6336, %v6340
        %v6344 = vsel %vm1810, %v6338, %v6342
        %v6345 = vsel %vm1810, %v6340, %v6336
        %v6346 = vsel %vm1810, %v6342, %v6338
        %v6347 = vmul.f32 %v6343, %v1816
        %v6348 = vmul.f32 %v6345, %v1817
        %v6349 = vmul.f32 %v6344, %v1816
        %v6350 = vmul.f32 %v6346, %v1817
        %6351 = vrot.lane.b32.xlu0 %v6219, 112
        %v6352 = vpop.permute.xlu0 %6351
        %6353 = vrot.lane.b32.xlu0 %v6221, 112
        %v6354 = vpop.permute.xlu0 %6353
        %6355 = vrot.lane.b32.xlu0 %v6247, 112
        %v6356 = vpop.permute.xlu0 %6355
        %6357 = vrot.lane.b32.xlu0 %v6249, 112
        %v6358 = vpop.permute.xlu0 %6357
        %v6359 = vsel %vm1826, %v6352, %v6356
        %v6360 = vsel %vm1826, %v6354, %v6358
        %v6361 = vsel %vm1826, %v6356, %v6352
        %v6362 = vsel %vm1826, %v6358, %v6354
        %v6363 = vmul.f32 %v6359, %v1832
        %v6364 = vmul.f32 %v6361, %v1833
        %v6365 = vmul.f32 %v6360, %v1832
        %v6366 = vmul.f32 %v6362, %v1833
        %6367 = vrot.lane.b32.xlu0 %v6219, 111
        %v6368 = vpop.permute.xlu0 %6367
        %6369 = vrot.lane.b32.xlu0 %v6221, 111
        %v6370 = vpop.permute.xlu0 %6369
        %6371 = vrot.lane.b32.xlu0 %v6247, 111
        %v6372 = vpop.permute.xlu0 %6371
        %6373 = vrot.lane.b32.xlu0 %v6249, 111
        %v6374 = vpop.permute.xlu0 %6373
        %v6375 = vsel %vm1842, %v6368, %v6372
        %v6376 = vsel %vm1842, %v6370, %v6374
        %v6377 = vsel %vm1842, %v6372, %v6368
        %v6378 = vsel %vm1842, %v6374, %v6370
        %v6379 = vmul.f32 %v6375, %v1848
        %v6380 = vmul.f32 %v6377, %v1849
        %v6381 = vmul.f32 %v6376, %v1848
        %v6382 = vmul.f32 %v6378, %v1849
        %v6383 = vpack.c.bf16 %v6265, %v6263
        %v6384 = vpack.c.bf16 %v6266, %v6264
        %v6385 = vpack.c.bf16 %v6281, %v6279
        %v6386 = vpack.c.bf16 %v6282, %v6280
        %v6387 = vpack.c.bf16 %v6297, %v6295
        %v6388 = vpack.c.bf16 %v6298, %v6296
        %v6389 = vpack.c.bf16 %v6313, %v6311
        %v6390 = vpack.c.bf16 %v6314, %v6312
        %v6391 = vpack.c.bf16 %v6317, %v6315
        %v6392 = vpack.c.bf16 %v6318, %v6316
        %v6393 = vpack.c.bf16 %v6333, %v6331
        %v6394 = vpack.c.bf16 %v6334, %v6332
        %v6395 = vpack.c.bf16 %v6349, %v6347
        %v6396 = vpack.c.bf16 %v6350, %v6348
        %v6397 = vpack.c.bf16 %v6365, %v6363
        %v6398 = vpack.c.bf16 %v6366, %v6364
        %v6399 = vpack.c.bf16 %v6381, %v6379
        %v6400 = vpack.c.bf16 %v6382, %v6380
        %v6401 = vld [vmem:[#allocation27] sm:$0xff]
        %v6402 = vld [vmem:[%s85] sm:$0xff]
        %6404 = vset.pattern.permute.xlu0 0
        %6405 = vperm.xlu0 %6404, %v6402
        %v6406 = vpop.permute.xlu0 %6405
        %v6409 = vunpack.c.l.b16 %v6401
        %v6410 = vunpack.c.h.b16 %v6401
        %v6411 = vpack.c.b16 %v6409, %v6409
        %v6412 = vpack.c.b16 %v6410, %v6410
        %v6415 = vsel %vm2373, %v6412, 0
        %6417 = vmatpush.bf16.msra.mxu0 %v6397
        %6418 = vmatpush.bf16.msra.mxu0 %v6395
        %6419 = vmatpush.bf16.msra.mxu0 %v6393
        %6420 = vmatpush.bf16.msra.mxu0 %v6391
        %6421 = vmatpush.bf16.msra.mxu0 %v6389
        %6422 = vmatpush.bf16.msra.mxu0 %v6387
        %6423 = vmatpush.bf16.msra.mxu0 %v6385
        %6424 = vmatpush.bf16.msra.mxu0 %v6383
        %6425 = vmatmul.bf16.gmra.mxu0 %v6411
        %v6426 = vpop.f32.mrf.mxu0
        %v6427 = vadd.f32 %v6406, %v6426
        %v6428 = vpop.f32.mrf.mxu0
        %6429 = vdwg.mxu0
        %6430 = vmatpush.bf16.msra.mxu0 0
        %6431 = vmatpush.bf16.msra.mxu0 0
        %6432 = vmatpush.bf16.msra.mxu0 0
        %6433 = vmatpush.bf16.msra.mxu0 0
        %6434 = vmatpush.bf16.msra.mxu0 0
        %6435 = vmatpush.bf16.msra.mxu0 0
        %6436 = vmatpush.bf16.msra.mxu0 0
        %6437 = vmatpush.bf16.msra.mxu0 %v6399
        %6438 = vmatmul.bf16.gmra.mxu0 %v6415
        %v6439 = vpop.f32.mrf.mxu0
        %v6440 = vadd.f32 %v6427, %v6439
        %v6441 = vpop.f32.mrf.mxu0
        %6442 = vdwg.mxu0
        %6443 = vmatpush.bf16.msra.mxu0 %v6398
        %6444 = vmatpush.bf16.msra.mxu0 %v6396
        %6445 = vmatpush.bf16.msra.mxu0 %v6394
        %6446 = vmatpush.bf16.msra.mxu0 %v6392
        %6447 = vmatpush.bf16.msra.mxu0 %v6390
        %6448 = vmatpush.bf16.msra.mxu0 %v6388
        %6449 = vmatpush.bf16.msra.mxu0 %v6386
        %6450 = vmatpush.bf16.msra.mxu0 %v6384
        %6451 = vmatmul.bf16.gmra.mxu0 %v6411
        %v6452 = vpop.f32.mrf.mxu0
        %v6453 = vadd.f32 %v6406, %v6452
        %v6454 = vpop.f32.mrf.mxu0
        %6455 = vdwg.mxu0
        %6456 = vmatpush.bf16.msra.mxu0 0
        %6457 = vmatpush.bf16.msra.mxu0 0
        %6458 = vmatpush.bf16.msra.mxu0 0
        %6459 = vmatpush.bf16.msra.mxu0 0
        %6460 = vmatpush.bf16.msra.mxu0 0
        %6461 = vmatpush.bf16.msra.mxu0 0
        %6462 = vmatpush.bf16.msra.mxu0 0
        %6463 = vmatpush.bf16.msra.mxu0 %v6400
        %6464 = vmatmul.bf16.gmra.mxu0 %v6415
        %v6465 = vpop.f32.mrf.mxu0
        %v6466 = vadd.f32 %v6453, %v6465
        %v6467 = vpop.f32.mrf.mxu0
        %6468 = vdwg.mxu0
        %v6469 = vmax.f32 %v6440, 0.0
        %v6470 = vmax.f32 %v6466, 0.0
        %6471 = vrot.lane.b32.xlu0 %v6469, 17
        %v6472 = vpop.permute.xlu0 %6471
        %6473 = vrot.lane.b32.xlu0 %v6470, 17
        %v6474 = vpop.permute.xlu0 %6473
        %v6475 = vsel %vm1722, %v6472, %v6474
        %v6476 = vsel %vm1722, %v6474, %v6472
        %v6477 = vmul.f32 %v6476, %v1727
        %v6478 = vmul.f32 %v6475, %v1728
        %6479 = vrot.lane.b32.xlu0 %v6469, 16
        %v6480 = vpop.permute.xlu0 %6479
        %6481 = vrot.lane.b32.xlu0 %v6470, 16
        %v6482 = vpop.permute.xlu0 %6481
        %v6483 = vsel %vm1737, %v6480, %v6482
        %v6484 = vsel %vm1737, %v6482, %v6480
        %v6485 = vmul.f32 %v6484, %v1743
        %v6486 = vmul.f32 %v6483, %v1744
        %6487 = vrot.lane.b32.xlu0 %v6469, 15
        %v6488 = vpop.permute.xlu0 %6487
        %6489 = vrot.lane.b32.xlu0 %v6470, 15
        %v6490 = vpop.permute.xlu0 %6489
        %v6491 = vsel %vm1753, %v6488, %v6490
        %v6492 = vsel %vm1753, %v6490, %v6488
        %v6493 = vmul.f32 %v6492, %v1759
        %v6494 = vmul.f32 %v6491, %v1760
        %6495 = vrot.lane.b32.xlu0 %v6469, 1
        %v6496 = vpop.permute.xlu0 %6495
        %6497 = vrot.lane.b32.xlu0 %v6470, 1
        %v6498 = vpop.permute.xlu0 %6497
        %v6499 = vsel %vm1769, %v6496, %v6498
        %v6500 = vsel %vm1769, %v6498, %v6496
        %v6501 = vmul.f32 %v6500, %v1775
        %v6502 = vmul.f32 %v6499, %v1776
        %v6503 = vmul.f32 %v6469, %v1784
        %v6504 = vmul.f32 %v6470, %v1785
        %6505 = vrot.lane.b32.xlu0 %v6469, 127
        %v6506 = vpop.permute.xlu0 %6505
        %6507 = vrot.lane.b32.xlu0 %v6470, 127
        %v6508 = vpop.permute.xlu0 %6507
        %v6509 = vsel %vm1794, %v6506, %v6508
        %v6510 = vsel %vm1794, %v6508, %v6506
        %v6511 = vmul.f32 %v6509, %v1800
        %v6512 = vmul.f32 %v6510, %v1801
        %6513 = vrot.lane.b32.xlu0 %v6469, 113
        %v6514 = vpop.permute.xlu0 %6513
        %6515 = vrot.lane.b32.xlu0 %v6470, 113
        %v6516 = vpop.permute.xlu0 %6515
        %v6517 = vsel %vm1810, %v6514, %v6516
        %v6518 = vsel %vm1810, %v6516, %v6514
        %v6519 = vmul.f32 %v6517, %v1816
        %v6520 = vmul.f32 %v6518, %v1817
        %6521 = vrot.lane.b32.xlu0 %v6469, 112
        %v6522 = vpop.permute.xlu0 %6521
        %6523 = vrot.lane.b32.xlu0 %v6470, 112
        %v6524 = vpop.permute.xlu0 %6523
        %v6525 = vsel %vm1826, %v6522, %v6524
        %v6526 = vsel %vm1826, %v6524, %v6522
        %v6527 = vmul.f32 %v6525, %v1832
        %v6528 = vmul.f32 %v6526, %v1833
        %6529 = vrot.lane.b32.xlu0 %v6469, 111
        %v6530 = vpop.permute.xlu0 %6529
        %6531 = vrot.lane.b32.xlu0 %v6470, 111
        %v6532 = vpop.permute.xlu0 %6531
        %v6533 = vsel %vm1842, %v6530, %v6532
        %v6534 = vsel %vm1842, %v6532, %v6530
        %v6535 = vmul.f32 %v6533, %v1848
        %v6536 = vmul.f32 %v6534, %v1849
        %v6537 = vpack.c.bf16 %v6485, %v6477
        %v6538 = vpack.c.bf16 %v6486, %v6478
        %v6539 = vpack.c.bf16 %v6501, %v6493
        %v6540 = vpack.c.bf16 %v6502, %v6494
        %v6541 = vpack.c.bf16 %v6511, %v6503
        %v6542 = vpack.c.bf16 %v6512, %v6504
        %v6543 = vpack.c.bf16 %v6527, %v6519
        %v6544 = vpack.c.bf16 %v6528, %v6520
        %v6545 = vpack.c.bf16 %v6535, %v6535
        %v6546 = vpack.c.bf16 %v6536, %v6536
        %v6547 = vld [vmem:[#allocation28] sm:$0xf]
        %v6548 = vld [vmem:[%s89] sm:$0xff]
        %6550 = vset.pattern.permute.xlu0 0
        %6551 = vperm.xlu0 %6550, %v6548
        %v6552 = vpop.permute.xlu0 %6551
        %v6555 = vsel %vm1871, %v6547, 0
        %v6558 = vsel %vm1875, %v6545, 0
        %v6561 = vsel %vm1875, %v6546, 0
        %6563 = vmatpush.bf16.msra.mxu0 0
        %6564 = vmatpush.bf16.msra.mxu0 0
        %6565 = vmatpush.bf16.msra.mxu0 0
        %6566 = vmatpush.bf16.msra.mxu0 %v6558
        %6567 = vmatpush.bf16.msra.mxu0 %v6543
        %6568 = vmatpush.bf16.msra.mxu0 %v6541
        %6569 = vmatpush.bf16.msra.mxu0 %v6539
        %6570 = vmatpush.bf16.msra.mxu0 %v6537
        %6571 = vmatmul.bf16.gmra.mxu0 %v6555
        %v6572 = vpop.f32.mrf.mxu0
        %v6573 = vadd.f32 %v6552, %v6572
        %v6574 = vpop.f32.mrf.mxu0
        %6575 = vdwg.mxu0
        %6576 = vmatpush.bf16.msra.mxu0 0
        %6577 = vmatpush.bf16.msra.mxu0 0
        %6578 = vmatpush.bf16.msra.mxu0 0
        %6579 = vmatpush.bf16.msra.mxu0 %v6561
        %6580 = vmatpush.bf16.msra.mxu0 %v6544
        %6581 = vmatpush.bf16.msra.mxu0 %v6542
        %6582 = vmatpush.bf16.msra.mxu0 %v6540
        %6583 = vmatpush.bf16.msra.mxu0 %v6538
        %6584 = vmatmul.bf16.gmra.mxu0 %v6555
        %v6585 = vpop.f32.mrf.mxu0
        %v6586 = vadd.f32 %v6552, %v6585
        %v6587 = vpop.f32.mrf.mxu0
        %6588 = vdwg.mxu0
        %v6589 = vmax.f32 %v6573, 0.0
        %v6590 = vmax.f32 %v6586, 0.0
        %v6591 = vld [vmem:[#allocation30] sm:$0x3]
        %v6592 = vpack.c.bf16 %v6589, %v6589
        %v6593 = vpack.c.bf16 %v6590, %v6590
        %v6594 = vld [vmem:[%s93] sm:$0x7]
        %6596 = vset.pattern.permute.xlu0 0
        %6597 = vperm.xlu0 %6596, %v6594
        %v6598 = vpop.permute.xlu0 %6597
        %vm6600 = vcmask 64512
        %v6602 = vsel %vm6600, %v6591, 0
        %v6605 = vsel %vm1875, %v6592, 0
        %v6608 = vsel %vm1875, %v6593, 0
        %6610 = vmatpush.bf16.msra.mxu0 0
        %6611 = vmatpush.bf16.msra.mxu0 0
        %6612 = vmatpush.bf16.msra.mxu0 0
        %6613 = vmatpush.bf16.msra.mxu0 0
        %6614 = vmatpush.bf16.msra.mxu0 0
        %6615 = vmatpush.bf16.msra.mxu0 0
        %6616 = vmatpush.bf16.msra.mxu0 0
        %6617 = vmatpush.bf16.msra.mxu0 %v6605
        %6618 = vmatmul.bf16.gmra.mxu0 %v6602
        %v6619 = vpop.f32.mrf.mxu0
        %v6620 = vadd.f32 %v6598, %v6619
        %v6621 = vpop.f32.mrf.mxu0
        %6622 = vdwg.mxu0
        %6623 = vmatpush.bf16.msra.mxu0 0
        %6624 = vmatpush.bf16.msra.mxu0 0
        %6625 = vmatpush.bf16.msra.mxu0 0
        %6626 = vmatpush.bf16.msra.mxu0 0
        %6627 = vmatpush.bf16.msra.mxu0 0
        %6628 = vmatpush.bf16.msra.mxu0 0
        %6629 = vmatpush.bf16.msra.mxu0 0
        %6630 = vmatpush.bf16.msra.mxu0 %v6608
        %6631 = vmatmul.bf16.gmra.mxu0 %v6602
        %v6632 = vpop.f32.mrf.mxu0
        %v6633 = vadd.f32 %v6598, %v6632
        %v6634 = vpop.f32.mrf.mxu0
        %6635 = vdwg.mxu0
        %v6638 = vrot.slane %v6633, 4
        %v6639 = vsel %vm1875, %v6620, %v6638
        %6641 = vst [vmem:[%s1712] sm:$0x77] %v6639
        %p6642 = scmp.lt.s32.totalorder %s116, 1
        %s6643 = scalar_select %p6642, %s116, 1
        %s6644 = smul.addr %s6643, 2
        %s6645 = smul.addr %s6644, 4
        %s6646 = scalar_lea.vmem %s95, %s6645
        // Predicated region
        $region285: #{aemad_forward.1} parent=207 // pred_check
          %p6647 = pneg %p1126
        $region286: #{aemad_forward.1} parent=207 // pred_check_branch
          %6649 = sbr.rel (%p6647) target = $region288
        $region287: #{aemad_forward.1} parent=207 // pred_region
          _
        $region288: #{aemad_forward.1} parent=207 // pred_fallthru
          _
      $region208: #{aemad_forward.1} parent=5 // pred_fallthru
        _
      %p6650 = scmp.le.s32.totalorder 2, %s111
      // Predicated region
      $region289: #{aemad_forward.1} parent=5 // pred_check
        %p6651 = pneg %p6650
      $region290: #{aemad_forward.1} parent=5 // pred_check_branch
        %6653 = sbr.rel (%p6651) target = $region292
      $region291: #{aemad_forward.1} parent=5 // pred_region
        %s6654 = ssub.s32 %s111, 2
        // Predicated region
        $region293: #{aemad_forward.1} parent=291 // pred_check
          %p6655 = pneg %p1132
        $region294: #{aemad_forward.1} parent=291 // pred_check_branch
          %6657 = sbr.rel (%p6655) target = $region296
        $region295: #{aemad_forward.1} parent=291 // pred_region
          %p6658 = scmp.lt.s32.totalorder %s117, 1
          %s6659 = scalar_select %p6658, %s117, 1
          %s6660 = smul.addr %s6659, 2
          %s6661 = smul.addr %s6660, 4
          %s6662 = scalar_lea.vmem %s95, %s6661
        $region296: #{aemad_forward.1} parent=291 // pred_fallthru
          _
      $region292: #{aemad_forward.1} parent=5 // pred_fallthru
        _
    $region6: #{aemad_forward.1} parent=1 // loop_footer
      %s115 = sadd.s32 1, %s111
    $region7: #{aemad_forward.1} parent=1 // loop_footer_branch
      %110 = sbr.rel target = $region3
    $region8: #{aemad_forward.1} parent=1 // loop_exit
      _
    %6663 = vsyncpa [#allocation3], 1
    %s6664 = scalar_lea.sflag [#allocation3], 1
    %6665 = vsyncpa %s6664, 1
    %6666 = vsyncpa [#allocation5], 1
    %6667 = vsyncpa [#allocation8], 1
    %6668 = vsyncpa [#allocation11], 1
    %6669 = vsyncpa [#allocation14], 1
    %6670 = vsyncpa [#allocation17], 1
    %6671 = vsyncpa [#allocation20], 1
    %6672 = vsyncpa [#allocation23], 1
    %6673 = vsyncpa [#allocation26], 1
    %6674 = vsyncpa [#allocation29], 1

</llo_original>
